<compile_context>
chip_gen: v5e
topology: v5e:2x2
jax: 0.10.0
libtpu: 0.0.40
codegen_flags: <defaults>
</compile_context>

<pallas_src>
import functools

import jax
import jax.numpy as jnp
from jax.experimental import pallas as pl
from jax.experimental.pallas import tpu as pltpu

_VMEM_LIMIT = 16 * 1024 * 1024   # fits every call; safe on v7x's 64 MiB VMEM

# conv1..conv3 run as im2col + GEMM pallas_calls: (cin, cout, kernel, stride)
_CONV_CFG13 = [
    (4, 8, 4, 2),
    (8, 16, 3, 2),
    (16, 32, 3, 2),
]


def _round_up(n, m):
    return (n + m - 1) // m * m


# ---------------------------------------------------------------------------
# fused conv-GEMM kernel:  out = relu(x @ w + b)   (bf16 operands, f32 acc)
# ---------------------------------------------------------------------------
def _conv_mm_kernel(x_ref, w_ref, b_ref, o_ref):
    acc = jnp.dot(x_ref[...], w_ref[...], preferred_element_type=jnp.float32)
    o_ref[...] = jnp.maximum(acc + b_ref[...], 0.0).astype(o_ref.dtype)


def fused_matmul_relu(x, w, b_row):
    """relu(x @ w + b). x:(M,K) bf16, w:(K,N) bf16, b_row:(1,N) f32 -> (M,N) bf16."""
    M, K = x.shape
    N = w.shape[1]
    # Exactly two row blocks per layer: minimal grid overhead, and v7x's two
    # TensorCores each take one "parallel" step.  Ragged last block rows are
    # discarded by the masked store (no in-kernel reductions over M).
    tm = max(16, _round_up(pl.cdiv(M, 2), 16))
    return pl.pallas_call(
        _conv_mm_kernel,
        out_shape=jax.ShapeDtypeStruct((M, N), jnp.bfloat16),
        grid=(pl.cdiv(M, tm),),
        in_specs=[
            pl.BlockSpec((tm, K), lambda i: (i, 0)),
            pl.BlockSpec((K, N), lambda i: (0, 0)),
            pl.BlockSpec((1, N), lambda i: (0, 0)),
        ],
        out_specs=pl.BlockSpec((tm, N), lambda i: (i, 0)),
        compiler_params=pltpu.CompilerParams(
            dimension_semantics=("parallel",),
            vmem_limit_bytes=_VMEM_LIMIT),
    )(x, w, b_row)


# ---------------------------------------------------------------------------
# fused tail kernel: conv4 + conv5 + conv6 + l1 + l2 + l3 + tanh*max_action
# One grid step per batch element; every intermediate stays on-core.
# ---------------------------------------------------------------------------
def _tail_kernel(amp, p4_ref, w4_ref, b4_ref, w5_ref, b5_ref, w6_ref, b6_ref,
                 w1_ref, b1_ref, w2_ref, b2_ref, w3_ref, b3_ref, o_ref):
    f32, bf16 = jnp.float32, jnp.bfloat16

    # conv4 (stride 2): pre-extracted patches (25, 288) @ (288, 64).
    h4 = jnp.dot(p4_ref[0], w4_ref[...], preferred_element_type=f32)
    h4 = jnp.maximum(h4 + b4_ref[...], 0.0)             # (25, 64) f32, rows=(ho*5+wo)

    # conv5 (3x3, stride 1) on the 5x5x64 map -> 3x3x128 via tap accumulation.
    h5 = []
    for ho in range(3):
        acc = jnp.zeros((3, 128), f32)
        for i in range(3):
            base = (ho + i) * 5
            for j in range(3):
                rows = h4[base + j:base + j + 3, :].astype(bf16)        # (3, 64)
                tap = (i * 3 + j) * 64
                acc = acc + jnp.dot(rows, w5_ref[tap:tap + 64, :],
                                    preferred_element_type=f32)
        h5.append(jnp.maximum(acc + b5_ref[...], 0.0))   # (3, 128) f32, rows = wo

    # conv6 (3x3, no BN) consumes the whole 3x3x128 map -> (1, 256).
    acc6 = jnp.zeros((1, 256), f32)
    for i in range(3):
        for j in range(3):
            tap = (i * 3 + j) * 128
            acc6 = acc6 + jnp.dot(h5[i][j:j + 1, :].astype(bf16),
                                  w6_ref[tap:tap + 128, :],
                                  preferred_element_type=f32)
    h = jnp.maximum(acc6 + b6_ref[...], 0.0)             # (1, 256) f32

    # l1 / l2 / l3 (padded-lane fc weights; padded lanes stay exactly zero).
    h = jnp.dot(h.astype(bf16), w1_ref[...], preferred_element_type=f32)
    h = jnp.maximum(h + b1_ref[...], 0.0)
    h = jnp.dot(h.astype(bf16), w2_ref[...], preferred_element_type=f32)
    h = jnp.maximum(h + b2_ref[...], 0.0)
    y = jnp.dot(h.astype(bf16), w3_ref[...], preferred_element_type=f32) + b3_ref[...]
    o_ref[0] = jnp.tanh(y) * amp                         # (1, action_dim) f32


def fused_tail(p4, params, max_action):
    """conv4..l3 on pre-extracted conv4 patches p4:(B, 25, 288) bf16."""
    B = p4.shape[0]
    n_act = params["w3"].shape[1]
    operands = (p4, params["w4"], params["b4"], params["w5"], params["b5"],
                params["w6"], params["b6"], params["w1"], params["b1"],
                params["w2"], params["b2"], params["w3"], params["b3"])
    in_specs = [pl.BlockSpec((1,) + p4.shape[1:], lambda b: (b, 0, 0))]
    in_specs += [pl.BlockSpec(op.shape, lambda b: (0, 0)) for op in operands[1:]]
    out = pl.pallas_call(
        functools.partial(_tail_kernel, float(max_action)),
        out_shape=jax.ShapeDtypeStruct((B, 1, n_act), jnp.float32),
        grid=(B,),
        in_specs=in_specs,
        out_specs=pl.BlockSpec((1, 1, n_act), lambda b: (b, 0, 0)),
        compiler_params=pltpu.CompilerParams(
            dimension_semantics=("parallel",),
            vmem_limit_bytes=_VMEM_LIMIT),
    )(*operands)
    return out.reshape(B, n_act)


# ---------------------------------------------------------------------------
# im2col (XLA glue, fused by jit) for the conv1..conv4 patch extraction
# ---------------------------------------------------------------------------
def _im2col(x_nhwc, kh, kw, stride):
    """Extract valid conv patches. Returns (B*Ho*Wo, kh*kw*C) and (B, Ho, Wo)."""
    # TODO(synk): conv1-conv3 patch extraction could move in-kernel (strided
    # windows / tap grid axis) to cut HBM traffic at large batch; at B=2 it is
    # negligible and is kept as jit-fused XLA glue.
    B, H, W, C = x_nhwc.shape
    Ho = (H - kh) // stride + 1
    Wo = (W - kw) // stride + 1
    cols = []
    for i in range(kh):
        for j in range(kw):
            cols.append(
                x_nhwc[:, i:i + stride * Ho:stride, j:j + stride * Wo:stride, :])
    patches = jnp.stack(cols, axis=3)  # (B, Ho, Wo, kh*kw, C)
    return patches.reshape(B * Ho * Wo, kh * kw * C), (B, Ho, Wo)


# ---------------------------------------------------------------------------
# full forward pass (jitted once)
# ---------------------------------------------------------------------------
def actor_forward(params, x_nchw, *, max_action):
    h = jnp.transpose(x_nchw, (0, 2, 3, 1)).astype(jnp.bfloat16)   # NCHW -> NHWC
    for (cin, cout, ks, stride), w_mat, b_row in zip(
            _CONV_CFG13, params["conv_w"], params["conv_b"]):
        cols, (B, Ho, Wo) = _im2col(h, ks, ks, stride)
        out = fused_matmul_relu(cols, w_mat, b_row)
        h = out.reshape(B, Ho, Wo, cout)
    # conv4 patches feed the fused tail kernel: (B, 5*5, 3*3*32)
    cols4, (B, Ho4, Wo4) = _im2col(h, 3, 3, 2)
    p4 = cols4.reshape(B, Ho4 * Wo4, 3 * 3 * 32)
    return fused_tail(p4, params, max_action)


class ActorPallas:
    """JAX/Pallas port of the PyTorch Actor (eval-mode BatchNorm)."""

    def __init__(self, state_dim, action_dim, max_action, key):
        self.max_action = float(max_action)
        self.action_dim = int(action_dim)

        keys = jax.random.split(key, 64)   # 38 consumed; margin avoids StopIteration
        k = iter(keys)

        def bn_conv(kw_, kb_, kg_, kbe_, km_, kv_, ks_, cin, cout):
            """Random conv + BatchNorm params, BN folded into (K, cout) GEMM form."""
            w = 0.05 * jax.random.normal(kw_, (ks_, ks_, cin, cout), jnp.float32)
            b = 0.05 * jax.random.normal(kb_, (cout,), jnp.float32)
            gamma = 1.0 + 0.1 * jax.random.normal(kg_, (cout,), jnp.float32)
            beta = 0.1 * jax.random.normal(kbe_, (cout,), jnp.float32)
            mean = 0.1 * jax.random.normal(km_, (cout,), jnp.float32)
            var = 1.0 + jnp.abs(0.1 * jax.random.normal(kv_, (cout,), jnp.float32))
            s = gamma / jnp.sqrt(var + 1e-5)
            w_mat = (w.reshape(ks_ * ks_ * cin, cout) * s[None, :]).astype(jnp.bfloat16)
            b_row = ((b - mean) * s + beta).reshape(1, cout).astype(jnp.float32)
            return w_mat, b_row

        conv_w, conv_b = [], []
        for (cin, cout, ks, stride) in _CONV_CFG13:
            w_mat, b_row = bn_conv(next(k), next(k), next(k), next(k), next(k),
                                   next(k), ks, cin, cout)
            conv_w.append(w_mat)
            conv_b.append(b_row)

        # conv4 (32->64, k3 s2, BN) and conv5 (64->128, k3 s1, BN): tap-matrix form.
        w4, b4 = bn_conv(next(k), next(k), next(k), next(k), next(k), next(k),
                         3, 32, 64)                      # (288, 64), (1, 64)
        w5, b5 = bn_conv(next(k), next(k), next(k), next(k), next(k), next(k),
                         3, 64, 128)                     # (576, 128), (1, 128)

        # conv6 (128->256, k3 s1, no BN) on a 3x3 map.
        w6 = 0.05 * jax.random.normal(next(k), (3, 3, 128, 256), jnp.float32)
        b6 = 0.05 * jax.random.normal(next(k), (256,), jnp.float32)

        def padded_linear(kw_, kb_, fan_in, fan_out, k_pad, n_pad):
            w = 0.05 * jax.random.normal(kw_, (fan_in, fan_out), jnp.float32)
            b = 0.05 * jax.random.normal(kb_, (fan_out,), jnp.float32)
            wp = jnp.zeros((k_pad, n_pad), jnp.float32).at[:fan_in, :fan_out].set(w)
            bp = jnp.zeros((1, n_pad), jnp.float32).at[0, :fan_out].set(b)
            return wp.astype(jnp.bfloat16), bp

        # fc widths padded once at init (400->512, 300->384); padded rows/cols are
        # zero so padded hidden lanes stay exactly zero through the chain.
        w1, b1 = padded_linear(next(k), next(k), 256, 400, 256, 512)
        w2, b2 = padded_linear(next(k), next(k), 400, 300, 512, 384)
        w3, b3 = padded_linear(next(k), next(k), 300, self.action_dim,
                               384, self.action_dim)

        self.params = {
            "conv_w": conv_w, "conv_b": conv_b,
            "w4": w4, "b4": b4,
            "w5": w5, "b5": b5,
            "w6": w6.reshape(3 * 3 * 128, 256).astype(jnp.bfloat16),
            "b6": b6.reshape(1, 256).astype(jnp.float32),
            "w1": w1, "b1": b1, "w2": w2, "b2": b2, "w3": w3, "b3": b3,
        }

        self._forward = jax.jit(
            functools.partial(actor_forward, max_action=self.max_action))

    def __call__(self, x_nchw):
        # x_nchw: (B, 4, 96, 96) float32
        return self._forward(self.params, x_nchw)


if __name__ == "__main__":
    key = jax.random.PRNGKey(0)
    k_param, k_x = jax.random.split(key)

    # Car-racing Actor: the conv stack structurally requires 96x96 input
    # (the forward's x.view(-1, 256) implies a 1x1x256 final feature map).
    batch = 2
    action_dim = 3
    max_action = 1.0

    actor = ActorPallas(state_dim=(4, 96, 96), action_dim=action_dim,
                        max_action=max_action, key=k_param)

    x = jax.random.normal(k_x, (batch, 4, 96, 96), dtype=jnp.float32)

    out = actor(x)
    out = jax.block_until_ready(out)
    assert out.shape == (batch, action_dim), out.shape
    assert bool(jnp.all(jnp.isfinite(out)))
    assert bool(jnp.all(jnp.abs(out) <= max_action + 1e-5))
    print("KERNEL_OK")
</pallas_src>

<mosaic_0001>
module attributes {stable_mosaic.version = 11 : i64} {
  func.func @_conv_mm_kernel(%arg0: i32, %arg1: memref<2224x64xbf16, #tpu.memory_space<vmem>>, %arg2: memref<64x8xbf16, #tpu.memory_space<vmem>>, %arg3: memref<1x8xf32, #tpu.memory_space<vmem>>, %arg4: memref<2224x8xbf16, #tpu.memory_space<vmem>>) attributes {dimension_semantics = [#tpu.dimension_semantics<parallel>], iteration_bounds = array<i64: 2>, scalar_prefetch = 0 : i64, scratch_operands = 0 : i64, tpu.core_type = #tpu.core_type<tc>, window_params = [{transform_indices = @transform_0, window_bounds = array<i64: 2224, 64>}, {pipeline_mode = #tpu.pipeline_mode<synchronous>, transform_indices = @transform_1, window_bounds = array<i64: 64, 8>}, {pipeline_mode = #tpu.pipeline_mode<synchronous>, transform_indices = @transform_2, window_bounds = array<i64: 1, 8>}, {transform_indices = @transform_3, window_bounds = array<i64: 2224, 8>}]} {
    %c0 = arith.constant 0 : index
    %c0_0 = arith.constant 0 : index
    %0 = vector.load %arg1[%c0, %c0_0] : memref<2224x64xbf16, #tpu.memory_space<vmem>>, vector<2224x64xbf16>
    %c0_1 = arith.constant 0 : index
    %c0_2 = arith.constant 0 : index
    %1 = vector.load %arg2[%c0_1, %c0_2] : memref<64x8xbf16, #tpu.memory_space<vmem>>, vector<64x8xbf16>
    %cst = arith.constant dense<0.000000e+00> : vector<2224x8xf32>
    %2 = tpu.matmul %0, %1, %cst {dimension_numbers = #tpu.dot_dimension_numbers<[1], [0], [0], [1], [0, 0, 1, 1], [], []>} : vector<2224x64xbf16>, vector<64x8xbf16>, vector<2224x8xf32> -> vector<2224x8xf32>
    %c0_3 = arith.constant 0 : index
    %c0_4 = arith.constant 0 : index
    %3 = vector.load %arg3[%c0_3, %c0_4] : memref<1x8xf32, #tpu.memory_space<vmem>>, vector<1x8xf32>
    %4 = vector.broadcast %3 : vector<1x8xf32> to vector<2224x8xf32>
    %5 = arith.addf %2, %4 : vector<2224x8xf32>
    %cst_5 = arith.constant 0.000000e+00 : f32
    %6 = vector.broadcast %cst_5 : f32 to vector<2224x8xf32>
    %7 = arith.maximumf %5, %6 : vector<2224x8xf32>
    %8 = arith.truncf %7 : vector<2224x8xf32> to vector<2224x8xbf16>
    %c0_6 = arith.constant 0 : index
    %c0_7 = arith.constant 0 : index
    %9 = vector.load %arg4[%c0_6, %c0_7] : memref<2224x8xbf16, #tpu.memory_space<vmem>>, vector<2224x8xbf16>
    tpu.vector_store %arg4[%c0_6, %c0_7], %8 {strides = array<i32>} : memref<2224x8xbf16, #tpu.memory_space<vmem>>, vector<2224x8xbf16>,
    return
  }
  func.func @transform_0(%arg0: i32) -> (i32, i32) {
    %c0_i32 = arith.constant 0 : i32
    %c0_i32_0 = arith.constant 0 : i32
    return %arg0, %c0_i32 : i32, i32
  }
  func.func @transform_1(%arg0: i32) -> (i32, i32) {
    %c0_i32 = arith.constant 0 : i32
    %c0_i32_0 = arith.constant 0 : i32
    %c0_i32_1 = arith.constant 0 : i32
    return %c0_i32, %c0_i32_0 : i32, i32
  }
  func.func @transform_2(%arg0: i32) -> (i32, i32) {
    %c0_i32 = arith.constant 0 : i32
    %c0_i32_0 = arith.constant 0 : i32
    %c0_i32_1 = arith.constant 0 : i32
    return %c0_i32, %c0_i32_0 : i32, i32
  }
  func.func @transform_3(%arg0: i32) -> (i32, i32) {
    %c0_i32 = arith.constant 0 : i32
    %c0_i32_0 = arith.constant 0 : i32
    return %arg0, %c0_i32 : i32, i32
  }
}

module attributes {stable_mosaic.version = 11 : i64} {
  func.func @_conv_mm_kernel(%arg0: i32, %arg1: memref<544x72xbf16, #tpu.memory_space<vmem>>, %arg2: memref<72x16xbf16, #tpu.memory_space<vmem>>, %arg3: memref<1x16xf32, #tpu.memory_space<vmem>>, %arg4: memref<544x16xbf16, #tpu.memory_space<vmem>>) attributes {dimension_semantics = [#tpu.dimension_semantics<parallel>], iteration_bounds = array<i64: 2>, scalar_prefetch = 0 : i64, scratch_operands = 0 : i64, tpu.core_type = #tpu.core_type<tc>, window_params = [{transform_indices = @transform_0, window_bounds = array<i64: 544, 72>}, {pipeline_mode = #tpu.pipeline_mode<synchronous>, transform_indices = @transform_1, window_bounds = array<i64: 72, 16>}, {pipeline_mode = #tpu.pipeline_mode<synchronous>, transform_indices = @transform_2, window_bounds = array<i64: 1, 16>}, {transform_indices = @transform_3, window_bounds = array<i64: 544, 16>}]} {
    %c0 = arith.constant 0 : index
    %c0_0 = arith.constant 0 : index
    %0 = vector.load %arg1[%c0, %c0_0] : memref<544x72xbf16, #tpu.memory_space<vmem>>, vector<544x72xbf16>
    %c0_1 = arith.constant 0 : index
    %c0_2 = arith.constant 0 : index
    %1 = vector.load %arg2[%c0_1, %c0_2] : memref<72x16xbf16, #tpu.memory_space<vmem>>, vector<72x16xbf16>
    %cst = arith.constant dense<0.000000e+00> : vector<544x16xf32>
    %2 = tpu.matmul %0, %1, %cst {dimension_numbers = #tpu.dot_dimension_numbers<[1], [0], [0], [1], [0, 0, 1, 1], [], []>} : vector<544x72xbf16>, vector<72x16xbf16>, vector<544x16xf32> -> vector<544x16xf32>
    %c0_3 = arith.constant 0 : index
    %c0_4 = arith.constant 0 : index
    %3 = vector.load %arg3[%c0_3, %c0_4] : memref<1x16xf32, #tpu.memory_space<vmem>>, vector<1x16xf32>
    %4 = vector.broadcast %3 : vector<1x16xf32> to vector<544x16xf32>
    %5 = arith.addf %2, %4 : vector<544x16xf32>
    %cst_5 = arith.constant 0.000000e+00 : f32
    %6 = vector.broadcast %cst_5 : f32 to vector<544x16xf32>
    %7 = arith.maximumf %5, %6 : vector<544x16xf32>
    %8 = arith.truncf %7 : vector<544x16xf32> to vector<544x16xbf16>
    %c0_6 = arith.constant 0 : index
    %c0_7 = arith.constant 0 : index
    %9 = vector.load %arg4[%c0_6, %c0_7] : memref<544x16xbf16, #tpu.memory_space<vmem>>, vector<544x16xbf16>
    tpu.vector_store %arg4[%c0_6, %c0_7], %8 {strides = array<i32>} : memref<544x16xbf16, #tpu.memory_space<vmem>>, vector<544x16xbf16>,
    return
  }
  func.func @transform_0(%arg0: i32) -> (i32, i32) {
    %c0_i32 = arith.constant 0 : i32
    %c0_i32_0 = arith.constant 0 : i32
    return %arg0, %c0_i32 : i32, i32
  }
  func.func @transform_1(%arg0: i32) -> (i32, i32) {
    %c0_i32 = arith.constant 0 : i32
    %c0_i32_0 = arith.constant 0 : i32
    %c0_i32_1 = arith.constant 0 : i32
    return %c0_i32, %c0_i32_0 : i32, i32
  }
  func.func @transform_2(%arg0: i32) -> (i32, i32) {
    %c0_i32 = arith.constant 0 : i32
    %c0_i32_0 = arith.constant 0 : i32
    %c0_i32_1 = arith.constant 0 : i32
    return %c0_i32, %c0_i32_0 : i32, i32
  }
  func.func @transform_3(%arg0: i32) -> (i32, i32) {
    %c0_i32 = arith.constant 0 : i32
    %c0_i32_0 = arith.constant 0 : i32
    return %arg0, %c0_i32 : i32, i32
  }
}

module attributes {stable_mosaic.version = 11 : i64} {
  func.func @_conv_mm_kernel(%arg0: i32, %arg1: memref<128x144xbf16, #tpu.memory_space<vmem>>, %arg2: memref<144x32xbf16, #tpu.memory_space<vmem>>, %arg3: memref<1x32xf32, #tpu.memory_space<vmem>>, %arg4: memref<128x32xbf16, #tpu.memory_space<vmem>>) attributes {dimension_semantics = [#tpu.dimension_semantics<parallel>], iteration_bounds = array<i64: 2>, scalar_prefetch = 0 : i64, scratch_operands = 0 : i64, tpu.core_type = #tpu.core_type<tc>, window_params = [{transform_indices = @transform_0, window_bounds = array<i64: 128, 144>}, {pipeline_mode = #tpu.pipeline_mode<synchronous>, transform_indices = @transform_1, window_bounds = array<i64: 144, 32>}, {pipeline_mode = #tpu.pipeline_mode<synchronous>, transform_indices = @transform_2, window_bounds = array<i64: 1, 32>}, {transform_indices = @transform_3, window_bounds = array<i64: 128, 32>}]} {
    %c0 = arith.constant 0 : index
    %c0_0 = arith.constant 0 : index
    %0 = vector.load %arg1[%c0, %c0_0] : memref<128x144xbf16, #tpu.memory_space<vmem>>, vector<128x144xbf16>
    %c0_1 = arith.constant 0 : index
    %c0_2 = arith.constant 0 : index
    %1 = vector.load %arg2[%c0_1, %c0_2] : memref<144x32xbf16, #tpu.memory_space<vmem>>, vector<144x32xbf16>
    %cst = arith.constant dense<0.000000e+00> : vector<128x32xf32>
    %2 = tpu.matmul %0, %1, %cst {dimension_numbers = #tpu.dot_dimension_numbers<[1], [0], [0], [1], [0, 0, 1, 1], [], []>} : vector<128x144xbf16>, vector<144x32xbf16>, vector<128x32xf32> -> vector<128x32xf32>
    %c0_3 = arith.constant 0 : index
    %c0_4 = arith.constant 0 : index
    %3 = vector.load %arg3[%c0_3, %c0_4] : memref<1x32xf32, #tpu.memory_space<vmem>>, vector<1x32xf32>
    %4 = vector.broadcast %3 : vector<1x32xf32> to vector<128x32xf32>
    %5 = arith.addf %2, %4 : vector<128x32xf32>
    %cst_5 = arith.constant 0.000000e+00 : f32
    %6 = vector.broadcast %cst_5 : f32 to vector<128x32xf32>
    %7 = arith.maximumf %5, %6 : vector<128x32xf32>
    %8 = arith.truncf %7 : vector<128x32xf32> to vector<128x32xbf16>
    %c0_6 = arith.constant 0 : index
    %c0_7 = arith.constant 0 : index
    %9 = vector.load %arg4[%c0_6, %c0_7] : memref<128x32xbf16, #tpu.memory_space<vmem>>, vector<128x32xbf16>
    tpu.vector_store %arg4[%c0_6, %c0_7], %8 {strides = array<i32>} : memref<128x32xbf16, #tpu.memory_space<vmem>>, vector<128x32xbf16>,
    return
  }
  func.func @transform_0(%arg0: i32) -> (i32, i32) {
    %c0_i32 = arith.constant 0 : i32
    %c0_i32_0 = arith.constant 0 : i32
    return %arg0, %c0_i32 : i32, i32
  }
  func.func @transform_1(%arg0: i32) -> (i32, i32) {
    %c0_i32 = arith.constant 0 : i32
    %c0_i32_0 = arith.constant 0 : i32
    %c0_i32_1 = arith.constant 0 : i32
    return %c0_i32, %c0_i32_0 : i32, i32
  }
  func.func @transform_2(%arg0: i32) -> (i32, i32) {
    %c0_i32 = arith.constant 0 : i32
    %c0_i32_0 = arith.constant 0 : i32
    %c0_i32_1 = arith.constant 0 : i32
    return %c0_i32, %c0_i32_0 : i32, i32
  }
  func.func @transform_3(%arg0: i32) -> (i32, i32) {
    %c0_i32 = arith.constant 0 : i32
    %c0_i32_0 = arith.constant 0 : i32
    return %arg0, %c0_i32 : i32, i32
  }
}

module attributes {stable_mosaic.version = 11 : i64} {
  func.func @_tail_kernel(%arg0: i32, %arg1: memref<1x25x288xbf16, #tpu.memory_space<vmem>>, %arg2: memref<288x64xbf16, #tpu.memory_space<vmem>>, %arg3: memref<1x64xf32, #tpu.memory_space<vmem>>, %arg4: memref<576x128xbf16, #tpu.memory_space<vmem>>, %arg5: memref<1x128xf32, #tpu.memory_space<vmem>>, %arg6: memref<1152x256xbf16, #tpu.memory_space<vmem>>, %arg7: memref<1x256xf32, #tpu.memory_space<vmem>>, %arg8: memref<256x512xbf16, #tpu.memory_space<vmem>>, %arg9: memref<1x512xf32, #tpu.memory_space<vmem>>, %arg10: memref<512x384xbf16, #tpu.memory_space<vmem>>, %arg11: memref<1x384xf32, #tpu.memory_space<vmem>>, %arg12: memref<384x3xbf16, #tpu.memory_space<vmem>>, %arg13: memref<1x3xf32, #tpu.memory_space<vmem>>, %arg14: memref<1x1x3xf32, #tpu.memory_space<vmem>>) attributes {dimension_semantics = [#tpu.dimension_semantics<parallel>], iteration_bounds = array<i64: 2>, scalar_prefetch = 0 : i64, scratch_operands = 0 : i64, tpu.core_type = #tpu.core_type<tc>, window_params = [{transform_indices = @transform_0, window_bounds = array<i64: 1, 25, 288>}, {pipeline_mode = #tpu.pipeline_mode<synchronous>, transform_indices = @transform_1, window_bounds = array<i64: 288, 64>}, {pipeline_mode = #tpu.pipeline_mode<synchronous>, transform_indices = @transform_2, window_bounds = array<i64: 1, 64>}, {pipeline_mode = #tpu.pipeline_mode<synchronous>, transform_indices = @transform_3, window_bounds = array<i64: 576, 128>}, {pipeline_mode = #tpu.pipeline_mode<synchronous>, transform_indices = @transform_4, window_bounds = array<i64: 1, 128>}, {pipeline_mode = #tpu.pipeline_mode<synchronous>, transform_indices = @transform_5, window_bounds = array<i64: 1152, 256>}, {pipeline_mode = #tpu.pipeline_mode<synchronous>, transform_indices = @transform_6, window_bounds = array<i64: 1, 256>}, {pipeline_mode = #tpu.pipeline_mode<synchronous>, transform_indices = @transform_7, window_bounds = array<i64: 256, 512>}, {pipeline_mode = #tpu.pipeline_mode<synchronous>, transform_indices = @transform_8, window_bounds = array<i64: 1, 512>}, {pipeline_mode = #tpu.pipeline_mode<synchronous>, transform_indices = @transform_9, window_bounds = array<i64: 512, 384>}, {pipeline_mode = #tpu.pipeline_mode<synchronous>, transform_indices = @transform_10, window_bounds = array<i64: 1, 384>}, {pipeline_mode = #tpu.pipeline_mode<synchronous>, transform_indices = @transform_11, window_bounds = array<i64: 384, 3>}, {pipeline_mode = #tpu.pipeline_mode<synchronous>, transform_indices = @transform_12, window_bounds = array<i64: 1, 3>}, {transform_indices = @transform_13, window_bounds = array<i64: 1, 1, 3>}]} {
    %c0 = arith.constant 0 : index
    %c0_0 = arith.constant 0 : index
    %c0_1 = arith.constant 0 : index
    %0 = vector.load %arg1[%c0, %c0_0, %c0_1] : memref<1x25x288xbf16, #tpu.memory_space<vmem>>, vector<1x25x288xbf16>
    %1 = vector.shape_cast %0 : vector<1x25x288xbf16> to vector<25x288xbf16>
    %c0_2 = arith.constant 0 : index
    %c0_3 = arith.constant 0 : index
    %2 = vector.load %arg2[%c0_2, %c0_3] : memref<288x64xbf16, #tpu.memory_space<vmem>>, vector<288x64xbf16>
    %cst = arith.constant dense<0.000000e+00> : vector<25x64xf32>
    %3 = tpu.matmul %1, %2, %cst {dimension_numbers = #tpu.dot_dimension_numbers<[1], [0], [0], [1], [0, 0, 1, 1], [], []>} : vector<25x288xbf16>, vector<288x64xbf16>, vector<25x64xf32> -> vector<25x64xf32>
    %c0_4 = arith.constant 0 : index
    %c0_5 = arith.constant 0 : index
    %4 = vector.load %arg3[%c0_4, %c0_5] : memref<1x64xf32, #tpu.memory_space<vmem>>, vector<1x64xf32>
    %5 = vector.broadcast %4 : vector<1x64xf32> to vector<25x64xf32>
    %6 = arith.addf %3, %5 : vector<25x64xf32>
    %cst_6 = arith.constant 0.000000e+00 : f32
    %7 = vector.broadcast %cst_6 : f32 to vector<25x64xf32>
    %8 = arith.maximumf %6, %7 : vector<25x64xf32>
    %cst_7 = arith.constant 0.000000e+00 : f32
    %9 = vector.broadcast %cst_7 : f32 to vector<3x128xf32>
    %10 = vector.extract_strided_slice %8 {offsets = [0, 0], sizes = [3, 64], strides = [1, 1]} : vector<25x64xf32> to vector<3x64xf32>
    %11 = arith.truncf %10 : vector<3x64xf32> to vector<3x64xbf16>
    %c0_8 = arith.constant 0 : index
    %c0_9 = arith.constant 0 : index
    %12 = vector.load %arg4[%c0_8, %c0_9] : memref<576x128xbf16, #tpu.memory_space<vmem>>, vector<64x128xbf16>
    %cst_10 = arith.constant dense<0.000000e+00> : vector<3x128xf32>
    %13 = tpu.matmul %11, %12, %cst_10 {dimension_numbers = #tpu.dot_dimension_numbers<[1], [0], [0], [1], [0, 0, 1, 1], [], []>} : vector<3x64xbf16>, vector<64x128xbf16>, vector<3x128xf32> -> vector<3x128xf32>
    %14 = arith.addf %9, %13 : vector<3x128xf32>
    %15 = vector.extract_strided_slice %8 {offsets = [1, 0], sizes = [3, 64], strides = [1, 1]} : vector<25x64xf32> to vector<3x64xf32>
    %16 = arith.truncf %15 : vector<3x64xf32> to vector<3x64xbf16>
    %c64 = arith.constant 64 : index
    %c0_11 = arith.constant 0 : index
    %17 = vector.load %arg4[%c64, %c0_11] : memref<576x128xbf16, #tpu.memory_space<vmem>>, vector<64x128xbf16>
    %cst_12 = arith.constant dense<0.000000e+00> : vector<3x128xf32>
    %18 = tpu.matmul %16, %17, %cst_12 {dimension_numbers = #tpu.dot_dimension_numbers<[1], [0], [0], [1], [0, 0, 1, 1], [], []>} : vector<3x64xbf16>, vector<64x128xbf16>, vector<3x128xf32> -> vector<3x128xf32>
    %19 = arith.addf %14, %18 : vector<3x128xf32>
    %20 = vector.extract_strided_slice %8 {offsets = [2, 0], sizes = [3, 64], strides = [1, 1]} : vector<25x64xf32> to vector<3x64xf32>
    %21 = arith.truncf %20 : vector<3x64xf32> to vector<3x64xbf16>
    %c128 = arith.constant 128 : index
    %c0_13 = arith.constant 0 : index
    %22 = vector.load %arg4[%c128, %c0_13] : memref<576x128xbf16, #tpu.memory_space<vmem>>, vector<64x128xbf16>
    %cst_14 = arith.constant dense<0.000000e+00> : vector<3x128xf32>
    %23 = tpu.matmul %21, %22, %cst_14 {dimension_numbers = #tpu.dot_dimension_numbers<[1], [0], [0], [1], [0, 0, 1, 1], [], []>} : vector<3x64xbf16>, vector<64x128xbf16>, vector<3x128xf32> -> vector<3x128xf32>
    %24 = arith.addf %19, %23 : vector<3x128xf32>
    %25 = vector.extract_strided_slice %8 {offsets = [5, 0], sizes = [3, 64], strides = [1, 1]} : vector<25x64xf32> to vector<3x64xf32>
    %26 = arith.truncf %25 : vector<3x64xf32> to vector<3x64xbf16>
    %c192 = arith.constant 192 : index
    %c0_15 = arith.constant 0 : index
    %27 = vector.load %arg4[%c192, %c0_15] : memref<576x128xbf16, #tpu.memory_space<vmem>>, vector<64x128xbf16>
    %cst_16 = arith.constant dense<0.000000e+00> : vector<3x128xf32>
    %28 = tpu.matmul %26, %27, %cst_16 {dimension_numbers = #tpu.dot_dimension_numbers<[1], [0], [0], [1], [0, 0, 1, 1], [], []>} : vector<3x64xbf16>, vector<64x128xbf16>, vector<3x128xf32> -> vector<3x128xf32>
    %29 = arith.addf %24, %28 : vector<3x128xf32>
    %30 = vector.extract_strided_slice %8 {offsets = [6, 0], sizes = [3, 64], strides = [1, 1]} : vector<25x64xf32> to vector<3x64xf32>
    %31 = arith.truncf %30 : vector<3x64xf32> to vector<3x64xbf16>
    %c256 = arith.constant 256 : index
    %c0_17 = arith.constant 0 : index
    %32 = vector.load %arg4[%c256, %c0_17] : memref<576x128xbf16, #tpu.memory_space<vmem>>, vector<64x128xbf16>
    %cst_18 = arith.constant dense<0.000000e+00> : vector<3x128xf32>
    %33 = tpu.matmul %31, %32, %cst_18 {dimension_numbers = #tpu.dot_dimension_numbers<[1], [0], [0], [1], [0, 0, 1, 1], [], []>} : vector<3x64xbf16>, vector<64x128xbf16>, vector<3x128xf32> -> vector<3x128xf32>
    %34 = arith.addf %29, %33 : vector<3x128xf32>
    %35 = vector.extract_strided_slice %8 {offsets = [7, 0], sizes = [3, 64], strides = [1, 1]} : vector<25x64xf32> to vector<3x64xf32>
    %36 = arith.truncf %35 : vector<3x64xf32> to vector<3x64xbf16>
    %c320 = arith.constant 320 : index
    %c0_19 = arith.constant 0 : index
    %37 = vector.load %arg4[%c320, %c0_19] : memref<576x128xbf16, #tpu.memory_space<vmem>>, vector<64x128xbf16>
    %cst_20 = arith.constant dense<0.000000e+00> : vector<3x128xf32>
    %38 = tpu.matmul %36, %37, %cst_20 {dimension_numbers = #tpu.dot_dimension_numbers<[1], [0], [0], [1], [0, 0, 1, 1], [], []>} : vector<3x64xbf16>, vector<64x128xbf16>, vector<3x128xf32> -> vector<3x128xf32>
    %39 = arith.addf %34, %38 : vector<3x128xf32>
    %40 = vector.extract_strided_slice %8 {offsets = [10, 0], sizes = [3, 64], strides = [1, 1]} : vector<25x64xf32> to vector<3x64xf32>
    %41 = arith.truncf %40 : vector<3x64xf32> to vector<3x64xbf16>
    %c384 = arith.constant 384 : index
    %c0_21 = arith.constant 0 : index
    %42 = vector.load %arg4[%c384, %c0_21] : memref<576x128xbf16, #tpu.memory_space<vmem>>, vector<64x128xbf16>
    %cst_22 = arith.constant dense<0.000000e+00> : vector<3x128xf32>
    %43 = tpu.matmul %41, %42, %cst_22 {dimension_numbers = #tpu.dot_dimension_numbers<[1], [0], [0], [1], [0, 0, 1, 1], [], []>} : vector<3x64xbf16>, vector<64x128xbf16>, vector<3x128xf32> -> vector<3x128xf32>
    %44 = arith.addf %39, %43 : vector<3x128xf32>
    %45 = vector.extract_strided_slice %8 {offsets = [11, 0], sizes = [3, 64], strides = [1, 1]} : vector<25x64xf32> to vector<3x64xf32>
    %46 = arith.truncf %45 : vector<3x64xf32> to vector<3x64xbf16>
    %c448 = arith.constant 448 : index
    %c0_23 = arith.constant 0 : index
    %47 = vector.load %arg4[%c448, %c0_23] : memref<576x128xbf16, #tpu.memory_space<vmem>>, vector<64x128xbf16>
    %cst_24 = arith.constant dense<0.000000e+00> : vector<3x128xf32>
    %48 = tpu.matmul %46, %47, %cst_24 {dimension_numbers = #tpu.dot_dimension_numbers<[1], [0], [0], [1], [0, 0, 1, 1], [], []>} : vector<3x64xbf16>, vector<64x128xbf16>, vector<3x128xf32> -> vector<3x128xf32>
    %49 = arith.addf %44, %48 : vector<3x128xf32>
    %50 = vector.extract_strided_slice %8 {offsets = [12, 0], sizes = [3, 64], strides = [1, 1]} : vector<25x64xf32> to vector<3x64xf32>
    %51 = arith.truncf %50 : vector<3x64xf32> to vector<3x64xbf16>
    %c512 = arith.constant 512 : index
    %c0_25 = arith.constant 0 : index
    %52 = vector.load %arg4[%c512, %c0_25] : memref<576x128xbf16, #tpu.memory_space<vmem>>, vector<64x128xbf16>
    %cst_26 = arith.constant dense<0.000000e+00> : vector<3x128xf32>
    %53 = tpu.matmul %51, %52, %cst_26 {dimension_numbers = #tpu.dot_dimension_numbers<[1], [0], [0], [1], [0, 0, 1, 1], [], []>} : vector<3x64xbf16>, vector<64x128xbf16>, vector<3x128xf32> -> vector<3x128xf32>
    %54 = arith.addf %49, %53 : vector<3x128xf32>
    %c0_27 = arith.constant 0 : index
    %c0_28 = arith.constant 0 : index
    %55 = vector.load %arg5[%c0_27, %c0_28] : memref<1x128xf32, #tpu.memory_space<vmem>>, vector<1x128xf32>
    %56 = vector.broadcast %55 : vector<1x128xf32> to vector<3x128xf32>
    %57 = arith.addf %54, %56 : vector<3x128xf32>
    %cst_29 = arith.constant 0.000000e+00 : f32
    %58 = vector.broadcast %cst_29 : f32 to vector<3x128xf32>
    %59 = arith.maximumf %57, %58 : vector<3x128xf32>
    %cst_30 = arith.constant 0.000000e+00 : f32
    %60 = vector.broadcast %cst_30 : f32 to vector<3x128xf32>
    %61 = vector.extract_strided_slice %8 {offsets = [5, 0], sizes = [3, 64], strides = [1, 1]} : vector<25x64xf32> to vector<3x64xf32>
    %62 = arith.truncf %61 : vector<3x64xf32> to vector<3x64xbf16>
    %c0_31 = arith.constant 0 : index
    %c0_32 = arith.constant 0 : index
    %63 = vector.load %arg4[%c0_31, %c0_32] : memref<576x128xbf16, #tpu.memory_space<vmem>>, vector<64x128xbf16>
    %cst_33 = arith.constant dense<0.000000e+00> : vector<3x128xf32>
    %64 = tpu.matmul %62, %63, %cst_33 {dimension_numbers = #tpu.dot_dimension_numbers<[1], [0], [0], [1], [0, 0, 1, 1], [], []>} : vector<3x64xbf16>, vector<64x128xbf16>, vector<3x128xf32> -> vector<3x128xf32>
    %65 = arith.addf %60, %64 : vector<3x128xf32>
    %66 = vector.extract_strided_slice %8 {offsets = [6, 0], sizes = [3, 64], strides = [1, 1]} : vector<25x64xf32> to vector<3x64xf32>
    %67 = arith.truncf %66 : vector<3x64xf32> to vector<3x64xbf16>
    %c64_34 = arith.constant 64 : index
    %c0_35 = arith.constant 0 : index
    %68 = vector.load %arg4[%c64_34, %c0_35] : memref<576x128xbf16, #tpu.memory_space<vmem>>, vector<64x128xbf16>
    %cst_36 = arith.constant dense<0.000000e+00> : vector<3x128xf32>
    %69 = tpu.matmul %67, %68, %cst_36 {dimension_numbers = #tpu.dot_dimension_numbers<[1], [0], [0], [1], [0, 0, 1, 1], [], []>} : vector<3x64xbf16>, vector<64x128xbf16>, vector<3x128xf32> -> vector<3x128xf32>
    %70 = arith.addf %65, %69 : vector<3x128xf32>
    %71 = vector.extract_strided_slice %8 {offsets = [7, 0], sizes = [3, 64], strides = [1, 1]} : vector<25x64xf32> to vector<3x64xf32>
    %72 = arith.truncf %71 : vector<3x64xf32> to vector<3x64xbf16>
    %c128_37 = arith.constant 128 : index
    %c0_38 = arith.constant 0 : index
    %73 = vector.load %arg4[%c128_37, %c0_38] : memref<576x128xbf16, #tpu.memory_space<vmem>>, vector<64x128xbf16>
    %cst_39 = arith.constant dense<0.000000e+00> : vector<3x128xf32>
    %74 = tpu.matmul %72, %73, %cst_39 {dimension_numbers = #tpu.dot_dimension_numbers<[1], [0], [0], [1], [0, 0, 1, 1], [], []>} : vector<3x64xbf16>, vector<64x128xbf16>, vector<3x128xf32> -> vector<3x128xf32>
    %75 = arith.addf %70, %74 : vector<3x128xf32>
    %76 = vector.extract_strided_slice %8 {offsets = [10, 0], sizes = [3, 64], strides = [1, 1]} : vector<25x64xf32> to vector<3x64xf32>
    %77 = arith.truncf %76 : vector<3x64xf32> to vector<3x64xbf16>
    %c192_40 = arith.constant 192 : index
    %c0_41 = arith.constant 0 : index
    %78 = vector.load %arg4[%c192_40, %c0_41] : memref<576x128xbf16, #tpu.memory_space<vmem>>, vector<64x128xbf16>
    %cst_42 = arith.constant dense<0.000000e+00> : vector<3x128xf32>
    %79 = tpu.matmul %77, %78, %cst_42 {dimension_numbers = #tpu.dot_dimension_numbers<[1], [0], [0], [1], [0, 0, 1, 1], [], []>} : vector<3x64xbf16>, vector<64x128xbf16>, vector<3x128xf32> -> vector<3x128xf32>
    %80 = arith.addf %75, %79 : vector<3x128xf32>
    %81 = vector.extract_strided_slice %8 {offsets = [11, 0], sizes = [3, 64], strides = [1, 1]} : vector<25x64xf32> to vector<3x64xf32>
    %82 = arith.truncf %81 : vector<3x64xf32> to vector<3x64xbf16>
    %c256_43 = arith.constant 256 : index
    %c0_44 = arith.constant 0 : index
    %83 = vector.load %arg4[%c256_43, %c0_44] : memref<576x128xbf16, #tpu.memory_space<vmem>>, vector<64x128xbf16>
    %cst_45 = arith.constant dense<0.000000e+00> : vector<3x128xf32>
    %84 = tpu.matmul %82, %83, %cst_45 {dimension_numbers = #tpu.dot_dimension_numbers<[1], [0], [0], [1], [0, 0, 1, 1], [], []>} : vector<3x64xbf16>, vector<64x128xbf16>, vector<3x128xf32> -> vector<3x128xf32>
    %85 = arith.addf %80, %84 : vector<3x128xf32>
    %86 = vector.extract_strided_slice %8 {offsets = [12, 0], sizes = [3, 64], strides = [1, 1]} : vector<25x64xf32> to vector<3x64xf32>
    %87 = arith.truncf %86 : vector<3x64xf32> to vector<3x64xbf16>
    %c320_46 = arith.constant 320 : index
    %c0_47 = arith.constant 0 : index
    %88 = vector.load %arg4[%c320_46, %c0_47] : memref<576x128xbf16, #tpu.memory_space<vmem>>, vector<64x128xbf16>
    %cst_48 = arith.constant dense<0.000000e+00> : vector<3x128xf32>
    %89 = tpu.matmul %87, %88, %cst_48 {dimension_numbers = #tpu.dot_dimension_numbers<[1], [0], [0], [1], [0, 0, 1, 1], [], []>} : vector<3x64xbf16>, vector<64x128xbf16>, vector<3x128xf32> -> vector<3x128xf32>
    %90 = arith.addf %85, %89 : vector<3x128xf32>
    %91 = vector.extract_strided_slice %8 {offsets = [15, 0], sizes = [3, 64], strides = [1, 1]} : vector<25x64xf32> to vector<3x64xf32>
    %92 = arith.truncf %91 : vector<3x64xf32> to vector<3x64xbf16>
    %c384_49 = arith.constant 384 : index
    %c0_50 = arith.constant 0 : index
    %93 = vector.load %arg4[%c384_49, %c0_50] : memref<576x128xbf16, #tpu.memory_space<vmem>>, vector<64x128xbf16>
    %cst_51 = arith.constant dense<0.000000e+00> : vector<3x128xf32>
    %94 = tpu.matmul %92, %93, %cst_51 {dimension_numbers = #tpu.dot_dimension_numbers<[1], [0], [0], [1], [0, 0, 1, 1], [], []>} : vector<3x64xbf16>, vector<64x128xbf16>, vector<3x128xf32> -> vector<3x128xf32>
    %95 = arith.addf %90, %94 : vector<3x128xf32>
    %96 = vector.extract_strided_slice %8 {offsets = [16, 0], sizes = [3, 64], strides = [1, 1]} : vector<25x64xf32> to vector<3x64xf32>
    %97 = arith.truncf %96 : vector<3x64xf32> to vector<3x64xbf16>
    %c448_52 = arith.constant 448 : index
    %c0_53 = arith.constant 0 : index
    %98 = vector.load %arg4[%c448_52, %c0_53] : memref<576x128xbf16, #tpu.memory_space<vmem>>, vector<64x128xbf16>
    %cst_54 = arith.constant dense<0.000000e+00> : vector<3x128xf32>
    %99 = tpu.matmul %97, %98, %cst_54 {dimension_numbers = #tpu.dot_dimension_numbers<[1], [0], [0], [1], [0, 0, 1, 1], [], []>} : vector<3x64xbf16>, vector<64x128xbf16>, vector<3x128xf32> -> vector<3x128xf32>
    %100 = arith.addf %95, %99 : vector<3x128xf32>
    %101 = vector.extract_strided_slice %8 {offsets = [17, 0], sizes = [3, 64], strides = [1, 1]} : vector<25x64xf32> to vector<3x64xf32>
    %102 = arith.truncf %101 : vector<3x64xf32> to vector<3x64xbf16>
    %c512_55 = arith.constant 512 : index
    %c0_56 = arith.constant 0 : index
    %103 = vector.load %arg4[%c512_55, %c0_56] : memref<576x128xbf16, #tpu.memory_space<vmem>>, vector<64x128xbf16>
    %cst_57 = arith.constant dense<0.000000e+00> : vector<3x128xf32>
    %104 = tpu.matmul %102, %103, %cst_57 {dimension_numbers = #tpu.dot_dimension_numbers<[1], [0], [0], [1], [0, 0, 1, 1], [], []>} : vector<3x64xbf16>, vector<64x128xbf16>, vector<3x128xf32> -> vector<3x128xf32>
    %105 = arith.addf %100, %104 : vector<3x128xf32>
    %c0_58 = arith.constant 0 : index
    %c0_59 = arith.constant 0 : index
    %106 = vector.load %arg5[%c0_58, %c0_59] : memref<1x128xf32, #tpu.memory_space<vmem>>, vector<1x128xf32>
    %107 = vector.broadcast %106 : vector<1x128xf32> to vector<3x128xf32>
    %108 = arith.addf %105, %107 : vector<3x128xf32>
    %cst_60 = arith.constant 0.000000e+00 : f32
    %109 = vector.broadcast %cst_60 : f32 to vector<3x128xf32>
    %110 = arith.maximumf %108, %109 : vector<3x128xf32>
    %cst_61 = arith.constant 0.000000e+00 : f32
    %111 = vector.broadcast %cst_61 : f32 to vector<3x128xf32>
    %112 = vector.extract_strided_slice %8 {offsets = [10, 0], sizes = [3, 64], strides = [1, 1]} : vector<25x64xf32> to vector<3x64xf32>
    %113 = arith.truncf %112 : vector<3x64xf32> to vector<3x64xbf16>
    %c0_62 = arith.constant 0 : index
    %c0_63 = arith.constant 0 : index
    %114 = vector.load %arg4[%c0_62, %c0_63] : memref<576x128xbf16, #tpu.memory_space<vmem>>, vector<64x128xbf16>
    %cst_64 = arith.constant dense<0.000000e+00> : vector<3x128xf32>
    %115 = tpu.matmul %113, %114, %cst_64 {dimension_numbers = #tpu.dot_dimension_numbers<[1], [0], [0], [1], [0, 0, 1, 1], [], []>} : vector<3x64xbf16>, vector<64x128xbf16>, vector<3x128xf32> -> vector<3x128xf32>
    %116 = arith.addf %111, %115 : vector<3x128xf32>
    %117 = vector.extract_strided_slice %8 {offsets = [11, 0], sizes = [3, 64], strides = [1, 1]} : vector<25x64xf32> to vector<3x64xf32>
    %118 = arith.truncf %117 : vector<3x64xf32> to vector<3x64xbf16>
    %c64_65 = arith.constant 64 : index
    %c0_66 = arith.constant 0 : index
    %119 = vector.load %arg4[%c64_65, %c0_66] : memref<576x128xbf16, #tpu.memory_space<vmem>>, vector<64x128xbf16>
    %cst_67 = arith.constant dense<0.000000e+00> : vector<3x128xf32>
    %120 = tpu.matmul %118, %119, %cst_67 {dimension_numbers = #tpu.dot_dimension_numbers<[1], [0], [0], [1], [0, 0, 1, 1], [], []>} : vector<3x64xbf16>, vector<64x128xbf16>, vector<3x128xf32> -> vector<3x128xf32>
    %121 = arith.addf %116, %120 : vector<3x128xf32>
    %122 = vector.extract_strided_slice %8 {offsets = [12, 0], sizes = [3, 64], strides = [1, 1]} : vector<25x64xf32> to vector<3x64xf32>
    %123 = arith.truncf %122 : vector<3x64xf32> to vector<3x64xbf16>
    %c128_68 = arith.constant 128 : index
    %c0_69 = arith.constant 0 : index
    %124 = vector.load %arg4[%c128_68, %c0_69] : memref<576x128xbf16, #tpu.memory_space<vmem>>, vector<64x128xbf16>
    %cst_70 = arith.constant dense<0.000000e+00> : vector<3x128xf32>
    %125 = tpu.matmul %123, %124, %cst_70 {dimension_numbers = #tpu.dot_dimension_numbers<[1], [0], [0], [1], [0, 0, 1, 1], [], []>} : vector<3x64xbf16>, vector<64x128xbf16>, vector<3x128xf32> -> vector<3x128xf32>
    %126 = arith.addf %121, %125 : vector<3x128xf32>
    %127 = vector.extract_strided_slice %8 {offsets = [15, 0], sizes = [3, 64], strides = [1, 1]} : vector<25x64xf32> to vector<3x64xf32>
    %128 = arith.truncf %127 : vector<3x64xf32> to vector<3x64xbf16>
    %c192_71 = arith.constant 192 : index
    %c0_72 = arith.constant 0 : index
    %129 = vector.load %arg4[%c192_71, %c0_72] : memref<576x128xbf16, #tpu.memory_space<vmem>>, vector<64x128xbf16>
    %cst_73 = arith.constant dense<0.000000e+00> : vector<3x128xf32>
    %130 = tpu.matmul %128, %129, %cst_73 {dimension_numbers = #tpu.dot_dimension_numbers<[1], [0], [0], [1], [0, 0, 1, 1], [], []>} : vector<3x64xbf16>, vector<64x128xbf16>, vector<3x128xf32> -> vector<3x128xf32>
    %131 = arith.addf %126, %130 : vector<3x128xf32>
    %132 = vector.extract_strided_slice %8 {offsets = [16, 0], sizes = [3, 64], strides = [1, 1]} : vector<25x64xf32> to vector<3x64xf32>
    %133 = arith.truncf %132 : vector<3x64xf32> to vector<3x64xbf16>
    %c256_74 = arith.constant 256 : index
    %c0_75 = arith.constant 0 : index
    %134 = vector.load %arg4[%c256_74, %c0_75] : memref<576x128xbf16, #tpu.memory_space<vmem>>, vector<64x128xbf16>
    %cst_76 = arith.constant dense<0.000000e+00> : vector<3x128xf32>
    %135 = tpu.matmul %133, %134, %cst_76 {dimension_numbers = #tpu.dot_dimension_numbers<[1], [0], [0], [1], [0, 0, 1, 1], [], []>} : vector<3x64xbf16>, vector<64x128xbf16>, vector<3x128xf32> -> vector<3x128xf32>
    %136 = arith.addf %131, %135 : vector<3x128xf32>
    %137 = vector.extract_strided_slice %8 {offsets = [17, 0], sizes = [3, 64], strides = [1, 1]} : vector<25x64xf32> to vector<3x64xf32>
    %138 = arith.truncf %137 : vector<3x64xf32> to vector<3x64xbf16>
    %c320_77 = arith.constant 320 : index
    %c0_78 = arith.constant 0 : index
    %139 = vector.load %arg4[%c320_77, %c0_78] : memref<576x128xbf16, #tpu.memory_space<vmem>>, vector<64x128xbf16>
    %cst_79 = arith.constant dense<0.000000e+00> : vector<3x128xf32>
    %140 = tpu.matmul %138, %139, %cst_79 {dimension_numbers = #tpu.dot_dimension_numbers<[1], [0], [0], [1], [0, 0, 1, 1], [], []>} : vector<3x64xbf16>, vector<64x128xbf16>, vector<3x128xf32> -> vector<3x128xf32>
    %141 = arith.addf %136, %140 : vector<3x128xf32>
    %142 = vector.extract_strided_slice %8 {offsets = [20, 0], sizes = [3, 64], strides = [1, 1]} : vector<25x64xf32> to vector<3x64xf32>
    %143 = arith.truncf %142 : vector<3x64xf32> to vector<3x64xbf16>
    %c384_80 = arith.constant 384 : index
    %c0_81 = arith.constant 0 : index
    %144 = vector.load %arg4[%c384_80, %c0_81] : memref<576x128xbf16, #tpu.memory_space<vmem>>, vector<64x128xbf16>
    %cst_82 = arith.constant dense<0.000000e+00> : vector<3x128xf32>
    %145 = tpu.matmul %143, %144, %cst_82 {dimension_numbers = #tpu.dot_dimension_numbers<[1], [0], [0], [1], [0, 0, 1, 1], [], []>} : vector<3x64xbf16>, vector<64x128xbf16>, vector<3x128xf32> -> vector<3x128xf32>
    %146 = arith.addf %141, %145 : vector<3x128xf32>
    %147 = vector.extract_strided_slice %8 {offsets = [21, 0], sizes = [3, 64], strides = [1, 1]} : vector<25x64xf32> to vector<3x64xf32>
    %148 = arith.truncf %147 : vector<3x64xf32> to vector<3x64xbf16>
    %c448_83 = arith.constant 448 : index
    %c0_84 = arith.constant 0 : index
    %149 = vector.load %arg4[%c448_83, %c0_84] : memref<576x128xbf16, #tpu.memory_space<vmem>>, vector<64x128xbf16>
    %cst_85 = arith.constant dense<0.000000e+00> : vector<3x128xf32>
    %150 = tpu.matmul %148, %149, %cst_85 {dimension_numbers = #tpu.dot_dimension_numbers<[1], [0], [0], [1], [0, 0, 1, 1], [], []>} : vector<3x64xbf16>, vector<64x128xbf16>, vector<3x128xf32> -> vector<3x128xf32>
    %151 = arith.addf %146, %150 : vector<3x128xf32>
    %152 = vector.extract_strided_slice %8 {offsets = [22, 0], sizes = [3, 64], strides = [1, 1]} : vector<25x64xf32> to vector<3x64xf32>
    %153 = arith.truncf %152 : vector<3x64xf32> to vector<3x64xbf16>
    %c512_86 = arith.constant 512 : index
    %c0_87 = arith.constant 0 : index
    %154 = vector.load %arg4[%c512_86, %c0_87] : memref<576x128xbf16, #tpu.memory_space<vmem>>, vector<64x128xbf16>
    %cst_88 = arith.constant dense<0.000000e+00> : vector<3x128xf32>
    %155 = tpu.matmul %153, %154, %cst_88 {dimension_numbers = #tpu.dot_dimension_numbers<[1], [0], [0], [1], [0, 0, 1, 1], [], []>} : vector<3x64xbf16>, vector<64x128xbf16>, vector<3x128xf32> -> vector<3x128xf32>
    %156 = arith.addf %151, %155 : vector<3x128xf32>
    %c0_89 = arith.constant 0 : index
    %c0_90 = arith.constant 0 : index
    %157 = vector.load %arg5[%c0_89, %c0_90] : memref<1x128xf32, #tpu.memory_space<vmem>>, vector<1x128xf32>
    %158 = vector.broadcast %157 : vector<1x128xf32> to vector<3x128xf32>
    %159 = arith.addf %156, %158 : vector<3x128xf32>
    %cst_91 = arith.constant 0.000000e+00 : f32
    %160 = vector.broadcast %cst_91 : f32 to vector<3x128xf32>
    %161 = arith.maximumf %159, %160 : vector<3x128xf32>
    %cst_92 = arith.constant 0.000000e+00 : f32
    %162 = vector.broadcast %cst_92 : f32 to vector<1x256xf32>
    %163 = vector.extract_strided_slice %59 {offsets = [0, 0], sizes = [1, 128], strides = [1, 1]} : vector<3x128xf32> to vector<1x128xf32>
    %164 = arith.truncf %163 : vector<1x128xf32> to vector<1x128xbf16>
    %c0_93 = arith.constant 0 : index
    %c0_94 = arith.constant 0 : index
    %165 = vector.load %arg6[%c0_93, %c0_94] : memref<1152x256xbf16, #tpu.memory_space<vmem>>, vector<128x256xbf16>
    %cst_95 = arith.constant dense<0.000000e+00> : vector<1x256xf32>
    %166 = tpu.matmul %164, %165, %cst_95 {dimension_numbers = #tpu.dot_dimension_numbers<[1], [0], [0], [1], [0, 0, 1, 1], [], []>} : vector<1x128xbf16>, vector<128x256xbf16>, vector<1x256xf32> -> vector<1x256xf32>
    %167 = arith.addf %162, %166 : vector<1x256xf32>
    %168 = vector.extract_strided_slice %59 {offsets = [1, 0], sizes = [1, 128], strides = [1, 1]} : vector<3x128xf32> to vector<1x128xf32>
    %169 = arith.truncf %168 : vector<1x128xf32> to vector<1x128xbf16>
    %c128_96 = arith.constant 128 : index
    %c0_97 = arith.constant 0 : index
    %170 = vector.load %arg6[%c128_96, %c0_97] : memref<1152x256xbf16, #tpu.memory_space<vmem>>, vector<128x256xbf16>
    %cst_98 = arith.constant dense<0.000000e+00> : vector<1x256xf32>
    %171 = tpu.matmul %169, %170, %cst_98 {dimension_numbers = #tpu.dot_dimension_numbers<[1], [0], [0], [1], [0, 0, 1, 1], [], []>} : vector<1x128xbf16>, vector<128x256xbf16>, vector<1x256xf32> -> vector<1x256xf32>
    %172 = arith.addf %167, %171 : vector<1x256xf32>
    %173 = vector.extract_strided_slice %59 {offsets = [2, 0], sizes = [1, 128], strides = [1, 1]} : vector<3x128xf32> to vector<1x128xf32>
    %174 = arith.truncf %173 : vector<1x128xf32> to vector<1x128xbf16>
    %c256_99 = arith.constant 256 : index
    %c0_100 = arith.constant 0 : index
    %175 = vector.load %arg6[%c256_99, %c0_100] : memref<1152x256xbf16, #tpu.memory_space<vmem>>, vector<128x256xbf16>
    %cst_101 = arith.constant dense<0.000000e+00> : vector<1x256xf32>
    %176 = tpu.matmul %174, %175, %cst_101 {dimension_numbers = #tpu.dot_dimension_numbers<[1], [0], [0], [1], [0, 0, 1, 1], [], []>} : vector<1x128xbf16>, vector<128x256xbf16>, vector<1x256xf32> -> vector<1x256xf32>
    %177 = arith.addf %172, %176 : vector<1x256xf32>
    %178 = vector.extract_strided_slice %110 {offsets = [0, 0], sizes = [1, 128], strides = [1, 1]} : vector<3x128xf32> to vector<1x128xf32>
    %179 = arith.truncf %178 : vector<1x128xf32> to vector<1x128xbf16>
    %c384_102 = arith.constant 384 : index
    %c0_103 = arith.constant 0 : index
    %180 = vector.load %arg6[%c384_102, %c0_103] : memref<1152x256xbf16, #tpu.memory_space<vmem>>, vector<128x256xbf16>
    %cst_104 = arith.constant dense<0.000000e+00> : vector<1x256xf32>
    %181 = tpu.matmul %179, %180, %cst_104 {dimension_numbers = #tpu.dot_dimension_numbers<[1], [0], [0], [1], [0, 0, 1, 1], [], []>} : vector<1x128xbf16>, vector<128x256xbf16>, vector<1x256xf32> -> vector<1x256xf32>
    %182 = arith.addf %177, %181 : vector<1x256xf32>
    %183 = vector.extract_strided_slice %110 {offsets = [1, 0], sizes = [1, 128], strides = [1, 1]} : vector<3x128xf32> to vector<1x128xf32>
    %184 = arith.truncf %183 : vector<1x128xf32> to vector<1x128xbf16>
    %c512_105 = arith.constant 512 : index
    %c0_106 = arith.constant 0 : index
    %185 = vector.load %arg6[%c512_105, %c0_106] : memref<1152x256xbf16, #tpu.memory_space<vmem>>, vector<128x256xbf16>
    %cst_107 = arith.constant dense<0.000000e+00> : vector<1x256xf32>
    %186 = tpu.matmul %184, %185, %cst_107 {dimension_numbers = #tpu.dot_dimension_numbers<[1], [0], [0], [1], [0, 0, 1, 1], [], []>} : vector<1x128xbf16>, vector<128x256xbf16>, vector<1x256xf32> -> vector<1x256xf32>
    %187 = arith.addf %182, %186 : vector<1x256xf32>
    %188 = vector.extract_strided_slice %110 {offsets = [2, 0], sizes = [1, 128], strides = [1, 1]} : vector<3x128xf32> to vector<1x128xf32>
    %189 = arith.truncf %188 : vector<1x128xf32> to vector<1x128xbf16>
    %c640 = arith.constant 640 : index
    %c0_108 = arith.constant 0 : index
    %190 = vector.load %arg6[%c640, %c0_108] : memref<1152x256xbf16, #tpu.memory_space<vmem>>, vector<128x256xbf16>
    %cst_109 = arith.constant dense<0.000000e+00> : vector<1x256xf32>
    %191 = tpu.matmul %189, %190, %cst_109 {dimension_numbers = #tpu.dot_dimension_numbers<[1], [0], [0], [1], [0, 0, 1, 1], [], []>} : vector<1x128xbf16>, vector<128x256xbf16>, vector<1x256xf32> -> vector<1x256xf32>
    %192 = arith.addf %187, %191 : vector<1x256xf32>
    %193 = vector.extract_strided_slice %161 {offsets = [0, 0], sizes = [1, 128], strides = [1, 1]} : vector<3x128xf32> to vector<1x128xf32>
    %194 = arith.truncf %193 : vector<1x128xf32> to vector<1x128xbf16>
    %c768 = arith.constant 768 : index
    %c0_110 = arith.constant 0 : index
    %195 = vector.load %arg6[%c768, %c0_110] : memref<1152x256xbf16, #tpu.memory_space<vmem>>, vector<128x256xbf16>
    %cst_111 = arith.constant dense<0.000000e+00> : vector<1x256xf32>
    %196 = tpu.matmul %194, %195, %cst_111 {dimension_numbers = #tpu.dot_dimension_numbers<[1], [0], [0], [1], [0, 0, 1, 1], [], []>} : vector<1x128xbf16>, vector<128x256xbf16>, vector<1x256xf32> -> vector<1x256xf32>
    %197 = arith.addf %192, %196 : vector<1x256xf32>
    %198 = vector.extract_strided_slice %161 {offsets = [1, 0], sizes = [1, 128], strides = [1, 1]} : vector<3x128xf32> to vector<1x128xf32>
    %199 = arith.truncf %198 : vector<1x128xf32> to vector<1x128xbf16>
    %c896 = arith.constant 896 : index
    %c0_112 = arith.constant 0 : index
    %200 = vector.load %arg6[%c896, %c0_112] : memref<1152x256xbf16, #tpu.memory_space<vmem>>, vector<128x256xbf16>
    %cst_113 = arith.constant dense<0.000000e+00> : vector<1x256xf32>
    %201 = tpu.matmul %199, %200, %cst_113 {dimension_numbers = #tpu.dot_dimension_numbers<[1], [0], [0], [1], [0, 0, 1, 1], [], []>} : vector<1x128xbf16>, vector<128x256xbf16>, vector<1x256xf32> -> vector<1x256xf32>
    %202 = arith.addf %197, %201 : vector<1x256xf32>
    %203 = vector.extract_strided_slice %161 {offsets = [2, 0], sizes = [1, 128], strides = [1, 1]} : vector<3x128xf32> to vector<1x128xf32>
    %204 = arith.truncf %203 : vector<1x128xf32> to vector<1x128xbf16>
    %c1024 = arith.constant 1024 : index
    %c0_114 = arith.constant 0 : index
    %205 = vector.load %arg6[%c1024, %c0_114] : memref<1152x256xbf16, #tpu.memory_space<vmem>>, vector<128x256xbf16>
    %cst_115 = arith.constant dense<0.000000e+00> : vector<1x256xf32>
    %206 = tpu.matmul %204, %205, %cst_115 {dimension_numbers = #tpu.dot_dimension_numbers<[1], [0], [0], [1], [0, 0, 1, 1], [], []>} : vector<1x128xbf16>, vector<128x256xbf16>, vector<1x256xf32> -> vector<1x256xf32>
    %207 = arith.addf %202, %206 : vector<1x256xf32>
    %c0_116 = arith.constant 0 : index
    %c0_117 = arith.constant 0 : index
    %208 = vector.load %arg7[%c0_116, %c0_117] : memref<1x256xf32, #tpu.memory_space<vmem>>, vector<1x256xf32>
    %209 = arith.addf %207, %208 : vector<1x256xf32>
    %cst_118 = arith.constant 0.000000e+00 : f32
    %210 = vector.broadcast %cst_118 : f32 to vector<1x256xf32>
    %211 = arith.maximumf %209, %210 : vector<1x256xf32>
    %212 = arith.truncf %211 : vector<1x256xf32> to vector<1x256xbf16>
    %c0_119 = arith.constant 0 : index
    %c0_120 = arith.constant 0 : index
    %213 = vector.load %arg8[%c0_119, %c0_120] : memref<256x512xbf16, #tpu.memory_space<vmem>>, vector<256x512xbf16>
    %cst_121 = arith.constant dense<0.000000e+00> : vector<1x512xf32>
    %214 = tpu.matmul %212, %213, %cst_121 {dimension_numbers = #tpu.dot_dimension_numbers<[1], [0], [0], [1], [0, 0, 1, 1], [], []>} : vector<1x256xbf16>, vector<256x512xbf16>, vector<1x512xf32> -> vector<1x512xf32>
    %c0_122 = arith.constant 0 : index
    %c0_123 = arith.constant 0 : index
    %215 = vector.load %arg9[%c0_122, %c0_123] : memref<1x512xf32, #tpu.memory_space<vmem>>, vector<1x512xf32>
    %216 = arith.addf %214, %215 : vector<1x512xf32>
    %cst_124 = arith.constant 0.000000e+00 : f32
    %217 = vector.broadcast %cst_124 : f32 to vector<1x512xf32>
    %218 = arith.maximumf %216, %217 : vector<1x512xf32>
    %219 = arith.truncf %218 : vector<1x512xf32> to vector<1x512xbf16>
    %c0_125 = arith.constant 0 : index
    %c0_126 = arith.constant 0 : index
    %220 = vector.load %arg10[%c0_125, %c0_126] : memref<512x384xbf16, #tpu.memory_space<vmem>>, vector<512x384xbf16>
    %cst_127 = arith.constant dense<0.000000e+00> : vector<1x384xf32>
    %221 = tpu.matmul %219, %220, %cst_127 {dimension_numbers = #tpu.dot_dimension_numbers<[1], [0], [0], [1], [0, 0, 1, 1], [], []>} : vector<1x512xbf16>, vector<512x384xbf16>, vector<1x384xf32> -> vector<1x384xf32>
    %c0_128 = arith.constant 0 : index
    %c0_129 = arith.constant 0 : index
    %222 = vector.load %arg11[%c0_128, %c0_129] : memref<1x384xf32, #tpu.memory_space<vmem>>, vector<1x384xf32>
    %223 = arith.addf %221, %222 : vector<1x384xf32>
    %cst_130 = arith.constant 0.000000e+00 : f32
    %224 = vector.broadcast %cst_130 : f32 to vector<1x384xf32>
    %225 = arith.maximumf %223, %224 : vector<1x384xf32>
    %226 = arith.truncf %225 : vector<1x384xf32> to vector<1x384xbf16>
    %c0_131 = arith.constant 0 : index
    %c0_132 = arith.constant 0 : index
    %227 = vector.load %arg12[%c0_131, %c0_132] : memref<384x3xbf16, #tpu.memory_space<vmem>>, vector<384x3xbf16>
    %cst_133 = arith.constant dense<0.000000e+00> : vector<1x3xf32>
    %228 = tpu.matmul %226, %227, %cst_133 {dimension_numbers = #tpu.dot_dimension_numbers<[1], [0], [0], [1], [0, 0, 1, 1], [], []>} : vector<1x384xbf16>, vector<384x3xbf16>, vector<1x3xf32> -> vector<1x3xf32>
    %c0_134 = arith.constant 0 : index
    %c0_135 = arith.constant 0 : index
    %229 = vector.load %arg13[%c0_134, %c0_135] : memref<1x3xf32, #tpu.memory_space<vmem>>, vector<1x3xf32>
    %230 = arith.addf %228, %229 : vector<1x3xf32>
    %231 = math.tanh %230 : vector<1x3xf32>
    %cst_136 = arith.constant 1.000000e+00 : f32
    %232 = vector.broadcast %cst_136 : f32 to vector<1x3xf32>
    %233 = arith.mulf %231, %232 : vector<1x3xf32>
    %c0_137 = arith.constant 0 : index
    %c0_138 = arith.constant 0 : index
    %c0_139 = arith.constant 0 : index
    %234 = vector.load %arg14[%c0_137, %c0_138, %c0_139] : memref<1x1x3xf32, #tpu.memory_space<vmem>>, vector<1x1x3xf32>
    %235 = vector.shape_cast %234 : vector<1x1x3xf32> to vector<1x3xf32>
    %236 = vector.shape_cast %233 : vector<1x3xf32> to vector<1x1x3xf32>
    tpu.vector_store %arg14[%c0_137, %c0_138, %c0_139], %236 {strides = array<i32>} : memref<1x1x3xf32, #tpu.memory_space<vmem>>, vector<1x1x3xf32>,
    return
  }
  func.func @transform_0(%arg0: i32) -> (i32, i32, i32) {
    %c0_i32 = arith.constant 0 : i32
    %c0_i32_0 = arith.constant 0 : i32
    %c0_i32_1 = arith.constant 0 : i32
    return %arg0, %c0_i32, %c0_i32_0 : i32, i32, i32
  }
  func.func @transform_1(%arg0: i32) -> (i32, i32) {
    %c0_i32 = arith.constant 0 : i32
    %c0_i32_0 = arith.constant 0 : i32
    %c0_i32_1 = arith.constant 0 : i32
    return %c0_i32, %c0_i32_0 : i32, i32
  }
  func.func @transform_2(%arg0: i32) -> (i32, i32) {
    %c0_i32 = arith.constant 0 : i32
    %c0_i32_0 = arith.constant 0 : i32
    %c0_i32_1 = arith.constant 0 : i32
    return %c0_i32, %c0_i32_0 : i32, i32
  }
  func.func @transform_3(%arg0: i32) -> (i32, i32) {
    %c0_i32 = arith.constant 0 : i32
    %c0_i32_0 = arith.constant 0 : i32
    %c0_i32_1 = arith.constant 0 : i32
    return %c0_i32, %c0_i32_0 : i32, i32
  }
  func.func @transform_4(%arg0: i32) -> (i32, i32) {
    %c0_i32 = arith.constant 0 : i32
    %c0_i32_0 = arith.constant 0 : i32
    %c0_i32_1 = arith.constant 0 : i32
    return %c0_i32, %c0_i32_0 : i32, i32
  }
  func.func @transform_5(%arg0: i32) -> (i32, i32) {
    %c0_i32 = arith.constant 0 : i32
    %c0_i32_0 = arith.constant 0 : i32
    %c0_i32_1 = arith.constant 0 : i32
    return %c0_i32, %c0_i32_0 : i32, i32
  }
  func.func @transform_6(%arg0: i32) -> (i32, i32) {
    %c0_i32 = arith.constant 0 : i32
    %c0_i32_0 = arith.constant 0 : i32
    %c0_i32_1 = arith.constant 0 : i32
    return %c0_i32, %c0_i32_0 : i32, i32
  }
  func.func @transform_7(%arg0: i32) -> (i32, i32) {
    %c0_i32 = arith.constant 0 : i32
    %c0_i32_0 = arith.constant 0 : i32
    %c0_i32_1 = arith.constant 0 : i32
    return %c0_i32, %c0_i32_0 : i32, i32
  }
  func.func @transform_8(%arg0: i32) -> (i32, i32) {
    %c0_i32 = arith.constant 0 : i32
    %c0_i32_0 = arith.constant 0 : i32
    %c0_i32_1 = arith.constant 0 : i32
    return %c0_i32, %c0_i32_0 : i32, i32
  }
  func.func @transform_9(%arg0: i32) -> (i32, i32) {
    %c0_i32 = arith.constant 0 : i32
    %c0_i32_0 = arith.constant 0 : i32
    %c0_i32_1 = arith.constant 0 : i32
    return %c0_i32, %c0_i32_0 : i32, i32
  }
  func.func @transform_10(%arg0: i32) -> (i32, i32) {
    %c0_i32 = arith.constant 0 : i32
    %c0_i32_0 = arith.constant 0 : i32
    %c0_i32_1 = arith.constant 0 : i32
    return %c0_i32, %c0_i32_0 : i32, i32
  }
  func.func @transform_11(%arg0: i32) -> (i32, i32) {
    %c0_i32 = arith.constant 0 : i32
    %c0_i32_0 = arith.constant 0 : i32
    %c0_i32_1 = arith.constant 0 : i32
    return %c0_i32, %c0_i32_0 : i32, i32
  }
  func.func @transform_12(%arg0: i32) -> (i32, i32) {
    %c0_i32 = arith.constant 0 : i32
    %c0_i32_0 = arith.constant 0 : i32
    %c0_i32_1 = arith.constant 0 : i32
    return %c0_i32, %c0_i32_0 : i32, i32
  }
  func.func @transform_13(%arg0: i32) -> (i32, i32, i32) {
    %c0_i32 = arith.constant 0 : i32
    %c0_i32_0 = arith.constant 0 : i32
    %c0_i32_1 = arith.constant 0 : i32
    return %arg0, %c0_i32, %c0_i32_0 : i32, i32, i32
  }
}

</mosaic_0001>

<llo_original>
// kernel: actor_forward.4
$region0: #{actor_forward.4}
  #allocation0 [shape = 'u32[]', space=smem, size = 0x4, offset = 0x4, fixed_abs, tag = 'smem constant byte address 0x4 - core index']
  #allocation1 [shape = 'u32[72,128]{1,0:T(1,128)}', space=vmem, size = 0x9000, scoped, tag = 'internal scratch']
  %s0 = inlined_call_operand.vmem [shape: bf16[4418,64], index: 0, kind: input, shape index: {}]
  %s1 = inlined_call_operand.vmem [shape: bf16[64,8], index: 1, kind: input, shape index: {}]
  %s2 = inlined_call_operand.vmem [shape: f32[1,8], index: 2, kind: input, shape index: {}]
  %s3 = inlined_call_operand.vmem [shape: bf16[4418,8], index: 3, kind: output, shape index: {}]
  %s4 = sld [smem:[#allocation0]]
  $region89: #{actor_forward.4} parent=0
    _
  %s6 = ssub.s32 1, %s4
  %s7 = scalar_select 0, %s6, %s4
  $region1: #{actor_forward.4} parent=0
    #allocation2 [shape = 'u8[1138688]{0}', space=vmem, size = 0x116000, scoped, tag = 'output window, operand 0']
    loop: start=0, step=1, limit=4
    $region2: #{actor_forward.4} parent=1 // loop_pre_header
      _
    $region3: #{actor_forward.4} parent=1 // loop_header
      %s9 = sphi 0, %s13
      %p10 = scmp.ge.s32.totalorder %s9, 4
      %s19 = sphi 0, %s21
      %s22 = sphi 0, %s19
      %s23 = sphi 0, %s22
      %s39 = sphi 0, %s23
      %s43 = sphi 0, %s43
      %s45 = sphi 0, %s43
      %s46 = sphi 0, %s45
      %s60 = sphi 0, %s46
      %s64 = sphi 0, %s64
      %s66 = sphi 0, %s64
      %s67 = sphi 0, %s66
      %s81 = sphi 0, %s67
      %s87 = sphi 0, %s89
      %s90 = sphi 0, %s87
      %s91 = sphi 0, %s90
      %s107 = sphi 0, %s91
    $region4: #{actor_forward.4} parent=1 // loop_header_branch
      %12 = sbr.rel (%p10) target = $region8
    $region5: #{actor_forward.4} parent=1 // loop_body
      %s14 = ssub.s32 %s9, 1
      %s15 = ssub.s32 %s9, 2
      %s16 = sadd.s32 %s9, 1
      %s17 = ssub.s32 %s9, %s16
      %p18 = scmp.eq.s32.totalorder %s17, 0
      %s20 = sadd.s32 %s19, 1
      %s21 = scalar_select %p18, %s19, %s20
      %p24 = pneg %p18
      %p25 = scmp.eq.s32.totalorder %s9, 1
      %p26 = por %p24, %p25
      %p27 = scmp.ne.s32.totalorder %s19, %s22
      %p28 = scmp.eq.s32.totalorder %s9, 0
      %p29 = por %p27, %p28
      %p30 = scmp.ne.s32.totalorder %s19, %s22
      %p31 = scmp.eq.s32.totalorder %s14, 1
      %p32 = por %p30, %p31
      %p33 = scmp.ne.s32.totalorder %s22, %s23
      %p34 = scmp.eq.s32.totalorder %s14, 0
      %p35 = por %p33, %p34
      %p36 = scmp.ne.s32.totalorder %s22, %s23
      %p37 = scmp.eq.s32.totalorder %s15, 1
      %p38 = por %p36, %p37
      %p40 = scmp.ne.s32.totalorder %s23, %s39
      %p41 = scmp.eq.s32.totalorder %s15, 0
      %p42 = por %p40, %p41
      %s44 = sadd.s32 %s43, 1
      %p47 = scmp.eq.s32.totalorder %s9, 1
      %p48 = scmp.ne.s32.totalorder %s43, %s45
      %p49 = scmp.eq.s32.totalorder %s9, 0
      %p50 = por %p48, %p49
      %p51 = scmp.ne.s32.totalorder %s43, %s45
      %p52 = scmp.eq.s32.totalorder %s14, 1
      %p53 = por %p51, %p52
      %p54 = scmp.ne.s32.totalorder %s45, %s46
      %p55 = scmp.eq.s32.totalorder %s14, 0
      %p56 = por %p54, %p55
      %p57 = scmp.ne.s32.totalorder %s45, %s46
      %p58 = scmp.eq.s32.totalorder %s15, 1
      %p59 = por %p57, %p58
      %p61 = scmp.ne.s32.totalorder %s46, %s60
      %p62 = scmp.eq.s32.totalorder %s15, 0
      %p63 = por %p61, %p62
      %s65 = sadd.s32 %s64, 1
      %p68 = scmp.eq.s32.totalorder %s9, 1
      %p69 = scmp.ne.s32.totalorder %s64, %s66
      %p70 = scmp.eq.s32.totalorder %s9, 0
      %p71 = por %p69, %p70
      %p72 = scmp.ne.s32.totalorder %s64, %s66
      %p73 = scmp.eq.s32.totalorder %s14, 1
      %p74 = por %p72, %p73
      %p75 = scmp.ne.s32.totalorder %s66, %s67
      %p76 = scmp.eq.s32.totalorder %s14, 0
      %p77 = por %p75, %p76
      %p78 = scmp.ne.s32.totalorder %s66, %s67
      %p79 = scmp.eq.s32.totalorder %s15, 1
      %p80 = por %p78, %p79
      %p82 = scmp.ne.s32.totalorder %s67, %s81
      %p83 = scmp.eq.s32.totalorder %s15, 0
      %p84 = por %p82, %p83
      %s85 = ssub.s32 %s9, %s16
      %p86 = scmp.eq.s32.totalorder %s85, 0
      %s88 = sadd.s32 %s87, 1
      %s89 = scalar_select %p86, %s87, %s88
      %p92 = pneg %p86
      %p93 = scmp.eq.s32.totalorder %s9, 1
      %p94 = por %p92, %p93
      %p95 = scmp.ne.s32.totalorder %s87, %s90
      %p96 = scmp.eq.s32.totalorder %s9, 0
      %p97 = por %p95, %p96
      %p98 = scmp.ne.s32.totalorder %s87, %s90
      %p99 = scmp.eq.s32.totalorder %s14, 1
      %p100 = por %p98, %p99
      %p101 = scmp.ne.s32.totalorder %s90, %s91
      %p102 = scmp.eq.s32.totalorder %s14, 0
      %p103 = por %p101, %p102
      %p104 = scmp.ne.s32.totalorder %s90, %s91
      %p105 = scmp.eq.s32.totalorder %s15, 1
      %p106 = por %p104, %p105
      %p108 = scmp.ne.s32.totalorder %s91, %s107
      %p109 = scmp.eq.s32.totalorder %s15, 0
      %p110 = por %p108, %p109
      %p111 = scmp.le.s32.totalorder 1, %s9
      %p112 = scmp.lt.s32.totalorder %s9, 3
      %p113 = pnand %p111, %p112
      %p114 = pneg %p113
      // Predicated region
      $region9: #{actor_forward.4} parent=5 // pred_check
        _
      $region10: #{actor_forward.4} parent=5 // pred_check_branch
        %116 = sbr.rel (%p113) target = $region12
      $region11: #{actor_forward.4} parent=5 // pred_region
        %s117 = ssub.s32 %s9, 1
        // Predicated region
        $region13: #{actor_forward.4} parent=11 // pred_check
          %p118 = pneg %p56
        $region14: #{actor_forward.4} parent=11 // pred_check_branch
          %120 = sbr.rel (%p118) target = $region16
        $region15: #{actor_forward.4} parent=11 // pred_region
          _
        $region16: #{actor_forward.4} parent=11 // pred_fallthru
          _
        // Predicated region
        $region17: #{actor_forward.4} parent=11 // pred_check
          %p121 = pneg %p77
        $region18: #{actor_forward.4} parent=11 // pred_check_branch
          %123 = sbr.rel (%p121) target = $region20
        $region19: #{actor_forward.4} parent=11 // pred_region
          _
        $region20: #{actor_forward.4} parent=11 // pred_fallthru
          _
      $region12: #{actor_forward.4} parent=5 // pred_fallthru
        _
      %p124 = scmp.lt.s32.totalorder %s9, 2
      // Predicated region
      $region21: #{actor_forward.4} parent=5 // pred_check
        %p125 = pneg %p124
      $region22: #{actor_forward.4} parent=5 // pred_check_branch
        %127 = sbr.rel (%p125) target = $region24
      $region23: #{actor_forward.4} parent=5 // pred_region
        // Predicated region
        $region25: #{actor_forward.4} parent=23 // pred_check
          %p128 = pneg %p29
        $region26: #{actor_forward.4} parent=23 // pred_check_branch
          %130 = sbr.rel (%p128) target = $region28
        $region27: #{actor_forward.4} parent=23 // pred_region
          %s131 = smul.u32 278, %s9
          %s132 = ssub.s32 553, %s131
          %p133 = scmp.lt.s32.totalorder %s132, 278
          %s134 = scalar_select %p133, %s132, 278
          %s135 = smul.u32 4, %s134
          %p136 = scmp.lt.s32.totalorder %s131, 552
          %s137 = scalar_select %p136, %s131, 552
          %s138 = smul.addr %s137, 4
          %s139 = scalar_lea.vmem %s0, %s138
          %s140 = smul.u32 278, %s9
          %s141 = ssub.s32 553, %s140
          %p142 = scmp.lt.s32.totalorder %s141, 278
          %s143 = scalar_select %p142, %s141, 278
          %s144 = smul.u32 4, %s143
        $region28: #{actor_forward.4} parent=23 // pred_fallthru
          _
      $region24: #{actor_forward.4} parent=5 // pred_fallthru
        _
      %p145 = scmp.le.s32.totalorder 1, %s9
      %p146 = scmp.lt.s32.totalorder %s9, 3
      %p147 = pnand %p145, %p146
      %p148 = pneg %p147
      // Predicated region
      $region29: #{actor_forward.4} parent=5 // pred_check
        _
      $region30: #{actor_forward.4} parent=5 // pred_check_branch
        %150 = sbr.rel (%p147) target = $region32
      $region31: #{actor_forward.4} parent=5 // pred_region
        %s151 = ssub.s32 %s9, 1
        %s152 = smul.u32 278, %s14
        %s153 = ssub.s32 553, %s152
        %p154 = scmp.lt.s32.totalorder %s153, 278
        %s155 = scalar_select %p154, %s153, 278
        %s156 = smul.u32 4, %s155
        %p157 = scmp.lt.s32.totalorder %s152, 552
        %s158 = scalar_select %p157, %s152, 552
        %s159 = smul.addr %s158, 4
        %s160 = scalar_lea.vmem %s0, %s159
        %p161 = pneg %p35
        %p162 = pneg %p32
        %p163 = pneg %p56
        %p164 = pneg %p53
        %p165 = pneg %p77
        %p166 = pneg %p74
        %p167 = pneg %p103
        %p168 = pneg %p100
        %s169 = sand.u32 %s90, 1
        %s170 = sand.u32 %s90, 1
        %s171 = smul.addr %s170, 1112
        %s172 = scalar_lea.vmem [#allocation2], %s171
        %s173 = smul.u32 278, %s14
        %s174 = ssub.s32 553, %s173
        %p175 = scmp.lt.s32.totalorder %s174, 278
        %s176 = scalar_select %p175, %s174, 278
        %s177 = smul.u32 4, %s176
        %p178 = scmp.lt.s32.totalorder %s173, 552
        %s179 = scalar_select %p178, %s173, 552
        %s180 = smul.addr %s179, 4
        %s181 = scalar_lea.vmem %s0, %s180
        %s182 = smul.u32 278, %s14
        %s183 = ssub.s32 553, %s182
        %p184 = scmp.lt.s32.totalorder %s183, 278
        %s185 = scalar_select %p184, %s183, 278
        %s186 = smul.u32 4, %s185
        %s187 = smul.u32 278, %s14
        %s188 = ssub.s32 553, %s187
        %p189 = scmp.lt.s32.totalorder %s188, 278
        %s190 = scalar_select %p189, %s188, 278
        %s191 = smul.u32 4, %s190
        %v193 = vld [vmem:[%s181] sm:$0xf]
        %v194 = vld [vmem:[%s181 + $0x4] sm:$0xf]
        %v195 = vld [vmem:[%s181 + $0x8] sm:$0xf]
        %v196 = vld [vmem:[%s181 + $0xc] sm:$0xf]
        %v197 = vld [vmem:[%s181 + $0x10] sm:$0xf]
        %v198 = vld [vmem:[%s181 + $0x14] sm:$0xf]
        %v199 = vld [vmem:[%s181 + $0x18] sm:$0xf]
        %v200 = vld [vmem:[%s181 + $0x1c] sm:$0xf]
        %v201 = vld [vmem:[%s181 + $0x20] sm:$0xf]
        %v202 = vld [vmem:[%s181 + $0x24] sm:$0xf]
        %v203 = vld [vmem:[%s181 + $0x28] sm:$0xf]
        %v204 = vld [vmem:[%s181 + $0x2c] sm:$0xf]
        %v205 = vld [vmem:[%s181 + $0x30] sm:$0xf]
        %v206 = vld [vmem:[%s181 + $0x34] sm:$0xf]
        %v207 = vld [vmem:[%s181 + $0x38] sm:$0xf]
        %v208 = vld [vmem:[%s181 + $0x3c] sm:$0xf]
        %v209 = vld [vmem:[%s181 + $0x40] sm:$0xf]
        %v210 = vld [vmem:[%s181 + $0x44] sm:$0xf]
        %v211 = vld [vmem:[%s181 + $0x48] sm:$0xf]
        %v212 = vld [vmem:[%s181 + $0x4c] sm:$0xf]
        %v213 = vld [vmem:[%s181 + $0x50] sm:$0xf]
        %v214 = vld [vmem:[%s181 + $0x54] sm:$0xf]
        %v215 = vld [vmem:[%s181 + $0x58] sm:$0xf]
        %v216 = vld [vmem:[%s181 + $0x5c] sm:$0xf]
        %v217 = vld [vmem:[%s181 + $0x60] sm:$0xf]
        %v218 = vld [vmem:[%s181 + $0x64] sm:$0xf]
        %v219 = vld [vmem:[%s181 + $0x68] sm:$0xf]
        %v220 = vld [vmem:[%s181 + $0x6c] sm:$0xf]
        %v221 = vld [vmem:[%s181 + $0x70] sm:$0xf]
        %v222 = vld [vmem:[%s181 + $0x74] sm:$0xf]
        %v223 = vld [vmem:[%s181 + $0x78] sm:$0xf]
        %v224 = vld [vmem:[%s181 + $0x7c] sm:$0xf]
        %v225 = vld [vmem:[%s181 + $0x80] sm:$0xf]
        %v226 = vld [vmem:[%s181 + $0x84] sm:$0xf]
        %v227 = vld [vmem:[%s181 + $0x88] sm:$0xf]
        %v228 = vld [vmem:[%s181 + $0x8c] sm:$0xf]
        %v229 = vld [vmem:[%s181 + $0x90] sm:$0xf]
        %v230 = vld [vmem:[%s181 + $0x94] sm:$0xf]
        %v231 = vld [vmem:[%s181 + $0x98] sm:$0xf]
        %v232 = vld [vmem:[%s181 + $0x9c] sm:$0xf]
        %v233 = vld [vmem:[%s181 + $0xa0] sm:$0xf]
        %v234 = vld [vmem:[%s181 + $0xa4] sm:$0xf]
        %v235 = vld [vmem:[%s181 + $0xa8] sm:$0xf]
        %v236 = vld [vmem:[%s181 + $0xac] sm:$0xf]
        %v237 = vld [vmem:[%s181 + $0xb0] sm:$0xf]
        %v238 = vld [vmem:[%s181 + $0xb4] sm:$0xf]
        %v239 = vld [vmem:[%s181 + $0xb8] sm:$0xf]
        %v240 = vld [vmem:[%s181 + $0xbc] sm:$0xf]
        %v241 = vld [vmem:[%s181 + $0xc0] sm:$0xf]
        %v242 = vld [vmem:[%s181 + $0xc4] sm:$0xf]
        %v243 = vld [vmem:[%s181 + $0xc8] sm:$0xf]
        %v244 = vld [vmem:[%s181 + $0xcc] sm:$0xf]
        %v245 = vld [vmem:[%s181 + $0xd0] sm:$0xf]
        %v246 = vld [vmem:[%s181 + $0xd4] sm:$0xf]
        %v247 = vld [vmem:[%s181 + $0xd8] sm:$0xf]
        %v248 = vld [vmem:[%s181 + $0xdc] sm:$0xf]
        %v249 = vld [vmem:[%s181 + $0xe0] sm:$0xf]
        %v250 = vld [vmem:[%s181 + $0xe4] sm:$0xf]
        %v251 = vld [vmem:[%s181 + $0xe8] sm:$0xf]
        %v252 = vld [vmem:[%s181 + $0xec] sm:$0xf]
        %v253 = vld [vmem:[%s181 + $0xf0] sm:$0xf]
        %v254 = vld [vmem:[%s181 + $0xf4] sm:$0xf]
        %v255 = vld [vmem:[%s181 + $0xf8] sm:$0xf]
        %v256 = vld [vmem:[%s181 + $0xfc] sm:$0xf]
        %v257 = vld [vmem:[%s181 + $0x100] sm:$0xf]
        %v258 = vld [vmem:[%s181 + $0x104] sm:$0xf]
        %v259 = vld [vmem:[%s181 + $0x108] sm:$0xf]
        %v260 = vld [vmem:[%s181 + $0x10c] sm:$0xf]
        %v261 = vld [vmem:[%s181 + $0x110] sm:$0xf]
        %v262 = vld [vmem:[%s181 + $0x114] sm:$0xf]
        %v263 = vld [vmem:[%s181 + $0x118] sm:$0xf]
        %v264 = vld [vmem:[%s181 + $0x11c] sm:$0xf]
        %v265 = vld [vmem:[%s181 + $0x120] sm:$0xf]
        %v266 = vld [vmem:[%s181 + $0x124] sm:$0xf]
        %v267 = vld [vmem:[%s181 + $0x128] sm:$0xf]
        %v268 = vld [vmem:[%s181 + $0x12c] sm:$0xf]
        %v269 = vld [vmem:[%s181 + $0x130] sm:$0xf]
        %v270 = vld [vmem:[%s181 + $0x134] sm:$0xf]
        %v271 = vld [vmem:[%s181 + $0x138] sm:$0xf]
        %v272 = vld [vmem:[%s181 + $0x13c] sm:$0xf]
        %v273 = vld [vmem:[%s181 + $0x140] sm:$0xf]
        %v274 = vld [vmem:[%s181 + $0x144] sm:$0xf]
        %v275 = vld [vmem:[%s181 + $0x148] sm:$0xf]
        %v276 = vld [vmem:[%s181 + $0x14c] sm:$0xf]
        %v277 = vld [vmem:[%s181 + $0x150] sm:$0xf]
        %v278 = vld [vmem:[%s181 + $0x154] sm:$0xf]
        %v279 = vld [vmem:[%s181 + $0x158] sm:$0xf]
        %v280 = vld [vmem:[%s181 + $0x15c] sm:$0xf]
        %v281 = vld [vmem:[%s181 + $0x160] sm:$0xf]
        %v282 = vld [vmem:[%s181 + $0x164] sm:$0xf]
        %v283 = vld [vmem:[%s181 + $0x168] sm:$0xf]
        %v284 = vld [vmem:[%s181 + $0x16c] sm:$0xf]
        %v285 = vld [vmem:[%s181 + $0x170] sm:$0xf]
        %v286 = vld [vmem:[%s181 + $0x174] sm:$0xf]
        %v287 = vld [vmem:[%s181 + $0x178] sm:$0xf]
        %v288 = vld [vmem:[%s181 + $0x17c] sm:$0xf]
        %v289 = vld [vmem:[%s181 + $0x180] sm:$0xf]
        %v290 = vld [vmem:[%s181 + $0x184] sm:$0xf]
        %v291 = vld [vmem:[%s181 + $0x188] sm:$0xf]
        %v292 = vld [vmem:[%s181 + $0x18c] sm:$0xf]
        %v293 = vld [vmem:[%s181 + $0x190] sm:$0xf]
        %v294 = vld [vmem:[%s181 + $0x194] sm:$0xf]
        %v295 = vld [vmem:[%s181 + $0x198] sm:$0xf]
        %v296 = vld [vmem:[%s181 + $0x19c] sm:$0xf]
        %v297 = vld [vmem:[%s181 + $0x1a0] sm:$0xf]
        %v298 = vld [vmem:[%s181 + $0x1a4] sm:$0xf]
        %v299 = vld [vmem:[%s181 + $0x1a8] sm:$0xf]
        %v300 = vld [vmem:[%s181 + $0x1ac] sm:$0xf]
        %v301 = vld [vmem:[%s181 + $0x1b0] sm:$0xf]
        %v302 = vld [vmem:[%s181 + $0x1b4] sm:$0xf]
        %v303 = vld [vmem:[%s181 + $0x1b8] sm:$0xf]
        %v304 = vld [vmem:[%s181 + $0x1bc] sm:$0xf]
        %v305 = vld [vmem:[%s181 + $0x1c0] sm:$0xf]
        %v306 = vld [vmem:[%s181 + $0x1c4] sm:$0xf]
        %v307 = vld [vmem:[%s181 + $0x1c8] sm:$0xf]
        %v308 = vld [vmem:[%s181 + $0x1cc] sm:$0xf]
        %v309 = vld [vmem:[%s181 + $0x1d0] sm:$0xf]
        %v310 = vld [vmem:[%s181 + $0x1d4] sm:$0xf]
        %v311 = vld [vmem:[%s181 + $0x1d8] sm:$0xf]
        %v312 = vld [vmem:[%s181 + $0x1dc] sm:$0xf]
        %v313 = vld [vmem:[%s181 + $0x1e0] sm:$0xf]
        %v314 = vld [vmem:[%s181 + $0x1e4] sm:$0xf]
        %v315 = vld [vmem:[%s181 + $0x1e8] sm:$0xf]
        %v316 = vld [vmem:[%s181 + $0x1ec] sm:$0xf]
        %v317 = vld [vmem:[%s181 + $0x1f0] sm:$0xf]
        %v318 = vld [vmem:[%s181 + $0x1f4] sm:$0xf]
        %v319 = vld [vmem:[%s181 + $0x1f8] sm:$0xf]
        %v320 = vld [vmem:[%s181 + $0x1fc] sm:$0xf]
        %v321 = vld [vmem:[%s181 + $0x200] sm:$0xf]
        %v322 = vld [vmem:[%s181 + $0x204] sm:$0xf]
        %v323 = vld [vmem:[%s181 + $0x208] sm:$0xf]
        %v324 = vld [vmem:[%s181 + $0x20c] sm:$0xf]
        %v325 = vld [vmem:[%s181 + $0x210] sm:$0xf]
        %v326 = vld [vmem:[%s181 + $0x214] sm:$0xf]
        %v327 = vld [vmem:[%s181 + $0x218] sm:$0xf]
        %v328 = vld [vmem:[%s181 + $0x21c] sm:$0xf]
        %v329 = vld [vmem:[%s181 + $0x220] sm:$0xf]
        %v330 = vld [vmem:[%s181 + $0x224] sm:$0xf]
        %v331 = vld [vmem:[%s181 + $0x228] sm:$0xf]
        %v332 = vld [vmem:[%s181 + $0x22c] sm:$0xf]
        %v333 = vld [vmem:[%s181 + $0x230] sm:$0xf]
        %v334 = vld [vmem:[%s181 + $0x234] sm:$0xf]
        %v335 = vld [vmem:[%s181 + $0x238] sm:$0xf]
        %v336 = vld [vmem:[%s181 + $0x23c] sm:$0xf]
        %v337 = vld [vmem:[%s181 + $0x240] sm:$0xf]
        %v338 = vld [vmem:[%s181 + $0x244] sm:$0xf]
        %v339 = vld [vmem:[%s181 + $0x248] sm:$0xf]
        %v340 = vld [vmem:[%s181 + $0x24c] sm:$0xf]
        %v341 = vld [vmem:[%s181 + $0x250] sm:$0xf]
        %v342 = vld [vmem:[%s181 + $0x254] sm:$0xf]
        %v343 = vld [vmem:[%s181 + $0x258] sm:$0xf]
        %v344 = vld [vmem:[%s181 + $0x25c] sm:$0xf]
        %v345 = vld [vmem:[%s181 + $0x260] sm:$0xf]
        %v346 = vld [vmem:[%s181 + $0x264] sm:$0xf]
        %v347 = vld [vmem:[%s181 + $0x268] sm:$0xf]
        %v348 = vld [vmem:[%s181 + $0x26c] sm:$0xf]
        %v349 = vld [vmem:[%s181 + $0x270] sm:$0xf]
        %v350 = vld [vmem:[%s181 + $0x274] sm:$0xf]
        %v351 = vld [vmem:[%s181 + $0x278] sm:$0xf]
        %v352 = vld [vmem:[%s181 + $0x27c] sm:$0xf]
        %v353 = vld [vmem:[%s181 + $0x280] sm:$0xf]
        %v354 = vld [vmem:[%s181 + $0x284] sm:$0xf]
        %v355 = vld [vmem:[%s181 + $0x288] sm:$0xf]
        %v356 = vld [vmem:[%s181 + $0x28c] sm:$0xf]
        %v357 = vld [vmem:[%s181 + $0x290] sm:$0xf]
        %v358 = vld [vmem:[%s181 + $0x294] sm:$0xf]
        %v359 = vld [vmem:[%s181 + $0x298] sm:$0xf]
        %v360 = vld [vmem:[%s181 + $0x29c] sm:$0xf]
        %v361 = vld [vmem:[%s181 + $0x2a0] sm:$0xf]
        %v362 = vld [vmem:[%s181 + $0x2a4] sm:$0xf]
        %v363 = vld [vmem:[%s181 + $0x2a8] sm:$0xf]
        %v364 = vld [vmem:[%s181 + $0x2ac] sm:$0xf]
        %v365 = vld [vmem:[%s181 + $0x2b0] sm:$0xf]
        %v366 = vld [vmem:[%s181 + $0x2b4] sm:$0xf]
        %v367 = vld [vmem:[%s181 + $0x2b8] sm:$0xf]
        %v368 = vld [vmem:[%s181 + $0x2bc] sm:$0xf]
        %v369 = vld [vmem:[%s181 + $0x2c0] sm:$0xf]
        %v370 = vld [vmem:[%s181 + $0x2c4] sm:$0xf]
        %v371 = vld [vmem:[%s181 + $0x2c8] sm:$0xf]
        %v372 = vld [vmem:[%s181 + $0x2cc] sm:$0xf]
        %v373 = vld [vmem:[%s181 + $0x2d0] sm:$0xf]
        %v374 = vld [vmem:[%s181 + $0x2d4] sm:$0xf]
        %v375 = vld [vmem:[%s181 + $0x2d8] sm:$0xf]
        %v376 = vld [vmem:[%s181 + $0x2dc] sm:$0xf]
        %v377 = vld [vmem:[%s181 + $0x2e0] sm:$0xf]
        %v378 = vld [vmem:[%s181 + $0x2e4] sm:$0xf]
        %v379 = vld [vmem:[%s181 + $0x2e8] sm:$0xf]
        %v380 = vld [vmem:[%s181 + $0x2ec] sm:$0xf]
        %v381 = vld [vmem:[%s181 + $0x2f0] sm:$0xf]
        %v382 = vld [vmem:[%s181 + $0x2f4] sm:$0xf]
        %v383 = vld [vmem:[%s181 + $0x2f8] sm:$0xf]
        %v384 = vld [vmem:[%s181 + $0x2fc] sm:$0xf]
        %v385 = vld [vmem:[%s181 + $0x300] sm:$0xf]
        %v386 = vld [vmem:[%s181 + $0x304] sm:$0xf]
        %v387 = vld [vmem:[%s181 + $0x308] sm:$0xf]
        %v388 = vld [vmem:[%s181 + $0x30c] sm:$0xf]
        %v389 = vld [vmem:[%s181 + $0x310] sm:$0xf]
        %v390 = vld [vmem:[%s181 + $0x314] sm:$0xf]
        %v391 = vld [vmem:[%s181 + $0x318] sm:$0xf]
        %v392 = vld [vmem:[%s181 + $0x31c] sm:$0xf]
        %v393 = vld [vmem:[%s181 + $0x320] sm:$0xf]
        %v394 = vld [vmem:[%s181 + $0x324] sm:$0xf]
        %v395 = vld [vmem:[%s181 + $0x328] sm:$0xf]
        %v396 = vld [vmem:[%s181 + $0x32c] sm:$0xf]
        %v397 = vld [vmem:[%s181 + $0x330] sm:$0xf]
        %v398 = vld [vmem:[%s181 + $0x334] sm:$0xf]
        %v399 = vld [vmem:[%s181 + $0x338] sm:$0xf]
        %v400 = vld [vmem:[%s181 + $0x33c] sm:$0xf]
        %v401 = vld [vmem:[%s181 + $0x340] sm:$0xf]
        %v402 = vld [vmem:[%s181 + $0x344] sm:$0xf]
        %v403 = vld [vmem:[%s181 + $0x348] sm:$0xf]
        %v404 = vld [vmem:[%s181 + $0x34c] sm:$0xf]
        %v405 = vld [vmem:[%s181 + $0x350] sm:$0xf]
        %v406 = vld [vmem:[%s181 + $0x354] sm:$0xf]
        %v407 = vld [vmem:[%s181 + $0x358] sm:$0xf]
        %v408 = vld [vmem:[%s181 + $0x35c] sm:$0xf]
        %v409 = vld [vmem:[%s181 + $0x360] sm:$0xf]
        %v410 = vld [vmem:[%s181 + $0x364] sm:$0xf]
        %v411 = vld [vmem:[%s181 + $0x368] sm:$0xf]
        %v412 = vld [vmem:[%s181 + $0x36c] sm:$0xf]
        %v413 = vld [vmem:[%s181 + $0x370] sm:$0xf]
        %v414 = vld [vmem:[%s181 + $0x374] sm:$0xf]
        %v415 = vld [vmem:[%s181 + $0x378] sm:$0xf]
        %v416 = vld [vmem:[%s181 + $0x37c] sm:$0xf]
        %v417 = vld [vmem:[%s181 + $0x380] sm:$0xf]
        %v418 = vld [vmem:[%s181 + $0x384] sm:$0xf]
        %v419 = vld [vmem:[%s181 + $0x388] sm:$0xf]
        %v420 = vld [vmem:[%s181 + $0x38c] sm:$0xf]
        %v421 = vld [vmem:[%s181 + $0x390] sm:$0xf]
        %v422 = vld [vmem:[%s181 + $0x394] sm:$0xf]
        %v423 = vld [vmem:[%s181 + $0x398] sm:$0xf]
        %v424 = vld [vmem:[%s181 + $0x39c] sm:$0xf]
        %v425 = vld [vmem:[%s181 + $0x3a0] sm:$0xf]
        %v426 = vld [vmem:[%s181 + $0x3a4] sm:$0xf]
        %v427 = vld [vmem:[%s181 + $0x3a8] sm:$0xf]
        %v428 = vld [vmem:[%s181 + $0x3ac] sm:$0xf]
        %v429 = vld [vmem:[%s181 + $0x3b0] sm:$0xf]
        %v430 = vld [vmem:[%s181 + $0x3b4] sm:$0xf]
        %v431 = vld [vmem:[%s181 + $0x3b8] sm:$0xf]
        %v432 = vld [vmem:[%s181 + $0x3bc] sm:$0xf]
        %v433 = vld [vmem:[%s181 + $0x3c0] sm:$0xf]
        %v434 = vld [vmem:[%s181 + $0x3c4] sm:$0xf]
        %v435 = vld [vmem:[%s181 + $0x3c8] sm:$0xf]
        %v436 = vld [vmem:[%s181 + $0x3cc] sm:$0xf]
        %v437 = vld [vmem:[%s181 + $0x3d0] sm:$0xf]
        %v438 = vld [vmem:[%s181 + $0x3d4] sm:$0xf]
        %v439 = vld [vmem:[%s181 + $0x3d8] sm:$0xf]
        %v440 = vld [vmem:[%s181 + $0x3dc] sm:$0xf]
        %v441 = vld [vmem:[%s181 + $0x3e0] sm:$0xf]
        %v442 = vld [vmem:[%s181 + $0x3e4] sm:$0xf]
        %v443 = vld [vmem:[%s181 + $0x3e8] sm:$0xf]
        %v444 = vld [vmem:[%s181 + $0x3ec] sm:$0xf]
        %v445 = vld [vmem:[%s181 + $0x3f0] sm:$0xf]
        %v446 = vld [vmem:[%s181 + $0x3f4] sm:$0xf]
        %v447 = vld [vmem:[%s181 + $0x3f8] sm:$0xf]
        %v448 = vld [vmem:[%s181 + $0x3fc] sm:$0xf]
        %v449 = vld [vmem:[%s181 + $0x400] sm:$0xf]
        %v450 = vld [vmem:[%s181 + $0x404] sm:$0xf]
        %v451 = vld [vmem:[%s181 + $0x408] sm:$0xf]
        %v452 = vld [vmem:[%s181 + $0x40c] sm:$0xf]
        %v453 = vld [vmem:[%s181 + $0x410] sm:$0xf]
        %v454 = vld [vmem:[%s181 + $0x414] sm:$0xf]
        %v455 = vld [vmem:[%s181 + $0x418] sm:$0xf]
        %v456 = vld [vmem:[%s181 + $0x41c] sm:$0xf]
        %v457 = vld [vmem:[%s181 + $0x420] sm:$0xf]
        %v458 = vld [vmem:[%s181 + $0x424] sm:$0xf]
        %v459 = vld [vmem:[%s181 + $0x428] sm:$0xf]
        %v460 = vld [vmem:[%s181 + $0x42c] sm:$0xf]
        %v461 = vld [vmem:[%s181 + $0x430] sm:$0xf]
        %v462 = vld [vmem:[%s181 + $0x434] sm:$0xf]
        %v463 = vld [vmem:[%s181 + $0x438] sm:$0xf]
        %v464 = vld [vmem:[%s181 + $0x43c] sm:$0xf]
        %v465 = vld [vmem:[%s181 + $0x440] sm:$0xf]
        %v466 = vld [vmem:[%s181 + $0x444] sm:$0xf]
        %v467 = vld [vmem:[%s181 + $0x448] sm:$0xf]
        %v468 = vld [vmem:[%s181 + $0x44c] sm:$0xf]
        %v469 = vld [vmem:[%s181 + $0x450] sm:$0xf]
        %v470 = vld [vmem:[%s181 + $0x454] sm:$0xf]
        %v471 = vld [vmem:[%s1] sm:$0xf]
        %v472 = vld [vmem:[%s1 + $0x4] sm:$0xf]
        %v473 = vld [vmem:[%s1 + $0x8] sm:$0xf]
        %v474 = vld [vmem:[%s1 + $0xc] sm:$0xf]
        %v475 = vld [vmem:[%s1 + $0x10] sm:$0xf]
        %v476 = vld [vmem:[%s1 + $0x14] sm:$0xf]
        %v477 = vld [vmem:[%s1 + $0x18] sm:$0xf]
        %v478 = vld [vmem:[%s1 + $0x1c] sm:$0xf]
        %v479 = vld [vmem:[%s2] sm:$0x1]
        %v481 = vperm.slane %v479, 0
        %v761 = vunpack.c.l.b16 %v193
        %v762 = vunpack.c.l.b16 %v194
        %v763 = vunpack.c.l.b16 %v195
        %v764 = vunpack.c.l.b16 %v196
        %v765 = vunpack.c.l.b16 %v197
        %v766 = vunpack.c.l.b16 %v198
        %v767 = vunpack.c.l.b16 %v199
        %v768 = vunpack.c.l.b16 %v200
        %v769 = vunpack.c.l.b16 %v201
        %v770 = vunpack.c.l.b16 %v202
        %v771 = vunpack.c.l.b16 %v203
        %v772 = vunpack.c.l.b16 %v204
        %v773 = vunpack.c.l.b16 %v205
        %v774 = vunpack.c.l.b16 %v206
        %v775 = vunpack.c.l.b16 %v207
        %v776 = vunpack.c.l.b16 %v208
        %v777 = vunpack.c.l.b16 %v209
        %v778 = vunpack.c.l.b16 %v210
        %v779 = vunpack.c.l.b16 %v211
        %v780 = vunpack.c.l.b16 %v212
        %v781 = vunpack.c.l.b16 %v213
        %v782 = vunpack.c.l.b16 %v214
        %v783 = vunpack.c.l.b16 %v215
        %v784 = vunpack.c.l.b16 %v216
        %v785 = vunpack.c.l.b16 %v217
        %v786 = vunpack.c.l.b16 %v218
        %v787 = vunpack.c.l.b16 %v219
        %v788 = vunpack.c.l.b16 %v220
        %v789 = vunpack.c.l.b16 %v221
        %v790 = vunpack.c.l.b16 %v222
        %v791 = vunpack.c.l.b16 %v223
        %v792 = vunpack.c.l.b16 %v224
        %v793 = vunpack.c.l.b16 %v225
        %v794 = vunpack.c.l.b16 %v226
        %v795 = vunpack.c.l.b16 %v227
        %v796 = vunpack.c.l.b16 %v228
        %v797 = vunpack.c.l.b16 %v229
        %v798 = vunpack.c.l.b16 %v230
        %v799 = vunpack.c.l.b16 %v231
        %v800 = vunpack.c.l.b16 %v232
        %v801 = vunpack.c.l.b16 %v233
        %v802 = vunpack.c.l.b16 %v234
        %v803 = vunpack.c.l.b16 %v235
        %v804 = vunpack.c.l.b16 %v236
        %v805 = vunpack.c.l.b16 %v237
        %v806 = vunpack.c.l.b16 %v238
        %v807 = vunpack.c.l.b16 %v239
        %v808 = vunpack.c.l.b16 %v240
        %v809 = vunpack.c.l.b16 %v241
        %v810 = vunpack.c.l.b16 %v242
        %v811 = vunpack.c.l.b16 %v243
        %v812 = vunpack.c.l.b16 %v244
        %v813 = vunpack.c.l.b16 %v245
        %v814 = vunpack.c.l.b16 %v246
        %v815 = vunpack.c.l.b16 %v247
        %v816 = vunpack.c.l.b16 %v248
        %v817 = vunpack.c.l.b16 %v249
        %v818 = vunpack.c.l.b16 %v250
        %v819 = vunpack.c.l.b16 %v251
        %v820 = vunpack.c.l.b16 %v252
        %v821 = vunpack.c.l.b16 %v253
        %v822 = vunpack.c.l.b16 %v254
        %v823 = vunpack.c.l.b16 %v255
        %v824 = vunpack.c.l.b16 %v256
        %v825 = vunpack.c.l.b16 %v257
        %v826 = vunpack.c.l.b16 %v258
        %v827 = vunpack.c.l.b16 %v259
        %v828 = vunpack.c.l.b16 %v260
        %v829 = vunpack.c.l.b16 %v261
        %v830 = vunpack.c.l.b16 %v262
        %v831 = vunpack.c.l.b16 %v263
        %v832 = vunpack.c.l.b16 %v264
        %v833 = vunpack.c.l.b16 %v265
        %v834 = vunpack.c.l.b16 %v266
        %v835 = vunpack.c.l.b16 %v267
        %v836 = vunpack.c.l.b16 %v268
        %v837 = vunpack.c.l.b16 %v269
        %v838 = vunpack.c.l.b16 %v270
        %v839 = vunpack.c.l.b16 %v271
        %v840 = vunpack.c.l.b16 %v272
        %v841 = vunpack.c.l.b16 %v273
        %v842 = vunpack.c.l.b16 %v274
        %v843 = vunpack.c.l.b16 %v275
        %v844 = vunpack.c.l.b16 %v276
        %v845 = vunpack.c.l.b16 %v277
        %v846 = vunpack.c.l.b16 %v278
        %v847 = vunpack.c.l.b16 %v279
        %v848 = vunpack.c.l.b16 %v280
        %v849 = vunpack.c.l.b16 %v281
        %v850 = vunpack.c.l.b16 %v282
        %v851 = vunpack.c.l.b16 %v283
        %v852 = vunpack.c.l.b16 %v284
        %v853 = vunpack.c.l.b16 %v285
        %v854 = vunpack.c.l.b16 %v286
        %v855 = vunpack.c.l.b16 %v287
        %v856 = vunpack.c.l.b16 %v288
        %v857 = vunpack.c.l.b16 %v289
        %v858 = vunpack.c.l.b16 %v290
        %v859 = vunpack.c.l.b16 %v291
        %v860 = vunpack.c.l.b16 %v292
        %v861 = vunpack.c.l.b16 %v293
        %v862 = vunpack.c.l.b16 %v294
        %v863 = vunpack.c.l.b16 %v295
        %v864 = vunpack.c.l.b16 %v296
        %v865 = vunpack.c.l.b16 %v297
        %v866 = vunpack.c.l.b16 %v298
        %v867 = vunpack.c.l.b16 %v299
        %v868 = vunpack.c.l.b16 %v300
        %v869 = vunpack.c.l.b16 %v301
        %v870 = vunpack.c.l.b16 %v302
        %v871 = vunpack.c.l.b16 %v303
        %v872 = vunpack.c.l.b16 %v304
        %v873 = vunpack.c.l.b16 %v305
        %v874 = vunpack.c.l.b16 %v306
        %v875 = vunpack.c.l.b16 %v307
        %v876 = vunpack.c.l.b16 %v308
        %v877 = vunpack.c.l.b16 %v309
        %v878 = vunpack.c.l.b16 %v310
        %v879 = vunpack.c.l.b16 %v311
        %v880 = vunpack.c.l.b16 %v312
        %v881 = vunpack.c.l.b16 %v313
        %v882 = vunpack.c.l.b16 %v314
        %v883 = vunpack.c.l.b16 %v315
        %v884 = vunpack.c.l.b16 %v316
        %v885 = vunpack.c.l.b16 %v317
        %v886 = vunpack.c.l.b16 %v318
        %v887 = vunpack.c.l.b16 %v319
        %v888 = vunpack.c.l.b16 %v320
        %v889 = vunpack.c.l.b16 %v321
        %v890 = vunpack.c.l.b16 %v322
        %v891 = vunpack.c.l.b16 %v323
        %v892 = vunpack.c.l.b16 %v324
        %v893 = vunpack.c.l.b16 %v325
        %v894 = vunpack.c.l.b16 %v326
        %v895 = vunpack.c.l.b16 %v327
        %v896 = vunpack.c.l.b16 %v328
        %v897 = vunpack.c.l.b16 %v329
        %v898 = vunpack.c.l.b16 %v330
        %v899 = vunpack.c.l.b16 %v331
        %v900 = vunpack.c.l.b16 %v332
        %v901 = vunpack.c.l.b16 %v333
        %v902 = vunpack.c.l.b16 %v334
        %v903 = vunpack.c.l.b16 %v335
        %v904 = vunpack.c.l.b16 %v336
        %v905 = vunpack.c.l.b16 %v337
        %v906 = vunpack.c.l.b16 %v338
        %v907 = vunpack.c.l.b16 %v339
        %v908 = vunpack.c.l.b16 %v340
        %v909 = vunpack.c.l.b16 %v341
        %v910 = vunpack.c.l.b16 %v342
        %v911 = vunpack.c.l.b16 %v343
        %v912 = vunpack.c.l.b16 %v344
        %v913 = vunpack.c.l.b16 %v345
        %v914 = vunpack.c.l.b16 %v346
        %v915 = vunpack.c.l.b16 %v347
        %v916 = vunpack.c.l.b16 %v348
        %v917 = vunpack.c.l.b16 %v349
        %v918 = vunpack.c.l.b16 %v350
        %v919 = vunpack.c.l.b16 %v351
        %v920 = vunpack.c.l.b16 %v352
        %v921 = vunpack.c.l.b16 %v353
        %v922 = vunpack.c.l.b16 %v354
        %v923 = vunpack.c.l.b16 %v355
        %v924 = vunpack.c.l.b16 %v356
        %v925 = vunpack.c.l.b16 %v357
        %v926 = vunpack.c.l.b16 %v358
        %v927 = vunpack.c.l.b16 %v359
        %v928 = vunpack.c.l.b16 %v360
        %v929 = vunpack.c.l.b16 %v361
        %v930 = vunpack.c.l.b16 %v362
        %v931 = vunpack.c.l.b16 %v363
        %v932 = vunpack.c.l.b16 %v364
        %v933 = vunpack.c.l.b16 %v365
        %v934 = vunpack.c.l.b16 %v366
        %v935 = vunpack.c.l.b16 %v367
        %v936 = vunpack.c.l.b16 %v368
        %v937 = vunpack.c.l.b16 %v369
        %v938 = vunpack.c.l.b16 %v370
        %v939 = vunpack.c.l.b16 %v371
        %v940 = vunpack.c.l.b16 %v372
        %v941 = vunpack.c.l.b16 %v373
        %v942 = vunpack.c.l.b16 %v374
        %v943 = vunpack.c.l.b16 %v375
        %v944 = vunpack.c.l.b16 %v376
        %v945 = vunpack.c.l.b16 %v377
        %v946 = vunpack.c.l.b16 %v378
        %v947 = vunpack.c.l.b16 %v379
        %v948 = vunpack.c.l.b16 %v380
        %v949 = vunpack.c.l.b16 %v381
        %v950 = vunpack.c.l.b16 %v382
        %v951 = vunpack.c.l.b16 %v383
        %v952 = vunpack.c.l.b16 %v384
        %v953 = vunpack.c.l.b16 %v385
        %v954 = vunpack.c.l.b16 %v386
        %v955 = vunpack.c.l.b16 %v387
        %v956 = vunpack.c.l.b16 %v388
        %v957 = vunpack.c.l.b16 %v389
        %v958 = vunpack.c.l.b16 %v390
        %v959 = vunpack.c.l.b16 %v391
        %v960 = vunpack.c.l.b16 %v392
        %v961 = vunpack.c.l.b16 %v393
        %v962 = vunpack.c.l.b16 %v394
        %v963 = vunpack.c.l.b16 %v395
        %v964 = vunpack.c.l.b16 %v396
        %v965 = vunpack.c.l.b16 %v397
        %v966 = vunpack.c.l.b16 %v398
        %v967 = vunpack.c.l.b16 %v399
        %v968 = vunpack.c.l.b16 %v400
        %v969 = vunpack.c.l.b16 %v401
        %v970 = vunpack.c.l.b16 %v402
        %v971 = vunpack.c.l.b16 %v403
        %v972 = vunpack.c.l.b16 %v404
        %v973 = vunpack.c.l.b16 %v405
        %v974 = vunpack.c.l.b16 %v406
        %v975 = vunpack.c.l.b16 %v407
        %v976 = vunpack.c.l.b16 %v408
        %v977 = vunpack.c.l.b16 %v409
        %v978 = vunpack.c.l.b16 %v410
        %v979 = vunpack.c.l.b16 %v411
        %v980 = vunpack.c.l.b16 %v412
        %v981 = vunpack.c.l.b16 %v413
        %v982 = vunpack.c.l.b16 %v414
        %v983 = vunpack.c.l.b16 %v415
        %v984 = vunpack.c.l.b16 %v416
        %v985 = vunpack.c.l.b16 %v417
        %v986 = vunpack.c.l.b16 %v418
        %v987 = vunpack.c.l.b16 %v419
        %v988 = vunpack.c.l.b16 %v420
        %v989 = vunpack.c.l.b16 %v421
        %v990 = vunpack.c.l.b16 %v422
        %v991 = vunpack.c.l.b16 %v423
        %v992 = vunpack.c.l.b16 %v424
        %v993 = vunpack.c.l.b16 %v425
        %v994 = vunpack.c.l.b16 %v426
        %v995 = vunpack.c.l.b16 %v427
        %v996 = vunpack.c.l.b16 %v428
        %v997 = vunpack.c.l.b16 %v429
        %v998 = vunpack.c.l.b16 %v430
        %v999 = vunpack.c.l.b16 %v431
        %v1000 = vunpack.c.l.b16 %v432
        %v1001 = vunpack.c.l.b16 %v433
        %v1002 = vunpack.c.l.b16 %v434
        %v1003 = vunpack.c.l.b16 %v435
        %v1004 = vunpack.c.l.b16 %v436
        %v1005 = vunpack.c.l.b16 %v437
        %v1006 = vunpack.c.l.b16 %v438
        %v1007 = vunpack.c.l.b16 %v439
        %v1008 = vunpack.c.l.b16 %v440
        %v1009 = vunpack.c.l.b16 %v441
        %v1010 = vunpack.c.l.b16 %v442
        %v1011 = vunpack.c.l.b16 %v443
        %v1012 = vunpack.c.l.b16 %v444
        %v1013 = vunpack.c.l.b16 %v445
        %v1014 = vunpack.c.l.b16 %v446
        %v1015 = vunpack.c.l.b16 %v447
        %v1016 = vunpack.c.l.b16 %v448
        %v1017 = vunpack.c.l.b16 %v449
        %v1018 = vunpack.c.l.b16 %v450
        %v1019 = vunpack.c.l.b16 %v451
        %v1020 = vunpack.c.l.b16 %v452
        %v1021 = vunpack.c.l.b16 %v453
        %v1022 = vunpack.c.l.b16 %v454
        %v1023 = vunpack.c.l.b16 %v455
        %v1024 = vunpack.c.l.b16 %v456
        %v1025 = vunpack.c.l.b16 %v457
        %v1026 = vunpack.c.l.b16 %v458
        %v1027 = vunpack.c.l.b16 %v459
        %v1028 = vunpack.c.l.b16 %v460
        %v1029 = vunpack.c.l.b16 %v461
        %v1030 = vunpack.c.l.b16 %v462
        %v1031 = vunpack.c.l.b16 %v463
        %v1032 = vunpack.c.l.b16 %v464
        %v1033 = vunpack.c.l.b16 %v465
        %v1034 = vunpack.c.l.b16 %v466
        %v1035 = vunpack.c.l.b16 %v467
        %v1036 = vunpack.c.l.b16 %v468
        %v1037 = vunpack.c.l.b16 %v469
        %v1038 = vunpack.c.l.b16 %v470
        %v1039 = vpack.c.b16 %v762, %v761
        %v1040 = vpack.c.b16 %v764, %v763
        %v1041 = vpack.c.b16 %v766, %v765
        %v1042 = vpack.c.b16 %v768, %v767
        %v1043 = vpack.c.b16 %v770, %v769
        %v1044 = vpack.c.b16 %v772, %v771
        %v1045 = vpack.c.b16 %v774, %v773
        %v1046 = vpack.c.b16 %v776, %v775
        %v1047 = vpack.c.b16 %v778, %v777
        %v1048 = vpack.c.b16 %v780, %v779
        %v1049 = vpack.c.b16 %v782, %v781
        %v1050 = vpack.c.b16 %v784, %v783
        %v1051 = vpack.c.b16 %v786, %v785
        %v1052 = vpack.c.b16 %v788, %v787
        %v1053 = vpack.c.b16 %v790, %v789
        %v1054 = vpack.c.b16 %v792, %v791
        %v1055 = vpack.c.b16 %v794, %v793
        %v1056 = vpack.c.b16 %v796, %v795
        %v1057 = vpack.c.b16 %v798, %v797
        %v1058 = vpack.c.b16 %v800, %v799
        %v1059 = vpack.c.b16 %v802, %v801
        %v1060 = vpack.c.b16 %v804, %v803
        %v1061 = vpack.c.b16 %v806, %v805
        %v1062 = vpack.c.b16 %v808, %v807
        %v1063 = vpack.c.b16 %v810, %v809
        %v1064 = vpack.c.b16 %v812, %v811
        %v1065 = vpack.c.b16 %v814, %v813
        %v1066 = vpack.c.b16 %v816, %v815
        %v1067 = vpack.c.b16 %v818, %v817
        %v1068 = vpack.c.b16 %v820, %v819
        %v1069 = vpack.c.b16 %v822, %v821
        %v1070 = vpack.c.b16 %v824, %v823
        %v1071 = vpack.c.b16 %v826, %v825
        %v1072 = vpack.c.b16 %v828, %v827
        %v1073 = vpack.c.b16 %v830, %v829
        %v1074 = vpack.c.b16 %v832, %v831
        %v1075 = vpack.c.b16 %v834, %v833
        %v1076 = vpack.c.b16 %v836, %v835
        %v1077 = vpack.c.b16 %v838, %v837
        %v1078 = vpack.c.b16 %v840, %v839
        %v1079 = vpack.c.b16 %v842, %v841
        %v1080 = vpack.c.b16 %v844, %v843
        %v1081 = vpack.c.b16 %v846, %v845
        %v1082 = vpack.c.b16 %v848, %v847
        %v1083 = vpack.c.b16 %v850, %v849
        %v1084 = vpack.c.b16 %v852, %v851
        %v1085 = vpack.c.b16 %v854, %v853
        %v1086 = vpack.c.b16 %v856, %v855
        %v1087 = vpack.c.b16 %v858, %v857
        %v1088 = vpack.c.b16 %v860, %v859
        %v1089 = vpack.c.b16 %v862, %v861
        %v1090 = vpack.c.b16 %v864, %v863
        %v1091 = vpack.c.b16 %v866, %v865
        %v1092 = vpack.c.b16 %v868, %v867
        %v1093 = vpack.c.b16 %v870, %v869
        %v1094 = vpack.c.b16 %v872, %v871
        %v1095 = vpack.c.b16 %v874, %v873
        %v1096 = vpack.c.b16 %v876, %v875
        %v1097 = vpack.c.b16 %v878, %v877
        %v1098 = vpack.c.b16 %v880, %v879
        %v1099 = vpack.c.b16 %v882, %v881
        %v1100 = vpack.c.b16 %v884, %v883
        %v1101 = vpack.c.b16 %v886, %v885
        %v1102 = vpack.c.b16 %v888, %v887
        %v1103 = vpack.c.b16 %v890, %v889
        %v1104 = vpack.c.b16 %v892, %v891
        %v1105 = vpack.c.b16 %v894, %v893
        %v1106 = vpack.c.b16 %v896, %v895
        %v1107 = vpack.c.b16 %v898, %v897
        %v1108 = vpack.c.b16 %v900, %v899
        %v1109 = vpack.c.b16 %v902, %v901
        %v1110 = vpack.c.b16 %v904, %v903
        %v1111 = vpack.c.b16 %v906, %v905
        %v1112 = vpack.c.b16 %v908, %v907
        %v1113 = vpack.c.b16 %v910, %v909
        %v1114 = vpack.c.b16 %v912, %v911
        %v1115 = vpack.c.b16 %v914, %v913
        %v1116 = vpack.c.b16 %v916, %v915
        %v1117 = vpack.c.b16 %v918, %v917
        %v1118 = vpack.c.b16 %v920, %v919
        %v1119 = vpack.c.b16 %v922, %v921
        %v1120 = vpack.c.b16 %v924, %v923
        %v1121 = vpack.c.b16 %v926, %v925
        %v1122 = vpack.c.b16 %v928, %v927
        %v1123 = vpack.c.b16 %v930, %v929
        %v1124 = vpack.c.b16 %v932, %v931
        %v1125 = vpack.c.b16 %v934, %v933
        %v1126 = vpack.c.b16 %v936, %v935
        %v1127 = vpack.c.b16 %v938, %v937
        %v1128 = vpack.c.b16 %v940, %v939
        %v1129 = vpack.c.b16 %v942, %v941
        %v1130 = vpack.c.b16 %v944, %v943
        %v1131 = vpack.c.b16 %v946, %v945
        %v1132 = vpack.c.b16 %v948, %v947
        %v1133 = vpack.c.b16 %v950, %v949
        %v1134 = vpack.c.b16 %v952, %v951
        %v1135 = vpack.c.b16 %v954, %v953
        %v1136 = vpack.c.b16 %v956, %v955
        %v1137 = vpack.c.b16 %v958, %v957
        %v1138 = vpack.c.b16 %v960, %v959
        %v1139 = vpack.c.b16 %v962, %v961
        %v1140 = vpack.c.b16 %v964, %v963
        %v1141 = vpack.c.b16 %v966, %v965
        %v1142 = vpack.c.b16 %v968, %v967
        %v1143 = vpack.c.b16 %v970, %v969
        %v1144 = vpack.c.b16 %v972, %v971
        %v1145 = vpack.c.b16 %v974, %v973
        %v1146 = vpack.c.b16 %v976, %v975
        %v1147 = vpack.c.b16 %v978, %v977
        %v1148 = vpack.c.b16 %v980, %v979
        %v1149 = vpack.c.b16 %v982, %v981
        %v1150 = vpack.c.b16 %v984, %v983
        %v1151 = vpack.c.b16 %v986, %v985
        %v1152 = vpack.c.b16 %v988, %v987
        %v1153 = vpack.c.b16 %v990, %v989
        %v1154 = vpack.c.b16 %v992, %v991
        %v1155 = vpack.c.b16 %v994, %v993
        %v1156 = vpack.c.b16 %v996, %v995
        %v1157 = vpack.c.b16 %v998, %v997
        %v1158 = vpack.c.b16 %v1000, %v999
        %v1159 = vpack.c.b16 %v1002, %v1001
        %v1160 = vpack.c.b16 %v1004, %v1003
        %v1161 = vpack.c.b16 %v1006, %v1005
        %v1162 = vpack.c.b16 %v1008, %v1007
        %v1163 = vpack.c.b16 %v1010, %v1009
        %v1164 = vpack.c.b16 %v1012, %v1011
        %v1165 = vpack.c.b16 %v1014, %v1013
        %v1166 = vpack.c.b16 %v1016, %v1015
        %v1167 = vpack.c.b16 %v1018, %v1017
        %v1168 = vpack.c.b16 %v1020, %v1019
        %v1169 = vpack.c.b16 %v1022, %v1021
        %v1170 = vpack.c.b16 %v1024, %v1023
        %v1171 = vpack.c.b16 %v1026, %v1025
        %v1172 = vpack.c.b16 %v1028, %v1027
        %v1173 = vpack.c.b16 %v1030, %v1029
        %v1174 = vpack.c.b16 %v1032, %v1031
        %v1175 = vpack.c.b16 %v1034, %v1033
        %v1176 = vpack.c.b16 %v1036, %v1035
        %v1177 = vpack.c.b16 %v1038, %v1037
        %v1186 = vunpack.c.l.b16 %v471
        %v1187 = vunpack.c.l.b16 %v472
        %v1188 = vunpack.c.l.b16 %v473
        %v1189 = vunpack.c.l.b16 %v474
        %v1190 = vunpack.c.l.b16 %v475
        %v1191 = vunpack.c.l.b16 %v476
        %v1192 = vunpack.c.l.b16 %v477
        %v1193 = vunpack.c.l.b16 %v478
        %v1194 = vpack.c.b16 %v1187, %v1186
        %v1195 = vpack.c.b16 %v1189, %v1188
        %v1196 = vpack.c.b16 %v1191, %v1190
        %v1197 = vpack.c.b16 %v1193, %v1192
        %vm1202 = vcmask 523264
        %v1204 = vsel %vm1202, %v1039, 0
        %v1207 = vsel %vm1202, %v1040, 0
        %v1210 = vsel %vm1202, %v1041, 0
        %v1213 = vsel %vm1202, %v1042, 0
        %v1216 = vsel %vm1202, %v1043, 0
        %v1219 = vsel %vm1202, %v1044, 0
        %v1222 = vsel %vm1202, %v1045, 0
        %v1225 = vsel %vm1202, %v1046, 0
        %v1228 = vsel %vm1202, %v1047, 0
        %v1231 = vsel %vm1202, %v1048, 0
        %v1234 = vsel %vm1202, %v1049, 0
        %v1237 = vsel %vm1202, %v1050, 0
        %v1240 = vsel %vm1202, %v1051, 0
        %v1243 = vsel %vm1202, %v1052, 0
        %v1246 = vsel %vm1202, %v1053, 0
        %v1249 = vsel %vm1202, %v1054, 0
        %v1252 = vsel %vm1202, %v1055, 0
        %v1255 = vsel %vm1202, %v1056, 0
        %v1258 = vsel %vm1202, %v1057, 0
        %v1261 = vsel %vm1202, %v1058, 0
        %v1264 = vsel %vm1202, %v1059, 0
        %v1267 = vsel %vm1202, %v1060, 0
        %v1270 = vsel %vm1202, %v1061, 0
        %v1273 = vsel %vm1202, %v1062, 0
        %v1276 = vsel %vm1202, %v1063, 0
        %v1279 = vsel %vm1202, %v1064, 0
        %v1282 = vsel %vm1202, %v1065, 0
        %v1285 = vsel %vm1202, %v1066, 0
        %v1288 = vsel %vm1202, %v1067, 0
        %v1291 = vsel %vm1202, %v1068, 0
        %v1294 = vsel %vm1202, %v1069, 0
        %v1297 = vsel %vm1202, %v1070, 0
        %v1300 = vsel %vm1202, %v1071, 0
        %v1303 = vsel %vm1202, %v1072, 0
        %v1306 = vsel %vm1202, %v1073, 0
        %v1309 = vsel %vm1202, %v1074, 0
        %v1312 = vsel %vm1202, %v1075, 0
        %v1315 = vsel %vm1202, %v1076, 0
        %v1318 = vsel %vm1202, %v1077, 0
        %v1321 = vsel %vm1202, %v1078, 0
        %v1324 = vsel %vm1202, %v1079, 0
        %v1327 = vsel %vm1202, %v1080, 0
        %v1330 = vsel %vm1202, %v1081, 0
        %v1333 = vsel %vm1202, %v1082, 0
        %v1336 = vsel %vm1202, %v1083, 0
        %v1339 = vsel %vm1202, %v1084, 0
        %v1342 = vsel %vm1202, %v1085, 0
        %v1345 = vsel %vm1202, %v1086, 0
        %v1348 = vsel %vm1202, %v1087, 0
        %v1351 = vsel %vm1202, %v1088, 0
        %v1354 = vsel %vm1202, %v1089, 0
        %v1357 = vsel %vm1202, %v1090, 0
        %v1360 = vsel %vm1202, %v1091, 0
        %v1363 = vsel %vm1202, %v1092, 0
        %v1366 = vsel %vm1202, %v1093, 0
        %v1369 = vsel %vm1202, %v1094, 0
        %v1372 = vsel %vm1202, %v1095, 0
        %v1375 = vsel %vm1202, %v1096, 0
        %v1378 = vsel %vm1202, %v1097, 0
        %v1381 = vsel %vm1202, %v1098, 0
        %v1384 = vsel %vm1202, %v1099, 0
        %v1387 = vsel %vm1202, %v1100, 0
        %v1390 = vsel %vm1202, %v1101, 0
        %v1393 = vsel %vm1202, %v1102, 0
        %v1396 = vsel %vm1202, %v1103, 0
        %v1399 = vsel %vm1202, %v1104, 0
        %v1402 = vsel %vm1202, %v1105, 0
        %v1405 = vsel %vm1202, %v1106, 0
        %v1408 = vsel %vm1202, %v1107, 0
        %v1411 = vsel %vm1202, %v1108, 0
        %v1414 = vsel %vm1202, %v1109, 0
        %v1417 = vsel %vm1202, %v1110, 0
        %v1420 = vsel %vm1202, %v1111, 0
        %v1423 = vsel %vm1202, %v1112, 0
        %v1426 = vsel %vm1202, %v1113, 0
        %v1429 = vsel %vm1202, %v1114, 0
        %v1432 = vsel %vm1202, %v1115, 0
        %v1435 = vsel %vm1202, %v1116, 0
        %v1438 = vsel %vm1202, %v1117, 0
        %v1441 = vsel %vm1202, %v1118, 0
        %v1444 = vsel %vm1202, %v1119, 0
        %v1447 = vsel %vm1202, %v1120, 0
        %v1450 = vsel %vm1202, %v1121, 0
        %v1453 = vsel %vm1202, %v1122, 0
        %v1456 = vsel %vm1202, %v1123, 0
        %v1459 = vsel %vm1202, %v1124, 0
        %v1462 = vsel %vm1202, %v1125, 0
        %v1465 = vsel %vm1202, %v1126, 0
        %v1468 = vsel %vm1202, %v1127, 0
        %v1471 = vsel %vm1202, %v1128, 0
        %v1474 = vsel %vm1202, %v1129, 0
        %v1477 = vsel %vm1202, %v1130, 0
        %v1480 = vsel %vm1202, %v1131, 0
        %v1483 = vsel %vm1202, %v1132, 0
        %v1486 = vsel %vm1202, %v1133, 0
        %v1489 = vsel %vm1202, %v1134, 0
        %v1492 = vsel %vm1202, %v1135, 0
        %v1495 = vsel %vm1202, %v1136, 0
        %v1498 = vsel %vm1202, %v1137, 0
        %v1501 = vsel %vm1202, %v1138, 0
        %v1504 = vsel %vm1202, %v1139, 0
        %v1507 = vsel %vm1202, %v1140, 0
        %v1510 = vsel %vm1202, %v1141, 0
        %v1513 = vsel %vm1202, %v1142, 0
        %v1516 = vsel %vm1202, %v1143, 0
        %v1519 = vsel %vm1202, %v1144, 0
        %v1522 = vsel %vm1202, %v1145, 0
        %v1525 = vsel %vm1202, %v1146, 0
        %v1528 = vsel %vm1202, %v1147, 0
        %v1531 = vsel %vm1202, %v1148, 0
        %v1534 = vsel %vm1202, %v1149, 0
        %v1537 = vsel %vm1202, %v1150, 0
        %v1540 = vsel %vm1202, %v1151, 0
        %v1543 = vsel %vm1202, %v1152, 0
        %v1546 = vsel %vm1202, %v1153, 0
        %v1549 = vsel %vm1202, %v1154, 0
        %v1552 = vsel %vm1202, %v1155, 0
        %v1555 = vsel %vm1202, %v1156, 0
        %v1558 = vsel %vm1202, %v1157, 0
        %v1561 = vsel %vm1202, %v1158, 0
        %v1564 = vsel %vm1202, %v1159, 0
        %v1567 = vsel %vm1202, %v1160, 0
        %v1570 = vsel %vm1202, %v1161, 0
        %v1573 = vsel %vm1202, %v1162, 0
        %v1576 = vsel %vm1202, %v1163, 0
        %v1579 = vsel %vm1202, %v1164, 0
        %v1582 = vsel %vm1202, %v1165, 0
        %v1585 = vsel %vm1202, %v1166, 0
        %v1588 = vsel %vm1202, %v1167, 0
        %v1591 = vsel %vm1202, %v1168, 0
        %v1594 = vsel %vm1202, %v1169, 0
        %v1597 = vsel %vm1202, %v1170, 0
        %v1600 = vsel %vm1202, %v1171, 0
        %v1603 = vsel %vm1202, %v1172, 0
        %v1606 = vsel %vm1202, %v1173, 0
        %v1609 = vsel %vm1202, %v1174, 0
        %v1612 = vsel %vm1202, %v1175, 0
        %v1615 = vsel %vm1202, %v1176, 0
        %v1618 = vsel %vm1202, %v1177, 0
        %1620 = vmatpush.bf16.msra.mxu0 0
        %1621 = vmatpush.bf16.msra.mxu0 0
        %1622 = vmatpush.bf16.msra.mxu0 0
        %1623 = vmatpush.bf16.msra.mxu0 0
        %1624 = vmatpush.bf16.msra.mxu0 %v1197
        %1625 = vmatpush.bf16.msra.mxu0 %v1196
        %1626 = vmatpush.bf16.msra.mxu0 %v1195
        %1627 = vmatpush.bf16.msra.mxu0 %v1194
        %1628 = vmatmul.bf16.gmra.mxu0 %v1204
        %v1629 = vpop.f32.mrf.mxu0
        %v1630 = vadd.f32 %v481, %v1629
        %v1631 = vpop.f32.mrf.mxu0
        %v1632 = vadd.f32 %v481, %v1631
        %1633 = vmatmul.bf16.gmra.mxu0 %v1207
        %v1634 = vpop.f32.mrf.mxu0
        %v1635 = vadd.f32 %v481, %v1634
        %v1636 = vpop.f32.mrf.mxu0
        %v1637 = vadd.f32 %v481, %v1636
        %1638 = vmatmul.bf16.gmra.mxu0 %v1210
        %v1639 = vpop.f32.mrf.mxu0
        %v1640 = vadd.f32 %v481, %v1639
        %v1641 = vpop.f32.mrf.mxu0
        %v1642 = vadd.f32 %v481, %v1641
        %1643 = vmatmul.bf16.gmra.mxu0 %v1213
        %v1644 = vpop.f32.mrf.mxu0
        %v1645 = vadd.f32 %v481, %v1644
        %v1646 = vpop.f32.mrf.mxu0
        %v1647 = vadd.f32 %v481, %v1646
        %1648 = vmatmul.bf16.gmra.mxu0 %v1216
        %v1649 = vpop.f32.mrf.mxu0
        %v1650 = vadd.f32 %v481, %v1649
        %v1651 = vpop.f32.mrf.mxu0
        %v1652 = vadd.f32 %v481, %v1651
        %1653 = vmatmul.bf16.gmra.mxu0 %v1219
        %v1654 = vpop.f32.mrf.mxu0
        %v1655 = vadd.f32 %v481, %v1654
        %v1656 = vpop.f32.mrf.mxu0
        %v1657 = vadd.f32 %v481, %v1656
        %1658 = vmatmul.bf16.gmra.mxu0 %v1222
        %v1659 = vpop.f32.mrf.mxu0
        %v1660 = vadd.f32 %v481, %v1659
        %v1661 = vpop.f32.mrf.mxu0
        %v1662 = vadd.f32 %v481, %v1661
        %1663 = vmatmul.bf16.gmra.mxu0 %v1225
        %v1664 = vpop.f32.mrf.mxu0
        %v1665 = vadd.f32 %v481, %v1664
        %v1666 = vpop.f32.mrf.mxu0
        %v1667 = vadd.f32 %v481, %v1666
        %1668 = vmatmul.bf16.gmra.mxu0 %v1228
        %v1669 = vpop.f32.mrf.mxu0
        %v1670 = vadd.f32 %v481, %v1669
        %v1671 = vpop.f32.mrf.mxu0
        %v1672 = vadd.f32 %v481, %v1671
        %1673 = vmatmul.bf16.gmra.mxu0 %v1231
        %v1674 = vpop.f32.mrf.mxu0
        %v1675 = vadd.f32 %v481, %v1674
        %v1676 = vpop.f32.mrf.mxu0
        %v1677 = vadd.f32 %v481, %v1676
        %1678 = vmatmul.bf16.gmra.mxu0 %v1234
        %v1679 = vpop.f32.mrf.mxu0
        %v1680 = vadd.f32 %v481, %v1679
        %v1681 = vpop.f32.mrf.mxu0
        %v1682 = vadd.f32 %v481, %v1681
        %1683 = vmatmul.bf16.gmra.mxu0 %v1237
        %v1684 = vpop.f32.mrf.mxu0
        %v1685 = vadd.f32 %v481, %v1684
        %v1686 = vpop.f32.mrf.mxu0
        %v1687 = vadd.f32 %v481, %v1686
        %1688 = vmatmul.bf16.gmra.mxu0 %v1240
        %v1689 = vpop.f32.mrf.mxu0
        %v1690 = vadd.f32 %v481, %v1689
        %v1691 = vpop.f32.mrf.mxu0
        %v1692 = vadd.f32 %v481, %v1691
        %1693 = vmatmul.bf16.gmra.mxu0 %v1243
        %v1694 = vpop.f32.mrf.mxu0
        %v1695 = vadd.f32 %v481, %v1694
        %v1696 = vpop.f32.mrf.mxu0
        %v1697 = vadd.f32 %v481, %v1696
        %1698 = vmatmul.bf16.gmra.mxu0 %v1246
        %v1699 = vpop.f32.mrf.mxu0
        %v1700 = vadd.f32 %v481, %v1699
        %v1701 = vpop.f32.mrf.mxu0
        %v1702 = vadd.f32 %v481, %v1701
        %1703 = vmatmul.bf16.gmra.mxu0 %v1249
        %v1704 = vpop.f32.mrf.mxu0
        %v1705 = vadd.f32 %v481, %v1704
        %v1706 = vpop.f32.mrf.mxu0
        %v1707 = vadd.f32 %v481, %v1706
        %1708 = vmatmul.bf16.gmra.mxu0 %v1252
        %v1709 = vpop.f32.mrf.mxu0
        %v1710 = vadd.f32 %v481, %v1709
        %v1711 = vpop.f32.mrf.mxu0
        %v1712 = vadd.f32 %v481, %v1711
        %1713 = vmatmul.bf16.gmra.mxu0 %v1255
        %v1714 = vpop.f32.mrf.mxu0
        %v1715 = vadd.f32 %v481, %v1714
        %v1716 = vpop.f32.mrf.mxu0
        %v1717 = vadd.f32 %v481, %v1716
        %1718 = vmatmul.bf16.gmra.mxu0 %v1258
        %v1719 = vpop.f32.mrf.mxu0
        %v1720 = vadd.f32 %v481, %v1719
        %v1721 = vpop.f32.mrf.mxu0
        %v1722 = vadd.f32 %v481, %v1721
        %1723 = vmatmul.bf16.gmra.mxu0 %v1261
        %v1724 = vpop.f32.mrf.mxu0
        %v1725 = vadd.f32 %v481, %v1724
        %v1726 = vpop.f32.mrf.mxu0
        %v1727 = vadd.f32 %v481, %v1726
        %1728 = vmatmul.bf16.gmra.mxu0 %v1264
        %v1729 = vpop.f32.mrf.mxu0
        %v1730 = vadd.f32 %v481, %v1729
        %v1731 = vpop.f32.mrf.mxu0
        %v1732 = vadd.f32 %v481, %v1731
        %1733 = vmatmul.bf16.gmra.mxu0 %v1267
        %v1734 = vpop.f32.mrf.mxu0
        %v1735 = vadd.f32 %v481, %v1734
        %v1736 = vpop.f32.mrf.mxu0
        %v1737 = vadd.f32 %v481, %v1736
        %1738 = vmatmul.bf16.gmra.mxu0 %v1270
        %v1739 = vpop.f32.mrf.mxu0
        %v1740 = vadd.f32 %v481, %v1739
        %v1741 = vpop.f32.mrf.mxu0
        %v1742 = vadd.f32 %v481, %v1741
        %1743 = vmatmul.bf16.gmra.mxu0 %v1273
        %v1744 = vpop.f32.mrf.mxu0
        %v1745 = vadd.f32 %v481, %v1744
        %v1746 = vpop.f32.mrf.mxu0
        %v1747 = vadd.f32 %v481, %v1746
        %1748 = vmatmul.bf16.gmra.mxu0 %v1276
        %v1749 = vpop.f32.mrf.mxu0
        %v1750 = vadd.f32 %v481, %v1749
        %v1751 = vpop.f32.mrf.mxu0
        %v1752 = vadd.f32 %v481, %v1751
        %1753 = vmatmul.bf16.gmra.mxu0 %v1279
        %v1754 = vpop.f32.mrf.mxu0
        %v1755 = vadd.f32 %v481, %v1754
        %v1756 = vpop.f32.mrf.mxu0
        %v1757 = vadd.f32 %v481, %v1756
        %1758 = vmatmul.bf16.gmra.mxu0 %v1282
        %v1759 = vpop.f32.mrf.mxu0
        %v1760 = vadd.f32 %v481, %v1759
        %v1761 = vpop.f32.mrf.mxu0
        %v1762 = vadd.f32 %v481, %v1761
        %1763 = vmatmul.bf16.gmra.mxu0 %v1285
        %v1764 = vpop.f32.mrf.mxu0
        %v1765 = vadd.f32 %v481, %v1764
        %v1766 = vpop.f32.mrf.mxu0
        %v1767 = vadd.f32 %v481, %v1766
        %1768 = vmatmul.bf16.gmra.mxu0 %v1288
        %v1769 = vpop.f32.mrf.mxu0
        %v1770 = vadd.f32 %v481, %v1769
        %v1771 = vpop.f32.mrf.mxu0
        %v1772 = vadd.f32 %v481, %v1771
        %1773 = vmatmul.bf16.gmra.mxu0 %v1291
        %v1774 = vpop.f32.mrf.mxu0
        %v1775 = vadd.f32 %v481, %v1774
        %v1776 = vpop.f32.mrf.mxu0
        %v1777 = vadd.f32 %v481, %v1776
        %1778 = vmatmul.bf16.gmra.mxu0 %v1294
        %v1779 = vpop.f32.mrf.mxu0
        %v1780 = vadd.f32 %v481, %v1779
        %v1781 = vpop.f32.mrf.mxu0
        %v1782 = vadd.f32 %v481, %v1781
        %1783 = vmatmul.bf16.gmra.mxu0 %v1297
        %v1784 = vpop.f32.mrf.mxu0
        %v1785 = vadd.f32 %v481, %v1784
        %v1786 = vpop.f32.mrf.mxu0
        %v1787 = vadd.f32 %v481, %v1786
        %1788 = vmatmul.bf16.gmra.mxu0 %v1300
        %v1789 = vpop.f32.mrf.mxu0
        %v1790 = vadd.f32 %v481, %v1789
        %v1791 = vpop.f32.mrf.mxu0
        %v1792 = vadd.f32 %v481, %v1791
        %1793 = vmatmul.bf16.gmra.mxu0 %v1303
        %v1794 = vpop.f32.mrf.mxu0
        %v1795 = vadd.f32 %v481, %v1794
        %v1796 = vpop.f32.mrf.mxu0
        %v1797 = vadd.f32 %v481, %v1796
        %1798 = vmatmul.bf16.gmra.mxu0 %v1306
        %v1799 = vpop.f32.mrf.mxu0
        %v1800 = vadd.f32 %v481, %v1799
        %v1801 = vpop.f32.mrf.mxu0
        %v1802 = vadd.f32 %v481, %v1801
        %1803 = vmatmul.bf16.gmra.mxu0 %v1309
        %v1804 = vpop.f32.mrf.mxu0
        %v1805 = vadd.f32 %v481, %v1804
        %v1806 = vpop.f32.mrf.mxu0
        %v1807 = vadd.f32 %v481, %v1806
        %1808 = vmatmul.bf16.gmra.mxu0 %v1312
        %v1809 = vpop.f32.mrf.mxu0
        %v1810 = vadd.f32 %v481, %v1809
        %v1811 = vpop.f32.mrf.mxu0
        %v1812 = vadd.f32 %v481, %v1811
        %1813 = vmatmul.bf16.gmra.mxu0 %v1315
        %v1814 = vpop.f32.mrf.mxu0
        %v1815 = vadd.f32 %v481, %v1814
        %v1816 = vpop.f32.mrf.mxu0
        %v1817 = vadd.f32 %v481, %v1816
        %1818 = vmatmul.bf16.gmra.mxu0 %v1318
        %v1819 = vpop.f32.mrf.mxu0
        %v1820 = vadd.f32 %v481, %v1819
        %v1821 = vpop.f32.mrf.mxu0
        %v1822 = vadd.f32 %v481, %v1821
        %1823 = vmatmul.bf16.gmra.mxu0 %v1321
        %v1824 = vpop.f32.mrf.mxu0
        %v1825 = vadd.f32 %v481, %v1824
        %v1826 = vpop.f32.mrf.mxu0
        %v1827 = vadd.f32 %v481, %v1826
        %1828 = vmatmul.bf16.gmra.mxu0 %v1324
        %v1829 = vpop.f32.mrf.mxu0
        %v1830 = vadd.f32 %v481, %v1829
        %v1831 = vpop.f32.mrf.mxu0
        %v1832 = vadd.f32 %v481, %v1831
        %1833 = vmatmul.bf16.gmra.mxu0 %v1327
        %v1834 = vpop.f32.mrf.mxu0
        %v1835 = vadd.f32 %v481, %v1834
        %v1836 = vpop.f32.mrf.mxu0
        %v1837 = vadd.f32 %v481, %v1836
        %1838 = vmatmul.bf16.gmra.mxu0 %v1330
        %v1839 = vpop.f32.mrf.mxu0
        %v1840 = vadd.f32 %v481, %v1839
        %v1841 = vpop.f32.mrf.mxu0
        %v1842 = vadd.f32 %v481, %v1841
        %1843 = vmatmul.bf16.gmra.mxu0 %v1333
        %v1844 = vpop.f32.mrf.mxu0
        %v1845 = vadd.f32 %v481, %v1844
        %v1846 = vpop.f32.mrf.mxu0
        %v1847 = vadd.f32 %v481, %v1846
        %1848 = vmatmul.bf16.gmra.mxu0 %v1336
        %v1849 = vpop.f32.mrf.mxu0
        %v1850 = vadd.f32 %v481, %v1849
        %v1851 = vpop.f32.mrf.mxu0
        %v1852 = vadd.f32 %v481, %v1851
        %1853 = vmatmul.bf16.gmra.mxu0 %v1339
        %v1854 = vpop.f32.mrf.mxu0
        %v1855 = vadd.f32 %v481, %v1854
        %v1856 = vpop.f32.mrf.mxu0
        %v1857 = vadd.f32 %v481, %v1856
        %1858 = vmatmul.bf16.gmra.mxu0 %v1342
        %v1859 = vpop.f32.mrf.mxu0
        %v1860 = vadd.f32 %v481, %v1859
        %v1861 = vpop.f32.mrf.mxu0
        %v1862 = vadd.f32 %v481, %v1861
        %1863 = vmatmul.bf16.gmra.mxu0 %v1345
        %v1864 = vpop.f32.mrf.mxu0
        %v1865 = vadd.f32 %v481, %v1864
        %v1866 = vpop.f32.mrf.mxu0
        %v1867 = vadd.f32 %v481, %v1866
        %1868 = vmatmul.bf16.gmra.mxu0 %v1348
        %v1869 = vpop.f32.mrf.mxu0
        %v1870 = vadd.f32 %v481, %v1869
        %v1871 = vpop.f32.mrf.mxu0
        %v1872 = vadd.f32 %v481, %v1871
        %1873 = vmatmul.bf16.gmra.mxu0 %v1351
        %v1874 = vpop.f32.mrf.mxu0
        %v1875 = vadd.f32 %v481, %v1874
        %v1876 = vpop.f32.mrf.mxu0
        %v1877 = vadd.f32 %v481, %v1876
        %1878 = vmatmul.bf16.gmra.mxu0 %v1354
        %v1879 = vpop.f32.mrf.mxu0
        %v1880 = vadd.f32 %v481, %v1879
        %v1881 = vpop.f32.mrf.mxu0
        %v1882 = vadd.f32 %v481, %v1881
        %1883 = vmatmul.bf16.gmra.mxu0 %v1357
        %v1884 = vpop.f32.mrf.mxu0
        %v1885 = vadd.f32 %v481, %v1884
        %v1886 = vpop.f32.mrf.mxu0
        %v1887 = vadd.f32 %v481, %v1886
        %1888 = vmatmul.bf16.gmra.mxu0 %v1360
        %v1889 = vpop.f32.mrf.mxu0
        %v1890 = vadd.f32 %v481, %v1889
        %v1891 = vpop.f32.mrf.mxu0
        %v1892 = vadd.f32 %v481, %v1891
        %1893 = vmatmul.bf16.gmra.mxu0 %v1363
        %v1894 = vpop.f32.mrf.mxu0
        %v1895 = vadd.f32 %v481, %v1894
        %v1896 = vpop.f32.mrf.mxu0
        %v1897 = vadd.f32 %v481, %v1896
        %1898 = vmatmul.bf16.gmra.mxu0 %v1366
        %v1899 = vpop.f32.mrf.mxu0
        %v1900 = vadd.f32 %v481, %v1899
        %v1901 = vpop.f32.mrf.mxu0
        %v1902 = vadd.f32 %v481, %v1901
        %1903 = vmatmul.bf16.gmra.mxu0 %v1369
        %v1904 = vpop.f32.mrf.mxu0
        %v1905 = vadd.f32 %v481, %v1904
        %v1906 = vpop.f32.mrf.mxu0
        %v1907 = vadd.f32 %v481, %v1906
        %1908 = vmatmul.bf16.gmra.mxu0 %v1372
        %v1909 = vpop.f32.mrf.mxu0
        %v1910 = vadd.f32 %v481, %v1909
        %v1911 = vpop.f32.mrf.mxu0
        %v1912 = vadd.f32 %v481, %v1911
        %1913 = vmatmul.bf16.gmra.mxu0 %v1375
        %v1914 = vpop.f32.mrf.mxu0
        %v1915 = vadd.f32 %v481, %v1914
        %v1916 = vpop.f32.mrf.mxu0
        %v1917 = vadd.f32 %v481, %v1916
        %1918 = vmatmul.bf16.gmra.mxu0 %v1378
        %v1919 = vpop.f32.mrf.mxu0
        %v1920 = vadd.f32 %v481, %v1919
        %v1921 = vpop.f32.mrf.mxu0
        %v1922 = vadd.f32 %v481, %v1921
        %1923 = vmatmul.bf16.gmra.mxu0 %v1381
        %v1924 = vpop.f32.mrf.mxu0
        %v1925 = vadd.f32 %v481, %v1924
        %v1926 = vpop.f32.mrf.mxu0
        %v1927 = vadd.f32 %v481, %v1926
        %1928 = vmatmul.bf16.gmra.mxu0 %v1384
        %v1929 = vpop.f32.mrf.mxu0
        %v1930 = vadd.f32 %v481, %v1929
        %v1931 = vpop.f32.mrf.mxu0
        %v1932 = vadd.f32 %v481, %v1931
        %1933 = vmatmul.bf16.gmra.mxu0 %v1387
        %v1934 = vpop.f32.mrf.mxu0
        %v1935 = vadd.f32 %v481, %v1934
        %v1936 = vpop.f32.mrf.mxu0
        %v1937 = vadd.f32 %v481, %v1936
        %1938 = vmatmul.bf16.gmra.mxu0 %v1390
        %v1939 = vpop.f32.mrf.mxu0
        %v1940 = vadd.f32 %v481, %v1939
        %v1941 = vpop.f32.mrf.mxu0
        %v1942 = vadd.f32 %v481, %v1941
        %1943 = vmatmul.bf16.gmra.mxu0 %v1393
        %v1944 = vpop.f32.mrf.mxu0
        %v1945 = vadd.f32 %v481, %v1944
        %v1946 = vpop.f32.mrf.mxu0
        %v1947 = vadd.f32 %v481, %v1946
        %1948 = vmatmul.bf16.gmra.mxu0 %v1396
        %v1949 = vpop.f32.mrf.mxu0
        %v1950 = vadd.f32 %v481, %v1949
        %v1951 = vpop.f32.mrf.mxu0
        %v1952 = vadd.f32 %v481, %v1951
        %1953 = vmatmul.bf16.gmra.mxu0 %v1399
        %v1954 = vpop.f32.mrf.mxu0
        %v1955 = vadd.f32 %v481, %v1954
        %v1956 = vpop.f32.mrf.mxu0
        %v1957 = vadd.f32 %v481, %v1956
        %1958 = vmatmul.bf16.gmra.mxu0 %v1402
        %v1959 = vpop.f32.mrf.mxu0
        %v1960 = vadd.f32 %v481, %v1959
        %v1961 = vpop.f32.mrf.mxu0
        %v1962 = vadd.f32 %v481, %v1961
        %1963 = vmatmul.bf16.gmra.mxu0 %v1405
        %v1964 = vpop.f32.mrf.mxu0
        %v1965 = vadd.f32 %v481, %v1964
        %v1966 = vpop.f32.mrf.mxu0
        %v1967 = vadd.f32 %v481, %v1966
        %1968 = vmatmul.bf16.gmra.mxu0 %v1408
        %v1969 = vpop.f32.mrf.mxu0
        %v1970 = vadd.f32 %v481, %v1969
        %v1971 = vpop.f32.mrf.mxu0
        %v1972 = vadd.f32 %v481, %v1971
        %1973 = vmatmul.bf16.gmra.mxu0 %v1411
        %v1974 = vpop.f32.mrf.mxu0
        %v1975 = vadd.f32 %v481, %v1974
        %v1976 = vpop.f32.mrf.mxu0
        %v1977 = vadd.f32 %v481, %v1976
        %1978 = vmatmul.bf16.gmra.mxu0 %v1414
        %v1979 = vpop.f32.mrf.mxu0
        %v1980 = vadd.f32 %v481, %v1979
        %v1981 = vpop.f32.mrf.mxu0
        %v1982 = vadd.f32 %v481, %v1981
        %1983 = vmatmul.bf16.gmra.mxu0 %v1417
        %v1984 = vpop.f32.mrf.mxu0
        %v1985 = vadd.f32 %v481, %v1984
        %v1986 = vpop.f32.mrf.mxu0
        %v1987 = vadd.f32 %v481, %v1986
        %1988 = vmatmul.bf16.gmra.mxu0 %v1420
        %v1989 = vpop.f32.mrf.mxu0
        %v1990 = vadd.f32 %v481, %v1989
        %v1991 = vpop.f32.mrf.mxu0
        %v1992 = vadd.f32 %v481, %v1991
        %1993 = vmatmul.bf16.gmra.mxu0 %v1423
        %v1994 = vpop.f32.mrf.mxu0
        %v1995 = vadd.f32 %v481, %v1994
        %v1996 = vpop.f32.mrf.mxu0
        %v1997 = vadd.f32 %v481, %v1996
        %1998 = vmatmul.bf16.gmra.mxu0 %v1426
        %v1999 = vpop.f32.mrf.mxu0
        %v2000 = vadd.f32 %v481, %v1999
        %v2001 = vpop.f32.mrf.mxu0
        %v2002 = vadd.f32 %v481, %v2001
        %2003 = vmatmul.bf16.gmra.mxu0 %v1429
        %v2004 = vpop.f32.mrf.mxu0
        %v2005 = vadd.f32 %v481, %v2004
        %v2006 = vpop.f32.mrf.mxu0
        %v2007 = vadd.f32 %v481, %v2006
        %2008 = vmatmul.bf16.gmra.mxu0 %v1432
        %v2009 = vpop.f32.mrf.mxu0
        %v2010 = vadd.f32 %v481, %v2009
        %v2011 = vpop.f32.mrf.mxu0
        %v2012 = vadd.f32 %v481, %v2011
        %2013 = vmatmul.bf16.gmra.mxu0 %v1435
        %v2014 = vpop.f32.mrf.mxu0
        %v2015 = vadd.f32 %v481, %v2014
        %v2016 = vpop.f32.mrf.mxu0
        %v2017 = vadd.f32 %v481, %v2016
        %2018 = vmatmul.bf16.gmra.mxu0 %v1438
        %v2019 = vpop.f32.mrf.mxu0
        %v2020 = vadd.f32 %v481, %v2019
        %v2021 = vpop.f32.mrf.mxu0
        %v2022 = vadd.f32 %v481, %v2021
        %2023 = vmatmul.bf16.gmra.mxu0 %v1441
        %v2024 = vpop.f32.mrf.mxu0
        %v2025 = vadd.f32 %v481, %v2024
        %v2026 = vpop.f32.mrf.mxu0
        %v2027 = vadd.f32 %v481, %v2026
        %2028 = vmatmul.bf16.gmra.mxu0 %v1444
        %v2029 = vpop.f32.mrf.mxu0
        %v2030 = vadd.f32 %v481, %v2029
        %v2031 = vpop.f32.mrf.mxu0
        %v2032 = vadd.f32 %v481, %v2031
        %2033 = vmatmul.bf16.gmra.mxu0 %v1447
        %v2034 = vpop.f32.mrf.mxu0
        %v2035 = vadd.f32 %v481, %v2034
        %v2036 = vpop.f32.mrf.mxu0
        %v2037 = vadd.f32 %v481, %v2036
        %2038 = vmatmul.bf16.gmra.mxu0 %v1450
        %v2039 = vpop.f32.mrf.mxu0
        %v2040 = vadd.f32 %v481, %v2039
        %v2041 = vpop.f32.mrf.mxu0
        %v2042 = vadd.f32 %v481, %v2041
        %2043 = vmatmul.bf16.gmra.mxu0 %v1453
        %v2044 = vpop.f32.mrf.mxu0
        %v2045 = vadd.f32 %v481, %v2044
        %v2046 = vpop.f32.mrf.mxu0
        %v2047 = vadd.f32 %v481, %v2046
        %2048 = vmatmul.bf16.gmra.mxu0 %v1456
        %v2049 = vpop.f32.mrf.mxu0
        %v2050 = vadd.f32 %v481, %v2049
        %v2051 = vpop.f32.mrf.mxu0
        %v2052 = vadd.f32 %v481, %v2051
        %2053 = vmatmul.bf16.gmra.mxu0 %v1459
        %v2054 = vpop.f32.mrf.mxu0
        %v2055 = vadd.f32 %v481, %v2054
        %v2056 = vpop.f32.mrf.mxu0
        %v2057 = vadd.f32 %v481, %v2056
        %2058 = vmatmul.bf16.gmra.mxu0 %v1462
        %v2059 = vpop.f32.mrf.mxu0
        %v2060 = vadd.f32 %v481, %v2059
        %v2061 = vpop.f32.mrf.mxu0
        %v2062 = vadd.f32 %v481, %v2061
        %2063 = vmatmul.bf16.gmra.mxu0 %v1465
        %v2064 = vpop.f32.mrf.mxu0
        %v2065 = vadd.f32 %v481, %v2064
        %v2066 = vpop.f32.mrf.mxu0
        %v2067 = vadd.f32 %v481, %v2066
        %2068 = vmatmul.bf16.gmra.mxu0 %v1468
        %v2069 = vpop.f32.mrf.mxu0
        %v2070 = vadd.f32 %v481, %v2069
        %v2071 = vpop.f32.mrf.mxu0
        %v2072 = vadd.f32 %v481, %v2071
        %2073 = vmatmul.bf16.gmra.mxu0 %v1471
        %v2074 = vpop.f32.mrf.mxu0
        %v2075 = vadd.f32 %v481, %v2074
        %v2076 = vpop.f32.mrf.mxu0
        %v2077 = vadd.f32 %v481, %v2076
        %2078 = vmatmul.bf16.gmra.mxu0 %v1474
        %v2079 = vpop.f32.mrf.mxu0
        %v2080 = vadd.f32 %v481, %v2079
        %v2081 = vpop.f32.mrf.mxu0
        %v2082 = vadd.f32 %v481, %v2081
        %2083 = vmatmul.bf16.gmra.mxu0 %v1477
        %v2084 = vpop.f32.mrf.mxu0
        %v2085 = vadd.f32 %v481, %v2084
        %v2086 = vpop.f32.mrf.mxu0
        %v2087 = vadd.f32 %v481, %v2086
        %2088 = vmatmul.bf16.gmra.mxu0 %v1480
        %v2089 = vpop.f32.mrf.mxu0
        %v2090 = vadd.f32 %v481, %v2089
        %v2091 = vpop.f32.mrf.mxu0
        %v2092 = vadd.f32 %v481, %v2091
        %2093 = vmatmul.bf16.gmra.mxu0 %v1483
        %v2094 = vpop.f32.mrf.mxu0
        %v2095 = vadd.f32 %v481, %v2094
        %v2096 = vpop.f32.mrf.mxu0
        %v2097 = vadd.f32 %v481, %v2096
        %2098 = vmatmul.bf16.gmra.mxu0 %v1486
        %v2099 = vpop.f32.mrf.mxu0
        %v2100 = vadd.f32 %v481, %v2099
        %v2101 = vpop.f32.mrf.mxu0
        %v2102 = vadd.f32 %v481, %v2101
        %2103 = vmatmul.bf16.gmra.mxu0 %v1489
        %v2104 = vpop.f32.mrf.mxu0
        %v2105 = vadd.f32 %v481, %v2104
        %v2106 = vpop.f32.mrf.mxu0
        %v2107 = vadd.f32 %v481, %v2106
        %2108 = vmatmul.bf16.gmra.mxu0 %v1492
        %v2109 = vpop.f32.mrf.mxu0
        %v2110 = vadd.f32 %v481, %v2109
        %v2111 = vpop.f32.mrf.mxu0
        %v2112 = vadd.f32 %v481, %v2111
        %2113 = vmatmul.bf16.gmra.mxu0 %v1495
        %v2114 = vpop.f32.mrf.mxu0
        %v2115 = vadd.f32 %v481, %v2114
        %v2116 = vpop.f32.mrf.mxu0
        %v2117 = vadd.f32 %v481, %v2116
        %2118 = vmatmul.bf16.gmra.mxu0 %v1498
        %v2119 = vpop.f32.mrf.mxu0
        %v2120 = vadd.f32 %v481, %v2119
        %v2121 = vpop.f32.mrf.mxu0
        %v2122 = vadd.f32 %v481, %v2121
        %2123 = vmatmul.bf16.gmra.mxu0 %v1501
        %v2124 = vpop.f32.mrf.mxu0
        %v2125 = vadd.f32 %v481, %v2124
        %v2126 = vpop.f32.mrf.mxu0
        %v2127 = vadd.f32 %v481, %v2126
        %2128 = vmatmul.bf16.gmra.mxu0 %v1504
        %v2129 = vpop.f32.mrf.mxu0
        %v2130 = vadd.f32 %v481, %v2129
        %v2131 = vpop.f32.mrf.mxu0
        %v2132 = vadd.f32 %v481, %v2131
        %2133 = vmatmul.bf16.gmra.mxu0 %v1507
        %v2134 = vpop.f32.mrf.mxu0
        %v2135 = vadd.f32 %v481, %v2134
        %v2136 = vpop.f32.mrf.mxu0
        %v2137 = vadd.f32 %v481, %v2136
        %2138 = vmatmul.bf16.gmra.mxu0 %v1510
        %v2139 = vpop.f32.mrf.mxu0
        %v2140 = vadd.f32 %v481, %v2139
        %v2141 = vpop.f32.mrf.mxu0
        %v2142 = vadd.f32 %v481, %v2141
        %2143 = vmatmul.bf16.gmra.mxu0 %v1513
        %v2144 = vpop.f32.mrf.mxu0
        %v2145 = vadd.f32 %v481, %v2144
        %v2146 = vpop.f32.mrf.mxu0
        %v2147 = vadd.f32 %v481, %v2146
        %2148 = vmatmul.bf16.gmra.mxu0 %v1516
        %v2149 = vpop.f32.mrf.mxu0
        %v2150 = vadd.f32 %v481, %v2149
        %v2151 = vpop.f32.mrf.mxu0
        %v2152 = vadd.f32 %v481, %v2151
        %2153 = vmatmul.bf16.gmra.mxu0 %v1519
        %v2154 = vpop.f32.mrf.mxu0
        %v2155 = vadd.f32 %v481, %v2154
        %v2156 = vpop.f32.mrf.mxu0
        %v2157 = vadd.f32 %v481, %v2156
        %2158 = vmatmul.bf16.gmra.mxu0 %v1522
        %v2159 = vpop.f32.mrf.mxu0
        %v2160 = vadd.f32 %v481, %v2159
        %v2161 = vpop.f32.mrf.mxu0
        %v2162 = vadd.f32 %v481, %v2161
        %2163 = vmatmul.bf16.gmra.mxu0 %v1525
        %v2164 = vpop.f32.mrf.mxu0
        %v2165 = vadd.f32 %v481, %v2164
        %v2166 = vpop.f32.mrf.mxu0
        %v2167 = vadd.f32 %v481, %v2166
        %2168 = vmatmul.bf16.gmra.mxu0 %v1528
        %v2169 = vpop.f32.mrf.mxu0
        %v2170 = vadd.f32 %v481, %v2169
        %v2171 = vpop.f32.mrf.mxu0
        %v2172 = vadd.f32 %v481, %v2171
        %2173 = vmatmul.bf16.gmra.mxu0 %v1531
        %v2174 = vpop.f32.mrf.mxu0
        %v2175 = vadd.f32 %v481, %v2174
        %v2176 = vpop.f32.mrf.mxu0
        %v2177 = vadd.f32 %v481, %v2176
        %2178 = vmatmul.bf16.gmra.mxu0 %v1534
        %v2179 = vpop.f32.mrf.mxu0
        %v2180 = vadd.f32 %v481, %v2179
        %v2181 = vpop.f32.mrf.mxu0
        %v2182 = vadd.f32 %v481, %v2181
        %2183 = vmatmul.bf16.gmra.mxu0 %v1537
        %v2184 = vpop.f32.mrf.mxu0
        %v2185 = vadd.f32 %v481, %v2184
        %v2186 = vpop.f32.mrf.mxu0
        %v2187 = vadd.f32 %v481, %v2186
        %2188 = vmatmul.bf16.gmra.mxu0 %v1540
        %v2189 = vpop.f32.mrf.mxu0
        %v2190 = vadd.f32 %v481, %v2189
        %v2191 = vpop.f32.mrf.mxu0
        %v2192 = vadd.f32 %v481, %v2191
        %2193 = vmatmul.bf16.gmra.mxu0 %v1543
        %v2194 = vpop.f32.mrf.mxu0
        %v2195 = vadd.f32 %v481, %v2194
        %v2196 = vpop.f32.mrf.mxu0
        %v2197 = vadd.f32 %v481, %v2196
        %2198 = vmatmul.bf16.gmra.mxu0 %v1546
        %v2199 = vpop.f32.mrf.mxu0
        %v2200 = vadd.f32 %v481, %v2199
        %v2201 = vpop.f32.mrf.mxu0
        %v2202 = vadd.f32 %v481, %v2201
        %2203 = vmatmul.bf16.gmra.mxu0 %v1549
        %v2204 = vpop.f32.mrf.mxu0
        %v2205 = vadd.f32 %v481, %v2204
        %v2206 = vpop.f32.mrf.mxu0
        %v2207 = vadd.f32 %v481, %v2206
        %2208 = vmatmul.bf16.gmra.mxu0 %v1552
        %v2209 = vpop.f32.mrf.mxu0
        %v2210 = vadd.f32 %v481, %v2209
        %v2211 = vpop.f32.mrf.mxu0
        %v2212 = vadd.f32 %v481, %v2211
        %2213 = vmatmul.bf16.gmra.mxu0 %v1555
        %v2214 = vpop.f32.mrf.mxu0
        %v2215 = vadd.f32 %v481, %v2214
        %v2216 = vpop.f32.mrf.mxu0
        %v2217 = vadd.f32 %v481, %v2216
        %2218 = vmatmul.bf16.gmra.mxu0 %v1558
        %v2219 = vpop.f32.mrf.mxu0
        %v2220 = vadd.f32 %v481, %v2219
        %v2221 = vpop.f32.mrf.mxu0
        %v2222 = vadd.f32 %v481, %v2221
        %2223 = vmatmul.bf16.gmra.mxu0 %v1561
        %v2224 = vpop.f32.mrf.mxu0
        %v2225 = vadd.f32 %v481, %v2224
        %v2226 = vpop.f32.mrf.mxu0
        %v2227 = vadd.f32 %v481, %v2226
        %2228 = vmatmul.bf16.gmra.mxu0 %v1564
        %v2229 = vpop.f32.mrf.mxu0
        %v2230 = vadd.f32 %v481, %v2229
        %v2231 = vpop.f32.mrf.mxu0
        %v2232 = vadd.f32 %v481, %v2231
        %2233 = vmatmul.bf16.gmra.mxu0 %v1567
        %v2234 = vpop.f32.mrf.mxu0
        %v2235 = vadd.f32 %v481, %v2234
        %v2236 = vpop.f32.mrf.mxu0
        %v2237 = vadd.f32 %v481, %v2236
        %2238 = vmatmul.bf16.gmra.mxu0 %v1570
        %v2239 = vpop.f32.mrf.mxu0
        %v2240 = vadd.f32 %v481, %v2239
        %v2241 = vpop.f32.mrf.mxu0
        %v2242 = vadd.f32 %v481, %v2241
        %2243 = vmatmul.bf16.gmra.mxu0 %v1573
        %v2244 = vpop.f32.mrf.mxu0
        %v2245 = vadd.f32 %v481, %v2244
        %v2246 = vpop.f32.mrf.mxu0
        %v2247 = vadd.f32 %v481, %v2246
        %2248 = vmatmul.bf16.gmra.mxu0 %v1576
        %v2249 = vpop.f32.mrf.mxu0
        %v2250 = vadd.f32 %v481, %v2249
        %v2251 = vpop.f32.mrf.mxu0
        %v2252 = vadd.f32 %v481, %v2251
        %2253 = vmatmul.bf16.gmra.mxu0 %v1579
        %v2254 = vpop.f32.mrf.mxu0
        %v2255 = vadd.f32 %v481, %v2254
        %v2256 = vpop.f32.mrf.mxu0
        %v2257 = vadd.f32 %v481, %v2256
        %2258 = vmatmul.bf16.gmra.mxu0 %v1582
        %v2259 = vpop.f32.mrf.mxu0
        %v2260 = vadd.f32 %v481, %v2259
        %v2261 = vpop.f32.mrf.mxu0
        %v2262 = vadd.f32 %v481, %v2261
        %2263 = vmatmul.bf16.gmra.mxu0 %v1585
        %v2264 = vpop.f32.mrf.mxu0
        %v2265 = vadd.f32 %v481, %v2264
        %v2266 = vpop.f32.mrf.mxu0
        %v2267 = vadd.f32 %v481, %v2266
        %2268 = vmatmul.bf16.gmra.mxu0 %v1588
        %v2269 = vpop.f32.mrf.mxu0
        %v2270 = vadd.f32 %v481, %v2269
        %v2271 = vpop.f32.mrf.mxu0
        %v2272 = vadd.f32 %v481, %v2271
        %2273 = vmatmul.bf16.gmra.mxu0 %v1591
        %v2274 = vpop.f32.mrf.mxu0
        %v2275 = vadd.f32 %v481, %v2274
        %v2276 = vpop.f32.mrf.mxu0
        %v2277 = vadd.f32 %v481, %v2276
        %2278 = vmatmul.bf16.gmra.mxu0 %v1594
        %v2279 = vpop.f32.mrf.mxu0
        %v2280 = vadd.f32 %v481, %v2279
        %v2281 = vpop.f32.mrf.mxu0
        %v2282 = vadd.f32 %v481, %v2281
        %2283 = vmatmul.bf16.gmra.mxu0 %v1597
        %v2284 = vpop.f32.mrf.mxu0
        %v2285 = vadd.f32 %v481, %v2284
        %v2286 = vpop.f32.mrf.mxu0
        %v2287 = vadd.f32 %v481, %v2286
        %2288 = vmatmul.bf16.gmra.mxu0 %v1600
        %v2289 = vpop.f32.mrf.mxu0
        %v2290 = vadd.f32 %v481, %v2289
        %v2291 = vpop.f32.mrf.mxu0
        %v2292 = vadd.f32 %v481, %v2291
        %2293 = vmatmul.bf16.gmra.mxu0 %v1603
        %v2294 = vpop.f32.mrf.mxu0
        %v2295 = vadd.f32 %v481, %v2294
        %v2296 = vpop.f32.mrf.mxu0
        %v2297 = vadd.f32 %v481, %v2296
        %2298 = vmatmul.bf16.gmra.mxu0 %v1606
        %v2299 = vpop.f32.mrf.mxu0
        %v2300 = vadd.f32 %v481, %v2299
        %v2301 = vpop.f32.mrf.mxu0
        %v2302 = vadd.f32 %v481, %v2301
        %2303 = vmatmul.bf16.gmra.mxu0 %v1609
        %v2304 = vpop.f32.mrf.mxu0
        %v2305 = vadd.f32 %v481, %v2304
        %v2306 = vpop.f32.mrf.mxu0
        %v2307 = vadd.f32 %v481, %v2306
        %2308 = vmatmul.bf16.gmra.mxu0 %v1612
        %v2309 = vpop.f32.mrf.mxu0
        %v2310 = vadd.f32 %v481, %v2309
        %v2311 = vpop.f32.mrf.mxu0
        %v2312 = vadd.f32 %v481, %v2311
        %2313 = vmatmul.bf16.gmra.mxu0 %v1615
        %v2314 = vpop.f32.mrf.mxu0
        %v2315 = vadd.f32 %v481, %v2314
        %v2316 = vpop.f32.mrf.mxu0
        %v2317 = vadd.f32 %v481, %v2316
        %2318 = vmatmul.bf16.gmra.mxu0 %v1618
        %v2319 = vpop.f32.mrf.mxu0
        %v2320 = vadd.f32 %v481, %v2319
        %v2321 = vpop.f32.mrf.mxu0
        %v2322 = vadd.f32 %v481, %v2321
        %2323 = vdwg.mxu0
        %v2324 = vmax.f32 %v1630, 0.0
        %v2325 = vmax.f32 %v1632, 0.0
        %v2326 = vmax.f32 %v1635, 0.0
        %v2327 = vmax.f32 %v1637, 0.0
        %v2328 = vmax.f32 %v1640, 0.0
        %v2329 = vmax.f32 %v1642, 0.0
        %v2330 = vmax.f32 %v1645, 0.0
        %v2331 = vmax.f32 %v1647, 0.0
        %v2332 = vmax.f32 %v1650, 0.0
        %v2333 = vmax.f32 %v1652, 0.0
        %v2334 = vmax.f32 %v1655, 0.0
        %v2335 = vmax.f32 %v1657, 0.0
        %v2336 = vmax.f32 %v1660, 0.0
        %v2337 = vmax.f32 %v1662, 0.0
        %v2338 = vmax.f32 %v1665, 0.0
        %v2339 = vmax.f32 %v1667, 0.0
        %v2340 = vmax.f32 %v1670, 0.0
        %v2341 = vmax.f32 %v1672, 0.0
        %v2342 = vmax.f32 %v1675, 0.0
        %v2343 = vmax.f32 %v1677, 0.0
        %v2344 = vmax.f32 %v1680, 0.0
        %v2345 = vmax.f32 %v1682, 0.0
        %v2346 = vmax.f32 %v1685, 0.0
        %v2347 = vmax.f32 %v1687, 0.0
        %v2348 = vmax.f32 %v1690, 0.0
        %v2349 = vmax.f32 %v1692, 0.0
        %v2350 = vmax.f32 %v1695, 0.0
        %v2351 = vmax.f32 %v1697, 0.0
        %v2352 = vmax.f32 %v1700, 0.0
        %v2353 = vmax.f32 %v1702, 0.0
        %v2354 = vmax.f32 %v1705, 0.0
        %v2355 = vmax.f32 %v1707, 0.0
        %v2356 = vmax.f32 %v1710, 0.0
        %v2357 = vmax.f32 %v1712, 0.0
        %v2358 = vmax.f32 %v1715, 0.0
        %v2359 = vmax.f32 %v1717, 0.0
        %v2360 = vmax.f32 %v1720, 0.0
        %v2361 = vmax.f32 %v1722, 0.0
        %v2362 = vmax.f32 %v1725, 0.0
        %v2363 = vmax.f32 %v1727, 0.0
        %v2364 = vmax.f32 %v1730, 0.0
        %v2365 = vmax.f32 %v1732, 0.0
        %v2366 = vmax.f32 %v1735, 0.0
        %v2367 = vmax.f32 %v1737, 0.0
        %v2368 = vmax.f32 %v1740, 0.0
        %v2369 = vmax.f32 %v1742, 0.0
        %v2370 = vmax.f32 %v1745, 0.0
        %v2371 = vmax.f32 %v1747, 0.0
        %v2372 = vmax.f32 %v1750, 0.0
        %v2373 = vmax.f32 %v1752, 0.0
        %v2374 = vmax.f32 %v1755, 0.0
        %v2375 = vmax.f32 %v1757, 0.0
        %v2376 = vmax.f32 %v1760, 0.0
        %v2377 = vmax.f32 %v1762, 0.0
        %v2378 = vmax.f32 %v1765, 0.0
        %v2379 = vmax.f32 %v1767, 0.0
        %v2380 = vmax.f32 %v1770, 0.0
        %v2381 = vmax.f32 %v1772, 0.0
        %v2382 = vmax.f32 %v1775, 0.0
        %v2383 = vmax.f32 %v1777, 0.0
        %v2384 = vmax.f32 %v1780, 0.0
        %v2385 = vmax.f32 %v1782, 0.0
        %v2386 = vmax.f32 %v1785, 0.0
        %v2387 = vmax.f32 %v1787, 0.0
        %v2388 = vmax.f32 %v1790, 0.0
        %v2389 = vmax.f32 %v1792, 0.0
        %v2390 = vmax.f32 %v1795, 0.0
        %v2391 = vmax.f32 %v1797, 0.0
        %v2392 = vmax.f32 %v1800, 0.0
        %v2393 = vmax.f32 %v1802, 0.0
        %v2394 = vmax.f32 %v1805, 0.0
        %v2395 = vmax.f32 %v1807, 0.0
        %v2396 = vmax.f32 %v1810, 0.0
        %v2397 = vmax.f32 %v1812, 0.0
        %v2398 = vmax.f32 %v1815, 0.0
        %v2399 = vmax.f32 %v1817, 0.0
        %v2400 = vmax.f32 %v1820, 0.0
        %v2401 = vmax.f32 %v1822, 0.0
        %v2402 = vmax.f32 %v1825, 0.0
        %v2403 = vmax.f32 %v1827, 0.0
        %v2404 = vmax.f32 %v1830, 0.0
        %v2405 = vmax.f32 %v1832, 0.0
        %v2406 = vmax.f32 %v1835, 0.0
        %v2407 = vmax.f32 %v1837, 0.0
        %v2408 = vmax.f32 %v1840, 0.0
        %v2409 = vmax.f32 %v1842, 0.0
        %v2410 = vmax.f32 %v1845, 0.0
        %v2411 = vmax.f32 %v1847, 0.0
        %v2412 = vmax.f32 %v1850, 0.0
        %v2413 = vmax.f32 %v1852, 0.0
        %v2414 = vmax.f32 %v1855, 0.0
        %v2415 = vmax.f32 %v1857, 0.0
        %v2416 = vmax.f32 %v1860, 0.0
        %v2417 = vmax.f32 %v1862, 0.0
        %v2418 = vmax.f32 %v1865, 0.0
        %v2419 = vmax.f32 %v1867, 0.0
        %v2420 = vmax.f32 %v1870, 0.0
        %v2421 = vmax.f32 %v1872, 0.0
        %v2422 = vmax.f32 %v1875, 0.0
        %v2423 = vmax.f32 %v1877, 0.0
        %v2424 = vmax.f32 %v1880, 0.0
        %v2425 = vmax.f32 %v1882, 0.0
        %v2426 = vmax.f32 %v1885, 0.0
        %v2427 = vmax.f32 %v1887, 0.0
        %v2428 = vmax.f32 %v1890, 0.0
        %v2429 = vmax.f32 %v1892, 0.0
        %v2430 = vmax.f32 %v1895, 0.0
        %v2431 = vmax.f32 %v1897, 0.0
        %v2432 = vmax.f32 %v1900, 0.0
        %v2433 = vmax.f32 %v1902, 0.0
        %v2434 = vmax.f32 %v1905, 0.0
        %v2435 = vmax.f32 %v1907, 0.0
        %v2436 = vmax.f32 %v1910, 0.0
        %v2437 = vmax.f32 %v1912, 0.0
        %v2438 = vmax.f32 %v1915, 0.0
        %v2439 = vmax.f32 %v1917, 0.0
        %v2440 = vmax.f32 %v1920, 0.0
        %v2441 = vmax.f32 %v1922, 0.0
        %v2442 = vmax.f32 %v1925, 0.0
        %v2443 = vmax.f32 %v1927, 0.0
        %v2444 = vmax.f32 %v1930, 0.0
        %v2445 = vmax.f32 %v1932, 0.0
        %v2446 = vmax.f32 %v1935, 0.0
        %v2447 = vmax.f32 %v1937, 0.0
        %v2448 = vmax.f32 %v1940, 0.0
        %v2449 = vmax.f32 %v1942, 0.0
        %v2450 = vmax.f32 %v1945, 0.0
        %v2451 = vmax.f32 %v1947, 0.0
        %v2452 = vmax.f32 %v1950, 0.0
        %v2453 = vmax.f32 %v1952, 0.0
        %v2454 = vmax.f32 %v1955, 0.0
        %v2455 = vmax.f32 %v1957, 0.0
        %v2456 = vmax.f32 %v1960, 0.0
        %v2457 = vmax.f32 %v1962, 0.0
        %v2458 = vmax.f32 %v1965, 0.0
        %v2459 = vmax.f32 %v1967, 0.0
        %v2460 = vmax.f32 %v1970, 0.0
        %v2461 = vmax.f32 %v1972, 0.0
        %v2462 = vmax.f32 %v1975, 0.0
        %v2463 = vmax.f32 %v1977, 0.0
        %v2464 = vmax.f32 %v1980, 0.0
        %v2465 = vmax.f32 %v1982, 0.0
        %v2466 = vmax.f32 %v1985, 0.0
        %v2467 = vmax.f32 %v1987, 0.0
        %v2468 = vmax.f32 %v1990, 0.0
        %v2469 = vmax.f32 %v1992, 0.0
        %v2470 = vmax.f32 %v1995, 0.0
        %v2471 = vmax.f32 %v1997, 0.0
        %v2472 = vmax.f32 %v2000, 0.0
        %v2473 = vmax.f32 %v2002, 0.0
        %v2474 = vmax.f32 %v2005, 0.0
        %v2475 = vmax.f32 %v2007, 0.0
        %v2476 = vmax.f32 %v2010, 0.0
        %v2477 = vmax.f32 %v2012, 0.0
        %v2478 = vmax.f32 %v2015, 0.0
        %v2479 = vmax.f32 %v2017, 0.0
        %v2480 = vmax.f32 %v2020, 0.0
        %v2481 = vmax.f32 %v2022, 0.0
        %v2482 = vmax.f32 %v2025, 0.0
        %v2483 = vmax.f32 %v2027, 0.0
        %v2484 = vmax.f32 %v2030, 0.0
        %v2485 = vmax.f32 %v2032, 0.0
        %v2486 = vmax.f32 %v2035, 0.0
        %v2487 = vmax.f32 %v2037, 0.0
        %v2488 = vmax.f32 %v2040, 0.0
        %v2489 = vmax.f32 %v2042, 0.0
        %v2490 = vmax.f32 %v2045, 0.0
        %v2491 = vmax.f32 %v2047, 0.0
        %v2492 = vmax.f32 %v2050, 0.0
        %v2493 = vmax.f32 %v2052, 0.0
        %v2494 = vmax.f32 %v2055, 0.0
        %v2495 = vmax.f32 %v2057, 0.0
        %v2496 = vmax.f32 %v2060, 0.0
        %v2497 = vmax.f32 %v2062, 0.0
        %v2498 = vmax.f32 %v2065, 0.0
        %v2499 = vmax.f32 %v2067, 0.0
        %v2500 = vmax.f32 %v2070, 0.0
        %v2501 = vmax.f32 %v2072, 0.0
        %v2502 = vmax.f32 %v2075, 0.0
        %v2503 = vmax.f32 %v2077, 0.0
        %v2504 = vmax.f32 %v2080, 0.0
        %v2505 = vmax.f32 %v2082, 0.0
        %v2506 = vmax.f32 %v2085, 0.0
        %v2507 = vmax.f32 %v2087, 0.0
        %v2508 = vmax.f32 %v2090, 0.0
        %v2509 = vmax.f32 %v2092, 0.0
        %v2510 = vmax.f32 %v2095, 0.0
        %v2511 = vmax.f32 %v2097, 0.0
        %v2512 = vmax.f32 %v2100, 0.0
        %v2513 = vmax.f32 %v2102, 0.0
        %v2514 = vmax.f32 %v2105, 0.0
        %v2515 = vmax.f32 %v2107, 0.0
        %v2516 = vmax.f32 %v2110, 0.0
        %v2517 = vmax.f32 %v2112, 0.0
        %v2518 = vmax.f32 %v2115, 0.0
        %v2519 = vmax.f32 %v2117, 0.0
        %v2520 = vmax.f32 %v2120, 0.0
        %v2521 = vmax.f32 %v2122, 0.0
        %v2522 = vmax.f32 %v2125, 0.0
        %v2523 = vmax.f32 %v2127, 0.0
        %v2524 = vmax.f32 %v2130, 0.0
        %v2525 = vmax.f32 %v2132, 0.0
        %v2526 = vmax.f32 %v2135, 0.0
        %v2527 = vmax.f32 %v2137, 0.0
        %v2528 = vmax.f32 %v2140, 0.0
        %v2529 = vmax.f32 %v2142, 0.0
        %v2530 = vmax.f32 %v2145, 0.0
        %v2531 = vmax.f32 %v2147, 0.0
        %v2532 = vmax.f32 %v2150, 0.0
        %v2533 = vmax.f32 %v2152, 0.0
        %v2534 = vmax.f32 %v2155, 0.0
        %v2535 = vmax.f32 %v2157, 0.0
        %v2536 = vmax.f32 %v2160, 0.0
        %v2537 = vmax.f32 %v2162, 0.0
        %v2538 = vmax.f32 %v2165, 0.0
        %v2539 = vmax.f32 %v2167, 0.0
        %v2540 = vmax.f32 %v2170, 0.0
        %v2541 = vmax.f32 %v2172, 0.0
        %v2542 = vmax.f32 %v2175, 0.0
        %v2543 = vmax.f32 %v2177, 0.0
        %v2544 = vmax.f32 %v2180, 0.0
        %v2545 = vmax.f32 %v2182, 0.0
        %v2546 = vmax.f32 %v2185, 0.0
        %v2547 = vmax.f32 %v2187, 0.0
        %v2548 = vmax.f32 %v2190, 0.0
        %v2549 = vmax.f32 %v2192, 0.0
        %v2550 = vmax.f32 %v2195, 0.0
        %v2551 = vmax.f32 %v2197, 0.0
        %v2552 = vmax.f32 %v2200, 0.0
        %v2553 = vmax.f32 %v2202, 0.0
        %v2554 = vmax.f32 %v2205, 0.0
        %v2555 = vmax.f32 %v2207, 0.0
        %v2556 = vmax.f32 %v2210, 0.0
        %v2557 = vmax.f32 %v2212, 0.0
        %v2558 = vmax.f32 %v2215, 0.0
        %v2559 = vmax.f32 %v2217, 0.0
        %v2560 = vmax.f32 %v2220, 0.0
        %v2561 = vmax.f32 %v2222, 0.0
        %v2562 = vmax.f32 %v2225, 0.0
        %v2563 = vmax.f32 %v2227, 0.0
        %v2564 = vmax.f32 %v2230, 0.0
        %v2565 = vmax.f32 %v2232, 0.0
        %v2566 = vmax.f32 %v2235, 0.0
        %v2567 = vmax.f32 %v2237, 0.0
        %v2568 = vmax.f32 %v2240, 0.0
        %v2569 = vmax.f32 %v2242, 0.0
        %v2570 = vmax.f32 %v2245, 0.0
        %v2571 = vmax.f32 %v2247, 0.0
        %v2572 = vmax.f32 %v2250, 0.0
        %v2573 = vmax.f32 %v2252, 0.0
        %v2574 = vmax.f32 %v2255, 0.0
        %v2575 = vmax.f32 %v2257, 0.0
        %v2576 = vmax.f32 %v2260, 0.0
        %v2577 = vmax.f32 %v2262, 0.0
        %v2578 = vmax.f32 %v2265, 0.0
        %v2579 = vmax.f32 %v2267, 0.0
        %v2580 = vmax.f32 %v2270, 0.0
        %v2581 = vmax.f32 %v2272, 0.0
        %v2582 = vmax.f32 %v2275, 0.0
        %v2583 = vmax.f32 %v2277, 0.0
        %v2584 = vmax.f32 %v2280, 0.0
        %v2585 = vmax.f32 %v2282, 0.0
        %v2586 = vmax.f32 %v2285, 0.0
        %v2587 = vmax.f32 %v2287, 0.0
        %v2588 = vmax.f32 %v2290, 0.0
        %v2589 = vmax.f32 %v2292, 0.0
        %v2590 = vmax.f32 %v2295, 0.0
        %v2591 = vmax.f32 %v2297, 0.0
        %v2592 = vmax.f32 %v2300, 0.0
        %v2593 = vmax.f32 %v2302, 0.0
        %v2594 = vmax.f32 %v2305, 0.0
        %v2595 = vmax.f32 %v2307, 0.0
        %v2596 = vmax.f32 %v2310, 0.0
        %v2597 = vmax.f32 %v2312, 0.0
        %v2598 = vmax.f32 %v2315, 0.0
        %v2599 = vmax.f32 %v2317, 0.0
        %v2600 = vmax.f32 %v2320, 0.0
        %v2601 = vmax.f32 %v2322, 0.0
        %v2602 = vpack.c.bf16 %v2324, %v2324
        %v2603 = vpack.c.bf16 %v2325, %v2325
        %v2604 = vpack.c.bf16 %v2326, %v2326
        %v2605 = vpack.c.bf16 %v2327, %v2327
        %v2606 = vpack.c.bf16 %v2328, %v2328
        %v2607 = vpack.c.bf16 %v2329, %v2329
        %v2608 = vpack.c.bf16 %v2330, %v2330
        %v2609 = vpack.c.bf16 %v2331, %v2331
        %v2610 = vpack.c.bf16 %v2332, %v2332
        %v2611 = vpack.c.bf16 %v2333, %v2333
        %v2612 = vpack.c.bf16 %v2334, %v2334
        %v2613 = vpack.c.bf16 %v2335, %v2335
        %v2614 = vpack.c.bf16 %v2336, %v2336
        %v2615 = vpack.c.bf16 %v2337, %v2337
        %v2616 = vpack.c.bf16 %v2338, %v2338
        %v2617 = vpack.c.bf16 %v2339, %v2339
        %v2618 = vpack.c.bf16 %v2340, %v2340
        %v2619 = vpack.c.bf16 %v2341, %v2341
        %v2620 = vpack.c.bf16 %v2342, %v2342
        %v2621 = vpack.c.bf16 %v2343, %v2343
        %v2622 = vpack.c.bf16 %v2344, %v2344
        %v2623 = vpack.c.bf16 %v2345, %v2345
        %v2624 = vpack.c.bf16 %v2346, %v2346
        %v2625 = vpack.c.bf16 %v2347, %v2347
        %v2626 = vpack.c.bf16 %v2348, %v2348
        %v2627 = vpack.c.bf16 %v2349, %v2349
        %v2628 = vpack.c.bf16 %v2350, %v2350
        %v2629 = vpack.c.bf16 %v2351, %v2351
        %v2630 = vpack.c.bf16 %v2352, %v2352
        %v2631 = vpack.c.bf16 %v2353, %v2353
        %v2632 = vpack.c.bf16 %v2354, %v2354
        %v2633 = vpack.c.bf16 %v2355, %v2355
        %v2634 = vpack.c.bf16 %v2356, %v2356
        %v2635 = vpack.c.bf16 %v2357, %v2357
        %v2636 = vpack.c.bf16 %v2358, %v2358
        %v2637 = vpack.c.bf16 %v2359, %v2359
        %v2638 = vpack.c.bf16 %v2360, %v2360
        %v2639 = vpack.c.bf16 %v2361, %v2361
        %v2640 = vpack.c.bf16 %v2362, %v2362
        %v2641 = vpack.c.bf16 %v2363, %v2363
        %v2642 = vpack.c.bf16 %v2364, %v2364
        %v2643 = vpack.c.bf16 %v2365, %v2365
        %v2644 = vpack.c.bf16 %v2366, %v2366
        %v2645 = vpack.c.bf16 %v2367, %v2367
        %v2646 = vpack.c.bf16 %v2368, %v2368
        %v2647 = vpack.c.bf16 %v2369, %v2369
        %v2648 = vpack.c.bf16 %v2370, %v2370
        %v2649 = vpack.c.bf16 %v2371, %v2371
        %v2650 = vpack.c.bf16 %v2372, %v2372
        %v2651 = vpack.c.bf16 %v2373, %v2373
        %v2652 = vpack.c.bf16 %v2374, %v2374
        %v2653 = vpack.c.bf16 %v2375, %v2375
        %v2654 = vpack.c.bf16 %v2376, %v2376
        %v2655 = vpack.c.bf16 %v2377, %v2377
        %v2656 = vpack.c.bf16 %v2378, %v2378
        %v2657 = vpack.c.bf16 %v2379, %v2379
        %v2658 = vpack.c.bf16 %v2380, %v2380
        %v2659 = vpack.c.bf16 %v2381, %v2381
        %v2660 = vpack.c.bf16 %v2382, %v2382
        %v2661 = vpack.c.bf16 %v2383, %v2383
        %v2662 = vpack.c.bf16 %v2384, %v2384
        %v2663 = vpack.c.bf16 %v2385, %v2385
        %v2664 = vpack.c.bf16 %v2386, %v2386
        %v2665 = vpack.c.bf16 %v2387, %v2387
        %v2666 = vpack.c.bf16 %v2388, %v2388
        %v2667 = vpack.c.bf16 %v2389, %v2389
        %v2668 = vpack.c.bf16 %v2390, %v2390
        %v2669 = vpack.c.bf16 %v2391, %v2391
        %v2670 = vpack.c.bf16 %v2392, %v2392
        %v2671 = vpack.c.bf16 %v2393, %v2393
        %v2672 = vpack.c.bf16 %v2394, %v2394
        %v2673 = vpack.c.bf16 %v2395, %v2395
        %v2674 = vpack.c.bf16 %v2396, %v2396
        %v2675 = vpack.c.bf16 %v2397, %v2397
        %v2676 = vpack.c.bf16 %v2398, %v2398
        %v2677 = vpack.c.bf16 %v2399, %v2399
        %v2678 = vpack.c.bf16 %v2400, %v2400
        %v2679 = vpack.c.bf16 %v2401, %v2401
        %v2680 = vpack.c.bf16 %v2402, %v2402
        %v2681 = vpack.c.bf16 %v2403, %v2403
        %v2682 = vpack.c.bf16 %v2404, %v2404
        %v2683 = vpack.c.bf16 %v2405, %v2405
        %v2684 = vpack.c.bf16 %v2406, %v2406
        %v2685 = vpack.c.bf16 %v2407, %v2407
        %v2686 = vpack.c.bf16 %v2408, %v2408
        %v2687 = vpack.c.bf16 %v2409, %v2409
        %v2688 = vpack.c.bf16 %v2410, %v2410
        %v2689 = vpack.c.bf16 %v2411, %v2411
        %v2690 = vpack.c.bf16 %v2412, %v2412
        %v2691 = vpack.c.bf16 %v2413, %v2413
        %v2692 = vpack.c.bf16 %v2414, %v2414
        %v2693 = vpack.c.bf16 %v2415, %v2415
        %v2694 = vpack.c.bf16 %v2416, %v2416
        %v2695 = vpack.c.bf16 %v2417, %v2417
        %v2696 = vpack.c.bf16 %v2418, %v2418
        %v2697 = vpack.c.bf16 %v2419, %v2419
        %v2698 = vpack.c.bf16 %v2420, %v2420
        %v2699 = vpack.c.bf16 %v2421, %v2421
        %v2700 = vpack.c.bf16 %v2422, %v2422
        %v2701 = vpack.c.bf16 %v2423, %v2423
        %v2702 = vpack.c.bf16 %v2424, %v2424
        %v2703 = vpack.c.bf16 %v2425, %v2425
        %v2704 = vpack.c.bf16 %v2426, %v2426
        %v2705 = vpack.c.bf16 %v2427, %v2427
        %v2706 = vpack.c.bf16 %v2428, %v2428
        %v2707 = vpack.c.bf16 %v2429, %v2429
        %v2708 = vpack.c.bf16 %v2430, %v2430
        %v2709 = vpack.c.bf16 %v2431, %v2431
        %v2710 = vpack.c.bf16 %v2432, %v2432
        %v2711 = vpack.c.bf16 %v2433, %v2433
        %v2712 = vpack.c.bf16 %v2434, %v2434
        %v2713 = vpack.c.bf16 %v2435, %v2435
        %v2714 = vpack.c.bf16 %v2436, %v2436
        %v2715 = vpack.c.bf16 %v2437, %v2437
        %v2716 = vpack.c.bf16 %v2438, %v2438
        %v2717 = vpack.c.bf16 %v2439, %v2439
        %v2718 = vpack.c.bf16 %v2440, %v2440
        %v2719 = vpack.c.bf16 %v2441, %v2441
        %v2720 = vpack.c.bf16 %v2442, %v2442
        %v2721 = vpack.c.bf16 %v2443, %v2443
        %v2722 = vpack.c.bf16 %v2444, %v2444
        %v2723 = vpack.c.bf16 %v2445, %v2445
        %v2724 = vpack.c.bf16 %v2446, %v2446
        %v2725 = vpack.c.bf16 %v2447, %v2447
        %v2726 = vpack.c.bf16 %v2448, %v2448
        %v2727 = vpack.c.bf16 %v2449, %v2449
        %v2728 = vpack.c.bf16 %v2450, %v2450
        %v2729 = vpack.c.bf16 %v2451, %v2451
        %v2730 = vpack.c.bf16 %v2452, %v2452
        %v2731 = vpack.c.bf16 %v2453, %v2453
        %v2732 = vpack.c.bf16 %v2454, %v2454
        %v2733 = vpack.c.bf16 %v2455, %v2455
        %v2734 = vpack.c.bf16 %v2456, %v2456
        %v2735 = vpack.c.bf16 %v2457, %v2457
        %v2736 = vpack.c.bf16 %v2458, %v2458
        %v2737 = vpack.c.bf16 %v2459, %v2459
        %v2738 = vpack.c.bf16 %v2460, %v2460
        %v2739 = vpack.c.bf16 %v2461, %v2461
        %v2740 = vpack.c.bf16 %v2462, %v2462
        %v2741 = vpack.c.bf16 %v2463, %v2463
        %v2742 = vpack.c.bf16 %v2464, %v2464
        %v2743 = vpack.c.bf16 %v2465, %v2465
        %v2744 = vpack.c.bf16 %v2466, %v2466
        %v2745 = vpack.c.bf16 %v2467, %v2467
        %v2746 = vpack.c.bf16 %v2468, %v2468
        %v2747 = vpack.c.bf16 %v2469, %v2469
        %v2748 = vpack.c.bf16 %v2470, %v2470
        %v2749 = vpack.c.bf16 %v2471, %v2471
        %v2750 = vpack.c.bf16 %v2472, %v2472
        %v2751 = vpack.c.bf16 %v2473, %v2473
        %v2752 = vpack.c.bf16 %v2474, %v2474
        %v2753 = vpack.c.bf16 %v2475, %v2475
        %v2754 = vpack.c.bf16 %v2476, %v2476
        %v2755 = vpack.c.bf16 %v2477, %v2477
        %v2756 = vpack.c.bf16 %v2478, %v2478
        %v2757 = vpack.c.bf16 %v2479, %v2479
        %v2758 = vpack.c.bf16 %v2480, %v2480
        %v2759 = vpack.c.bf16 %v2481, %v2481
        %v2760 = vpack.c.bf16 %v2482, %v2482
        %v2761 = vpack.c.bf16 %v2483, %v2483
        %v2762 = vpack.c.bf16 %v2484, %v2484
        %v2763 = vpack.c.bf16 %v2485, %v2485
        %v2764 = vpack.c.bf16 %v2486, %v2486
        %v2765 = vpack.c.bf16 %v2487, %v2487
        %v2766 = vpack.c.bf16 %v2488, %v2488
        %v2767 = vpack.c.bf16 %v2489, %v2489
        %v2768 = vpack.c.bf16 %v2490, %v2490
        %v2769 = vpack.c.bf16 %v2491, %v2491
        %v2770 = vpack.c.bf16 %v2492, %v2492
        %v2771 = vpack.c.bf16 %v2493, %v2493
        %v2772 = vpack.c.bf16 %v2494, %v2494
        %v2773 = vpack.c.bf16 %v2495, %v2495
        %v2774 = vpack.c.bf16 %v2496, %v2496
        %v2775 = vpack.c.bf16 %v2497, %v2497
        %v2776 = vpack.c.bf16 %v2498, %v2498
        %v2777 = vpack.c.bf16 %v2499, %v2499
        %v2778 = vpack.c.bf16 %v2500, %v2500
        %v2779 = vpack.c.bf16 %v2501, %v2501
        %v2780 = vpack.c.bf16 %v2502, %v2502
        %v2781 = vpack.c.bf16 %v2503, %v2503
        %v2782 = vpack.c.bf16 %v2504, %v2504
        %v2783 = vpack.c.bf16 %v2505, %v2505
        %v2784 = vpack.c.bf16 %v2506, %v2506
        %v2785 = vpack.c.bf16 %v2507, %v2507
        %v2786 = vpack.c.bf16 %v2508, %v2508
        %v2787 = vpack.c.bf16 %v2509, %v2509
        %v2788 = vpack.c.bf16 %v2510, %v2510
        %v2789 = vpack.c.bf16 %v2511, %v2511
        %v2790 = vpack.c.bf16 %v2512, %v2512
        %v2791 = vpack.c.bf16 %v2513, %v2513
        %v2792 = vpack.c.bf16 %v2514, %v2514
        %v2793 = vpack.c.bf16 %v2515, %v2515
        %v2794 = vpack.c.bf16 %v2516, %v2516
        %v2795 = vpack.c.bf16 %v2517, %v2517
        %v2796 = vpack.c.bf16 %v2518, %v2518
        %v2797 = vpack.c.bf16 %v2519, %v2519
        %v2798 = vpack.c.bf16 %v2520, %v2520
        %v2799 = vpack.c.bf16 %v2521, %v2521
        %v2800 = vpack.c.bf16 %v2522, %v2522
        %v2801 = vpack.c.bf16 %v2523, %v2523
        %v2802 = vpack.c.bf16 %v2524, %v2524
        %v2803 = vpack.c.bf16 %v2525, %v2525
        %v2804 = vpack.c.bf16 %v2526, %v2526
        %v2805 = vpack.c.bf16 %v2527, %v2527
        %v2806 = vpack.c.bf16 %v2528, %v2528
        %v2807 = vpack.c.bf16 %v2529, %v2529
        %v2808 = vpack.c.bf16 %v2530, %v2530
        %v2809 = vpack.c.bf16 %v2531, %v2531
        %v2810 = vpack.c.bf16 %v2532, %v2532
        %v2811 = vpack.c.bf16 %v2533, %v2533
        %v2812 = vpack.c.bf16 %v2534, %v2534
        %v2813 = vpack.c.bf16 %v2535, %v2535
        %v2814 = vpack.c.bf16 %v2536, %v2536
        %v2815 = vpack.c.bf16 %v2537, %v2537
        %v2816 = vpack.c.bf16 %v2538, %v2538
        %v2817 = vpack.c.bf16 %v2539, %v2539
        %v2818 = vpack.c.bf16 %v2540, %v2540
        %v2819 = vpack.c.bf16 %v2541, %v2541
        %v2820 = vpack.c.bf16 %v2542, %v2542
        %v2821 = vpack.c.bf16 %v2543, %v2543
        %v2822 = vpack.c.bf16 %v2544, %v2544
        %v2823 = vpack.c.bf16 %v2545, %v2545
        %v2824 = vpack.c.bf16 %v2546, %v2546
        %v2825 = vpack.c.bf16 %v2547, %v2547
        %v2826 = vpack.c.bf16 %v2548, %v2548
        %v2827 = vpack.c.bf16 %v2549, %v2549
        %v2828 = vpack.c.bf16 %v2550, %v2550
        %v2829 = vpack.c.bf16 %v2551, %v2551
        %v2830 = vpack.c.bf16 %v2552, %v2552
        %v2831 = vpack.c.bf16 %v2553, %v2553
        %v2832 = vpack.c.bf16 %v2554, %v2554
        %v2833 = vpack.c.bf16 %v2555, %v2555
        %v2834 = vpack.c.bf16 %v2556, %v2556
        %v2835 = vpack.c.bf16 %v2557, %v2557
        %v2836 = vpack.c.bf16 %v2558, %v2558
        %v2837 = vpack.c.bf16 %v2559, %v2559
        %v2838 = vpack.c.bf16 %v2560, %v2560
        %v2839 = vpack.c.bf16 %v2561, %v2561
        %v2840 = vpack.c.bf16 %v2562, %v2562
        %v2841 = vpack.c.bf16 %v2563, %v2563
        %v2842 = vpack.c.bf16 %v2564, %v2564
        %v2843 = vpack.c.bf16 %v2565, %v2565
        %v2844 = vpack.c.bf16 %v2566, %v2566
        %v2845 = vpack.c.bf16 %v2567, %v2567
        %v2846 = vpack.c.bf16 %v2568, %v2568
        %v2847 = vpack.c.bf16 %v2569, %v2569
        %v2848 = vpack.c.bf16 %v2570, %v2570
        %v2849 = vpack.c.bf16 %v2571, %v2571
        %v2850 = vpack.c.bf16 %v2572, %v2572
        %v2851 = vpack.c.bf16 %v2573, %v2573
        %v2852 = vpack.c.bf16 %v2574, %v2574
        %v2853 = vpack.c.bf16 %v2575, %v2575
        %v2854 = vpack.c.bf16 %v2576, %v2576
        %v2855 = vpack.c.bf16 %v2577, %v2577
        %v2856 = vpack.c.bf16 %v2578, %v2578
        %v2857 = vpack.c.bf16 %v2579, %v2579
        %v2858 = vpack.c.bf16 %v2580, %v2580
        %v2859 = vpack.c.bf16 %v2581, %v2581
        %v2860 = vpack.c.bf16 %v2582, %v2582
        %v2861 = vpack.c.bf16 %v2583, %v2583
        %v2862 = vpack.c.bf16 %v2584, %v2584
        %v2863 = vpack.c.bf16 %v2585, %v2585
        %v2864 = vpack.c.bf16 %v2586, %v2586
        %v2865 = vpack.c.bf16 %v2587, %v2587
        %v2866 = vpack.c.bf16 %v2588, %v2588
        %v2867 = vpack.c.bf16 %v2589, %v2589
        %v2868 = vpack.c.bf16 %v2590, %v2590
        %v2869 = vpack.c.bf16 %v2591, %v2591
        %v2870 = vpack.c.bf16 %v2592, %v2592
        %v2871 = vpack.c.bf16 %v2593, %v2593
        %v2872 = vpack.c.bf16 %v2594, %v2594
        %v2873 = vpack.c.bf16 %v2595, %v2595
        %v2874 = vpack.c.bf16 %v2596, %v2596
        %v2875 = vpack.c.bf16 %v2597, %v2597
        %v2876 = vpack.c.bf16 %v2598, %v2598
        %v2877 = vpack.c.bf16 %v2599, %v2599
        %v2878 = vpack.c.bf16 %v2600, %v2600
        %v2879 = vpack.c.bf16 %v2601, %v2601
        %vm2880 = vcmask 60416
        %2881 = vst.msk [vmem:[%s172] sm:$0xf] %vm2880, %v2602
        %2882 = vst.msk [vmem:[%s172 + $0x4] sm:$0xf] %vm2880, %v2603
        %2883 = vst.msk [vmem:[%s172 + $0x8] sm:$0xf] %vm2880, %v2604
        %2884 = vst.msk [vmem:[%s172 + $0xc] sm:$0xf] %vm2880, %v2605
        %2885 = vst.msk [vmem:[%s172 + $0x10] sm:$0xf] %vm2880, %v2606
        %2886 = vst.msk [vmem:[%s172 + $0x14] sm:$0xf] %vm2880, %v2607
        %2887 = vst.msk [vmem:[%s172 + $0x18] sm:$0xf] %vm2880, %v2608
        %2888 = vst.msk [vmem:[%s172 + $0x1c] sm:$0xf] %vm2880, %v2609
        %2889 = vst.msk [vmem:[%s172 + $0x20] sm:$0xf] %vm2880, %v2610
        %2890 = vst.msk [vmem:[%s172 + $0x24] sm:$0xf] %vm2880, %v2611
        %2891 = vst.msk [vmem:[%s172 + $0x28] sm:$0xf] %vm2880, %v2612
        %2892 = vst.msk [vmem:[%s172 + $0x2c] sm:$0xf] %vm2880, %v2613
        %2893 = vst.msk [vmem:[%s172 + $0x30] sm:$0xf] %vm2880, %v2614
        %2894 = vst.msk [vmem:[%s172 + $0x34] sm:$0xf] %vm2880, %v2615
        %2895 = vst.msk [vmem:[%s172 + $0x38] sm:$0xf] %vm2880, %v2616
        %2896 = vst.msk [vmem:[%s172 + $0x3c] sm:$0xf] %vm2880, %v2617
        %2897 = vst.msk [vmem:[%s172 + $0x40] sm:$0xf] %vm2880, %v2618
        %2898 = vst.msk [vmem:[%s172 + $0x44] sm:$0xf] %vm2880, %v2619
        %2899 = vst.msk [vmem:[%s172 + $0x48] sm:$0xf] %vm2880, %v2620
        %2900 = vst.msk [vmem:[%s172 + $0x4c] sm:$0xf] %vm2880, %v2621
        %2901 = vst.msk [vmem:[%s172 + $0x50] sm:$0xf] %vm2880, %v2622
        %2902 = vst.msk [vmem:[%s172 + $0x54] sm:$0xf] %vm2880, %v2623
        %2903 = vst.msk [vmem:[%s172 + $0x58] sm:$0xf] %vm2880, %v2624
        %2904 = vst.msk [vmem:[%s172 + $0x5c] sm:$0xf] %vm2880, %v2625
        %2905 = vst.msk [vmem:[%s172 + $0x60] sm:$0xf] %vm2880, %v2626
        %2906 = vst.msk [vmem:[%s172 + $0x64] sm:$0xf] %vm2880, %v2627
        %2907 = vst.msk [vmem:[%s172 + $0x68] sm:$0xf] %vm2880, %v2628
        %2908 = vst.msk [vmem:[%s172 + $0x6c] sm:$0xf] %vm2880, %v2629
        %2909 = vst.msk [vmem:[%s172 + $0x70] sm:$0xf] %vm2880, %v2630
        %2910 = vst.msk [vmem:[%s172 + $0x74] sm:$0xf] %vm2880, %v2631
        %2911 = vst.msk [vmem:[%s172 + $0x78] sm:$0xf] %vm2880, %v2632
        %2912 = vst.msk [vmem:[%s172 + $0x7c] sm:$0xf] %vm2880, %v2633
        %2913 = vst.msk [vmem:[%s172 + $0x80] sm:$0xf] %vm2880, %v2634
        %2914 = vst.msk [vmem:[%s172 + $0x84] sm:$0xf] %vm2880, %v2635
        %2915 = vst.msk [vmem:[%s172 + $0x88] sm:$0xf] %vm2880, %v2636
        %2916 = vst.msk [vmem:[%s172 + $0x8c] sm:$0xf] %vm2880, %v2637
        %2917 = vst.msk [vmem:[%s172 + $0x90] sm:$0xf] %vm2880, %v2638
        %2918 = vst.msk [vmem:[%s172 + $0x94] sm:$0xf] %vm2880, %v2639
        %2919 = vst.msk [vmem:[%s172 + $0x98] sm:$0xf] %vm2880, %v2640
        %2920 = vst.msk [vmem:[%s172 + $0x9c] sm:$0xf] %vm2880, %v2641
        %2921 = vst.msk [vmem:[%s172 + $0xa0] sm:$0xf] %vm2880, %v2642
        %2922 = vst.msk [vmem:[%s172 + $0xa4] sm:$0xf] %vm2880, %v2643
        %2923 = vst.msk [vmem:[%s172 + $0xa8] sm:$0xf] %vm2880, %v2644
        %2924 = vst.msk [vmem:[%s172 + $0xac] sm:$0xf] %vm2880, %v2645
        %2925 = vst.msk [vmem:[%s172 + $0xb0] sm:$0xf] %vm2880, %v2646
        %2926 = vst.msk [vmem:[%s172 + $0xb4] sm:$0xf] %vm2880, %v2647
        %2927 = vst.msk [vmem:[%s172 + $0xb8] sm:$0xf] %vm2880, %v2648
        %2928 = vst.msk [vmem:[%s172 + $0xbc] sm:$0xf] %vm2880, %v2649
        %2929 = vst.msk [vmem:[%s172 + $0xc0] sm:$0xf] %vm2880, %v2650
        %2930 = vst.msk [vmem:[%s172 + $0xc4] sm:$0xf] %vm2880, %v2651
        %2931 = vst.msk [vmem:[%s172 + $0xc8] sm:$0xf] %vm2880, %v2652
        %2932 = vst.msk [vmem:[%s172 + $0xcc] sm:$0xf] %vm2880, %v2653
        %2933 = vst.msk [vmem:[%s172 + $0xd0] sm:$0xf] %vm2880, %v2654
        %2934 = vst.msk [vmem:[%s172 + $0xd4] sm:$0xf] %vm2880, %v2655
        %2935 = vst.msk [vmem:[%s172 + $0xd8] sm:$0xf] %vm2880, %v2656
        %2936 = vst.msk [vmem:[%s172 + $0xdc] sm:$0xf] %vm2880, %v2657
        %2937 = vst.msk [vmem:[%s172 + $0xe0] sm:$0xf] %vm2880, %v2658
        %2938 = vst.msk [vmem:[%s172 + $0xe4] sm:$0xf] %vm2880, %v2659
        %2939 = vst.msk [vmem:[%s172 + $0xe8] sm:$0xf] %vm2880, %v2660
        %2940 = vst.msk [vmem:[%s172 + $0xec] sm:$0xf] %vm2880, %v2661
        %2941 = vst.msk [vmem:[%s172 + $0xf0] sm:$0xf] %vm2880, %v2662
        %2942 = vst.msk [vmem:[%s172 + $0xf4] sm:$0xf] %vm2880, %v2663
        %2943 = vst.msk [vmem:[%s172 + $0xf8] sm:$0xf] %vm2880, %v2664
        %2944 = vst.msk [vmem:[%s172 + $0xfc] sm:$0xf] %vm2880, %v2665
        %2945 = vst.msk [vmem:[%s172 + $0x100] sm:$0xf] %vm2880, %v2666
        %2946 = vst.msk [vmem:[%s172 + $0x104] sm:$0xf] %vm2880, %v2667
        %2947 = vst.msk [vmem:[%s172 + $0x108] sm:$0xf] %vm2880, %v2668
        %2948 = vst.msk [vmem:[%s172 + $0x10c] sm:$0xf] %vm2880, %v2669
        %2949 = vst.msk [vmem:[%s172 + $0x110] sm:$0xf] %vm2880, %v2670
        %2950 = vst.msk [vmem:[%s172 + $0x114] sm:$0xf] %vm2880, %v2671
        %2951 = vst.msk [vmem:[%s172 + $0x118] sm:$0xf] %vm2880, %v2672
        %2952 = vst.msk [vmem:[%s172 + $0x11c] sm:$0xf] %vm2880, %v2673
        %2953 = vst.msk [vmem:[%s172 + $0x120] sm:$0xf] %vm2880, %v2674
        %2954 = vst.msk [vmem:[%s172 + $0x124] sm:$0xf] %vm2880, %v2675
        %2955 = vst.msk [vmem:[%s172 + $0x128] sm:$0xf] %vm2880, %v2676
        %2956 = vst.msk [vmem:[%s172 + $0x12c] sm:$0xf] %vm2880, %v2677
        %2957 = vst.msk [vmem:[%s172 + $0x130] sm:$0xf] %vm2880, %v2678
        %2958 = vst.msk [vmem:[%s172 + $0x134] sm:$0xf] %vm2880, %v2679
        %2959 = vst.msk [vmem:[%s172 + $0x138] sm:$0xf] %vm2880, %v2680
        %2960 = vst.msk [vmem:[%s172 + $0x13c] sm:$0xf] %vm2880, %v2681
        %2961 = vst.msk [vmem:[%s172 + $0x140] sm:$0xf] %vm2880, %v2682
        %2962 = vst.msk [vmem:[%s172 + $0x144] sm:$0xf] %vm2880, %v2683
        %2963 = vst.msk [vmem:[%s172 + $0x148] sm:$0xf] %vm2880, %v2684
        %2964 = vst.msk [vmem:[%s172 + $0x14c] sm:$0xf] %vm2880, %v2685
        %2965 = vst.msk [vmem:[%s172 + $0x150] sm:$0xf] %vm2880, %v2686
        %2966 = vst.msk [vmem:[%s172 + $0x154] sm:$0xf] %vm2880, %v2687
        %2967 = vst.msk [vmem:[%s172 + $0x158] sm:$0xf] %vm2880, %v2688
        %2968 = vst.msk [vmem:[%s172 + $0x15c] sm:$0xf] %vm2880, %v2689
        %2969 = vst.msk [vmem:[%s172 + $0x160] sm:$0xf] %vm2880, %v2690
        %2970 = vst.msk [vmem:[%s172 + $0x164] sm:$0xf] %vm2880, %v2691
        %2971 = vst.msk [vmem:[%s172 + $0x168] sm:$0xf] %vm2880, %v2692
        %2972 = vst.msk [vmem:[%s172 + $0x16c] sm:$0xf] %vm2880, %v2693
        %2973 = vst.msk [vmem:[%s172 + $0x170] sm:$0xf] %vm2880, %v2694
        %2974 = vst.msk [vmem:[%s172 + $0x174] sm:$0xf] %vm2880, %v2695
        %2975 = vst.msk [vmem:[%s172 + $0x178] sm:$0xf] %vm2880, %v2696
        %2976 = vst.msk [vmem:[%s172 + $0x17c] sm:$0xf] %vm2880, %v2697
        %2977 = vst.msk [vmem:[%s172 + $0x180] sm:$0xf] %vm2880, %v2698
        %2978 = vst.msk [vmem:[%s172 + $0x184] sm:$0xf] %vm2880, %v2699
        %2979 = vst.msk [vmem:[%s172 + $0x188] sm:$0xf] %vm2880, %v2700
        %2980 = vst.msk [vmem:[%s172 + $0x18c] sm:$0xf] %vm2880, %v2701
        %2981 = vst.msk [vmem:[%s172 + $0x190] sm:$0xf] %vm2880, %v2702
        %2982 = vst.msk [vmem:[%s172 + $0x194] sm:$0xf] %vm2880, %v2703
        %2983 = vst.msk [vmem:[%s172 + $0x198] sm:$0xf] %vm2880, %v2704
        %2984 = vst.msk [vmem:[%s172 + $0x19c] sm:$0xf] %vm2880, %v2705
        %2985 = vst.msk [vmem:[%s172 + $0x1a0] sm:$0xf] %vm2880, %v2706
        %2986 = vst.msk [vmem:[%s172 + $0x1a4] sm:$0xf] %vm2880, %v2707
        %2987 = vst.msk [vmem:[%s172 + $0x1a8] sm:$0xf] %vm2880, %v2708
        %2988 = vst.msk [vmem:[%s172 + $0x1ac] sm:$0xf] %vm2880, %v2709
        %2989 = vst.msk [vmem:[%s172 + $0x1b0] sm:$0xf] %vm2880, %v2710
        %2990 = vst.msk [vmem:[%s172 + $0x1b4] sm:$0xf] %vm2880, %v2711
        %2991 = vst.msk [vmem:[%s172 + $0x1b8] sm:$0xf] %vm2880, %v2712
        %2992 = vst.msk [vmem:[%s172 + $0x1bc] sm:$0xf] %vm2880, %v2713
        %2993 = vst.msk [vmem:[%s172 + $0x1c0] sm:$0xf] %vm2880, %v2714
        %2994 = vst.msk [vmem:[%s172 + $0x1c4] sm:$0xf] %vm2880, %v2715
        %2995 = vst.msk [vmem:[%s172 + $0x1c8] sm:$0xf] %vm2880, %v2716
        %2996 = vst.msk [vmem:[%s172 + $0x1cc] sm:$0xf] %vm2880, %v2717
        %2997 = vst.msk [vmem:[%s172 + $0x1d0] sm:$0xf] %vm2880, %v2718
        %2998 = vst.msk [vmem:[%s172 + $0x1d4] sm:$0xf] %vm2880, %v2719
        %2999 = vst.msk [vmem:[%s172 + $0x1d8] sm:$0xf] %vm2880, %v2720
        %3000 = vst.msk [vmem:[%s172 + $0x1dc] sm:$0xf] %vm2880, %v2721
        %3001 = vst.msk [vmem:[%s172 + $0x1e0] sm:$0xf] %vm2880, %v2722
        %3002 = vst.msk [vmem:[%s172 + $0x1e4] sm:$0xf] %vm2880, %v2723
        %3003 = vst.msk [vmem:[%s172 + $0x1e8] sm:$0xf] %vm2880, %v2724
        %3004 = vst.msk [vmem:[%s172 + $0x1ec] sm:$0xf] %vm2880, %v2725
        %3005 = vst.msk [vmem:[%s172 + $0x1f0] sm:$0xf] %vm2880, %v2726
        %3006 = vst.msk [vmem:[%s172 + $0x1f4] sm:$0xf] %vm2880, %v2727
        %3007 = vst.msk [vmem:[%s172 + $0x1f8] sm:$0xf] %vm2880, %v2728
        %3008 = vst.msk [vmem:[%s172 + $0x1fc] sm:$0xf] %vm2880, %v2729
        %3009 = vst.msk [vmem:[%s172 + $0x200] sm:$0xf] %vm2880, %v2730
        %3010 = vst.msk [vmem:[%s172 + $0x204] sm:$0xf] %vm2880, %v2731
        %3011 = vst.msk [vmem:[%s172 + $0x208] sm:$0xf] %vm2880, %v2732
        %3012 = vst.msk [vmem:[%s172 + $0x20c] sm:$0xf] %vm2880, %v2733
        %3013 = vst.msk [vmem:[%s172 + $0x210] sm:$0xf] %vm2880, %v2734
        %3014 = vst.msk [vmem:[%s172 + $0x214] sm:$0xf] %vm2880, %v2735
        %3015 = vst.msk [vmem:[%s172 + $0x218] sm:$0xf] %vm2880, %v2736
        %3016 = vst.msk [vmem:[%s172 + $0x21c] sm:$0xf] %vm2880, %v2737
        %3017 = vst.msk [vmem:[%s172 + $0x220] sm:$0xf] %vm2880, %v2738
        %3018 = vst.msk [vmem:[%s172 + $0x224] sm:$0xf] %vm2880, %v2739
        %3019 = vst.msk [vmem:[%s172 + $0x228] sm:$0xf] %vm2880, %v2740
        %3020 = vst.msk [vmem:[%s172 + $0x22c] sm:$0xf] %vm2880, %v2741
        %3021 = vst.msk [vmem:[%s172 + $0x230] sm:$0xf] %vm2880, %v2742
        %3022 = vst.msk [vmem:[%s172 + $0x234] sm:$0xf] %vm2880, %v2743
        %3023 = vst.msk [vmem:[%s172 + $0x238] sm:$0xf] %vm2880, %v2744
        %3024 = vst.msk [vmem:[%s172 + $0x23c] sm:$0xf] %vm2880, %v2745
        %3025 = vst.msk [vmem:[%s172 + $0x240] sm:$0xf] %vm2880, %v2746
        %3026 = vst.msk [vmem:[%s172 + $0x244] sm:$0xf] %vm2880, %v2747
        %3027 = vst.msk [vmem:[%s172 + $0x248] sm:$0xf] %vm2880, %v2748
        %3028 = vst.msk [vmem:[%s172 + $0x24c] sm:$0xf] %vm2880, %v2749
        %3029 = vst.msk [vmem:[%s172 + $0x250] sm:$0xf] %vm2880, %v2750
        %3030 = vst.msk [vmem:[%s172 + $0x254] sm:$0xf] %vm2880, %v2751
        %3031 = vst.msk [vmem:[%s172 + $0x258] sm:$0xf] %vm2880, %v2752
        %3032 = vst.msk [vmem:[%s172 + $0x25c] sm:$0xf] %vm2880, %v2753
        %3033 = vst.msk [vmem:[%s172 + $0x260] sm:$0xf] %vm2880, %v2754
        %3034 = vst.msk [vmem:[%s172 + $0x264] sm:$0xf] %vm2880, %v2755
        %3035 = vst.msk [vmem:[%s172 + $0x268] sm:$0xf] %vm2880, %v2756
        %3036 = vst.msk [vmem:[%s172 + $0x26c] sm:$0xf] %vm2880, %v2757
        %3037 = vst.msk [vmem:[%s172 + $0x270] sm:$0xf] %vm2880, %v2758
        %3038 = vst.msk [vmem:[%s172 + $0x274] sm:$0xf] %vm2880, %v2759
        %3039 = vst.msk [vmem:[%s172 + $0x278] sm:$0xf] %vm2880, %v2760
        %3040 = vst.msk [vmem:[%s172 + $0x27c] sm:$0xf] %vm2880, %v2761
        %3041 = vst.msk [vmem:[%s172 + $0x280] sm:$0xf] %vm2880, %v2762
        %3042 = vst.msk [vmem:[%s172 + $0x284] sm:$0xf] %vm2880, %v2763
        %3043 = vst.msk [vmem:[%s172 + $0x288] sm:$0xf] %vm2880, %v2764
        %3044 = vst.msk [vmem:[%s172 + $0x28c] sm:$0xf] %vm2880, %v2765
        %3045 = vst.msk [vmem:[%s172 + $0x290] sm:$0xf] %vm2880, %v2766
        %3046 = vst.msk [vmem:[%s172 + $0x294] sm:$0xf] %vm2880, %v2767
        %3047 = vst.msk [vmem:[%s172 + $0x298] sm:$0xf] %vm2880, %v2768
        %3048 = vst.msk [vmem:[%s172 + $0x29c] sm:$0xf] %vm2880, %v2769
        %3049 = vst.msk [vmem:[%s172 + $0x2a0] sm:$0xf] %vm2880, %v2770
        %3050 = vst.msk [vmem:[%s172 + $0x2a4] sm:$0xf] %vm2880, %v2771
        %3051 = vst.msk [vmem:[%s172 + $0x2a8] sm:$0xf] %vm2880, %v2772
        %3052 = vst.msk [vmem:[%s172 + $0x2ac] sm:$0xf] %vm2880, %v2773
        %3053 = vst.msk [vmem:[%s172 + $0x2b0] sm:$0xf] %vm2880, %v2774
        %3054 = vst.msk [vmem:[%s172 + $0x2b4] sm:$0xf] %vm2880, %v2775
        %3055 = vst.msk [vmem:[%s172 + $0x2b8] sm:$0xf] %vm2880, %v2776
        %3056 = vst.msk [vmem:[%s172 + $0x2bc] sm:$0xf] %vm2880, %v2777
        %3057 = vst.msk [vmem:[%s172 + $0x2c0] sm:$0xf] %vm2880, %v2778
        %3058 = vst.msk [vmem:[%s172 + $0x2c4] sm:$0xf] %vm2880, %v2779
        %3059 = vst.msk [vmem:[%s172 + $0x2c8] sm:$0xf] %vm2880, %v2780
        %3060 = vst.msk [vmem:[%s172 + $0x2cc] sm:$0xf] %vm2880, %v2781
        %3061 = vst.msk [vmem:[%s172 + $0x2d0] sm:$0xf] %vm2880, %v2782
        %3062 = vst.msk [vmem:[%s172 + $0x2d4] sm:$0xf] %vm2880, %v2783
        %3063 = vst.msk [vmem:[%s172 + $0x2d8] sm:$0xf] %vm2880, %v2784
        %3064 = vst.msk [vmem:[%s172 + $0x2dc] sm:$0xf] %vm2880, %v2785
        %3065 = vst.msk [vmem:[%s172 + $0x2e0] sm:$0xf] %vm2880, %v2786
        %3066 = vst.msk [vmem:[%s172 + $0x2e4] sm:$0xf] %vm2880, %v2787
        %3067 = vst.msk [vmem:[%s172 + $0x2e8] sm:$0xf] %vm2880, %v2788
        %3068 = vst.msk [vmem:[%s172 + $0x2ec] sm:$0xf] %vm2880, %v2789
        %3069 = vst.msk [vmem:[%s172 + $0x2f0] sm:$0xf] %vm2880, %v2790
        %3070 = vst.msk [vmem:[%s172 + $0x2f4] sm:$0xf] %vm2880, %v2791
        %3071 = vst.msk [vmem:[%s172 + $0x2f8] sm:$0xf] %vm2880, %v2792
        %3072 = vst.msk [vmem:[%s172 + $0x2fc] sm:$0xf] %vm2880, %v2793
        %3073 = vst.msk [vmem:[%s172 + $0x300] sm:$0xf] %vm2880, %v2794
        %3074 = vst.msk [vmem:[%s172 + $0x304] sm:$0xf] %vm2880, %v2795
        %3075 = vst.msk [vmem:[%s172 + $0x308] sm:$0xf] %vm2880, %v2796
        %3076 = vst.msk [vmem:[%s172 + $0x30c] sm:$0xf] %vm2880, %v2797
        %3077 = vst.msk [vmem:[%s172 + $0x310] sm:$0xf] %vm2880, %v2798
        %3078 = vst.msk [vmem:[%s172 + $0x314] sm:$0xf] %vm2880, %v2799
        %3079 = vst.msk [vmem:[%s172 + $0x318] sm:$0xf] %vm2880, %v2800
        %3080 = vst.msk [vmem:[%s172 + $0x31c] sm:$0xf] %vm2880, %v2801
        %3081 = vst.msk [vmem:[%s172 + $0x320] sm:$0xf] %vm2880, %v2802
        %3082 = vst.msk [vmem:[%s172 + $0x324] sm:$0xf] %vm2880, %v2803
        %3083 = vst.msk [vmem:[%s172 + $0x328] sm:$0xf] %vm2880, %v2804
        %3084 = vst.msk [vmem:[%s172 + $0x32c] sm:$0xf] %vm2880, %v2805
        %3085 = vst.msk [vmem:[%s172 + $0x330] sm:$0xf] %vm2880, %v2806
        %3086 = vst.msk [vmem:[%s172 + $0x334] sm:$0xf] %vm2880, %v2807
        %3087 = vst.msk [vmem:[%s172 + $0x338] sm:$0xf] %vm2880, %v2808
        %3088 = vst.msk [vmem:[%s172 + $0x33c] sm:$0xf] %vm2880, %v2809
        %3089 = vst.msk [vmem:[%s172 + $0x340] sm:$0xf] %vm2880, %v2810
        %3090 = vst.msk [vmem:[%s172 + $0x344] sm:$0xf] %vm2880, %v2811
        %3091 = vst.msk [vmem:[%s172 + $0x348] sm:$0xf] %vm2880, %v2812
        %3092 = vst.msk [vmem:[%s172 + $0x34c] sm:$0xf] %vm2880, %v2813
        %3093 = vst.msk [vmem:[%s172 + $0x350] sm:$0xf] %vm2880, %v2814
        %3094 = vst.msk [vmem:[%s172 + $0x354] sm:$0xf] %vm2880, %v2815
        %3095 = vst.msk [vmem:[%s172 + $0x358] sm:$0xf] %vm2880, %v2816
        %3096 = vst.msk [vmem:[%s172 + $0x35c] sm:$0xf] %vm2880, %v2817
        %3097 = vst.msk [vmem:[%s172 + $0x360] sm:$0xf] %vm2880, %v2818
        %3098 = vst.msk [vmem:[%s172 + $0x364] sm:$0xf] %vm2880, %v2819
        %3099 = vst.msk [vmem:[%s172 + $0x368] sm:$0xf] %vm2880, %v2820
        %3100 = vst.msk [vmem:[%s172 + $0x36c] sm:$0xf] %vm2880, %v2821
        %3101 = vst.msk [vmem:[%s172 + $0x370] sm:$0xf] %vm2880, %v2822
        %3102 = vst.msk [vmem:[%s172 + $0x374] sm:$0xf] %vm2880, %v2823
        %3103 = vst.msk [vmem:[%s172 + $0x378] sm:$0xf] %vm2880, %v2824
        %3104 = vst.msk [vmem:[%s172 + $0x37c] sm:$0xf] %vm2880, %v2825
        %3105 = vst.msk [vmem:[%s172 + $0x380] sm:$0xf] %vm2880, %v2826
        %3106 = vst.msk [vmem:[%s172 + $0x384] sm:$0xf] %vm2880, %v2827
        %3107 = vst.msk [vmem:[%s172 + $0x388] sm:$0xf] %vm2880, %v2828
        %3108 = vst.msk [vmem:[%s172 + $0x38c] sm:$0xf] %vm2880, %v2829
        %3109 = vst.msk [vmem:[%s172 + $0x390] sm:$0xf] %vm2880, %v2830
        %3110 = vst.msk [vmem:[%s172 + $0x394] sm:$0xf] %vm2880, %v2831
        %3111 = vst.msk [vmem:[%s172 + $0x398] sm:$0xf] %vm2880, %v2832
        %3112 = vst.msk [vmem:[%s172 + $0x39c] sm:$0xf] %vm2880, %v2833
        %3113 = vst.msk [vmem:[%s172 + $0x3a0] sm:$0xf] %vm2880, %v2834
        %3114 = vst.msk [vmem:[%s172 + $0x3a4] sm:$0xf] %vm2880, %v2835
        %3115 = vst.msk [vmem:[%s172 + $0x3a8] sm:$0xf] %vm2880, %v2836
        %3116 = vst.msk [vmem:[%s172 + $0x3ac] sm:$0xf] %vm2880, %v2837
        %3117 = vst.msk [vmem:[%s172 + $0x3b0] sm:$0xf] %vm2880, %v2838
        %3118 = vst.msk [vmem:[%s172 + $0x3b4] sm:$0xf] %vm2880, %v2839
        %3119 = vst.msk [vmem:[%s172 + $0x3b8] sm:$0xf] %vm2880, %v2840
        %3120 = vst.msk [vmem:[%s172 + $0x3bc] sm:$0xf] %vm2880, %v2841
        %3121 = vst.msk [vmem:[%s172 + $0x3c0] sm:$0xf] %vm2880, %v2842
        %3122 = vst.msk [vmem:[%s172 + $0x3c4] sm:$0xf] %vm2880, %v2843
        %3123 = vst.msk [vmem:[%s172 + $0x3c8] sm:$0xf] %vm2880, %v2844
        %3124 = vst.msk [vmem:[%s172 + $0x3cc] sm:$0xf] %vm2880, %v2845
        %3125 = vst.msk [vmem:[%s172 + $0x3d0] sm:$0xf] %vm2880, %v2846
        %3126 = vst.msk [vmem:[%s172 + $0x3d4] sm:$0xf] %vm2880, %v2847
        %3127 = vst.msk [vmem:[%s172 + $0x3d8] sm:$0xf] %vm2880, %v2848
        %3128 = vst.msk [vmem:[%s172 + $0x3dc] sm:$0xf] %vm2880, %v2849
        %3129 = vst.msk [vmem:[%s172 + $0x3e0] sm:$0xf] %vm2880, %v2850
        %3130 = vst.msk [vmem:[%s172 + $0x3e4] sm:$0xf] %vm2880, %v2851
        %3131 = vst.msk [vmem:[%s172 + $0x3e8] sm:$0xf] %vm2880, %v2852
        %3132 = vst.msk [vmem:[%s172 + $0x3ec] sm:$0xf] %vm2880, %v2853
        %3133 = vst.msk [vmem:[%s172 + $0x3f0] sm:$0xf] %vm2880, %v2854
        %3134 = vst.msk [vmem:[%s172 + $0x3f4] sm:$0xf] %vm2880, %v2855
        %3135 = vst.msk [vmem:[%s172 + $0x3f8] sm:$0xf] %vm2880, %v2856
        %3136 = vst.msk [vmem:[%s172 + $0x3fc] sm:$0xf] %vm2880, %v2857
        %3137 = vst.msk [vmem:[%s172 + $0x400] sm:$0xf] %vm2880, %v2858
        %3138 = vst.msk [vmem:[%s172 + $0x404] sm:$0xf] %vm2880, %v2859
        %3139 = vst.msk [vmem:[%s172 + $0x408] sm:$0xf] %vm2880, %v2860
        %3140 = vst.msk [vmem:[%s172 + $0x40c] sm:$0xf] %vm2880, %v2861
        %3141 = vst.msk [vmem:[%s172 + $0x410] sm:$0xf] %vm2880, %v2862
        %3142 = vst.msk [vmem:[%s172 + $0x414] sm:$0xf] %vm2880, %v2863
        %3143 = vst.msk [vmem:[%s172 + $0x418] sm:$0xf] %vm2880, %v2864
        %3144 = vst.msk [vmem:[%s172 + $0x41c] sm:$0xf] %vm2880, %v2865
        %3145 = vst.msk [vmem:[%s172 + $0x420] sm:$0xf] %vm2880, %v2866
        %3146 = vst.msk [vmem:[%s172 + $0x424] sm:$0xf] %vm2880, %v2867
        %3147 = vst.msk [vmem:[%s172 + $0x428] sm:$0xf] %vm2880, %v2868
        %3148 = vst.msk [vmem:[%s172 + $0x42c] sm:$0xf] %vm2880, %v2869
        %3149 = vst.msk [vmem:[%s172 + $0x430] sm:$0xf] %vm2880, %v2870
        %3150 = vst.msk [vmem:[%s172 + $0x434] sm:$0xf] %vm2880, %v2871
        %3151 = vst.msk [vmem:[%s172 + $0x438] sm:$0xf] %vm2880, %v2872
        %3152 = vst.msk [vmem:[%s172 + $0x43c] sm:$0xf] %vm2880, %v2873
        %3153 = vst.msk [vmem:[%s172 + $0x440] sm:$0xf] %vm2880, %v2874
        %3154 = vst.msk [vmem:[%s172 + $0x444] sm:$0xf] %vm2880, %v2875
        %3155 = vst.msk [vmem:[%s172 + $0x448] sm:$0xf] %vm2880, %v2876
        %3156 = vst.msk [vmem:[%s172 + $0x44c] sm:$0xf] %vm2880, %v2877
        %3157 = vst.msk [vmem:[%s172 + $0x450] sm:$0xf] %vm2880, %v2878
        %3158 = vst.msk [vmem:[%s172 + $0x454] sm:$0xf] %vm2880, %v2879
        %s3159 = sand.u32 %s90, 1
        %s3160 = sand.u32 %s90, 1
        %s3161 = smul.addr %s3160, 1112
        %s3162 = scalar_lea.vmem [#allocation2], %s3161
        // Predicated region
        $region33: #{actor_forward.4} parent=31 // pred_check
          %p3163 = pneg %p100
        $region34: #{actor_forward.4} parent=31 // pred_check_branch
          %3165 = sbr.rel (%p3163) target = $region36
        $region35: #{actor_forward.4} parent=31 // pred_region
          %s3166 = smul.u32 278, %s14
          %s3167 = ssub.s32 553, %s3166
          %p3168 = scmp.lt.s32.totalorder %s3167, 278
          %s3169 = scalar_select %p3168, %s3167, 278
          %s3170 = smul.u32 4, %s3169
          %p3171 = scmp.ne.s32.totalorder 0, %s3170
          %s3172 = smul.addr %s3166, 4
          %s3173 = scalar_lea.vmem %s3, %s3172
          // Predicated region
          $region37: #{actor_forward.4} parent=35 // pred_check
            %p3174 = pneg %p3171
          $region38: #{actor_forward.4} parent=35 // pred_check_branch
            %3176 = sbr.rel (%p3174) target = $region40
          $region39: #{actor_forward.4} parent=35 // pred_region
            // Predicated region
            $region41: #{actor_forward.4} parent=39 // pred_check
              _
            $region42: #{actor_forward.4} parent=39 // pred_check_branch
              %3178 = sbr.rel target = $region44
            $region43: #{actor_forward.4} parent=39 // pred_region
              // Predicated region
              $region63: #{actor_forward.4} parent=43 // pred_check
                _
              $region64: #{actor_forward.4} parent=43 // pred_check_branch
                %3290 = sbr.rel (0) target = $region66
              $region65: #{actor_forward.4} parent=43 // pred_region
                %s3292 = ssub.s32 16, 1
                %s3293 = sshrl.u32 %s3169, 5
                // While loop
                $region67: #{actor_forward.4} parent=65 // loop_pre_header
                  _
                $region68: #{actor_forward.4} parent=65 // loop_header
                  %s3295 = sphi 0, %s3297
                  %p3296 = scmp.ge.s32.totalorder %s3295, %s3293
                  %s3300 = sphi 0, %s3369
                  %s3301 = sphi %s3162, %s3372
                  %s3302 = sphi %s3173, %s3373
                $region69: #{actor_forward.4} parent=65 // loop_header_branch
                  %3299 = sbr.rel (%p3296) target = $region73
                $region70: #{actor_forward.4} parent=65 // loop_body
                  %v3303 = vld [vmem:[%s3301] sm:%s3292]
                  %3304 = vst [vmem:[%s3302] sm:%s3292] %v3303
                  %v3305 = vld [vmem:[%s3301 + $0x4] sm:%s3292]
                  %3306 = vst [vmem:[%s3302 + $0x4] sm:%s3292] %v3305
                  %v3307 = vld [vmem:[%s3301 + $0x8] sm:%s3292]
                  %3308 = vst [vmem:[%s3302 + $0x8] sm:%s3292] %v3307
                  %v3309 = vld [vmem:[%s3301 + $0xc] sm:%s3292]
                  %3310 = vst [vmem:[%s3302 + $0xc] sm:%s3292] %v3309
                  %v3311 = vld [vmem:[%s3301 + $0x10] sm:%s3292]
                  %3312 = vst [vmem:[%s3302 + $0x10] sm:%s3292] %v3311
                  %v3313 = vld [vmem:[%s3301 + $0x14] sm:%s3292]
                  %3314 = vst [vmem:[%s3302 + $0x14] sm:%s3292] %v3313
                  %v3315 = vld [vmem:[%s3301 + $0x18] sm:%s3292]
                  %3316 = vst [vmem:[%s3302 + $0x18] sm:%s3292] %v3315
                  %v3317 = vld [vmem:[%s3301 + $0x1c] sm:%s3292]
                  %3318 = vst [vmem:[%s3302 + $0x1c] sm:%s3292] %v3317
                  %v3319 = vld [vmem:[%s3301 + $0x20] sm:%s3292]
                  %3320 = vst [vmem:[%s3302 + $0x20] sm:%s3292] %v3319
                  %v3321 = vld [vmem:[%s3301 + $0x24] sm:%s3292]
                  %3322 = vst [vmem:[%s3302 + $0x24] sm:%s3292] %v3321
                  %v3323 = vld [vmem:[%s3301 + $0x28] sm:%s3292]
                  %3324 = vst [vmem:[%s3302 + $0x28] sm:%s3292] %v3323
                  %v3325 = vld [vmem:[%s3301 + $0x2c] sm:%s3292]
                  %3326 = vst [vmem:[%s3302 + $0x2c] sm:%s3292] %v3325
                  %v3327 = vld [vmem:[%s3301 + $0x30] sm:%s3292]
                  %3328 = vst [vmem:[%s3302 + $0x30] sm:%s3292] %v3327
                  %v3329 = vld [vmem:[%s3301 + $0x34] sm:%s3292]
                  %3330 = vst [vmem:[%s3302 + $0x34] sm:%s3292] %v3329
                  %v3331 = vld [vmem:[%s3301 + $0x38] sm:%s3292]
                  %3332 = vst [vmem:[%s3302 + $0x38] sm:%s3292] %v3331
                  %v3333 = vld [vmem:[%s3301 + $0x3c] sm:%s3292]
                  %3334 = vst [vmem:[%s3302 + $0x3c] sm:%s3292] %v3333
                  %v3335 = vld [vmem:[%s3301 + $0x40] sm:%s3292]
                  %3336 = vst [vmem:[%s3302 + $0x40] sm:%s3292] %v3335
                  %v3337 = vld [vmem:[%s3301 + $0x44] sm:%s3292]
                  %3338 = vst [vmem:[%s3302 + $0x44] sm:%s3292] %v3337
                  %v3339 = vld [vmem:[%s3301 + $0x48] sm:%s3292]
                  %3340 = vst [vmem:[%s3302 + $0x48] sm:%s3292] %v3339
                  %v3341 = vld [vmem:[%s3301 + $0x4c] sm:%s3292]
                  %3342 = vst [vmem:[%s3302 + $0x4c] sm:%s3292] %v3341
                  %v3343 = vld [vmem:[%s3301 + $0x50] sm:%s3292]
                  %3344 = vst [vmem:[%s3302 + $0x50] sm:%s3292] %v3343
                  %v3345 = vld [vmem:[%s3301 + $0x54] sm:%s3292]
                  %3346 = vst [vmem:[%s3302 + $0x54] sm:%s3292] %v3345
                  %v3347 = vld [vmem:[%s3301 + $0x58] sm:%s3292]
                  %3348 = vst [vmem:[%s3302 + $0x58] sm:%s3292] %v3347
                  %v3349 = vld [vmem:[%s3301 + $0x5c] sm:%s3292]
                  %3350 = vst [vmem:[%s3302 + $0x5c] sm:%s3292] %v3349
                  %v3351 = vld [vmem:[%s3301 + $0x60] sm:%s3292]
                  %3352 = vst [vmem:[%s3302 + $0x60] sm:%s3292] %v3351
                  %v3353 = vld [vmem:[%s3301 + $0x64] sm:%s3292]
                  %3354 = vst [vmem:[%s3302 + $0x64] sm:%s3292] %v3353
                  %v3355 = vld [vmem:[%s3301 + $0x68] sm:%s3292]
                  %3356 = vst [vmem:[%s3302 + $0x68] sm:%s3292] %v3355
                  %v3357 = vld [vmem:[%s3301 + $0x6c] sm:%s3292]
                  %3358 = vst [vmem:[%s3302 + $0x6c] sm:%s3292] %v3357
                  %v3359 = vld [vmem:[%s3301 + $0x70] sm:%s3292]
                  %3360 = vst [vmem:[%s3302 + $0x70] sm:%s3292] %v3359
                  %v3361 = vld [vmem:[%s3301 + $0x74] sm:%s3292]
                  %3362 = vst [vmem:[%s3302 + $0x74] sm:%s3292] %v3361
                  %v3363 = vld [vmem:[%s3301 + $0x78] sm:%s3292]
                  %3364 = vst [vmem:[%s3302 + $0x78] sm:%s3292] %v3363
                  %v3365 = vld [vmem:[%s3301 + $0x7c] sm:%s3292]
                  %3366 = vst [vmem:[%s3302 + $0x7c] sm:%s3292] %v3365
                  %s3367 = sadd.s32 1, %s3300
                  %p3368 = scmp.ge.s32.totalorder %s3367, %s3293
                  %s3369 = scalar_select %p3368, 0, %s3367
                  %s3370 = smul.u32 %s3369, 128
                  %s3371 = smul.u32 %s3369, 128
                  %s3372 = scalar_lea.vmem %s3162, %s3370 [#allocation2]
                  %s3373 = scalar_lea.vmem %s3173, %s3371
                $region71: #{actor_forward.4} parent=65 // loop_footer
                  %s3297 = sadd.s32 %s3295, 1
                $region72: #{actor_forward.4} parent=65 // loop_footer_branch
                  %3294 = sbr.rel target = $region68
                $region73: #{actor_forward.4} parent=65 // loop_exit
                  _
                %s3374 = sshrl.u32 %s3169, 5
                %s3375 = sand.u32 %s3169, 31
                %s3376 = smul.u32 %s3374, 32
                %s3377 = smul.u32 4, %s3376
                %s3378 = scalar_lea.vmem %s3162, %s3377 [#allocation2]
                %s3379 = smul.u32 4, %s3376
                %s3380 = scalar_lea.vmem %s3173, %s3379
                // While loop
                $region74: #{actor_forward.4} parent=65 // loop_pre_header
                  _
                $region75: #{actor_forward.4} parent=65 // loop_header
                  %s3382 = sphi 0, %s3384
                  %p3383 = scmp.ge.s32.totalorder %s3382, %s3375
                  %s3387 = sphi 0, %s3394
                  %s3388 = sphi %s3378, %s3397
                  %s3389 = sphi %s3380, %s3398
                $region76: #{actor_forward.4} parent=65 // loop_header_branch
                  %3386 = sbr.rel (%p3383) target = $region80
                $region77: #{actor_forward.4} parent=65 // loop_body
                  %v3390 = vld [vmem:[%s3388] sm:%s3292]
                  %3391 = vst [vmem:[%s3389] sm:%s3292] %v3390
                  %s3392 = sadd.s32 1, %s3387
                  %p3393 = scmp.ge.s32.totalorder %s3392, %s3375
                  %s3394 = scalar_select %p3393, 0, %s3392
                  %s3395 = smul.u32 %s3394, 4
                  %s3396 = smul.u32 %s3394, 4
                  %s3397 = scalar_lea.vmem %s3378, %s3395 [#allocation2]
                  %s3398 = scalar_lea.vmem %s3380, %s3396
                $region78: #{actor_forward.4} parent=65 // loop_footer
                  %s3384 = sadd.s32 %s3382, 1
                $region79: #{actor_forward.4} parent=65 // loop_footer_branch
                  %3381 = sbr.rel target = $region75
                $region80: #{actor_forward.4} parent=65 // loop_exit
                  _
              $region66: #{actor_forward.4} parent=43 // pred_fallthru
                _
            $region44: #{actor_forward.4} parent=39 // pred_fallthru
              _
            // Predicated region
            $region45: #{actor_forward.4} parent=39 // pred_check
              _
            $region46: #{actor_forward.4} parent=39 // pred_check_branch
              %3180 = sbr.rel (0) target = $region48
            $region47: #{actor_forward.4} parent=39 // pred_region
              %s3182 = ssub.s32 16, 1
              %s3183 = sshrl.u32 %s3169, 5
              // While loop
              $region49: #{actor_forward.4} parent=47 // loop_pre_header
                _
              $region50: #{actor_forward.4} parent=47 // loop_header
                %s3185 = sphi 0, %s3187
                %p3186 = scmp.ge.s32.totalorder %s3185, %s3183
                %s3190 = sphi 0, %s3259
                %s3191 = sphi %s3162, %s3262
                %s3192 = sphi %s3173, %s3263
              $region51: #{actor_forward.4} parent=47 // loop_header_branch
                %3189 = sbr.rel (%p3186) target = $region55
              $region52: #{actor_forward.4} parent=47 // loop_body
                %v3193 = vld [vmem:[%s3191] sm:%s3182]
                %3194 = vst [vmem:[%s3192] sm:%s3182] %v3193
                %v3195 = vld [vmem:[%s3191 + $0x4] sm:%s3182]
                %3196 = vst [vmem:[%s3192 + $0x4] sm:%s3182] %v3195
                %v3197 = vld [vmem:[%s3191 + $0x8] sm:%s3182]
                %3198 = vst [vmem:[%s3192 + $0x8] sm:%s3182] %v3197
                %v3199 = vld [vmem:[%s3191 + $0xc] sm:%s3182]
                %3200 = vst [vmem:[%s3192 + $0xc] sm:%s3182] %v3199
                %v3201 = vld [vmem:[%s3191 + $0x10] sm:%s3182]
                %3202 = vst [vmem:[%s3192 + $0x10] sm:%s3182] %v3201
                %v3203 = vld [vmem:[%s3191 + $0x14] sm:%s3182]
                %3204 = vst [vmem:[%s3192 + $0x14] sm:%s3182] %v3203
                %v3205 = vld [vmem:[%s3191 + $0x18] sm:%s3182]
                %3206 = vst [vmem:[%s3192 + $0x18] sm:%s3182] %v3205
                %v3207 = vld [vmem:[%s3191 + $0x1c] sm:%s3182]
                %3208 = vst [vmem:[%s3192 + $0x1c] sm:%s3182] %v3207
                %v3209 = vld [vmem:[%s3191 + $0x20] sm:%s3182]
                %3210 = vst [vmem:[%s3192 + $0x20] sm:%s3182] %v3209
                %v3211 = vld [vmem:[%s3191 + $0x24] sm:%s3182]
                %3212 = vst [vmem:[%s3192 + $0x24] sm:%s3182] %v3211
                %v3213 = vld [vmem:[%s3191 + $0x28] sm:%s3182]
                %3214 = vst [vmem:[%s3192 + $0x28] sm:%s3182] %v3213
                %v3215 = vld [vmem:[%s3191 + $0x2c] sm:%s3182]
                %3216 = vst [vmem:[%s3192 + $0x2c] sm:%s3182] %v3215
                %v3217 = vld [vmem:[%s3191 + $0x30] sm:%s3182]
                %3218 = vst [vmem:[%s3192 + $0x30] sm:%s3182] %v3217
                %v3219 = vld [vmem:[%s3191 + $0x34] sm:%s3182]
                %3220 = vst [vmem:[%s3192 + $0x34] sm:%s3182] %v3219
                %v3221 = vld [vmem:[%s3191 + $0x38] sm:%s3182]
                %3222 = vst [vmem:[%s3192 + $0x38] sm:%s3182] %v3221
                %v3223 = vld [vmem:[%s3191 + $0x3c] sm:%s3182]
                %3224 = vst [vmem:[%s3192 + $0x3c] sm:%s3182] %v3223
                %v3225 = vld [vmem:[%s3191 + $0x40] sm:%s3182]
                %3226 = vst [vmem:[%s3192 + $0x40] sm:%s3182] %v3225
                %v3227 = vld [vmem:[%s3191 + $0x44] sm:%s3182]
                %3228 = vst [vmem:[%s3192 + $0x44] sm:%s3182] %v3227
                %v3229 = vld [vmem:[%s3191 + $0x48] sm:%s3182]
                %3230 = vst [vmem:[%s3192 + $0x48] sm:%s3182] %v3229
                %v3231 = vld [vmem:[%s3191 + $0x4c] sm:%s3182]
                %3232 = vst [vmem:[%s3192 + $0x4c] sm:%s3182] %v3231
                %v3233 = vld [vmem:[%s3191 + $0x50] sm:%s3182]
                %3234 = vst [vmem:[%s3192 + $0x50] sm:%s3182] %v3233
                %v3235 = vld [vmem:[%s3191 + $0x54] sm:%s3182]
                %3236 = vst [vmem:[%s3192 + $0x54] sm:%s3182] %v3235
                %v3237 = vld [vmem:[%s3191 + $0x58] sm:%s3182]
                %3238 = vst [vmem:[%s3192 + $0x58] sm:%s3182] %v3237
                %v3239 = vld [vmem:[%s3191 + $0x5c] sm:%s3182]
                %3240 = vst [vmem:[%s3192 + $0x5c] sm:%s3182] %v3239
                %v3241 = vld [vmem:[%s3191 + $0x60] sm:%s3182]
                %3242 = vst [vmem:[%s3192 + $0x60] sm:%s3182] %v3241
                %v3243 = vld [vmem:[%s3191 + $0x64] sm:%s3182]
                %3244 = vst [vmem:[%s3192 + $0x64] sm:%s3182] %v3243
                %v3245 = vld [vmem:[%s3191 + $0x68] sm:%s3182]
                %3246 = vst [vmem:[%s3192 + $0x68] sm:%s3182] %v3245
                %v3247 = vld [vmem:[%s3191 + $0x6c] sm:%s3182]
                %3248 = vst [vmem:[%s3192 + $0x6c] sm:%s3182] %v3247
                %v3249 = vld [vmem:[%s3191 + $0x70] sm:%s3182]
                %3250 = vst [vmem:[%s3192 + $0x70] sm:%s3182] %v3249
                %v3251 = vld [vmem:[%s3191 + $0x74] sm:%s3182]
                %3252 = vst [vmem:[%s3192 + $0x74] sm:%s3182] %v3251
                %v3253 = vld [vmem:[%s3191 + $0x78] sm:%s3182]
                %3254 = vst [vmem:[%s3192 + $0x78] sm:%s3182] %v3253
                %v3255 = vld [vmem:[%s3191 + $0x7c] sm:%s3182]
                %3256 = vst [vmem:[%s3192 + $0x7c] sm:%s3182] %v3255
                %s3257 = sadd.s32 1, %s3190
                %p3258 = scmp.ge.s32.totalorder %s3257, %s3183
                %s3259 = scalar_select %p3258, 0, %s3257
                %s3260 = smul.u32 %s3259, 128
                %s3261 = smul.u32 %s3259, 128
                %s3262 = scalar_lea.vmem %s3162, %s3260 [#allocation2]
                %s3263 = scalar_lea.vmem %s3173, %s3261
              $region53: #{actor_forward.4} parent=47 // loop_footer
                %s3187 = sadd.s32 %s3185, 1
              $region54: #{actor_forward.4} parent=47 // loop_footer_branch
                %3184 = sbr.rel target = $region50
              $region55: #{actor_forward.4} parent=47 // loop_exit
                _
              %s3264 = sshrl.u32 %s3169, 5
              %s3265 = sand.u32 %s3169, 31
              %s3266 = smul.u32 %s3264, 32
              %s3267 = smul.u32 4, %s3266
              %s3268 = scalar_lea.vmem %s3162, %s3267 [#allocation2]
              %s3269 = smul.u32 4, %s3266
              %s3270 = scalar_lea.vmem %s3173, %s3269
              // While loop
              $region56: #{actor_forward.4} parent=47 // loop_pre_header
                _
              $region57: #{actor_forward.4} parent=47 // loop_header
                %s3272 = sphi 0, %s3274
                %p3273 = scmp.ge.s32.totalorder %s3272, %s3265
                %s3277 = sphi 0, %s3284
                %s3278 = sphi %s3268, %s3287
                %s3279 = sphi %s3270, %s3288
              $region58: #{actor_forward.4} parent=47 // loop_header_branch
                %3276 = sbr.rel (%p3273) target = $region62
              $region59: #{actor_forward.4} parent=47 // loop_body
                %v3280 = vld [vmem:[%s3278] sm:%s3182]
                %3281 = vst [vmem:[%s3279] sm:%s3182] %v3280
                %s3282 = sadd.s32 1, %s3277
                %p3283 = scmp.ge.s32.totalorder %s3282, %s3265
                %s3284 = scalar_select %p3283, 0, %s3282
                %s3285 = smul.u32 %s3284, 4
                %s3286 = smul.u32 %s3284, 4
                %s3287 = scalar_lea.vmem %s3268, %s3285 [#allocation2]
                %s3288 = scalar_lea.vmem %s3270, %s3286
              $region60: #{actor_forward.4} parent=47 // loop_footer
                %s3274 = sadd.s32 %s3272, 1
              $region61: #{actor_forward.4} parent=47 // loop_footer_branch
                %3271 = sbr.rel target = $region57
              $region62: #{actor_forward.4} parent=47 // loop_exit
                _
            $region48: #{actor_forward.4} parent=39 // pred_fallthru
              _
          $region40: #{actor_forward.4} parent=35 // pred_fallthru
            _
          %3399 = vnop
        $region36: #{actor_forward.4} parent=31 // pred_fallthru
          _
      $region32: #{actor_forward.4} parent=5 // pred_fallthru
        _
      %p3400 = scmp.le.s32.totalorder 2, %s9
      // Predicated region
      $region81: #{actor_forward.4} parent=5 // pred_check
        %p3401 = pneg %p3400
      $region82: #{actor_forward.4} parent=5 // pred_check_branch
        %3403 = sbr.rel (%p3401) target = $region84
      $region83: #{actor_forward.4} parent=5 // pred_region
        %s3404 = ssub.s32 %s9, 2
        // Predicated region
        $region85: #{actor_forward.4} parent=83 // pred_check
          %p3405 = pneg %p106
        $region86: #{actor_forward.4} parent=83 // pred_check_branch
          %3407 = sbr.rel (%p3405) target = $region88
        $region87: #{actor_forward.4} parent=83 // pred_region
          %s3408 = sand.u32 %s91, 1
          %s3409 = sand.u32 %s91, 1
          %s3410 = smul.addr %s3409, 1112
          %s3411 = scalar_lea.vmem [#allocation2], %s3410
        $region88: #{actor_forward.4} parent=83 // pred_fallthru
          _
      $region84: #{actor_forward.4} parent=5 // pred_fallthru
        _
    $region6: #{actor_forward.4} parent=1 // loop_footer
      %s13 = sadd.s32 1, %s9
    $region7: #{actor_forward.4} parent=1 // loop_footer_branch
      %8 = sbr.rel target = $region3
    $region8: #{actor_forward.4} parent=1 // loop_exit
      _

// kernel: actor_forward.5
$region0: #{actor_forward.5}
  #allocation0 [shape = 'u32[]', space=smem, size = 0x4, offset = 0x4, fixed_abs, tag = 'smem constant byte address 0x4 - core index']
  #allocation1 [shape = 'u32[72,128]{1,0:T(1,128)}', space=vmem, size = 0x9000, scoped, tag = 'internal scratch']
  %s0 = inlined_call_operand.vmem [shape: bf16[1058,72], index: 0, kind: input, shape index: {}]
  %s1 = inlined_call_operand.vmem [shape: bf16[72,16], index: 1, kind: input, shape index: {}]
  %s2 = inlined_call_operand.vmem [shape: f32[1,16], index: 2, kind: input, shape index: {}]
  %s3 = inlined_call_operand.vmem [shape: bf16[1058,16], index: 3, kind: output, shape index: {}]
  %s4 = sld [smem:[#allocation0]]
  $region89: #{actor_forward.5} parent=0
    _
  %s6 = ssub.s32 1, %s4
  %s7 = scalar_select 0, %s6, %s4
  $region1: #{actor_forward.5} parent=0
    #allocation2 [shape = 'u8[278528]{0}', space=vmem, size = 0x44000, scoped, tag = 'output window, operand 0']
    loop: start=0, step=1, limit=4
    $region2: #{actor_forward.5} parent=1 // loop_pre_header
      _
    $region3: #{actor_forward.5} parent=1 // loop_header
      %s9 = sphi 0, %s13
      %p10 = scmp.ge.s32.totalorder %s9, 4
      %s19 = sphi 0, %s21
      %s22 = sphi 0, %s19
      %s23 = sphi 0, %s22
      %s39 = sphi 0, %s23
      %s43 = sphi 0, %s43
      %s45 = sphi 0, %s43
      %s46 = sphi 0, %s45
      %s60 = sphi 0, %s46
      %s64 = sphi 0, %s64
      %s66 = sphi 0, %s64
      %s67 = sphi 0, %s66
      %s81 = sphi 0, %s67
      %s87 = sphi 0, %s89
      %s90 = sphi 0, %s87
      %s91 = sphi 0, %s90
      %s107 = sphi 0, %s91
    $region4: #{actor_forward.5} parent=1 // loop_header_branch
      %12 = sbr.rel (%p10) target = $region8
    $region5: #{actor_forward.5} parent=1 // loop_body
      %s14 = ssub.s32 %s9, 1
      %s15 = ssub.s32 %s9, 2
      %s16 = sadd.s32 %s9, 1
      %s17 = ssub.s32 %s9, %s16
      %p18 = scmp.eq.s32.totalorder %s17, 0
      %s20 = sadd.s32 %s19, 1
      %s21 = scalar_select %p18, %s19, %s20
      %p24 = pneg %p18
      %p25 = scmp.eq.s32.totalorder %s9, 1
      %p26 = por %p24, %p25
      %p27 = scmp.ne.s32.totalorder %s19, %s22
      %p28 = scmp.eq.s32.totalorder %s9, 0
      %p29 = por %p27, %p28
      %p30 = scmp.ne.s32.totalorder %s19, %s22
      %p31 = scmp.eq.s32.totalorder %s14, 1
      %p32 = por %p30, %p31
      %p33 = scmp.ne.s32.totalorder %s22, %s23
      %p34 = scmp.eq.s32.totalorder %s14, 0
      %p35 = por %p33, %p34
      %p36 = scmp.ne.s32.totalorder %s22, %s23
      %p37 = scmp.eq.s32.totalorder %s15, 1
      %p38 = por %p36, %p37
      %p40 = scmp.ne.s32.totalorder %s23, %s39
      %p41 = scmp.eq.s32.totalorder %s15, 0
      %p42 = por %p40, %p41
      %s44 = sadd.s32 %s43, 1
      %p47 = scmp.eq.s32.totalorder %s9, 1
      %p48 = scmp.ne.s32.totalorder %s43, %s45
      %p49 = scmp.eq.s32.totalorder %s9, 0
      %p50 = por %p48, %p49
      %p51 = scmp.ne.s32.totalorder %s43, %s45
      %p52 = scmp.eq.s32.totalorder %s14, 1
      %p53 = por %p51, %p52
      %p54 = scmp.ne.s32.totalorder %s45, %s46
      %p55 = scmp.eq.s32.totalorder %s14, 0
      %p56 = por %p54, %p55
      %p57 = scmp.ne.s32.totalorder %s45, %s46
      %p58 = scmp.eq.s32.totalorder %s15, 1
      %p59 = por %p57, %p58
      %p61 = scmp.ne.s32.totalorder %s46, %s60
      %p62 = scmp.eq.s32.totalorder %s15, 0
      %p63 = por %p61, %p62
      %s65 = sadd.s32 %s64, 1
      %p68 = scmp.eq.s32.totalorder %s9, 1
      %p69 = scmp.ne.s32.totalorder %s64, %s66
      %p70 = scmp.eq.s32.totalorder %s9, 0
      %p71 = por %p69, %p70
      %p72 = scmp.ne.s32.totalorder %s64, %s66
      %p73 = scmp.eq.s32.totalorder %s14, 1
      %p74 = por %p72, %p73
      %p75 = scmp.ne.s32.totalorder %s66, %s67
      %p76 = scmp.eq.s32.totalorder %s14, 0
      %p77 = por %p75, %p76
      %p78 = scmp.ne.s32.totalorder %s66, %s67
      %p79 = scmp.eq.s32.totalorder %s15, 1
      %p80 = por %p78, %p79
      %p82 = scmp.ne.s32.totalorder %s67, %s81
      %p83 = scmp.eq.s32.totalorder %s15, 0
      %p84 = por %p82, %p83
      %s85 = ssub.s32 %s9, %s16
      %p86 = scmp.eq.s32.totalorder %s85, 0
      %s88 = sadd.s32 %s87, 1
      %s89 = scalar_select %p86, %s87, %s88
      %p92 = pneg %p86
      %p93 = scmp.eq.s32.totalorder %s9, 1
      %p94 = por %p92, %p93
      %p95 = scmp.ne.s32.totalorder %s87, %s90
      %p96 = scmp.eq.s32.totalorder %s9, 0
      %p97 = por %p95, %p96
      %p98 = scmp.ne.s32.totalorder %s87, %s90
      %p99 = scmp.eq.s32.totalorder %s14, 1
      %p100 = por %p98, %p99
      %p101 = scmp.ne.s32.totalorder %s90, %s91
      %p102 = scmp.eq.s32.totalorder %s14, 0
      %p103 = por %p101, %p102
      %p104 = scmp.ne.s32.totalorder %s90, %s91
      %p105 = scmp.eq.s32.totalorder %s15, 1
      %p106 = por %p104, %p105
      %p108 = scmp.ne.s32.totalorder %s91, %s107
      %p109 = scmp.eq.s32.totalorder %s15, 0
      %p110 = por %p108, %p109
      %p111 = scmp.le.s32.totalorder 1, %s9
      %p112 = scmp.lt.s32.totalorder %s9, 3
      %p113 = pnand %p111, %p112
      %p114 = pneg %p113
      // Predicated region
      $region9: #{actor_forward.5} parent=5 // pred_check
        _
      $region10: #{actor_forward.5} parent=5 // pred_check_branch
        %116 = sbr.rel (%p113) target = $region12
      $region11: #{actor_forward.5} parent=5 // pred_region
        %s117 = ssub.s32 %s9, 1
        // Predicated region
        $region13: #{actor_forward.5} parent=11 // pred_check
          %p118 = pneg %p56
        $region14: #{actor_forward.5} parent=11 // pred_check_branch
          %120 = sbr.rel (%p118) target = $region16
        $region15: #{actor_forward.5} parent=11 // pred_region
          _
        $region16: #{actor_forward.5} parent=11 // pred_fallthru
          _
        // Predicated region
        $region17: #{actor_forward.5} parent=11 // pred_check
          %p121 = pneg %p77
        $region18: #{actor_forward.5} parent=11 // pred_check_branch
          %123 = sbr.rel (%p121) target = $region20
        $region19: #{actor_forward.5} parent=11 // pred_region
          _
        $region20: #{actor_forward.5} parent=11 // pred_fallthru
          _
      $region12: #{actor_forward.5} parent=5 // pred_fallthru
        _
      %p124 = scmp.lt.s32.totalorder %s9, 2
      // Predicated region
      $region21: #{actor_forward.5} parent=5 // pred_check
        %p125 = pneg %p124
      $region22: #{actor_forward.5} parent=5 // pred_check_branch
        %127 = sbr.rel (%p125) target = $region24
      $region23: #{actor_forward.5} parent=5 // pred_region
        // Predicated region
        $region25: #{actor_forward.5} parent=23 // pred_check
          %p128 = pneg %p29
        $region26: #{actor_forward.5} parent=23 // pred_check_branch
          %130 = sbr.rel (%p128) target = $region28
        $region27: #{actor_forward.5} parent=23 // pred_region
          %s131 = smul.u32 68, %s9
          %s132 = ssub.s32 133, %s131
          %p133 = scmp.lt.s32.totalorder %s132, 68
          %s134 = scalar_select %p133, %s132, 68
          %s135 = smul.u32 4, %s134
          %p136 = scmp.lt.s32.totalorder %s131, 132
          %s137 = scalar_select %p136, %s131, 132
          %s138 = smul.addr %s137, 4
          %s139 = scalar_lea.vmem %s0, %s138
          %s140 = smul.u32 68, %s9
          %s141 = ssub.s32 133, %s140
          %p142 = scmp.lt.s32.totalorder %s141, 68
          %s143 = scalar_select %p142, %s141, 68
          %s144 = smul.u32 4, %s143
        $region28: #{actor_forward.5} parent=23 // pred_fallthru
          _
      $region24: #{actor_forward.5} parent=5 // pred_fallthru
        _
      %p145 = scmp.le.s32.totalorder 1, %s9
      %p146 = scmp.lt.s32.totalorder %s9, 3
      %p147 = pnand %p145, %p146
      %p148 = pneg %p147
      // Predicated region
      $region29: #{actor_forward.5} parent=5 // pred_check
        _
      $region30: #{actor_forward.5} parent=5 // pred_check_branch
        %150 = sbr.rel (%p147) target = $region32
      $region31: #{actor_forward.5} parent=5 // pred_region
        %s151 = ssub.s32 %s9, 1
        %s152 = smul.u32 68, %s14
        %s153 = ssub.s32 133, %s152
        %p154 = scmp.lt.s32.totalorder %s153, 68
        %s155 = scalar_select %p154, %s153, 68
        %s156 = smul.u32 4, %s155
        %p157 = scmp.lt.s32.totalorder %s152, 132
        %s158 = scalar_select %p157, %s152, 132
        %s159 = smul.addr %s158, 4
        %s160 = scalar_lea.vmem %s0, %s159
        %p161 = pneg %p35
        %p162 = pneg %p32
        %p163 = pneg %p56
        %p164 = pneg %p53
        %p165 = pneg %p77
        %p166 = pneg %p74
        %p167 = pneg %p103
        %p168 = pneg %p100
        %s169 = sand.u32 %s90, 1
        %s170 = sand.u32 %s90, 1
        %s171 = smul.addr %s170, 272
        %s172 = scalar_lea.vmem [#allocation2], %s171
        %s173 = smul.u32 68, %s14
        %s174 = ssub.s32 133, %s173
        %p175 = scmp.lt.s32.totalorder %s174, 68
        %s176 = scalar_select %p175, %s174, 68
        %s177 = smul.u32 4, %s176
        %p178 = scmp.lt.s32.totalorder %s173, 132
        %s179 = scalar_select %p178, %s173, 132
        %s180 = smul.addr %s179, 4
        %s181 = scalar_lea.vmem %s0, %s180
        %s182 = smul.u32 68, %s14
        %s183 = ssub.s32 133, %s182
        %p184 = scmp.lt.s32.totalorder %s183, 68
        %s185 = scalar_select %p184, %s183, 68
        %s186 = smul.u32 4, %s185
        %s187 = smul.u32 68, %s14
        %s188 = ssub.s32 133, %s187
        %p189 = scmp.lt.s32.totalorder %s188, 68
        %s190 = scalar_select %p189, %s188, 68
        %s191 = smul.u32 4, %s190
        %v193 = vld [vmem:[%s181] sm:$0xf]
        %v194 = vld [vmem:[%s181 + $0x4] sm:$0xf]
        %v195 = vld [vmem:[%s181 + $0x8] sm:$0xf]
        %v196 = vld [vmem:[%s181 + $0xc] sm:$0xf]
        %v197 = vld [vmem:[%s181 + $0x10] sm:$0xf]
        %v198 = vld [vmem:[%s181 + $0x14] sm:$0xf]
        %v199 = vld [vmem:[%s181 + $0x18] sm:$0xf]
        %v200 = vld [vmem:[%s181 + $0x1c] sm:$0xf]
        %v201 = vld [vmem:[%s181 + $0x20] sm:$0xf]
        %v202 = vld [vmem:[%s181 + $0x24] sm:$0xf]
        %v203 = vld [vmem:[%s181 + $0x28] sm:$0xf]
        %v204 = vld [vmem:[%s181 + $0x2c] sm:$0xf]
        %v205 = vld [vmem:[%s181 + $0x30] sm:$0xf]
        %v206 = vld [vmem:[%s181 + $0x34] sm:$0xf]
        %v207 = vld [vmem:[%s181 + $0x38] sm:$0xf]
        %v208 = vld [vmem:[%s181 + $0x3c] sm:$0xf]
        %v209 = vld [vmem:[%s181 + $0x40] sm:$0xf]
        %v210 = vld [vmem:[%s181 + $0x44] sm:$0xf]
        %v211 = vld [vmem:[%s181 + $0x48] sm:$0xf]
        %v212 = vld [vmem:[%s181 + $0x4c] sm:$0xf]
        %v213 = vld [vmem:[%s181 + $0x50] sm:$0xf]
        %v214 = vld [vmem:[%s181 + $0x54] sm:$0xf]
        %v215 = vld [vmem:[%s181 + $0x58] sm:$0xf]
        %v216 = vld [vmem:[%s181 + $0x5c] sm:$0xf]
        %v217 = vld [vmem:[%s181 + $0x60] sm:$0xf]
        %v218 = vld [vmem:[%s181 + $0x64] sm:$0xf]
        %v219 = vld [vmem:[%s181 + $0x68] sm:$0xf]
        %v220 = vld [vmem:[%s181 + $0x6c] sm:$0xf]
        %v221 = vld [vmem:[%s181 + $0x70] sm:$0xf]
        %v222 = vld [vmem:[%s181 + $0x74] sm:$0xf]
        %v223 = vld [vmem:[%s181 + $0x78] sm:$0xf]
        %v224 = vld [vmem:[%s181 + $0x7c] sm:$0xf]
        %v225 = vld [vmem:[%s181 + $0x80] sm:$0xf]
        %v226 = vld [vmem:[%s181 + $0x84] sm:$0xf]
        %v227 = vld [vmem:[%s181 + $0x88] sm:$0xf]
        %v228 = vld [vmem:[%s181 + $0x8c] sm:$0xf]
        %v229 = vld [vmem:[%s181 + $0x90] sm:$0xf]
        %v230 = vld [vmem:[%s181 + $0x94] sm:$0xf]
        %v231 = vld [vmem:[%s181 + $0x98] sm:$0xf]
        %v232 = vld [vmem:[%s181 + $0x9c] sm:$0xf]
        %v233 = vld [vmem:[%s181 + $0xa0] sm:$0xf]
        %v234 = vld [vmem:[%s181 + $0xa4] sm:$0xf]
        %v235 = vld [vmem:[%s181 + $0xa8] sm:$0xf]
        %v236 = vld [vmem:[%s181 + $0xac] sm:$0xf]
        %v237 = vld [vmem:[%s181 + $0xb0] sm:$0xf]
        %v238 = vld [vmem:[%s181 + $0xb4] sm:$0xf]
        %v239 = vld [vmem:[%s181 + $0xb8] sm:$0xf]
        %v240 = vld [vmem:[%s181 + $0xbc] sm:$0xf]
        %v241 = vld [vmem:[%s181 + $0xc0] sm:$0xf]
        %v242 = vld [vmem:[%s181 + $0xc4] sm:$0xf]
        %v243 = vld [vmem:[%s181 + $0xc8] sm:$0xf]
        %v244 = vld [vmem:[%s181 + $0xcc] sm:$0xf]
        %v245 = vld [vmem:[%s181 + $0xd0] sm:$0xf]
        %v246 = vld [vmem:[%s181 + $0xd4] sm:$0xf]
        %v247 = vld [vmem:[%s181 + $0xd8] sm:$0xf]
        %v248 = vld [vmem:[%s181 + $0xdc] sm:$0xf]
        %v249 = vld [vmem:[%s181 + $0xe0] sm:$0xf]
        %v250 = vld [vmem:[%s181 + $0xe4] sm:$0xf]
        %v251 = vld [vmem:[%s181 + $0xe8] sm:$0xf]
        %v252 = vld [vmem:[%s181 + $0xec] sm:$0xf]
        %v253 = vld [vmem:[%s181 + $0xf0] sm:$0xf]
        %v254 = vld [vmem:[%s181 + $0xf4] sm:$0xf]
        %v255 = vld [vmem:[%s181 + $0xf8] sm:$0xf]
        %v256 = vld [vmem:[%s181 + $0xfc] sm:$0xf]
        %v257 = vld [vmem:[%s181 + $0x100] sm:$0xf]
        %v258 = vld [vmem:[%s181 + $0x104] sm:$0xf]
        %v259 = vld [vmem:[%s181 + $0x108] sm:$0xf]
        %v260 = vld [vmem:[%s181 + $0x10c] sm:$0xf]
        %v261 = vld [vmem:[%s1] sm:$0xf]
        %v262 = vld [vmem:[%s1 + $0x4] sm:$0xf]
        %v263 = vld [vmem:[%s1 + $0x8] sm:$0xf]
        %v264 = vld [vmem:[%s1 + $0xc] sm:$0xf]
        %v265 = vld [vmem:[%s1 + $0x10] sm:$0xf]
        %v266 = vld [vmem:[%s1 + $0x14] sm:$0xf]
        %v267 = vld [vmem:[%s1 + $0x18] sm:$0xf]
        %v268 = vld [vmem:[%s1 + $0x1c] sm:$0xf]
        %v269 = vld [vmem:[%s1 + $0x20] sm:$0xf]
        %v270 = vld [vmem:[%s2] sm:$0x1]
        %v272 = vperm.slane %v270, 0
        %v342 = vunpack.c.l.b16 %v193
        %v343 = vunpack.c.l.b16 %v194
        %v344 = vunpack.c.l.b16 %v195
        %v345 = vunpack.c.l.b16 %v196
        %v346 = vunpack.c.l.b16 %v197
        %v347 = vunpack.c.l.b16 %v198
        %v348 = vunpack.c.l.b16 %v199
        %v349 = vunpack.c.l.b16 %v200
        %v350 = vunpack.c.l.b16 %v201
        %v351 = vunpack.c.l.b16 %v202
        %v352 = vunpack.c.l.b16 %v203
        %v353 = vunpack.c.l.b16 %v204
        %v354 = vunpack.c.l.b16 %v205
        %v355 = vunpack.c.l.b16 %v206
        %v356 = vunpack.c.l.b16 %v207
        %v357 = vunpack.c.l.b16 %v208
        %v358 = vunpack.c.l.b16 %v209
        %v359 = vunpack.c.l.b16 %v210
        %v360 = vunpack.c.l.b16 %v211
        %v361 = vunpack.c.l.b16 %v212
        %v362 = vunpack.c.l.b16 %v213
        %v363 = vunpack.c.l.b16 %v214
        %v364 = vunpack.c.l.b16 %v215
        %v365 = vunpack.c.l.b16 %v216
        %v366 = vunpack.c.l.b16 %v217
        %v367 = vunpack.c.l.b16 %v218
        %v368 = vunpack.c.l.b16 %v219
        %v369 = vunpack.c.l.b16 %v220
        %v370 = vunpack.c.l.b16 %v221
        %v371 = vunpack.c.l.b16 %v222
        %v372 = vunpack.c.l.b16 %v223
        %v373 = vunpack.c.l.b16 %v224
        %v374 = vunpack.c.l.b16 %v225
        %v375 = vunpack.c.l.b16 %v226
        %v376 = vunpack.c.l.b16 %v227
        %v377 = vunpack.c.l.b16 %v228
        %v378 = vunpack.c.l.b16 %v229
        %v379 = vunpack.c.l.b16 %v230
        %v380 = vunpack.c.l.b16 %v231
        %v381 = vunpack.c.l.b16 %v232
        %v382 = vunpack.c.l.b16 %v233
        %v383 = vunpack.c.l.b16 %v234
        %v384 = vunpack.c.l.b16 %v235
        %v385 = vunpack.c.l.b16 %v236
        %v386 = vunpack.c.l.b16 %v237
        %v387 = vunpack.c.l.b16 %v238
        %v388 = vunpack.c.l.b16 %v239
        %v389 = vunpack.c.l.b16 %v240
        %v390 = vunpack.c.l.b16 %v241
        %v391 = vunpack.c.l.b16 %v242
        %v392 = vunpack.c.l.b16 %v243
        %v393 = vunpack.c.l.b16 %v244
        %v394 = vunpack.c.l.b16 %v245
        %v395 = vunpack.c.l.b16 %v246
        %v396 = vunpack.c.l.b16 %v247
        %v397 = vunpack.c.l.b16 %v248
        %v398 = vunpack.c.l.b16 %v249
        %v399 = vunpack.c.l.b16 %v250
        %v400 = vunpack.c.l.b16 %v251
        %v401 = vunpack.c.l.b16 %v252
        %v402 = vunpack.c.l.b16 %v253
        %v403 = vunpack.c.l.b16 %v254
        %v404 = vunpack.c.l.b16 %v255
        %v405 = vunpack.c.l.b16 %v256
        %v406 = vunpack.c.l.b16 %v257
        %v407 = vunpack.c.l.b16 %v258
        %v408 = vunpack.c.l.b16 %v259
        %v409 = vunpack.c.l.b16 %v260
        %v410 = vpack.c.b16 %v343, %v342
        %v411 = vpack.c.b16 %v345, %v344
        %v412 = vpack.c.b16 %v347, %v346
        %v413 = vpack.c.b16 %v349, %v348
        %v414 = vpack.c.b16 %v351, %v350
        %v415 = vpack.c.b16 %v353, %v352
        %v416 = vpack.c.b16 %v355, %v354
        %v417 = vpack.c.b16 %v357, %v356
        %v418 = vpack.c.b16 %v359, %v358
        %v419 = vpack.c.b16 %v361, %v360
        %v420 = vpack.c.b16 %v363, %v362
        %v421 = vpack.c.b16 %v365, %v364
        %v422 = vpack.c.b16 %v367, %v366
        %v423 = vpack.c.b16 %v369, %v368
        %v424 = vpack.c.b16 %v371, %v370
        %v425 = vpack.c.b16 %v373, %v372
        %v426 = vpack.c.b16 %v375, %v374
        %v427 = vpack.c.b16 %v377, %v376
        %v428 = vpack.c.b16 %v379, %v378
        %v429 = vpack.c.b16 %v381, %v380
        %v430 = vpack.c.b16 %v383, %v382
        %v431 = vpack.c.b16 %v385, %v384
        %v432 = vpack.c.b16 %v387, %v386
        %v433 = vpack.c.b16 %v389, %v388
        %v434 = vpack.c.b16 %v391, %v390
        %v435 = vpack.c.b16 %v393, %v392
        %v436 = vpack.c.b16 %v395, %v394
        %v437 = vpack.c.b16 %v397, %v396
        %v438 = vpack.c.b16 %v399, %v398
        %v439 = vpack.c.b16 %v401, %v400
        %v440 = vpack.c.b16 %v403, %v402
        %v441 = vpack.c.b16 %v405, %v404
        %v442 = vpack.c.b16 %v407, %v406
        %v443 = vpack.c.b16 %v409, %v408
        %v453 = vunpack.c.l.b16 %v261
        %v454 = vunpack.c.l.b16 %v262
        %v455 = vunpack.c.l.b16 %v263
        %v456 = vunpack.c.l.b16 %v264
        %v457 = vunpack.c.l.b16 %v265
        %v458 = vunpack.c.l.b16 %v266
        %v459 = vunpack.c.l.b16 %v267
        %v460 = vunpack.c.l.b16 %v268
        %v461 = vunpack.c.l.b16 %v269
        %v462 = vpack.c.b16 %v454, %v453
        %v463 = vpack.c.b16 %v456, %v455
        %v464 = vpack.c.b16 %v458, %v457
        %v465 = vpack.c.b16 %v460, %v459
        %v466 = vpack.c.b16 %v461, %v461
        %vm471 = vcmask 588800
        %v473 = vsel %vm471, %v410, 0
        %v476 = vsel %vm471, %v411, 0
        %v479 = vsel %vm471, %v412, 0
        %v482 = vsel %vm471, %v413, 0
        %v485 = vsel %vm471, %v414, 0
        %v488 = vsel %vm471, %v415, 0
        %v491 = vsel %vm471, %v416, 0
        %v494 = vsel %vm471, %v417, 0
        %v497 = vsel %vm471, %v418, 0
        %v500 = vsel %vm471, %v419, 0
        %v503 = vsel %vm471, %v420, 0
        %v506 = vsel %vm471, %v421, 0
        %v509 = vsel %vm471, %v422, 0
        %v512 = vsel %vm471, %v423, 0
        %v515 = vsel %vm471, %v424, 0
        %v518 = vsel %vm471, %v425, 0
        %v521 = vsel %vm471, %v426, 0
        %v524 = vsel %vm471, %v427, 0
        %v527 = vsel %vm471, %v428, 0
        %v530 = vsel %vm471, %v429, 0
        %v533 = vsel %vm471, %v430, 0
        %v536 = vsel %vm471, %v431, 0
        %v539 = vsel %vm471, %v432, 0
        %v542 = vsel %vm471, %v433, 0
        %v545 = vsel %vm471, %v434, 0
        %v548 = vsel %vm471, %v435, 0
        %v551 = vsel %vm471, %v436, 0
        %v554 = vsel %vm471, %v437, 0
        %v557 = vsel %vm471, %v438, 0
        %v560 = vsel %vm471, %v439, 0
        %v563 = vsel %vm471, %v440, 0
        %v566 = vsel %vm471, %v441, 0
        %v569 = vsel %vm471, %v442, 0
        %v572 = vsel %vm471, %v443, 0
        %vm574 = vcmask 1043456
        %v576 = vsel %vm574, %v466, 0
        %578 = vmatpush.bf16.msra.mxu0 0
        %579 = vmatpush.bf16.msra.mxu0 0
        %580 = vmatpush.bf16.msra.mxu0 0
        %581 = vmatpush.bf16.msra.mxu0 %v576
        %582 = vmatpush.bf16.msra.mxu0 %v465
        %583 = vmatpush.bf16.msra.mxu0 %v464
        %584 = vmatpush.bf16.msra.mxu0 %v463
        %585 = vmatpush.bf16.msra.mxu0 %v462
        %586 = vmatmul.bf16.gmra.mxu0 %v473
        %v587 = vpop.f32.mrf.mxu0
        %v588 = vadd.f32 %v272, %v587
        %v589 = vpop.f32.mrf.mxu0
        %v590 = vadd.f32 %v272, %v589
        %591 = vmatmul.bf16.gmra.mxu0 %v476
        %v592 = vpop.f32.mrf.mxu0
        %v593 = vadd.f32 %v272, %v592
        %v594 = vpop.f32.mrf.mxu0
        %v595 = vadd.f32 %v272, %v594
        %596 = vmatmul.bf16.gmra.mxu0 %v479
        %v597 = vpop.f32.mrf.mxu0
        %v598 = vadd.f32 %v272, %v597
        %v599 = vpop.f32.mrf.mxu0
        %v600 = vadd.f32 %v272, %v599
        %601 = vmatmul.bf16.gmra.mxu0 %v482
        %v602 = vpop.f32.mrf.mxu0
        %v603 = vadd.f32 %v272, %v602
        %v604 = vpop.f32.mrf.mxu0
        %v605 = vadd.f32 %v272, %v604
        %606 = vmatmul.bf16.gmra.mxu0 %v485
        %v607 = vpop.f32.mrf.mxu0
        %v608 = vadd.f32 %v272, %v607
        %v609 = vpop.f32.mrf.mxu0
        %v610 = vadd.f32 %v272, %v609
        %611 = vmatmul.bf16.gmra.mxu0 %v488
        %v612 = vpop.f32.mrf.mxu0
        %v613 = vadd.f32 %v272, %v612
        %v614 = vpop.f32.mrf.mxu0
        %v615 = vadd.f32 %v272, %v614
        %616 = vmatmul.bf16.gmra.mxu0 %v491
        %v617 = vpop.f32.mrf.mxu0
        %v618 = vadd.f32 %v272, %v617
        %v619 = vpop.f32.mrf.mxu0
        %v620 = vadd.f32 %v272, %v619
        %621 = vmatmul.bf16.gmra.mxu0 %v494
        %v622 = vpop.f32.mrf.mxu0
        %v623 = vadd.f32 %v272, %v622
        %v624 = vpop.f32.mrf.mxu0
        %v625 = vadd.f32 %v272, %v624
        %626 = vmatmul.bf16.gmra.mxu0 %v497
        %v627 = vpop.f32.mrf.mxu0
        %v628 = vadd.f32 %v272, %v627
        %v629 = vpop.f32.mrf.mxu0
        %v630 = vadd.f32 %v272, %v629
        %631 = vmatmul.bf16.gmra.mxu0 %v500
        %v632 = vpop.f32.mrf.mxu0
        %v633 = vadd.f32 %v272, %v632
        %v634 = vpop.f32.mrf.mxu0
        %v635 = vadd.f32 %v272, %v634
        %636 = vmatmul.bf16.gmra.mxu0 %v503
        %v637 = vpop.f32.mrf.mxu0
        %v638 = vadd.f32 %v272, %v637
        %v639 = vpop.f32.mrf.mxu0
        %v640 = vadd.f32 %v272, %v639
        %641 = vmatmul.bf16.gmra.mxu0 %v506
        %v642 = vpop.f32.mrf.mxu0
        %v643 = vadd.f32 %v272, %v642
        %v644 = vpop.f32.mrf.mxu0
        %v645 = vadd.f32 %v272, %v644
        %646 = vmatmul.bf16.gmra.mxu0 %v509
        %v647 = vpop.f32.mrf.mxu0
        %v648 = vadd.f32 %v272, %v647
        %v649 = vpop.f32.mrf.mxu0
        %v650 = vadd.f32 %v272, %v649
        %651 = vmatmul.bf16.gmra.mxu0 %v512
        %v652 = vpop.f32.mrf.mxu0
        %v653 = vadd.f32 %v272, %v652
        %v654 = vpop.f32.mrf.mxu0
        %v655 = vadd.f32 %v272, %v654
        %656 = vmatmul.bf16.gmra.mxu0 %v515
        %v657 = vpop.f32.mrf.mxu0
        %v658 = vadd.f32 %v272, %v657
        %v659 = vpop.f32.mrf.mxu0
        %v660 = vadd.f32 %v272, %v659
        %661 = vmatmul.bf16.gmra.mxu0 %v518
        %v662 = vpop.f32.mrf.mxu0
        %v663 = vadd.f32 %v272, %v662
        %v664 = vpop.f32.mrf.mxu0
        %v665 = vadd.f32 %v272, %v664
        %666 = vmatmul.bf16.gmra.mxu0 %v521
        %v667 = vpop.f32.mrf.mxu0
        %v668 = vadd.f32 %v272, %v667
        %v669 = vpop.f32.mrf.mxu0
        %v670 = vadd.f32 %v272, %v669
        %671 = vmatmul.bf16.gmra.mxu0 %v524
        %v672 = vpop.f32.mrf.mxu0
        %v673 = vadd.f32 %v272, %v672
        %v674 = vpop.f32.mrf.mxu0
        %v675 = vadd.f32 %v272, %v674
        %676 = vmatmul.bf16.gmra.mxu0 %v527
        %v677 = vpop.f32.mrf.mxu0
        %v678 = vadd.f32 %v272, %v677
        %v679 = vpop.f32.mrf.mxu0
        %v680 = vadd.f32 %v272, %v679
        %681 = vmatmul.bf16.gmra.mxu0 %v530
        %v682 = vpop.f32.mrf.mxu0
        %v683 = vadd.f32 %v272, %v682
        %v684 = vpop.f32.mrf.mxu0
        %v685 = vadd.f32 %v272, %v684
        %686 = vmatmul.bf16.gmra.mxu0 %v533
        %v687 = vpop.f32.mrf.mxu0
        %v688 = vadd.f32 %v272, %v687
        %v689 = vpop.f32.mrf.mxu0
        %v690 = vadd.f32 %v272, %v689
        %691 = vmatmul.bf16.gmra.mxu0 %v536
        %v692 = vpop.f32.mrf.mxu0
        %v693 = vadd.f32 %v272, %v692
        %v694 = vpop.f32.mrf.mxu0
        %v695 = vadd.f32 %v272, %v694
        %696 = vmatmul.bf16.gmra.mxu0 %v539
        %v697 = vpop.f32.mrf.mxu0
        %v698 = vadd.f32 %v272, %v697
        %v699 = vpop.f32.mrf.mxu0
        %v700 = vadd.f32 %v272, %v699
        %701 = vmatmul.bf16.gmra.mxu0 %v542
        %v702 = vpop.f32.mrf.mxu0
        %v703 = vadd.f32 %v272, %v702
        %v704 = vpop.f32.mrf.mxu0
        %v705 = vadd.f32 %v272, %v704
        %706 = vmatmul.bf16.gmra.mxu0 %v545
        %v707 = vpop.f32.mrf.mxu0
        %v708 = vadd.f32 %v272, %v707
        %v709 = vpop.f32.mrf.mxu0
        %v710 = vadd.f32 %v272, %v709
        %711 = vmatmul.bf16.gmra.mxu0 %v548
        %v712 = vpop.f32.mrf.mxu0
        %v713 = vadd.f32 %v272, %v712
        %v714 = vpop.f32.mrf.mxu0
        %v715 = vadd.f32 %v272, %v714
        %716 = vmatmul.bf16.gmra.mxu0 %v551
        %v717 = vpop.f32.mrf.mxu0
        %v718 = vadd.f32 %v272, %v717
        %v719 = vpop.f32.mrf.mxu0
        %v720 = vadd.f32 %v272, %v719
        %721 = vmatmul.bf16.gmra.mxu0 %v554
        %v722 = vpop.f32.mrf.mxu0
        %v723 = vadd.f32 %v272, %v722
        %v724 = vpop.f32.mrf.mxu0
        %v725 = vadd.f32 %v272, %v724
        %726 = vmatmul.bf16.gmra.mxu0 %v557
        %v727 = vpop.f32.mrf.mxu0
        %v728 = vadd.f32 %v272, %v727
        %v729 = vpop.f32.mrf.mxu0
        %v730 = vadd.f32 %v272, %v729
        %731 = vmatmul.bf16.gmra.mxu0 %v560
        %v732 = vpop.f32.mrf.mxu0
        %v733 = vadd.f32 %v272, %v732
        %v734 = vpop.f32.mrf.mxu0
        %v735 = vadd.f32 %v272, %v734
        %736 = vmatmul.bf16.gmra.mxu0 %v563
        %v737 = vpop.f32.mrf.mxu0
        %v738 = vadd.f32 %v272, %v737
        %v739 = vpop.f32.mrf.mxu0
        %v740 = vadd.f32 %v272, %v739
        %741 = vmatmul.bf16.gmra.mxu0 %v566
        %v742 = vpop.f32.mrf.mxu0
        %v743 = vadd.f32 %v272, %v742
        %v744 = vpop.f32.mrf.mxu0
        %v745 = vadd.f32 %v272, %v744
        %746 = vmatmul.bf16.gmra.mxu0 %v569
        %v747 = vpop.f32.mrf.mxu0
        %v748 = vadd.f32 %v272, %v747
        %v749 = vpop.f32.mrf.mxu0
        %v750 = vadd.f32 %v272, %v749
        %751 = vmatmul.bf16.gmra.mxu0 %v572
        %v752 = vpop.f32.mrf.mxu0
        %v753 = vadd.f32 %v272, %v752
        %v754 = vpop.f32.mrf.mxu0
        %v755 = vadd.f32 %v272, %v754
        %756 = vdwg.mxu0
        %v757 = vmax.f32 %v588, 0.0
        %v758 = vmax.f32 %v590, 0.0
        %v759 = vmax.f32 %v593, 0.0
        %v760 = vmax.f32 %v595, 0.0
        %v761 = vmax.f32 %v598, 0.0
        %v762 = vmax.f32 %v600, 0.0
        %v763 = vmax.f32 %v603, 0.0
        %v764 = vmax.f32 %v605, 0.0
        %v765 = vmax.f32 %v608, 0.0
        %v766 = vmax.f32 %v610, 0.0
        %v767 = vmax.f32 %v613, 0.0
        %v768 = vmax.f32 %v615, 0.0
        %v769 = vmax.f32 %v618, 0.0
        %v770 = vmax.f32 %v620, 0.0
        %v771 = vmax.f32 %v623, 0.0
        %v772 = vmax.f32 %v625, 0.0
        %v773 = vmax.f32 %v628, 0.0
        %v774 = vmax.f32 %v630, 0.0
        %v775 = vmax.f32 %v633, 0.0
        %v776 = vmax.f32 %v635, 0.0
        %v777 = vmax.f32 %v638, 0.0
        %v778 = vmax.f32 %v640, 0.0
        %v779 = vmax.f32 %v643, 0.0
        %v780 = vmax.f32 %v645, 0.0
        %v781 = vmax.f32 %v648, 0.0
        %v782 = vmax.f32 %v650, 0.0
        %v783 = vmax.f32 %v653, 0.0
        %v784 = vmax.f32 %v655, 0.0
        %v785 = vmax.f32 %v658, 0.0
        %v786 = vmax.f32 %v660, 0.0
        %v787 = vmax.f32 %v663, 0.0
        %v788 = vmax.f32 %v665, 0.0
        %v789 = vmax.f32 %v668, 0.0
        %v790 = vmax.f32 %v670, 0.0
        %v791 = vmax.f32 %v673, 0.0
        %v792 = vmax.f32 %v675, 0.0
        %v793 = vmax.f32 %v678, 0.0
        %v794 = vmax.f32 %v680, 0.0
        %v795 = vmax.f32 %v683, 0.0
        %v796 = vmax.f32 %v685, 0.0
        %v797 = vmax.f32 %v688, 0.0
        %v798 = vmax.f32 %v690, 0.0
        %v799 = vmax.f32 %v693, 0.0
        %v800 = vmax.f32 %v695, 0.0
        %v801 = vmax.f32 %v698, 0.0
        %v802 = vmax.f32 %v700, 0.0
        %v803 = vmax.f32 %v703, 0.0
        %v804 = vmax.f32 %v705, 0.0
        %v805 = vmax.f32 %v708, 0.0
        %v806 = vmax.f32 %v710, 0.0
        %v807 = vmax.f32 %v713, 0.0
        %v808 = vmax.f32 %v715, 0.0
        %v809 = vmax.f32 %v718, 0.0
        %v810 = vmax.f32 %v720, 0.0
        %v811 = vmax.f32 %v723, 0.0
        %v812 = vmax.f32 %v725, 0.0
        %v813 = vmax.f32 %v728, 0.0
        %v814 = vmax.f32 %v730, 0.0
        %v815 = vmax.f32 %v733, 0.0
        %v816 = vmax.f32 %v735, 0.0
        %v817 = vmax.f32 %v738, 0.0
        %v818 = vmax.f32 %v740, 0.0
        %v819 = vmax.f32 %v743, 0.0
        %v820 = vmax.f32 %v745, 0.0
        %v821 = vmax.f32 %v748, 0.0
        %v822 = vmax.f32 %v750, 0.0
        %v823 = vmax.f32 %v753, 0.0
        %v824 = vmax.f32 %v755, 0.0
        %v825 = vpack.c.bf16 %v757, %v757
        %v826 = vpack.c.bf16 %v758, %v758
        %v827 = vpack.c.bf16 %v759, %v759
        %v828 = vpack.c.bf16 %v760, %v760
        %v829 = vpack.c.bf16 %v761, %v761
        %v830 = vpack.c.bf16 %v762, %v762
        %v831 = vpack.c.bf16 %v763, %v763
        %v832 = vpack.c.bf16 %v764, %v764
        %v833 = vpack.c.bf16 %v765, %v765
        %v834 = vpack.c.bf16 %v766, %v766
        %v835 = vpack.c.bf16 %v767, %v767
        %v836 = vpack.c.bf16 %v768, %v768
        %v837 = vpack.c.bf16 %v769, %v769
        %v838 = vpack.c.bf16 %v770, %v770
        %v839 = vpack.c.bf16 %v771, %v771
        %v840 = vpack.c.bf16 %v772, %v772
        %v841 = vpack.c.bf16 %v773, %v773
        %v842 = vpack.c.bf16 %v774, %v774
        %v843 = vpack.c.bf16 %v775, %v775
        %v844 = vpack.c.bf16 %v776, %v776
        %v845 = vpack.c.bf16 %v777, %v777
        %v846 = vpack.c.bf16 %v778, %v778
        %v847 = vpack.c.bf16 %v779, %v779
        %v848 = vpack.c.bf16 %v780, %v780
        %v849 = vpack.c.bf16 %v781, %v781
        %v850 = vpack.c.bf16 %v782, %v782
        %v851 = vpack.c.bf16 %v783, %v783
        %v852 = vpack.c.bf16 %v784, %v784
        %v853 = vpack.c.bf16 %v785, %v785
        %v854 = vpack.c.bf16 %v786, %v786
        %v855 = vpack.c.bf16 %v787, %v787
        %v856 = vpack.c.bf16 %v788, %v788
        %v857 = vpack.c.bf16 %v789, %v789
        %v858 = vpack.c.bf16 %v790, %v790
        %v859 = vpack.c.bf16 %v791, %v791
        %v860 = vpack.c.bf16 %v792, %v792
        %v861 = vpack.c.bf16 %v793, %v793
        %v862 = vpack.c.bf16 %v794, %v794
        %v863 = vpack.c.bf16 %v795, %v795
        %v864 = vpack.c.bf16 %v796, %v796
        %v865 = vpack.c.bf16 %v797, %v797
        %v866 = vpack.c.bf16 %v798, %v798
        %v867 = vpack.c.bf16 %v799, %v799
        %v868 = vpack.c.bf16 %v800, %v800
        %v869 = vpack.c.bf16 %v801, %v801
        %v870 = vpack.c.bf16 %v802, %v802
        %v871 = vpack.c.bf16 %v803, %v803
        %v872 = vpack.c.bf16 %v804, %v804
        %v873 = vpack.c.bf16 %v805, %v805
        %v874 = vpack.c.bf16 %v806, %v806
        %v875 = vpack.c.bf16 %v807, %v807
        %v876 = vpack.c.bf16 %v808, %v808
        %v877 = vpack.c.bf16 %v809, %v809
        %v878 = vpack.c.bf16 %v810, %v810
        %v879 = vpack.c.bf16 %v811, %v811
        %v880 = vpack.c.bf16 %v812, %v812
        %v881 = vpack.c.bf16 %v813, %v813
        %v882 = vpack.c.bf16 %v814, %v814
        %v883 = vpack.c.bf16 %v815, %v815
        %v884 = vpack.c.bf16 %v816, %v816
        %v885 = vpack.c.bf16 %v817, %v817
        %v886 = vpack.c.bf16 %v818, %v818
        %v887 = vpack.c.bf16 %v819, %v819
        %v888 = vpack.c.bf16 %v820, %v820
        %v889 = vpack.c.bf16 %v821, %v821
        %v890 = vpack.c.bf16 %v822, %v822
        %v891 = vpack.c.bf16 %v823, %v823
        %v892 = vpack.c.bf16 %v824, %v824
        %vm893 = vcmask 125952
        %894 = vst.msk [vmem:[%s172] sm:$0xf] %vm893, %v825
        %895 = vst.msk [vmem:[%s172 + $0x4] sm:$0xf] %vm893, %v826
        %896 = vst.msk [vmem:[%s172 + $0x8] sm:$0xf] %vm893, %v827
        %897 = vst.msk [vmem:[%s172 + $0xc] sm:$0xf] %vm893, %v828
        %898 = vst.msk [vmem:[%s172 + $0x10] sm:$0xf] %vm893, %v829
        %899 = vst.msk [vmem:[%s172 + $0x14] sm:$0xf] %vm893, %v830
        %900 = vst.msk [vmem:[%s172 + $0x18] sm:$0xf] %vm893, %v831
        %901 = vst.msk [vmem:[%s172 + $0x1c] sm:$0xf] %vm893, %v832
        %902 = vst.msk [vmem:[%s172 + $0x20] sm:$0xf] %vm893, %v833
        %903 = vst.msk [vmem:[%s172 + $0x24] sm:$0xf] %vm893, %v834
        %904 = vst.msk [vmem:[%s172 + $0x28] sm:$0xf] %vm893, %v835
        %905 = vst.msk [vmem:[%s172 + $0x2c] sm:$0xf] %vm893, %v836
        %906 = vst.msk [vmem:[%s172 + $0x30] sm:$0xf] %vm893, %v837
        %907 = vst.msk [vmem:[%s172 + $0x34] sm:$0xf] %vm893, %v838
        %908 = vst.msk [vmem:[%s172 + $0x38] sm:$0xf] %vm893, %v839
        %909 = vst.msk [vmem:[%s172 + $0x3c] sm:$0xf] %vm893, %v840
        %910 = vst.msk [vmem:[%s172 + $0x40] sm:$0xf] %vm893, %v841
        %911 = vst.msk [vmem:[%s172 + $0x44] sm:$0xf] %vm893, %v842
        %912 = vst.msk [vmem:[%s172 + $0x48] sm:$0xf] %vm893, %v843
        %913 = vst.msk [vmem:[%s172 + $0x4c] sm:$0xf] %vm893, %v844
        %914 = vst.msk [vmem:[%s172 + $0x50] sm:$0xf] %vm893, %v845
        %915 = vst.msk [vmem:[%s172 + $0x54] sm:$0xf] %vm893, %v846
        %916 = vst.msk [vmem:[%s172 + $0x58] sm:$0xf] %vm893, %v847
        %917 = vst.msk [vmem:[%s172 + $0x5c] sm:$0xf] %vm893, %v848
        %918 = vst.msk [vmem:[%s172 + $0x60] sm:$0xf] %vm893, %v849
        %919 = vst.msk [vmem:[%s172 + $0x64] sm:$0xf] %vm893, %v850
        %920 = vst.msk [vmem:[%s172 + $0x68] sm:$0xf] %vm893, %v851
        %921 = vst.msk [vmem:[%s172 + $0x6c] sm:$0xf] %vm893, %v852
        %922 = vst.msk [vmem:[%s172 + $0x70] sm:$0xf] %vm893, %v853
        %923 = vst.msk [vmem:[%s172 + $0x74] sm:$0xf] %vm893, %v854
        %924 = vst.msk [vmem:[%s172 + $0x78] sm:$0xf] %vm893, %v855
        %925 = vst.msk [vmem:[%s172 + $0x7c] sm:$0xf] %vm893, %v856
        %926 = vst.msk [vmem:[%s172 + $0x80] sm:$0xf] %vm893, %v857
        %927 = vst.msk [vmem:[%s172 + $0x84] sm:$0xf] %vm893, %v858
        %928 = vst.msk [vmem:[%s172 + $0x88] sm:$0xf] %vm893, %v859
        %929 = vst.msk [vmem:[%s172 + $0x8c] sm:$0xf] %vm893, %v860
        %930 = vst.msk [vmem:[%s172 + $0x90] sm:$0xf] %vm893, %v861
        %931 = vst.msk [vmem:[%s172 + $0x94] sm:$0xf] %vm893, %v862
        %932 = vst.msk [vmem:[%s172 + $0x98] sm:$0xf] %vm893, %v863
        %933 = vst.msk [vmem:[%s172 + $0x9c] sm:$0xf] %vm893, %v864
        %934 = vst.msk [vmem:[%s172 + $0xa0] sm:$0xf] %vm893, %v865
        %935 = vst.msk [vmem:[%s172 + $0xa4] sm:$0xf] %vm893, %v866
        %936 = vst.msk [vmem:[%s172 + $0xa8] sm:$0xf] %vm893, %v867
        %937 = vst.msk [vmem:[%s172 + $0xac] sm:$0xf] %vm893, %v868
        %938 = vst.msk [vmem:[%s172 + $0xb0] sm:$0xf] %vm893, %v869
        %939 = vst.msk [vmem:[%s172 + $0xb4] sm:$0xf] %vm893, %v870
        %940 = vst.msk [vmem:[%s172 + $0xb8] sm:$0xf] %vm893, %v871
        %941 = vst.msk [vmem:[%s172 + $0xbc] sm:$0xf] %vm893, %v872
        %942 = vst.msk [vmem:[%s172 + $0xc0] sm:$0xf] %vm893, %v873
        %943 = vst.msk [vmem:[%s172 + $0xc4] sm:$0xf] %vm893, %v874
        %944 = vst.msk [vmem:[%s172 + $0xc8] sm:$0xf] %vm893, %v875
        %945 = vst.msk [vmem:[%s172 + $0xcc] sm:$0xf] %vm893, %v876
        %946 = vst.msk [vmem:[%s172 + $0xd0] sm:$0xf] %vm893, %v877
        %947 = vst.msk [vmem:[%s172 + $0xd4] sm:$0xf] %vm893, %v878
        %948 = vst.msk [vmem:[%s172 + $0xd8] sm:$0xf] %vm893, %v879
        %949 = vst.msk [vmem:[%s172 + $0xdc] sm:$0xf] %vm893, %v880
        %950 = vst.msk [vmem:[%s172 + $0xe0] sm:$0xf] %vm893, %v881
        %951 = vst.msk [vmem:[%s172 + $0xe4] sm:$0xf] %vm893, %v882
        %952 = vst.msk [vmem:[%s172 + $0xe8] sm:$0xf] %vm893, %v883
        %953 = vst.msk [vmem:[%s172 + $0xec] sm:$0xf] %vm893, %v884
        %954 = vst.msk [vmem:[%s172 + $0xf0] sm:$0xf] %vm893, %v885
        %955 = vst.msk [vmem:[%s172 + $0xf4] sm:$0xf] %vm893, %v886
        %956 = vst.msk [vmem:[%s172 + $0xf8] sm:$0xf] %vm893, %v887
        %957 = vst.msk [vmem:[%s172 + $0xfc] sm:$0xf] %vm893, %v888
        %958 = vst.msk [vmem:[%s172 + $0x100] sm:$0xf] %vm893, %v889
        %959 = vst.msk [vmem:[%s172 + $0x104] sm:$0xf] %vm893, %v890
        %960 = vst.msk [vmem:[%s172 + $0x108] sm:$0xf] %vm893, %v891
        %961 = vst.msk [vmem:[%s172 + $0x10c] sm:$0xf] %vm893, %v892
        %s962 = sand.u32 %s90, 1
        %s963 = sand.u32 %s90, 1
        %s964 = smul.addr %s963, 272
        %s965 = scalar_lea.vmem [#allocation2], %s964
        // Predicated region
        $region33: #{actor_forward.5} parent=31 // pred_check
          %p966 = pneg %p100
        $region34: #{actor_forward.5} parent=31 // pred_check_branch
          %968 = sbr.rel (%p966) target = $region36
        $region35: #{actor_forward.5} parent=31 // pred_region
          %s969 = smul.u32 68, %s14
          %s970 = ssub.s32 133, %s969
          %p971 = scmp.lt.s32.totalorder %s970, 68
          %s972 = scalar_select %p971, %s970, 68
          %s973 = smul.u32 4, %s972
          %p974 = scmp.ne.s32.totalorder 0, %s973
          %s975 = smul.addr %s969, 4
          %s976 = scalar_lea.vmem %s3, %s975
          // Predicated region
          $region37: #{actor_forward.5} parent=35 // pred_check
            %p977 = pneg %p974
          $region38: #{actor_forward.5} parent=35 // pred_check_branch
            %979 = sbr.rel (%p977) target = $region40
          $region39: #{actor_forward.5} parent=35 // pred_region
            // Predicated region
            $region41: #{actor_forward.5} parent=39 // pred_check
              _
            $region42: #{actor_forward.5} parent=39 // pred_check_branch
              %981 = sbr.rel target = $region44
            $region43: #{actor_forward.5} parent=39 // pred_region
              // Predicated region
              $region63: #{actor_forward.5} parent=43 // pred_check
                _
              $region64: #{actor_forward.5} parent=43 // pred_check_branch
                %1093 = sbr.rel (0) target = $region66
              $region65: #{actor_forward.5} parent=43 // pred_region
                %s1095 = ssub.s32 16, 1
                %s1096 = sshrl.u32 %s972, 5
                // While loop
                $region67: #{actor_forward.5} parent=65 // loop_pre_header
                  _
                $region68: #{actor_forward.5} parent=65 // loop_header
                  %s1098 = sphi 0, %s1100
                  %p1099 = scmp.ge.s32.totalorder %s1098, %s1096
                  %s1103 = sphi 0, %s1172
                  %s1104 = sphi %s965, %s1175
                  %s1105 = sphi %s976, %s1176
                $region69: #{actor_forward.5} parent=65 // loop_header_branch
                  %1102 = sbr.rel (%p1099) target = $region73
                $region70: #{actor_forward.5} parent=65 // loop_body
                  %v1106 = vld [vmem:[%s1104] sm:%s1095]
                  %1107 = vst [vmem:[%s1105] sm:%s1095] %v1106
                  %v1108 = vld [vmem:[%s1104 + $0x4] sm:%s1095]
                  %1109 = vst [vmem:[%s1105 + $0x4] sm:%s1095] %v1108
                  %v1110 = vld [vmem:[%s1104 + $0x8] sm:%s1095]
                  %1111 = vst [vmem:[%s1105 + $0x8] sm:%s1095] %v1110
                  %v1112 = vld [vmem:[%s1104 + $0xc] sm:%s1095]
                  %1113 = vst [vmem:[%s1105 + $0xc] sm:%s1095] %v1112
                  %v1114 = vld [vmem:[%s1104 + $0x10] sm:%s1095]
                  %1115 = vst [vmem:[%s1105 + $0x10] sm:%s1095] %v1114
                  %v1116 = vld [vmem:[%s1104 + $0x14] sm:%s1095]
                  %1117 = vst [vmem:[%s1105 + $0x14] sm:%s1095] %v1116
                  %v1118 = vld [vmem:[%s1104 + $0x18] sm:%s1095]
                  %1119 = vst [vmem:[%s1105 + $0x18] sm:%s1095] %v1118
                  %v1120 = vld [vmem:[%s1104 + $0x1c] sm:%s1095]
                  %1121 = vst [vmem:[%s1105 + $0x1c] sm:%s1095] %v1120
                  %v1122 = vld [vmem:[%s1104 + $0x20] sm:%s1095]
                  %1123 = vst [vmem:[%s1105 + $0x20] sm:%s1095] %v1122
                  %v1124 = vld [vmem:[%s1104 + $0x24] sm:%s1095]
                  %1125 = vst [vmem:[%s1105 + $0x24] sm:%s1095] %v1124
                  %v1126 = vld [vmem:[%s1104 + $0x28] sm:%s1095]
                  %1127 = vst [vmem:[%s1105 + $0x28] sm:%s1095] %v1126
                  %v1128 = vld [vmem:[%s1104 + $0x2c] sm:%s1095]
                  %1129 = vst [vmem:[%s1105 + $0x2c] sm:%s1095] %v1128
                  %v1130 = vld [vmem:[%s1104 + $0x30] sm:%s1095]
                  %1131 = vst [vmem:[%s1105 + $0x30] sm:%s1095] %v1130
                  %v1132 = vld [vmem:[%s1104 + $0x34] sm:%s1095]
                  %1133 = vst [vmem:[%s1105 + $0x34] sm:%s1095] %v1132
                  %v1134 = vld [vmem:[%s1104 + $0x38] sm:%s1095]
                  %1135 = vst [vmem:[%s1105 + $0x38] sm:%s1095] %v1134
                  %v1136 = vld [vmem:[%s1104 + $0x3c] sm:%s1095]
                  %1137 = vst [vmem:[%s1105 + $0x3c] sm:%s1095] %v1136
                  %v1138 = vld [vmem:[%s1104 + $0x40] sm:%s1095]
                  %1139 = vst [vmem:[%s1105 + $0x40] sm:%s1095] %v1138
                  %v1140 = vld [vmem:[%s1104 + $0x44] sm:%s1095]
                  %1141 = vst [vmem:[%s1105 + $0x44] sm:%s1095] %v1140
                  %v1142 = vld [vmem:[%s1104 + $0x48] sm:%s1095]
                  %1143 = vst [vmem:[%s1105 + $0x48] sm:%s1095] %v1142
                  %v1144 = vld [vmem:[%s1104 + $0x4c] sm:%s1095]
                  %1145 = vst [vmem:[%s1105 + $0x4c] sm:%s1095] %v1144
                  %v1146 = vld [vmem:[%s1104 + $0x50] sm:%s1095]
                  %1147 = vst [vmem:[%s1105 + $0x50] sm:%s1095] %v1146
                  %v1148 = vld [vmem:[%s1104 + $0x54] sm:%s1095]
                  %1149 = vst [vmem:[%s1105 + $0x54] sm:%s1095] %v1148
                  %v1150 = vld [vmem:[%s1104 + $0x58] sm:%s1095]
                  %1151 = vst [vmem:[%s1105 + $0x58] sm:%s1095] %v1150
                  %v1152 = vld [vmem:[%s1104 + $0x5c] sm:%s1095]
                  %1153 = vst [vmem:[%s1105 + $0x5c] sm:%s1095] %v1152
                  %v1154 = vld [vmem:[%s1104 + $0x60] sm:%s1095]
                  %1155 = vst [vmem:[%s1105 + $0x60] sm:%s1095] %v1154
                  %v1156 = vld [vmem:[%s1104 + $0x64] sm:%s1095]
                  %1157 = vst [vmem:[%s1105 + $0x64] sm:%s1095] %v1156
                  %v1158 = vld [vmem:[%s1104 + $0x68] sm:%s1095]
                  %1159 = vst [vmem:[%s1105 + $0x68] sm:%s1095] %v1158
                  %v1160 = vld [vmem:[%s1104 + $0x6c] sm:%s1095]
                  %1161 = vst [vmem:[%s1105 + $0x6c] sm:%s1095] %v1160
                  %v1162 = vld [vmem:[%s1104 + $0x70] sm:%s1095]
                  %1163 = vst [vmem:[%s1105 + $0x70] sm:%s1095] %v1162
                  %v1164 = vld [vmem:[%s1104 + $0x74] sm:%s1095]
                  %1165 = vst [vmem:[%s1105 + $0x74] sm:%s1095] %v1164
                  %v1166 = vld [vmem:[%s1104 + $0x78] sm:%s1095]
                  %1167 = vst [vmem:[%s1105 + $0x78] sm:%s1095] %v1166
                  %v1168 = vld [vmem:[%s1104 + $0x7c] sm:%s1095]
                  %1169 = vst [vmem:[%s1105 + $0x7c] sm:%s1095] %v1168
                  %s1170 = sadd.s32 1, %s1103
                  %p1171 = scmp.ge.s32.totalorder %s1170, %s1096
                  %s1172 = scalar_select %p1171, 0, %s1170
                  %s1173 = smul.u32 %s1172, 128
                  %s1174 = smul.u32 %s1172, 128
                  %s1175 = scalar_lea.vmem %s965, %s1173 [#allocation2]
                  %s1176 = scalar_lea.vmem %s976, %s1174
                $region71: #{actor_forward.5} parent=65 // loop_footer
                  %s1100 = sadd.s32 %s1098, 1
                $region72: #{actor_forward.5} parent=65 // loop_footer_branch
                  %1097 = sbr.rel target = $region68
                $region73: #{actor_forward.5} parent=65 // loop_exit
                  _
                %s1177 = sshrl.u32 %s972, 5
                %s1178 = sand.u32 %s972, 31
                %s1179 = smul.u32 %s1177, 32
                %s1180 = smul.u32 4, %s1179
                %s1181 = scalar_lea.vmem %s965, %s1180 [#allocation2]
                %s1182 = smul.u32 4, %s1179
                %s1183 = scalar_lea.vmem %s976, %s1182
                // While loop
                $region74: #{actor_forward.5} parent=65 // loop_pre_header
                  _
                $region75: #{actor_forward.5} parent=65 // loop_header
                  %s1185 = sphi 0, %s1187
                  %p1186 = scmp.ge.s32.totalorder %s1185, %s1178
                  %s1190 = sphi 0, %s1197
                  %s1191 = sphi %s1181, %s1200
                  %s1192 = sphi %s1183, %s1201
                $region76: #{actor_forward.5} parent=65 // loop_header_branch
                  %1189 = sbr.rel (%p1186) target = $region80
                $region77: #{actor_forward.5} parent=65 // loop_body
                  %v1193 = vld [vmem:[%s1191] sm:%s1095]
                  %1194 = vst [vmem:[%s1192] sm:%s1095] %v1193
                  %s1195 = sadd.s32 1, %s1190
                  %p1196 = scmp.ge.s32.totalorder %s1195, %s1178
                  %s1197 = scalar_select %p1196, 0, %s1195
                  %s1198 = smul.u32 %s1197, 4
                  %s1199 = smul.u32 %s1197, 4
                  %s1200 = scalar_lea.vmem %s1181, %s1198 [#allocation2]
                  %s1201 = scalar_lea.vmem %s1183, %s1199
                $region78: #{actor_forward.5} parent=65 // loop_footer
                  %s1187 = sadd.s32 %s1185, 1
                $region79: #{actor_forward.5} parent=65 // loop_footer_branch
                  %1184 = sbr.rel target = $region75
                $region80: #{actor_forward.5} parent=65 // loop_exit
                  _
              $region66: #{actor_forward.5} parent=43 // pred_fallthru
                _
            $region44: #{actor_forward.5} parent=39 // pred_fallthru
              _
            // Predicated region
            $region45: #{actor_forward.5} parent=39 // pred_check
              _
            $region46: #{actor_forward.5} parent=39 // pred_check_branch
              %983 = sbr.rel (0) target = $region48
            $region47: #{actor_forward.5} parent=39 // pred_region
              %s985 = ssub.s32 16, 1
              %s986 = sshrl.u32 %s972, 5
              // While loop
              $region49: #{actor_forward.5} parent=47 // loop_pre_header
                _
              $region50: #{actor_forward.5} parent=47 // loop_header
                %s988 = sphi 0, %s990
                %p989 = scmp.ge.s32.totalorder %s988, %s986
                %s993 = sphi 0, %s1062
                %s994 = sphi %s965, %s1065
                %s995 = sphi %s976, %s1066
              $region51: #{actor_forward.5} parent=47 // loop_header_branch
                %992 = sbr.rel (%p989) target = $region55
              $region52: #{actor_forward.5} parent=47 // loop_body
                %v996 = vld [vmem:[%s994] sm:%s985]
                %997 = vst [vmem:[%s995] sm:%s985] %v996
                %v998 = vld [vmem:[%s994 + $0x4] sm:%s985]
                %999 = vst [vmem:[%s995 + $0x4] sm:%s985] %v998
                %v1000 = vld [vmem:[%s994 + $0x8] sm:%s985]
                %1001 = vst [vmem:[%s995 + $0x8] sm:%s985] %v1000
                %v1002 = vld [vmem:[%s994 + $0xc] sm:%s985]
                %1003 = vst [vmem:[%s995 + $0xc] sm:%s985] %v1002
                %v1004 = vld [vmem:[%s994 + $0x10] sm:%s985]
                %1005 = vst [vmem:[%s995 + $0x10] sm:%s985] %v1004
                %v1006 = vld [vmem:[%s994 + $0x14] sm:%s985]
                %1007 = vst [vmem:[%s995 + $0x14] sm:%s985] %v1006
                %v1008 = vld [vmem:[%s994 + $0x18] sm:%s985]
                %1009 = vst [vmem:[%s995 + $0x18] sm:%s985] %v1008
                %v1010 = vld [vmem:[%s994 + $0x1c] sm:%s985]
                %1011 = vst [vmem:[%s995 + $0x1c] sm:%s985] %v1010
                %v1012 = vld [vmem:[%s994 + $0x20] sm:%s985]
                %1013 = vst [vmem:[%s995 + $0x20] sm:%s985] %v1012
                %v1014 = vld [vmem:[%s994 + $0x24] sm:%s985]
                %1015 = vst [vmem:[%s995 + $0x24] sm:%s985] %v1014
                %v1016 = vld [vmem:[%s994 + $0x28] sm:%s985]
                %1017 = vst [vmem:[%s995 + $0x28] sm:%s985] %v1016
                %v1018 = vld [vmem:[%s994 + $0x2c] sm:%s985]
                %1019 = vst [vmem:[%s995 + $0x2c] sm:%s985] %v1018
                %v1020 = vld [vmem:[%s994 + $0x30] sm:%s985]
                %1021 = vst [vmem:[%s995 + $0x30] sm:%s985] %v1020
                %v1022 = vld [vmem:[%s994 + $0x34] sm:%s985]
                %1023 = vst [vmem:[%s995 + $0x34] sm:%s985] %v1022
                %v1024 = vld [vmem:[%s994 + $0x38] sm:%s985]
                %1025 = vst [vmem:[%s995 + $0x38] sm:%s985] %v1024
                %v1026 = vld [vmem:[%s994 + $0x3c] sm:%s985]
                %1027 = vst [vmem:[%s995 + $0x3c] sm:%s985] %v1026
                %v1028 = vld [vmem:[%s994 + $0x40] sm:%s985]
                %1029 = vst [vmem:[%s995 + $0x40] sm:%s985] %v1028
                %v1030 = vld [vmem:[%s994 + $0x44] sm:%s985]
                %1031 = vst [vmem:[%s995 + $0x44] sm:%s985] %v1030
                %v1032 = vld [vmem:[%s994 + $0x48] sm:%s985]
                %1033 = vst [vmem:[%s995 + $0x48] sm:%s985] %v1032
                %v1034 = vld [vmem:[%s994 + $0x4c] sm:%s985]
                %1035 = vst [vmem:[%s995 + $0x4c] sm:%s985] %v1034
                %v1036 = vld [vmem:[%s994 + $0x50] sm:%s985]
                %1037 = vst [vmem:[%s995 + $0x50] sm:%s985] %v1036
                %v1038 = vld [vmem:[%s994 + $0x54] sm:%s985]
                %1039 = vst [vmem:[%s995 + $0x54] sm:%s985] %v1038
                %v1040 = vld [vmem:[%s994 + $0x58] sm:%s985]
                %1041 = vst [vmem:[%s995 + $0x58] sm:%s985] %v1040
                %v1042 = vld [vmem:[%s994 + $0x5c] sm:%s985]
                %1043 = vst [vmem:[%s995 + $0x5c] sm:%s985] %v1042
                %v1044 = vld [vmem:[%s994 + $0x60] sm:%s985]
                %1045 = vst [vmem:[%s995 + $0x60] sm:%s985] %v1044
                %v1046 = vld [vmem:[%s994 + $0x64] sm:%s985]
                %1047 = vst [vmem:[%s995 + $0x64] sm:%s985] %v1046
                %v1048 = vld [vmem:[%s994 + $0x68] sm:%s985]
                %1049 = vst [vmem:[%s995 + $0x68] sm:%s985] %v1048
                %v1050 = vld [vmem:[%s994 + $0x6c] sm:%s985]
                %1051 = vst [vmem:[%s995 + $0x6c] sm:%s985] %v1050
                %v1052 = vld [vmem:[%s994 + $0x70] sm:%s985]
                %1053 = vst [vmem:[%s995 + $0x70] sm:%s985] %v1052
                %v1054 = vld [vmem:[%s994 + $0x74] sm:%s985]
                %1055 = vst [vmem:[%s995 + $0x74] sm:%s985] %v1054
                %v1056 = vld [vmem:[%s994 + $0x78] sm:%s985]
                %1057 = vst [vmem:[%s995 + $0x78] sm:%s985] %v1056
                %v1058 = vld [vmem:[%s994 + $0x7c] sm:%s985]
                %1059 = vst [vmem:[%s995 + $0x7c] sm:%s985] %v1058
                %s1060 = sadd.s32 1, %s993
                %p1061 = scmp.ge.s32.totalorder %s1060, %s986
                %s1062 = scalar_select %p1061, 0, %s1060
                %s1063 = smul.u32 %s1062, 128
                %s1064 = smul.u32 %s1062, 128
                %s1065 = scalar_lea.vmem %s965, %s1063 [#allocation2]
                %s1066 = scalar_lea.vmem %s976, %s1064
              $region53: #{actor_forward.5} parent=47 // loop_footer
                %s990 = sadd.s32 %s988, 1
              $region54: #{actor_forward.5} parent=47 // loop_footer_branch
                %987 = sbr.rel target = $region50
              $region55: #{actor_forward.5} parent=47 // loop_exit
                _
              %s1067 = sshrl.u32 %s972, 5
              %s1068 = sand.u32 %s972, 31
              %s1069 = smul.u32 %s1067, 32
              %s1070 = smul.u32 4, %s1069
              %s1071 = scalar_lea.vmem %s965, %s1070 [#allocation2]
              %s1072 = smul.u32 4, %s1069
              %s1073 = scalar_lea.vmem %s976, %s1072
              // While loop
              $region56: #{actor_forward.5} parent=47 // loop_pre_header
                _
              $region57: #{actor_forward.5} parent=47 // loop_header
                %s1075 = sphi 0, %s1077
                %p1076 = scmp.ge.s32.totalorder %s1075, %s1068
                %s1080 = sphi 0, %s1087
                %s1081 = sphi %s1071, %s1090
                %s1082 = sphi %s1073, %s1091
              $region58: #{actor_forward.5} parent=47 // loop_header_branch
                %1079 = sbr.rel (%p1076) target = $region62
              $region59: #{actor_forward.5} parent=47 // loop_body
                %v1083 = vld [vmem:[%s1081] sm:%s985]
                %1084 = vst [vmem:[%s1082] sm:%s985] %v1083
                %s1085 = sadd.s32 1, %s1080
                %p1086 = scmp.ge.s32.totalorder %s1085, %s1068
                %s1087 = scalar_select %p1086, 0, %s1085
                %s1088 = smul.u32 %s1087, 4
                %s1089 = smul.u32 %s1087, 4
                %s1090 = scalar_lea.vmem %s1071, %s1088 [#allocation2]
                %s1091 = scalar_lea.vmem %s1073, %s1089
              $region60: #{actor_forward.5} parent=47 // loop_footer
                %s1077 = sadd.s32 %s1075, 1
              $region61: #{actor_forward.5} parent=47 // loop_footer_branch
                %1074 = sbr.rel target = $region57
              $region62: #{actor_forward.5} parent=47 // loop_exit
                _
            $region48: #{actor_forward.5} parent=39 // pred_fallthru
              _
          $region40: #{actor_forward.5} parent=35 // pred_fallthru
            _
          %1202 = vnop
        $region36: #{actor_forward.5} parent=31 // pred_fallthru
          _
      $region32: #{actor_forward.5} parent=5 // pred_fallthru
        _
      %p1203 = scmp.le.s32.totalorder 2, %s9
      // Predicated region
      $region81: #{actor_forward.5} parent=5 // pred_check
        %p1204 = pneg %p1203
      $region82: #{actor_forward.5} parent=5 // pred_check_branch
        %1206 = sbr.rel (%p1204) target = $region84
      $region83: #{actor_forward.5} parent=5 // pred_region
        %s1207 = ssub.s32 %s9, 2
        // Predicated region
        $region85: #{actor_forward.5} parent=83 // pred_check
          %p1208 = pneg %p106
        $region86: #{actor_forward.5} parent=83 // pred_check_branch
          %1210 = sbr.rel (%p1208) target = $region88
        $region87: #{actor_forward.5} parent=83 // pred_region
          %s1211 = sand.u32 %s91, 1
          %s1212 = sand.u32 %s91, 1
          %s1213 = smul.addr %s1212, 272
          %s1214 = scalar_lea.vmem [#allocation2], %s1213
        $region88: #{actor_forward.5} parent=83 // pred_fallthru
          _
      $region84: #{actor_forward.5} parent=5 // pred_fallthru
        _
    $region6: #{actor_forward.5} parent=1 // loop_footer
      %s13 = sadd.s32 1, %s9
    $region7: #{actor_forward.5} parent=1 // loop_footer_branch
      %8 = sbr.rel target = $region3
    $region8: #{actor_forward.5} parent=1 // loop_exit
      _

// kernel: actor_forward.6
$region0: #{actor_forward.6}
  #allocation0 [shape = 'u32[]', space=smem, size = 0x4, offset = 0x4, fixed_abs, tag = 'smem constant byte address 0x4 - core index']
  #allocation1 [shape = 'u32[72,128]{1,0:T(1,128)}', space=vmem, size = 0x9000, scoped, tag = 'internal scratch']
  %s0 = inlined_call_operand.vmem [shape: bf16[242,144], index: 0, kind: input, shape index: {}]
  %s1 = inlined_call_operand.vmem [shape: bf16[144,32], index: 1, kind: input, shape index: {}]
  %s2 = inlined_call_operand.vmem [shape: f32[1,32], index: 2, kind: input, shape index: {}]
  %s3 = inlined_call_operand.vmem [shape: bf16[242,32], index: 3, kind: output, shape index: {}]
  %s4 = sld [smem:[#allocation0]]
  $region89: #{actor_forward.6} parent=0
    _
  %s6 = ssub.s32 1, %s4
  %s7 = scalar_select 0, %s6, %s4
  $region1: #{actor_forward.6} parent=0
    #allocation2 [shape = 'u8[65536]{0}', space=vmem, size = 0x10000, scoped, tag = 'output window, operand 0']
    loop: start=0, step=1, limit=4
    $region2: #{actor_forward.6} parent=1 // loop_pre_header
      _
    $region3: #{actor_forward.6} parent=1 // loop_header
      %s9 = sphi 0, %s13
      %p10 = scmp.ge.s32.totalorder %s9, 4
      %s19 = sphi 0, %s21
      %s22 = sphi 0, %s19
      %s23 = sphi 0, %s22
      %s39 = sphi 0, %s23
      %s43 = sphi 0, %s43
      %s45 = sphi 0, %s43
      %s46 = sphi 0, %s45
      %s60 = sphi 0, %s46
      %s64 = sphi 0, %s64
      %s66 = sphi 0, %s64
      %s67 = sphi 0, %s66
      %s81 = sphi 0, %s67
      %s87 = sphi 0, %s89
      %s90 = sphi 0, %s87
      %s91 = sphi 0, %s90
      %s107 = sphi 0, %s91
    $region4: #{actor_forward.6} parent=1 // loop_header_branch
      %12 = sbr.rel (%p10) target = $region8
    $region5: #{actor_forward.6} parent=1 // loop_body
      %s14 = ssub.s32 %s9, 1
      %s15 = ssub.s32 %s9, 2
      %s16 = sadd.s32 %s9, 1
      %s17 = ssub.s32 %s9, %s16
      %p18 = scmp.eq.s32.totalorder %s17, 0
      %s20 = sadd.s32 %s19, 1
      %s21 = scalar_select %p18, %s19, %s20
      %p24 = pneg %p18
      %p25 = scmp.eq.s32.totalorder %s9, 1
      %p26 = por %p24, %p25
      %p27 = scmp.ne.s32.totalorder %s19, %s22
      %p28 = scmp.eq.s32.totalorder %s9, 0
      %p29 = por %p27, %p28
      %p30 = scmp.ne.s32.totalorder %s19, %s22
      %p31 = scmp.eq.s32.totalorder %s14, 1
      %p32 = por %p30, %p31
      %p33 = scmp.ne.s32.totalorder %s22, %s23
      %p34 = scmp.eq.s32.totalorder %s14, 0
      %p35 = por %p33, %p34
      %p36 = scmp.ne.s32.totalorder %s22, %s23
      %p37 = scmp.eq.s32.totalorder %s15, 1
      %p38 = por %p36, %p37
      %p40 = scmp.ne.s32.totalorder %s23, %s39
      %p41 = scmp.eq.s32.totalorder %s15, 0
      %p42 = por %p40, %p41
      %s44 = sadd.s32 %s43, 1
      %p47 = scmp.eq.s32.totalorder %s9, 1
      %p48 = scmp.ne.s32.totalorder %s43, %s45
      %p49 = scmp.eq.s32.totalorder %s9, 0
      %p50 = por %p48, %p49
      %p51 = scmp.ne.s32.totalorder %s43, %s45
      %p52 = scmp.eq.s32.totalorder %s14, 1
      %p53 = por %p51, %p52
      %p54 = scmp.ne.s32.totalorder %s45, %s46
      %p55 = scmp.eq.s32.totalorder %s14, 0
      %p56 = por %p54, %p55
      %p57 = scmp.ne.s32.totalorder %s45, %s46
      %p58 = scmp.eq.s32.totalorder %s15, 1
      %p59 = por %p57, %p58
      %p61 = scmp.ne.s32.totalorder %s46, %s60
      %p62 = scmp.eq.s32.totalorder %s15, 0
      %p63 = por %p61, %p62
      %s65 = sadd.s32 %s64, 1
      %p68 = scmp.eq.s32.totalorder %s9, 1
      %p69 = scmp.ne.s32.totalorder %s64, %s66
      %p70 = scmp.eq.s32.totalorder %s9, 0
      %p71 = por %p69, %p70
      %p72 = scmp.ne.s32.totalorder %s64, %s66
      %p73 = scmp.eq.s32.totalorder %s14, 1
      %p74 = por %p72, %p73
      %p75 = scmp.ne.s32.totalorder %s66, %s67
      %p76 = scmp.eq.s32.totalorder %s14, 0
      %p77 = por %p75, %p76
      %p78 = scmp.ne.s32.totalorder %s66, %s67
      %p79 = scmp.eq.s32.totalorder %s15, 1
      %p80 = por %p78, %p79
      %p82 = scmp.ne.s32.totalorder %s67, %s81
      %p83 = scmp.eq.s32.totalorder %s15, 0
      %p84 = por %p82, %p83
      %s85 = ssub.s32 %s9, %s16
      %p86 = scmp.eq.s32.totalorder %s85, 0
      %s88 = sadd.s32 %s87, 1
      %s89 = scalar_select %p86, %s87, %s88
      %p92 = pneg %p86
      %p93 = scmp.eq.s32.totalorder %s9, 1
      %p94 = por %p92, %p93
      %p95 = scmp.ne.s32.totalorder %s87, %s90
      %p96 = scmp.eq.s32.totalorder %s9, 0
      %p97 = por %p95, %p96
      %p98 = scmp.ne.s32.totalorder %s87, %s90
      %p99 = scmp.eq.s32.totalorder %s14, 1
      %p100 = por %p98, %p99
      %p101 = scmp.ne.s32.totalorder %s90, %s91
      %p102 = scmp.eq.s32.totalorder %s14, 0
      %p103 = por %p101, %p102
      %p104 = scmp.ne.s32.totalorder %s90, %s91
      %p105 = scmp.eq.s32.totalorder %s15, 1
      %p106 = por %p104, %p105
      %p108 = scmp.ne.s32.totalorder %s91, %s107
      %p109 = scmp.eq.s32.totalorder %s15, 0
      %p110 = por %p108, %p109
      %p111 = scmp.le.s32.totalorder 1, %s9
      %p112 = scmp.lt.s32.totalorder %s9, 3
      %p113 = pnand %p111, %p112
      %p114 = pneg %p113
      // Predicated region
      $region9: #{actor_forward.6} parent=5 // pred_check
        _
      $region10: #{actor_forward.6} parent=5 // pred_check_branch
        %116 = sbr.rel (%p113) target = $region12
      $region11: #{actor_forward.6} parent=5 // pred_region
        %s117 = ssub.s32 %s9, 1
        // Predicated region
        $region13: #{actor_forward.6} parent=11 // pred_check
          %p118 = pneg %p56
        $region14: #{actor_forward.6} parent=11 // pred_check_branch
          %120 = sbr.rel (%p118) target = $region16
        $region15: #{actor_forward.6} parent=11 // pred_region
          _
        $region16: #{actor_forward.6} parent=11 // pred_fallthru
          _
        // Predicated region
        $region17: #{actor_forward.6} parent=11 // pred_check
          %p121 = pneg %p77
        $region18: #{actor_forward.6} parent=11 // pred_check_branch
          %123 = sbr.rel (%p121) target = $region20
        $region19: #{actor_forward.6} parent=11 // pred_region
          _
        $region20: #{actor_forward.6} parent=11 // pred_fallthru
          _
      $region12: #{actor_forward.6} parent=5 // pred_fallthru
        _
      %p124 = scmp.lt.s32.totalorder %s9, 2
      // Predicated region
      $region21: #{actor_forward.6} parent=5 // pred_check
        %p125 = pneg %p124
      $region22: #{actor_forward.6} parent=5 // pred_check_branch
        %127 = sbr.rel (%p125) target = $region24
      $region23: #{actor_forward.6} parent=5 // pred_region
        // Predicated region
        $region25: #{actor_forward.6} parent=23 // pred_check
          %p128 = pneg %p29
        $region26: #{actor_forward.6} parent=23 // pred_check_branch
          %130 = sbr.rel (%p128) target = $region28
        $region27: #{actor_forward.6} parent=23 // pred_region
          %s131 = smul.u32 16, %s9
          %s132 = ssub.s32 31, %s131
          %p133 = scmp.lt.s32.totalorder %s132, 16
          %s134 = scalar_select %p133, %s132, 16
          %s135 = smul.u32 4, %s134
          %s136 = smul.u32 %s135, 2
          %p137 = scmp.lt.s32.totalorder %s131, 30
          %s138 = scalar_select %p137, %s131, 30
          %s139 = smul.addr %s138, 2
          %s140 = smul.addr %s139, 4
          %s141 = scalar_lea.vmem %s0, %s140
          %s142 = smul.u32 16, %s9
          %s143 = ssub.s32 31, %s142
          %p144 = scmp.lt.s32.totalorder %s143, 16
          %s145 = scalar_select %p144, %s143, 16
          %s146 = smul.u32 4, %s145
          %s147 = smul.u32 %s146, 2
        $region28: #{actor_forward.6} parent=23 // pred_fallthru
          _
      $region24: #{actor_forward.6} parent=5 // pred_fallthru
        _
      %p148 = scmp.le.s32.totalorder 1, %s9
      %p149 = scmp.lt.s32.totalorder %s9, 3
      %p150 = pnand %p148, %p149
      %p151 = pneg %p150
      // Predicated region
      $region29: #{actor_forward.6} parent=5 // pred_check
        _
      $region30: #{actor_forward.6} parent=5 // pred_check_branch
        %153 = sbr.rel (%p150) target = $region32
      $region31: #{actor_forward.6} parent=5 // pred_region
        %s154 = ssub.s32 %s9, 1
        %s155 = smul.u32 16, %s14
        %s156 = ssub.s32 31, %s155
        %p157 = scmp.lt.s32.totalorder %s156, 16
        %s158 = scalar_select %p157, %s156, 16
        %s159 = smul.u32 4, %s158
        %s160 = smul.u32 %s159, 2
        %p161 = scmp.lt.s32.totalorder %s155, 30
        %s162 = scalar_select %p161, %s155, 30
        %s163 = smul.addr %s162, 2
        %s164 = smul.addr %s163, 4
        %s165 = scalar_lea.vmem %s0, %s164
        %p166 = pneg %p35
        %p167 = pneg %p32
        %p168 = pneg %p56
        %p169 = pneg %p53
        %p170 = pneg %p77
        %p171 = pneg %p74
        %p172 = pneg %p103
        %p173 = pneg %p100
        %s174 = sand.u32 %s90, 1
        %s175 = sand.u32 %s90, 1
        %s176 = smul.addr %s175, 64
        %s177 = scalar_lea.vmem [#allocation2], %s176
        %s178 = smul.u32 16, %s14
        %s179 = ssub.s32 31, %s178
        %p180 = scmp.lt.s32.totalorder %s179, 16
        %s181 = scalar_select %p180, %s179, 16
        %s182 = smul.u32 4, %s181
        %s183 = smul.u32 %s182, 2
        %p184 = scmp.lt.s32.totalorder %s178, 30
        %s185 = scalar_select %p184, %s178, 30
        %s186 = smul.addr %s185, 2
        %s187 = smul.addr %s186, 4
        %s188 = scalar_lea.vmem %s0, %s187
        %s189 = smul.u32 16, %s14
        %s190 = ssub.s32 31, %s189
        %p191 = scmp.lt.s32.totalorder %s190, 16
        %s192 = scalar_select %p191, %s190, 16
        %s193 = smul.u32 4, %s192
        %s194 = smul.u32 %s193, 2
        %s195 = smul.u32 16, %s14
        %s196 = ssub.s32 31, %s195
        %p197 = scmp.lt.s32.totalorder %s196, 16
        %s198 = scalar_select %p197, %s196, 16
        %s199 = smul.u32 4, %s198
        %v201 = vld [vmem:[%s188] sm:$0xff]
        %v202 = vld [vmem:[%s188 + $0x8] sm:$0xff]
        %v203 = vld [vmem:[%s188 + $0x10] sm:$0xff]
        %v204 = vld [vmem:[%s188 + $0x18] sm:$0xff]
        %v205 = vld [vmem:[%s188 + $0x20] sm:$0xff]
        %v206 = vld [vmem:[%s188 + $0x28] sm:$0xff]
        %v207 = vld [vmem:[%s188 + $0x30] sm:$0xff]
        %v208 = vld [vmem:[%s188 + $0x38] sm:$0xff]
        %v209 = vld [vmem:[%s188 + $0x40] sm:$0xff]
        %v210 = vld [vmem:[%s188 + $0x48] sm:$0xff]
        %v211 = vld [vmem:[%s188 + $0x50] sm:$0xff]
        %v212 = vld [vmem:[%s188 + $0x58] sm:$0xff]
        %v213 = vld [vmem:[%s188 + $0x60] sm:$0xff]
        %v214 = vld [vmem:[%s188 + $0x68] sm:$0xff]
        %v215 = vld [vmem:[%s188 + $0x70] sm:$0xff]
        %v216 = vld [vmem:[%s188 + $0x78] sm:$0xff]
        %v217 = vld [vmem:[%s1] sm:$0xf]
        %v218 = vld [vmem:[%s1 + $0x4] sm:$0xf]
        %v219 = vld [vmem:[%s1 + $0x8] sm:$0xf]
        %v220 = vld [vmem:[%s1 + $0xc] sm:$0xf]
        %v221 = vld [vmem:[%s1 + $0x10] sm:$0xf]
        %v222 = vld [vmem:[%s1 + $0x14] sm:$0xf]
        %v223 = vld [vmem:[%s1 + $0x18] sm:$0xf]
        %v224 = vld [vmem:[%s1 + $0x1c] sm:$0xf]
        %v225 = vld [vmem:[%s1 + $0x20] sm:$0xf]
        %v226 = vld [vmem:[%s1 + $0x24] sm:$0xf]
        %v227 = vld [vmem:[%s1 + $0x28] sm:$0xf]
        %v228 = vld [vmem:[%s1 + $0x2c] sm:$0xf]
        %v229 = vld [vmem:[%s1 + $0x30] sm:$0xf]
        %v230 = vld [vmem:[%s1 + $0x34] sm:$0xf]
        %v231 = vld [vmem:[%s1 + $0x38] sm:$0xf]
        %v232 = vld [vmem:[%s1 + $0x3c] sm:$0xf]
        %v233 = vld [vmem:[%s1 + $0x40] sm:$0xf]
        %v234 = vld [vmem:[%s1 + $0x44] sm:$0xf]
        %v235 = vld [vmem:[%s2] sm:$0x1]
        %v237 = vperm.slane %v235, 0
        %v255 = vunpack.c.l.b16 %v201
        %v256 = vunpack.c.h.b16 %v201
        %v257 = vunpack.c.l.b16 %v202
        %v258 = vunpack.c.h.b16 %v202
        %v259 = vunpack.c.l.b16 %v203
        %v260 = vunpack.c.h.b16 %v203
        %v261 = vunpack.c.l.b16 %v204
        %v262 = vunpack.c.h.b16 %v204
        %v263 = vunpack.c.l.b16 %v205
        %v264 = vunpack.c.h.b16 %v205
        %v265 = vunpack.c.l.b16 %v206
        %v266 = vunpack.c.h.b16 %v206
        %v267 = vunpack.c.l.b16 %v207
        %v268 = vunpack.c.h.b16 %v207
        %v269 = vunpack.c.l.b16 %v208
        %v270 = vunpack.c.h.b16 %v208
        %v271 = vunpack.c.l.b16 %v209
        %v272 = vunpack.c.h.b16 %v209
        %v273 = vunpack.c.l.b16 %v210
        %v274 = vunpack.c.h.b16 %v210
        %v275 = vunpack.c.l.b16 %v211
        %v276 = vunpack.c.h.b16 %v211
        %v277 = vunpack.c.l.b16 %v212
        %v278 = vunpack.c.h.b16 %v212
        %v279 = vunpack.c.l.b16 %v213
        %v280 = vunpack.c.h.b16 %v213
        %v281 = vunpack.c.l.b16 %v214
        %v282 = vunpack.c.h.b16 %v214
        %v283 = vunpack.c.l.b16 %v215
        %v284 = vunpack.c.h.b16 %v215
        %v285 = vunpack.c.l.b16 %v216
        %v286 = vunpack.c.h.b16 %v216
        %v287 = vpack.c.b16 %v257, %v255
        %v288 = vpack.c.b16 %v258, %v256
        %v289 = vpack.c.b16 %v261, %v259
        %v290 = vpack.c.b16 %v262, %v260
        %v291 = vpack.c.b16 %v265, %v263
        %v292 = vpack.c.b16 %v266, %v264
        %v293 = vpack.c.b16 %v269, %v267
        %v294 = vpack.c.b16 %v270, %v268
        %v295 = vpack.c.b16 %v273, %v271
        %v296 = vpack.c.b16 %v274, %v272
        %v297 = vpack.c.b16 %v277, %v275
        %v298 = vpack.c.b16 %v278, %v276
        %v299 = vpack.c.b16 %v281, %v279
        %v300 = vpack.c.b16 %v282, %v280
        %v301 = vpack.c.b16 %v285, %v283
        %v302 = vpack.c.b16 %v286, %v284
        %v329 = vunpack.c.l.b16 %v217
        %v330 = vunpack.c.l.b16 %v218
        %v331 = vunpack.c.l.b16 %v219
        %v332 = vunpack.c.l.b16 %v220
        %v333 = vunpack.c.l.b16 %v221
        %v334 = vunpack.c.l.b16 %v222
        %v335 = vunpack.c.l.b16 %v223
        %v336 = vunpack.c.l.b16 %v224
        %v337 = vunpack.c.l.b16 %v225
        %v338 = vunpack.c.l.b16 %v226
        %v339 = vunpack.c.l.b16 %v227
        %v340 = vunpack.c.l.b16 %v228
        %v341 = vunpack.c.l.b16 %v229
        %v342 = vunpack.c.l.b16 %v230
        %v343 = vunpack.c.l.b16 %v231
        %v344 = vunpack.c.l.b16 %v232
        %v345 = vunpack.c.l.b16 %v233
        %v346 = vunpack.c.l.b16 %v234
        %v347 = vpack.c.b16 %v330, %v329
        %v348 = vpack.c.b16 %v332, %v331
        %v349 = vpack.c.b16 %v334, %v333
        %v350 = vpack.c.b16 %v336, %v335
        %v351 = vpack.c.b16 %v338, %v337
        %v352 = vpack.c.b16 %v340, %v339
        %v353 = vpack.c.b16 %v342, %v341
        %v354 = vpack.c.b16 %v344, %v343
        %v355 = vpack.c.b16 %v346, %v345
        %vm365 = vcmask 130048
        %v367 = vsel %vm365, %v288, 0
        %v370 = vsel %vm365, %v290, 0
        %v373 = vsel %vm365, %v292, 0
        %v376 = vsel %vm365, %v294, 0
        %v379 = vsel %vm365, %v296, 0
        %v382 = vsel %vm365, %v298, 0
        %v385 = vsel %vm365, %v300, 0
        %v388 = vsel %vm365, %v302, 0
        %390 = vmatpush.bf16.msra.mxu0 %v354
        %391 = vmatpush.bf16.msra.mxu0 %v353
        %392 = vmatpush.bf16.msra.mxu0 %v352
        %393 = vmatpush.bf16.msra.mxu0 %v351
        %394 = vmatpush.bf16.msra.mxu0 %v350
        %395 = vmatpush.bf16.msra.mxu0 %v349
        %396 = vmatpush.bf16.msra.mxu0 %v348
        %397 = vmatpush.bf16.msra.mxu0 %v347
        %398 = vmatmul.bf16.gmra.mxu0 %v287
        %v399 = vpop.f32.mrf.mxu0
        %v400 = vadd.f32 %v237, %v399
        %v401 = vpop.f32.mrf.mxu0
        %v402 = vadd.f32 %v237, %v401
        %403 = vmatmul.bf16.gmra.mxu0 %v289
        %v404 = vpop.f32.mrf.mxu0
        %v405 = vadd.f32 %v237, %v404
        %v406 = vpop.f32.mrf.mxu0
        %v407 = vadd.f32 %v237, %v406
        %408 = vmatmul.bf16.gmra.mxu0 %v291
        %v409 = vpop.f32.mrf.mxu0
        %v410 = vadd.f32 %v237, %v409
        %v411 = vpop.f32.mrf.mxu0
        %v412 = vadd.f32 %v237, %v411
        %413 = vmatmul.bf16.gmra.mxu0 %v293
        %v414 = vpop.f32.mrf.mxu0
        %v415 = vadd.f32 %v237, %v414
        %v416 = vpop.f32.mrf.mxu0
        %v417 = vadd.f32 %v237, %v416
        %418 = vmatmul.bf16.gmra.mxu0 %v295
        %v419 = vpop.f32.mrf.mxu0
        %v420 = vadd.f32 %v237, %v419
        %v421 = vpop.f32.mrf.mxu0
        %v422 = vadd.f32 %v237, %v421
        %423 = vmatmul.bf16.gmra.mxu0 %v297
        %v424 = vpop.f32.mrf.mxu0
        %v425 = vadd.f32 %v237, %v424
        %v426 = vpop.f32.mrf.mxu0
        %v427 = vadd.f32 %v237, %v426
        %428 = vmatmul.bf16.gmra.mxu0 %v299
        %v429 = vpop.f32.mrf.mxu0
        %v430 = vadd.f32 %v237, %v429
        %v431 = vpop.f32.mrf.mxu0
        %v432 = vadd.f32 %v237, %v431
        %433 = vmatmul.bf16.gmra.mxu0 %v301
        %v434 = vpop.f32.mrf.mxu0
        %v435 = vadd.f32 %v237, %v434
        %v436 = vpop.f32.mrf.mxu0
        %v437 = vadd.f32 %v237, %v436
        %438 = vdwg.mxu0
        %439 = vmatpush.bf16.msra.mxu0 0
        %440 = vmatpush.bf16.msra.mxu0 0
        %441 = vmatpush.bf16.msra.mxu0 0
        %442 = vmatpush.bf16.msra.mxu0 0
        %443 = vmatpush.bf16.msra.mxu0 0
        %444 = vmatpush.bf16.msra.mxu0 0
        %445 = vmatpush.bf16.msra.mxu0 0
        %446 = vmatpush.bf16.msra.mxu0 %v355
        %447 = vmatmul.bf16.gmra.mxu0 %v367
        %v448 = vpop.f32.mrf.mxu0
        %v449 = vadd.f32 %v400, %v448
        %v450 = vpop.f32.mrf.mxu0
        %v451 = vadd.f32 %v402, %v450
        %452 = vmatmul.bf16.gmra.mxu0 %v370
        %v453 = vpop.f32.mrf.mxu0
        %v454 = vadd.f32 %v405, %v453
        %v455 = vpop.f32.mrf.mxu0
        %v456 = vadd.f32 %v407, %v455
        %457 = vmatmul.bf16.gmra.mxu0 %v373
        %v458 = vpop.f32.mrf.mxu0
        %v459 = vadd.f32 %v410, %v458
        %v460 = vpop.f32.mrf.mxu0
        %v461 = vadd.f32 %v412, %v460
        %462 = vmatmul.bf16.gmra.mxu0 %v376
        %v463 = vpop.f32.mrf.mxu0
        %v464 = vadd.f32 %v415, %v463
        %v465 = vpop.f32.mrf.mxu0
        %v466 = vadd.f32 %v417, %v465
        %467 = vmatmul.bf16.gmra.mxu0 %v379
        %v468 = vpop.f32.mrf.mxu0
        %v469 = vadd.f32 %v420, %v468
        %v470 = vpop.f32.mrf.mxu0
        %v471 = vadd.f32 %v422, %v470
        %472 = vmatmul.bf16.gmra.mxu0 %v382
        %v473 = vpop.f32.mrf.mxu0
        %v474 = vadd.f32 %v425, %v473
        %v475 = vpop.f32.mrf.mxu0
        %v476 = vadd.f32 %v427, %v475
        %477 = vmatmul.bf16.gmra.mxu0 %v385
        %v478 = vpop.f32.mrf.mxu0
        %v479 = vadd.f32 %v430, %v478
        %v480 = vpop.f32.mrf.mxu0
        %v481 = vadd.f32 %v432, %v480
        %482 = vmatmul.bf16.gmra.mxu0 %v388
        %v483 = vpop.f32.mrf.mxu0
        %v484 = vadd.f32 %v435, %v483
        %v485 = vpop.f32.mrf.mxu0
        %v486 = vadd.f32 %v437, %v485
        %487 = vdwg.mxu0
        %v488 = vmax.f32 %v449, 0.0
        %v489 = vmax.f32 %v451, 0.0
        %v490 = vmax.f32 %v454, 0.0
        %v491 = vmax.f32 %v456, 0.0
        %v492 = vmax.f32 %v459, 0.0
        %v493 = vmax.f32 %v461, 0.0
        %v494 = vmax.f32 %v464, 0.0
        %v495 = vmax.f32 %v466, 0.0
        %v496 = vmax.f32 %v469, 0.0
        %v497 = vmax.f32 %v471, 0.0
        %v498 = vmax.f32 %v474, 0.0
        %v499 = vmax.f32 %v476, 0.0
        %v500 = vmax.f32 %v479, 0.0
        %v501 = vmax.f32 %v481, 0.0
        %v502 = vmax.f32 %v484, 0.0
        %v503 = vmax.f32 %v486, 0.0
        %v504 = vpack.c.bf16 %v488, %v488
        %v505 = vpack.c.bf16 %v489, %v489
        %v506 = vpack.c.bf16 %v490, %v490
        %v507 = vpack.c.bf16 %v491, %v491
        %v508 = vpack.c.bf16 %v492, %v492
        %v509 = vpack.c.bf16 %v493, %v493
        %v510 = vpack.c.bf16 %v494, %v494
        %v511 = vpack.c.bf16 %v495, %v495
        %v512 = vpack.c.bf16 %v496, %v496
        %v513 = vpack.c.bf16 %v497, %v497
        %v514 = vpack.c.bf16 %v498, %v498
        %v515 = vpack.c.bf16 %v499, %v499
        %v516 = vpack.c.bf16 %v500, %v500
        %v517 = vpack.c.bf16 %v501, %v501
        %v518 = vpack.c.bf16 %v502, %v502
        %v519 = vpack.c.bf16 %v503, %v503
        %vm520 = vcmask 257024
        %521 = vst.msk [vmem:[%s177] sm:$0xf] %vm520, %v504
        %522 = vst.msk [vmem:[%s177 + $0x4] sm:$0xf] %vm520, %v505
        %523 = vst.msk [vmem:[%s177 + $0x8] sm:$0xf] %vm520, %v506
        %524 = vst.msk [vmem:[%s177 + $0xc] sm:$0xf] %vm520, %v507
        %525 = vst.msk [vmem:[%s177 + $0x10] sm:$0xf] %vm520, %v508
        %526 = vst.msk [vmem:[%s177 + $0x14] sm:$0xf] %vm520, %v509
        %527 = vst.msk [vmem:[%s177 + $0x18] sm:$0xf] %vm520, %v510
        %528 = vst.msk [vmem:[%s177 + $0x1c] sm:$0xf] %vm520, %v511
        %529 = vst.msk [vmem:[%s177 + $0x20] sm:$0xf] %vm520, %v512
        %530 = vst.msk [vmem:[%s177 + $0x24] sm:$0xf] %vm520, %v513
        %531 = vst.msk [vmem:[%s177 + $0x28] sm:$0xf] %vm520, %v514
        %532 = vst.msk [vmem:[%s177 + $0x2c] sm:$0xf] %vm520, %v515
        %533 = vst.msk [vmem:[%s177 + $0x30] sm:$0xf] %vm520, %v516
        %534 = vst.msk [vmem:[%s177 + $0x34] sm:$0xf] %vm520, %v517
        %535 = vst.msk [vmem:[%s177 + $0x38] sm:$0xf] %vm520, %v518
        %536 = vst.msk [vmem:[%s177 + $0x3c] sm:$0xf] %vm520, %v519
        %s537 = sand.u32 %s90, 1
        %s538 = sand.u32 %s90, 1
        %s539 = smul.addr %s538, 64
        %s540 = scalar_lea.vmem [#allocation2], %s539
        // Predicated region
        $region33: #{actor_forward.6} parent=31 // pred_check
          %p541 = pneg %p100
        $region34: #{actor_forward.6} parent=31 // pred_check_branch
          %543 = sbr.rel (%p541) target = $region36
        $region35: #{actor_forward.6} parent=31 // pred_region
          %s544 = smul.u32 16, %s14
          %s545 = ssub.s32 31, %s544
          %p546 = scmp.lt.s32.totalorder %s545, 16
          %s547 = scalar_select %p546, %s545, 16
          %s548 = smul.u32 4, %s547
          %p549 = scmp.ne.s32.totalorder 0, %s548
          %s550 = smul.addr %s544, 4
          %s551 = scalar_lea.vmem %s3, %s550
          // Predicated region
          $region37: #{actor_forward.6} parent=35 // pred_check
            %p552 = pneg %p549
          $region38: #{actor_forward.6} parent=35 // pred_check_branch
            %554 = sbr.rel (%p552) target = $region40
          $region39: #{actor_forward.6} parent=35 // pred_region
            // Predicated region
            $region41: #{actor_forward.6} parent=39 // pred_check
              _
            $region42: #{actor_forward.6} parent=39 // pred_check_branch
              %556 = sbr.rel target = $region44
            $region43: #{actor_forward.6} parent=39 // pred_region
              // Predicated region
              $region63: #{actor_forward.6} parent=43 // pred_check
                _
              $region64: #{actor_forward.6} parent=43 // pred_check_branch
                %636 = sbr.rel (0) target = $region66
              $region65: #{actor_forward.6} parent=43 // pred_region
                %s638 = ssub.s32 16, 1
                %s639 = sshrl.u32 %s547, 4
                // While loop
                $region67: #{actor_forward.6} parent=65 // loop_pre_header
                  _
                $region68: #{actor_forward.6} parent=65 // loop_header
                  %s641 = sphi 0, %s643
                  %p642 = scmp.ge.s32.totalorder %s641, %s639
                  %s646 = sphi 0, %s683
                  %s647 = sphi %s540, %s686
                  %s648 = sphi %s551, %s687
                $region69: #{actor_forward.6} parent=65 // loop_header_branch
                  %645 = sbr.rel (%p642) target = $region73
                $region70: #{actor_forward.6} parent=65 // loop_body
                  %v649 = vld [vmem:[%s647] sm:%s638]
                  %650 = vst [vmem:[%s648] sm:%s638] %v649
                  %v651 = vld [vmem:[%s647 + $0x4] sm:%s638]
                  %652 = vst [vmem:[%s648 + $0x4] sm:%s638] %v651
                  %v653 = vld [vmem:[%s647 + $0x8] sm:%s638]
                  %654 = vst [vmem:[%s648 + $0x8] sm:%s638] %v653
                  %v655 = vld [vmem:[%s647 + $0xc] sm:%s638]
                  %656 = vst [vmem:[%s648 + $0xc] sm:%s638] %v655
                  %v657 = vld [vmem:[%s647 + $0x10] sm:%s638]
                  %658 = vst [vmem:[%s648 + $0x10] sm:%s638] %v657
                  %v659 = vld [vmem:[%s647 + $0x14] sm:%s638]
                  %660 = vst [vmem:[%s648 + $0x14] sm:%s638] %v659
                  %v661 = vld [vmem:[%s647 + $0x18] sm:%s638]
                  %662 = vst [vmem:[%s648 + $0x18] sm:%s638] %v661
                  %v663 = vld [vmem:[%s647 + $0x1c] sm:%s638]
                  %664 = vst [vmem:[%s648 + $0x1c] sm:%s638] %v663
                  %v665 = vld [vmem:[%s647 + $0x20] sm:%s638]
                  %666 = vst [vmem:[%s648 + $0x20] sm:%s638] %v665
                  %v667 = vld [vmem:[%s647 + $0x24] sm:%s638]
                  %668 = vst [vmem:[%s648 + $0x24] sm:%s638] %v667
                  %v669 = vld [vmem:[%s647 + $0x28] sm:%s638]
                  %670 = vst [vmem:[%s648 + $0x28] sm:%s638] %v669
                  %v671 = vld [vmem:[%s647 + $0x2c] sm:%s638]
                  %672 = vst [vmem:[%s648 + $0x2c] sm:%s638] %v671
                  %v673 = vld [vmem:[%s647 + $0x30] sm:%s638]
                  %674 = vst [vmem:[%s648 + $0x30] sm:%s638] %v673
                  %v675 = vld [vmem:[%s647 + $0x34] sm:%s638]
                  %676 = vst [vmem:[%s648 + $0x34] sm:%s638] %v675
                  %v677 = vld [vmem:[%s647 + $0x38] sm:%s638]
                  %678 = vst [vmem:[%s648 + $0x38] sm:%s638] %v677
                  %v679 = vld [vmem:[%s647 + $0x3c] sm:%s638]
                  %680 = vst [vmem:[%s648 + $0x3c] sm:%s638] %v679
                  %s681 = sadd.s32 1, %s646
                  %p682 = scmp.ge.s32.totalorder %s681, %s639
                  %s683 = scalar_select %p682, 0, %s681
                  %s684 = smul.u32 %s683, 64
                  %s685 = smul.u32 %s683, 64
                  %s686 = scalar_lea.vmem %s540, %s684 [#allocation2]
                  %s687 = scalar_lea.vmem %s551, %s685
                $region71: #{actor_forward.6} parent=65 // loop_footer
                  %s643 = sadd.s32 %s641, 1
                $region72: #{actor_forward.6} parent=65 // loop_footer_branch
                  %640 = sbr.rel target = $region68
                $region73: #{actor_forward.6} parent=65 // loop_exit
                  _
                %s688 = sshrl.u32 %s547, 4
                %s689 = sand.u32 %s547, 15
                %s690 = smul.u32 %s688, 16
                %s691 = smul.u32 4, %s690
                %s692 = scalar_lea.vmem %s540, %s691 [#allocation2]
                %s693 = smul.u32 4, %s690
                %s694 = scalar_lea.vmem %s551, %s693
                // While loop
                $region74: #{actor_forward.6} parent=65 // loop_pre_header
                  _
                $region75: #{actor_forward.6} parent=65 // loop_header
                  %s696 = sphi 0, %s698
                  %p697 = scmp.ge.s32.totalorder %s696, %s689
                  %s701 = sphi 0, %s708
                  %s702 = sphi %s692, %s711
                  %s703 = sphi %s694, %s712
                $region76: #{actor_forward.6} parent=65 // loop_header_branch
                  %700 = sbr.rel (%p697) target = $region80
                $region77: #{actor_forward.6} parent=65 // loop_body
                  %v704 = vld [vmem:[%s702] sm:%s638]
                  %705 = vst [vmem:[%s703] sm:%s638] %v704
                  %s706 = sadd.s32 1, %s701
                  %p707 = scmp.ge.s32.totalorder %s706, %s689
                  %s708 = scalar_select %p707, 0, %s706
                  %s709 = smul.u32 %s708, 4
                  %s710 = smul.u32 %s708, 4
                  %s711 = scalar_lea.vmem %s692, %s709 [#allocation2]
                  %s712 = scalar_lea.vmem %s694, %s710
                $region78: #{actor_forward.6} parent=65 // loop_footer
                  %s698 = sadd.s32 %s696, 1
                $region79: #{actor_forward.6} parent=65 // loop_footer_branch
                  %695 = sbr.rel target = $region75
                $region80: #{actor_forward.6} parent=65 // loop_exit
                  _
              $region66: #{actor_forward.6} parent=43 // pred_fallthru
                _
            $region44: #{actor_forward.6} parent=39 // pred_fallthru
              _
            // Predicated region
            $region45: #{actor_forward.6} parent=39 // pred_check
              _
            $region46: #{actor_forward.6} parent=39 // pred_check_branch
              %558 = sbr.rel (0) target = $region48
            $region47: #{actor_forward.6} parent=39 // pred_region
              %s560 = ssub.s32 16, 1
              %s561 = sshrl.u32 %s547, 4
              // While loop
              $region49: #{actor_forward.6} parent=47 // loop_pre_header
                _
              $region50: #{actor_forward.6} parent=47 // loop_header
                %s563 = sphi 0, %s565
                %p564 = scmp.ge.s32.totalorder %s563, %s561
                %s568 = sphi 0, %s605
                %s569 = sphi %s540, %s608
                %s570 = sphi %s551, %s609
              $region51: #{actor_forward.6} parent=47 // loop_header_branch
                %567 = sbr.rel (%p564) target = $region55
              $region52: #{actor_forward.6} parent=47 // loop_body
                %v571 = vld [vmem:[%s569] sm:%s560]
                %572 = vst [vmem:[%s570] sm:%s560] %v571
                %v573 = vld [vmem:[%s569 + $0x4] sm:%s560]
                %574 = vst [vmem:[%s570 + $0x4] sm:%s560] %v573
                %v575 = vld [vmem:[%s569 + $0x8] sm:%s560]
                %576 = vst [vmem:[%s570 + $0x8] sm:%s560] %v575
                %v577 = vld [vmem:[%s569 + $0xc] sm:%s560]
                %578 = vst [vmem:[%s570 + $0xc] sm:%s560] %v577
                %v579 = vld [vmem:[%s569 + $0x10] sm:%s560]
                %580 = vst [vmem:[%s570 + $0x10] sm:%s560] %v579
                %v581 = vld [vmem:[%s569 + $0x14] sm:%s560]
                %582 = vst [vmem:[%s570 + $0x14] sm:%s560] %v581
                %v583 = vld [vmem:[%s569 + $0x18] sm:%s560]
                %584 = vst [vmem:[%s570 + $0x18] sm:%s560] %v583
                %v585 = vld [vmem:[%s569 + $0x1c] sm:%s560]
                %586 = vst [vmem:[%s570 + $0x1c] sm:%s560] %v585
                %v587 = vld [vmem:[%s569 + $0x20] sm:%s560]
                %588 = vst [vmem:[%s570 + $0x20] sm:%s560] %v587
                %v589 = vld [vmem:[%s569 + $0x24] sm:%s560]
                %590 = vst [vmem:[%s570 + $0x24] sm:%s560] %v589
                %v591 = vld [vmem:[%s569 + $0x28] sm:%s560]
                %592 = vst [vmem:[%s570 + $0x28] sm:%s560] %v591
                %v593 = vld [vmem:[%s569 + $0x2c] sm:%s560]
                %594 = vst [vmem:[%s570 + $0x2c] sm:%s560] %v593
                %v595 = vld [vmem:[%s569 + $0x30] sm:%s560]
                %596 = vst [vmem:[%s570 + $0x30] sm:%s560] %v595
                %v597 = vld [vmem:[%s569 + $0x34] sm:%s560]
                %598 = vst [vmem:[%s570 + $0x34] sm:%s560] %v597
                %v599 = vld [vmem:[%s569 + $0x38] sm:%s560]
                %600 = vst [vmem:[%s570 + $0x38] sm:%s560] %v599
                %v601 = vld [vmem:[%s569 + $0x3c] sm:%s560]
                %602 = vst [vmem:[%s570 + $0x3c] sm:%s560] %v601
                %s603 = sadd.s32 1, %s568
                %p604 = scmp.ge.s32.totalorder %s603, %s561
                %s605 = scalar_select %p604, 0, %s603
                %s606 = smul.u32 %s605, 64
                %s607 = smul.u32 %s605, 64
                %s608 = scalar_lea.vmem %s540, %s606 [#allocation2]
                %s609 = scalar_lea.vmem %s551, %s607
              $region53: #{actor_forward.6} parent=47 // loop_footer
                %s565 = sadd.s32 %s563, 1
              $region54: #{actor_forward.6} parent=47 // loop_footer_branch
                %562 = sbr.rel target = $region50
              $region55: #{actor_forward.6} parent=47 // loop_exit
                _
              %s610 = sshrl.u32 %s547, 4
              %s611 = sand.u32 %s547, 15
              %s612 = smul.u32 %s610, 16
              %s613 = smul.u32 4, %s612
              %s614 = scalar_lea.vmem %s540, %s613 [#allocation2]
              %s615 = smul.u32 4, %s612
              %s616 = scalar_lea.vmem %s551, %s615
              // While loop
              $region56: #{actor_forward.6} parent=47 // loop_pre_header
                _
              $region57: #{actor_forward.6} parent=47 // loop_header
                %s618 = sphi 0, %s620
                %p619 = scmp.ge.s32.totalorder %s618, %s611
                %s623 = sphi 0, %s630
                %s624 = sphi %s614, %s633
                %s625 = sphi %s616, %s634
              $region58: #{actor_forward.6} parent=47 // loop_header_branch
                %622 = sbr.rel (%p619) target = $region62
              $region59: #{actor_forward.6} parent=47 // loop_body
                %v626 = vld [vmem:[%s624] sm:%s560]
                %627 = vst [vmem:[%s625] sm:%s560] %v626
                %s628 = sadd.s32 1, %s623
                %p629 = scmp.ge.s32.totalorder %s628, %s611
                %s630 = scalar_select %p629, 0, %s628
                %s631 = smul.u32 %s630, 4
                %s632 = smul.u32 %s630, 4
                %s633 = scalar_lea.vmem %s614, %s631 [#allocation2]
                %s634 = scalar_lea.vmem %s616, %s632
              $region60: #{actor_forward.6} parent=47 // loop_footer
                %s620 = sadd.s32 %s618, 1
              $region61: #{actor_forward.6} parent=47 // loop_footer_branch
                %617 = sbr.rel target = $region57
              $region62: #{actor_forward.6} parent=47 // loop_exit
                _
            $region48: #{actor_forward.6} parent=39 // pred_fallthru
              _
          $region40: #{actor_forward.6} parent=35 // pred_fallthru
            _
          %713 = vnop
        $region36: #{actor_forward.6} parent=31 // pred_fallthru
          _
      $region32: #{actor_forward.6} parent=5 // pred_fallthru
        _
      %p714 = scmp.le.s32.totalorder 2, %s9
      // Predicated region
      $region81: #{actor_forward.6} parent=5 // pred_check
        %p715 = pneg %p714
      $region82: #{actor_forward.6} parent=5 // pred_check_branch
        %717 = sbr.rel (%p715) target = $region84
      $region83: #{actor_forward.6} parent=5 // pred_region
        %s718 = ssub.s32 %s9, 2
        // Predicated region
        $region85: #{actor_forward.6} parent=83 // pred_check
          %p719 = pneg %p106
        $region86: #{actor_forward.6} parent=83 // pred_check_branch
          %721 = sbr.rel (%p719) target = $region88
        $region87: #{actor_forward.6} parent=83 // pred_region
          %s722 = sand.u32 %s91, 1
          %s723 = sand.u32 %s91, 1
          %s724 = smul.addr %s723, 64
          %s725 = scalar_lea.vmem [#allocation2], %s724
        $region88: #{actor_forward.6} parent=83 // pred_fallthru
          _
      $region84: #{actor_forward.6} parent=5 // pred_fallthru
        _
    $region6: #{actor_forward.6} parent=1 // loop_footer
      %s13 = sadd.s32 1, %s9
    $region7: #{actor_forward.6} parent=1 // loop_footer_branch
      %8 = sbr.rel target = $region3
    $region8: #{actor_forward.6} parent=1 // loop_exit
      _

// kernel: actor_forward.7
$region0: #{actor_forward.7}
  #allocation0 [shape = 'u32[]', space=smem, size = 0x4, offset = 0x4, fixed_abs, tag = 'smem constant byte address 0x4 - core index']
  #allocation1 [shape = 'u32[72,128]{1,0:T(1,128)}', space=vmem, size = 0x9000, scoped, tag = 'internal scratch']
  %s0 = inlined_call_operand.vmem [shape: bf16[2,25,288], index: 0, kind: input, shape index: {}]
  %s1 = inlined_call_operand.vmem [shape: bf16[288,64], index: 1, kind: input, shape index: {}]
  %s2 = inlined_call_operand.vmem [shape: f32[1,64], index: 2, kind: input, shape index: {}]
  %s3 = inlined_call_operand.vmem [shape: bf16[576,128], index: 3, kind: input, shape index: {}]
  %s4 = inlined_call_operand.vmem [shape: f32[1,128], index: 4, kind: input, shape index: {}]
  %s5 = inlined_call_operand.vmem [shape: bf16[1152,256], index: 5, kind: input, shape index: {}]
  %s6 = inlined_call_operand.vmem [shape: f32[1,256], index: 6, kind: input, shape index: {}]
  %s7 = inlined_call_operand.vmem [shape: bf16[256,512], index: 7, kind: input, shape index: {}]
  %s8 = inlined_call_operand.vmem [shape: f32[1,512], index: 8, kind: input, shape index: {}]
  %s9 = inlined_call_operand.vmem [shape: bf16[512,384], index: 9, kind: input, shape index: {}]
  %s10 = inlined_call_operand.vmem [shape: f32[1,384], index: 10, kind: input, shape index: {}]
  %s11 = inlined_call_operand.vmem [shape: bf16[384,3], index: 11, kind: input, shape index: {}]
  %s12 = inlined_call_operand.vmem [shape: f32[1,3], index: 12, kind: input, shape index: {}]
  %s13 = inlined_call_operand.hbm [shape: f32[2,1,3], index: 13, kind: output, shape index: {}]
  %s14 = sld [smem:[#allocation0]]
  $region85: #{actor_forward.7} parent=0
    _
  %s16 = ssub.s32 1, %s14
  %s17 = scalar_select 0, %s16, %s14
  $region1: #{actor_forward.7} parent=0
    #allocation2 [shape = 'u8[1024]{0}', space=vmem, size = 0x400, scoped, tag = 'output window, operand 0']
    #allocation3 [shape = 's32[2]{0}', space=sflag, size = 0x8, scoped, tag = 'scoped memory for actor_forward.7']
    %18 = vsyncpa [#allocation3], 0
    %s19 = scalar_lea.sflag [#allocation3], 1
    %20 = vsyncpa %s19, 0
    loop: start=0, step=1, limit=4
    $region2: #{actor_forward.7} parent=1 // loop_pre_header
      _
    $region3: #{actor_forward.7} parent=1 // loop_header
      %s22 = sphi 0, %s26
      %p23 = scmp.ge.s32.totalorder %s22, 4
      %s32 = sphi 0, %s34
      %s35 = sphi 0, %s32
      %s36 = sphi 0, %s35
      %s52 = sphi 0, %s36
      %s56 = sphi 0, %s56
      %s58 = sphi 0, %s56
      %s59 = sphi 0, %s58
      %s73 = sphi 0, %s59
      %s77 = sphi 0, %s77
      %s79 = sphi 0, %s77
      %s80 = sphi 0, %s79
      %s94 = sphi 0, %s80
      %s98 = sphi 0, %s98
      %s100 = sphi 0, %s98
      %s101 = sphi 0, %s100
      %s115 = sphi 0, %s101
      %s119 = sphi 0, %s119
      %s121 = sphi 0, %s119
      %s122 = sphi 0, %s121
      %s136 = sphi 0, %s122
      %s140 = sphi 0, %s140
      %s142 = sphi 0, %s140
      %s143 = sphi 0, %s142
      %s157 = sphi 0, %s143
      %s161 = sphi 0, %s161
      %s163 = sphi 0, %s161
      %s164 = sphi 0, %s163
      %s178 = sphi 0, %s164
      %s182 = sphi 0, %s182
      %s184 = sphi 0, %s182
      %s185 = sphi 0, %s184
      %s199 = sphi 0, %s185
      %s203 = sphi 0, %s203
      %s205 = sphi 0, %s203
      %s206 = sphi 0, %s205
      %s220 = sphi 0, %s206
      %s224 = sphi 0, %s224
      %s226 = sphi 0, %s224
      %s227 = sphi 0, %s226
      %s241 = sphi 0, %s227
      %s245 = sphi 0, %s245
      %s247 = sphi 0, %s245
      %s248 = sphi 0, %s247
      %s262 = sphi 0, %s248
      %s266 = sphi 0, %s266
      %s268 = sphi 0, %s266
      %s269 = sphi 0, %s268
      %s283 = sphi 0, %s269
      %s287 = sphi 0, %s287
      %s289 = sphi 0, %s287
      %s290 = sphi 0, %s289
      %s304 = sphi 0, %s290
      %s310 = sphi 0, %s312
      %s313 = sphi 0, %s310
      %s314 = sphi 0, %s313
      %s330 = sphi 0, %s314
    $region4: #{actor_forward.7} parent=1 // loop_header_branch
      %25 = sbr.rel (%p23) target = $region8
    $region5: #{actor_forward.7} parent=1 // loop_body
      %s27 = ssub.s32 %s22, 1
      %s28 = ssub.s32 %s22, 2
      %s29 = sadd.s32 %s22, 1
      %s30 = ssub.s32 %s22, %s29
      %p31 = scmp.eq.s32.totalorder %s30, 0
      %s33 = sadd.s32 %s32, 1
      %s34 = scalar_select %p31, %s32, %s33
      %p37 = pneg %p31
      %p38 = scmp.eq.s32.totalorder %s22, 1
      %p39 = por %p37, %p38
      %p40 = scmp.ne.s32.totalorder %s32, %s35
      %p41 = scmp.eq.s32.totalorder %s22, 0
      %p42 = por %p40, %p41
      %p43 = scmp.ne.s32.totalorder %s32, %s35
      %p44 = scmp.eq.s32.totalorder %s27, 1
      %p45 = por %p43, %p44
      %p46 = scmp.ne.s32.totalorder %s35, %s36
      %p47 = scmp.eq.s32.totalorder %s27, 0
      %p48 = por %p46, %p47
      %p49 = scmp.ne.s32.totalorder %s35, %s36
      %p50 = scmp.eq.s32.totalorder %s28, 1
      %p51 = por %p49, %p50
      %p53 = scmp.ne.s32.totalorder %s36, %s52
      %p54 = scmp.eq.s32.totalorder %s28, 0
      %p55 = por %p53, %p54
      %s57 = sadd.s32 %s56, 1
      %p60 = scmp.eq.s32.totalorder %s22, 1
      %p61 = scmp.ne.s32.totalorder %s56, %s58
      %p62 = scmp.eq.s32.totalorder %s22, 0
      %p63 = por %p61, %p62
      %p64 = scmp.ne.s32.totalorder %s56, %s58
      %p65 = scmp.eq.s32.totalorder %s27, 1
      %p66 = por %p64, %p65
      %p67 = scmp.ne.s32.totalorder %s58, %s59
      %p68 = scmp.eq.s32.totalorder %s27, 0
      %p69 = por %p67, %p68
      %p70 = scmp.ne.s32.totalorder %s58, %s59
      %p71 = scmp.eq.s32.totalorder %s28, 1
      %p72 = por %p70, %p71
      %p74 = scmp.ne.s32.totalorder %s59, %s73
      %p75 = scmp.eq.s32.totalorder %s28, 0
      %p76 = por %p74, %p75
      %s78 = sadd.s32 %s77, 1
      %p81 = scmp.eq.s32.totalorder %s22, 1
      %p82 = scmp.ne.s32.totalorder %s77, %s79
      %p83 = scmp.eq.s32.totalorder %s22, 0
      %p84 = por %p82, %p83
      %p85 = scmp.ne.s32.totalorder %s77, %s79
      %p86 = scmp.eq.s32.totalorder %s27, 1
      %p87 = por %p85, %p86
      %p88 = scmp.ne.s32.totalorder %s79, %s80
      %p89 = scmp.eq.s32.totalorder %s27, 0
      %p90 = por %p88, %p89
      %p91 = scmp.ne.s32.totalorder %s79, %s80
      %p92 = scmp.eq.s32.totalorder %s28, 1
      %p93 = por %p91, %p92
      %p95 = scmp.ne.s32.totalorder %s80, %s94
      %p96 = scmp.eq.s32.totalorder %s28, 0
      %p97 = por %p95, %p96
      %s99 = sadd.s32 %s98, 1
      %p102 = scmp.eq.s32.totalorder %s22, 1
      %p103 = scmp.ne.s32.totalorder %s98, %s100
      %p104 = scmp.eq.s32.totalorder %s22, 0
      %p105 = por %p103, %p104
      %p106 = scmp.ne.s32.totalorder %s98, %s100
      %p107 = scmp.eq.s32.totalorder %s27, 1
      %p108 = por %p106, %p107
      %p109 = scmp.ne.s32.totalorder %s100, %s101
      %p110 = scmp.eq.s32.totalorder %s27, 0
      %p111 = por %p109, %p110
      %p112 = scmp.ne.s32.totalorder %s100, %s101
      %p113 = scmp.eq.s32.totalorder %s28, 1
      %p114 = por %p112, %p113
      %p116 = scmp.ne.s32.totalorder %s101, %s115
      %p117 = scmp.eq.s32.totalorder %s28, 0
      %p118 = por %p116, %p117
      %s120 = sadd.s32 %s119, 1
      %p123 = scmp.eq.s32.totalorder %s22, 1
      %p124 = scmp.ne.s32.totalorder %s119, %s121
      %p125 = scmp.eq.s32.totalorder %s22, 0
      %p126 = por %p124, %p125
      %p127 = scmp.ne.s32.totalorder %s119, %s121
      %p128 = scmp.eq.s32.totalorder %s27, 1
      %p129 = por %p127, %p128
      %p130 = scmp.ne.s32.totalorder %s121, %s122
      %p131 = scmp.eq.s32.totalorder %s27, 0
      %p132 = por %p130, %p131
      %p133 = scmp.ne.s32.totalorder %s121, %s122
      %p134 = scmp.eq.s32.totalorder %s28, 1
      %p135 = por %p133, %p134
      %p137 = scmp.ne.s32.totalorder %s122, %s136
      %p138 = scmp.eq.s32.totalorder %s28, 0
      %p139 = por %p137, %p138
      %s141 = sadd.s32 %s140, 1
      %p144 = scmp.eq.s32.totalorder %s22, 1
      %p145 = scmp.ne.s32.totalorder %s140, %s142
      %p146 = scmp.eq.s32.totalorder %s22, 0
      %p147 = por %p145, %p146
      %p148 = scmp.ne.s32.totalorder %s140, %s142
      %p149 = scmp.eq.s32.totalorder %s27, 1
      %p150 = por %p148, %p149
      %p151 = scmp.ne.s32.totalorder %s142, %s143
      %p152 = scmp.eq.s32.totalorder %s27, 0
      %p153 = por %p151, %p152
      %p154 = scmp.ne.s32.totalorder %s142, %s143
      %p155 = scmp.eq.s32.totalorder %s28, 1
      %p156 = por %p154, %p155
      %p158 = scmp.ne.s32.totalorder %s143, %s157
      %p159 = scmp.eq.s32.totalorder %s28, 0
      %p160 = por %p158, %p159
      %s162 = sadd.s32 %s161, 1
      %p165 = scmp.eq.s32.totalorder %s22, 1
      %p166 = scmp.ne.s32.totalorder %s161, %s163
      %p167 = scmp.eq.s32.totalorder %s22, 0
      %p168 = por %p166, %p167
      %p169 = scmp.ne.s32.totalorder %s161, %s163
      %p170 = scmp.eq.s32.totalorder %s27, 1
      %p171 = por %p169, %p170
      %p172 = scmp.ne.s32.totalorder %s163, %s164
      %p173 = scmp.eq.s32.totalorder %s27, 0
      %p174 = por %p172, %p173
      %p175 = scmp.ne.s32.totalorder %s163, %s164
      %p176 = scmp.eq.s32.totalorder %s28, 1
      %p177 = por %p175, %p176
      %p179 = scmp.ne.s32.totalorder %s164, %s178
      %p180 = scmp.eq.s32.totalorder %s28, 0
      %p181 = por %p179, %p180
      %s183 = sadd.s32 %s182, 1
      %p186 = scmp.eq.s32.totalorder %s22, 1
      %p187 = scmp.ne.s32.totalorder %s182, %s184
      %p188 = scmp.eq.s32.totalorder %s22, 0
      %p189 = por %p187, %p188
      %p190 = scmp.ne.s32.totalorder %s182, %s184
      %p191 = scmp.eq.s32.totalorder %s27, 1
      %p192 = por %p190, %p191
      %p193 = scmp.ne.s32.totalorder %s184, %s185
      %p194 = scmp.eq.s32.totalorder %s27, 0
      %p195 = por %p193, %p194
      %p196 = scmp.ne.s32.totalorder %s184, %s185
      %p197 = scmp.eq.s32.totalorder %s28, 1
      %p198 = por %p196, %p197
      %p200 = scmp.ne.s32.totalorder %s185, %s199
      %p201 = scmp.eq.s32.totalorder %s28, 0
      %p202 = por %p200, %p201
      %s204 = sadd.s32 %s203, 1
      %p207 = scmp.eq.s32.totalorder %s22, 1
      %p208 = scmp.ne.s32.totalorder %s203, %s205
      %p209 = scmp.eq.s32.totalorder %s22, 0
      %p210 = por %p208, %p209
      %p211 = scmp.ne.s32.totalorder %s203, %s205
      %p212 = scmp.eq.s32.totalorder %s27, 1
      %p213 = por %p211, %p212
      %p214 = scmp.ne.s32.totalorder %s205, %s206
      %p215 = scmp.eq.s32.totalorder %s27, 0
      %p216 = por %p214, %p215
      %p217 = scmp.ne.s32.totalorder %s205, %s206
      %p218 = scmp.eq.s32.totalorder %s28, 1
      %p219 = por %p217, %p218
      %p221 = scmp.ne.s32.totalorder %s206, %s220
      %p222 = scmp.eq.s32.totalorder %s28, 0
      %p223 = por %p221, %p222
      %s225 = sadd.s32 %s224, 1
      %p228 = scmp.eq.s32.totalorder %s22, 1
      %p229 = scmp.ne.s32.totalorder %s224, %s226
      %p230 = scmp.eq.s32.totalorder %s22, 0
      %p231 = por %p229, %p230
      %p232 = scmp.ne.s32.totalorder %s224, %s226
      %p233 = scmp.eq.s32.totalorder %s27, 1
      %p234 = por %p232, %p233
      %p235 = scmp.ne.s32.totalorder %s226, %s227
      %p236 = scmp.eq.s32.totalorder %s27, 0
      %p237 = por %p235, %p236
      %p238 = scmp.ne.s32.totalorder %s226, %s227
      %p239 = scmp.eq.s32.totalorder %s28, 1
      %p240 = por %p238, %p239
      %p242 = scmp.ne.s32.totalorder %s227, %s241
      %p243 = scmp.eq.s32.totalorder %s28, 0
      %p244 = por %p242, %p243
      %s246 = sadd.s32 %s245, 1
      %p249 = scmp.eq.s32.totalorder %s22, 1
      %p250 = scmp.ne.s32.totalorder %s245, %s247
      %p251 = scmp.eq.s32.totalorder %s22, 0
      %p252 = por %p250, %p251
      %p253 = scmp.ne.s32.totalorder %s245, %s247
      %p254 = scmp.eq.s32.totalorder %s27, 1
      %p255 = por %p253, %p254
      %p256 = scmp.ne.s32.totalorder %s247, %s248
      %p257 = scmp.eq.s32.totalorder %s27, 0
      %p258 = por %p256, %p257
      %p259 = scmp.ne.s32.totalorder %s247, %s248
      %p260 = scmp.eq.s32.totalorder %s28, 1
      %p261 = por %p259, %p260
      %p263 = scmp.ne.s32.totalorder %s248, %s262
      %p264 = scmp.eq.s32.totalorder %s28, 0
      %p265 = por %p263, %p264
      %s267 = sadd.s32 %s266, 1
      %p270 = scmp.eq.s32.totalorder %s22, 1
      %p271 = scmp.ne.s32.totalorder %s266, %s268
      %p272 = scmp.eq.s32.totalorder %s22, 0
      %p273 = por %p271, %p272
      %p274 = scmp.ne.s32.totalorder %s266, %s268
      %p275 = scmp.eq.s32.totalorder %s27, 1
      %p276 = por %p274, %p275
      %p277 = scmp.ne.s32.totalorder %s268, %s269
      %p278 = scmp.eq.s32.totalorder %s27, 0
      %p279 = por %p277, %p278
      %p280 = scmp.ne.s32.totalorder %s268, %s269
      %p281 = scmp.eq.s32.totalorder %s28, 1
      %p282 = por %p280, %p281
      %p284 = scmp.ne.s32.totalorder %s269, %s283
      %p285 = scmp.eq.s32.totalorder %s28, 0
      %p286 = por %p284, %p285
      %s288 = sadd.s32 %s287, 1
      %p291 = scmp.eq.s32.totalorder %s22, 1
      %p292 = scmp.ne.s32.totalorder %s287, %s289
      %p293 = scmp.eq.s32.totalorder %s22, 0
      %p294 = por %p292, %p293
      %p295 = scmp.ne.s32.totalorder %s287, %s289
      %p296 = scmp.eq.s32.totalorder %s27, 1
      %p297 = por %p295, %p296
      %p298 = scmp.ne.s32.totalorder %s289, %s290
      %p299 = scmp.eq.s32.totalorder %s27, 0
      %p300 = por %p298, %p299
      %p301 = scmp.ne.s32.totalorder %s289, %s290
      %p302 = scmp.eq.s32.totalorder %s28, 1
      %p303 = por %p301, %p302
      %p305 = scmp.ne.s32.totalorder %s290, %s304
      %p306 = scmp.eq.s32.totalorder %s28, 0
      %p307 = por %p305, %p306
      %s308 = ssub.s32 %s22, %s29
      %p309 = scmp.eq.s32.totalorder %s308, 0
      %s311 = sadd.s32 %s310, 1
      %s312 = scalar_select %p309, %s310, %s311
      %p315 = pneg %p309
      %p316 = scmp.eq.s32.totalorder %s22, 1
      %p317 = por %p315, %p316
      %p318 = scmp.ne.s32.totalorder %s310, %s313
      %p319 = scmp.eq.s32.totalorder %s22, 0
      %p320 = por %p318, %p319
      %p321 = scmp.ne.s32.totalorder %s310, %s313
      %p322 = scmp.eq.s32.totalorder %s27, 1
      %p323 = por %p321, %p322
      %p324 = scmp.ne.s32.totalorder %s313, %s314
      %p325 = scmp.eq.s32.totalorder %s27, 0
      %p326 = por %p324, %p325
      %p327 = scmp.ne.s32.totalorder %s313, %s314
      %p328 = scmp.eq.s32.totalorder %s28, 1
      %p329 = por %p327, %p328
      %p331 = scmp.ne.s32.totalorder %s314, %s330
      %p332 = scmp.eq.s32.totalorder %s28, 0
      %p333 = por %p331, %p332
      %p334 = scmp.le.s32.totalorder 1, %s22
      %p335 = scmp.lt.s32.totalorder %s22, 3
      %p336 = pnand %p334, %p335
      %p337 = pneg %p336
      // Predicated region
      $region9: #{actor_forward.7} parent=5 // pred_check
        _
      $region10: #{actor_forward.7} parent=5 // pred_check_branch
        %339 = sbr.rel (%p336) target = $region12
      $region11: #{actor_forward.7} parent=5 // pred_region
        %s340 = ssub.s32 %s22, 1
        // Predicated region
        $region13: #{actor_forward.7} parent=11 // pred_check
          %p341 = pneg %p69
        $region14: #{actor_forward.7} parent=11 // pred_check_branch
          %343 = sbr.rel (%p341) target = $region16
        $region15: #{actor_forward.7} parent=11 // pred_region
          _
        $region16: #{actor_forward.7} parent=11 // pred_fallthru
          _
        // Predicated region
        $region17: #{actor_forward.7} parent=11 // pred_check
          %p344 = pneg %p90
        $region18: #{actor_forward.7} parent=11 // pred_check_branch
          %346 = sbr.rel (%p344) target = $region20
        $region19: #{actor_forward.7} parent=11 // pred_region
          _
        $region20: #{actor_forward.7} parent=11 // pred_fallthru
          _
        // Predicated region
        $region21: #{actor_forward.7} parent=11 // pred_check
          %p347 = pneg %p111
        $region22: #{actor_forward.7} parent=11 // pred_check_branch
          %349 = sbr.rel (%p347) target = $region24
        $region23: #{actor_forward.7} parent=11 // pred_region
          _
        $region24: #{actor_forward.7} parent=11 // pred_fallthru
          _
        // Predicated region
        $region25: #{actor_forward.7} parent=11 // pred_check
          %p350 = pneg %p132
        $region26: #{actor_forward.7} parent=11 // pred_check_branch
          %352 = sbr.rel (%p350) target = $region28
        $region27: #{actor_forward.7} parent=11 // pred_region
          _
        $region28: #{actor_forward.7} parent=11 // pred_fallthru
          _
        // Predicated region
        $region29: #{actor_forward.7} parent=11 // pred_check
          %p353 = pneg %p153
        $region30: #{actor_forward.7} parent=11 // pred_check_branch
          %355 = sbr.rel (%p353) target = $region32
        $region31: #{actor_forward.7} parent=11 // pred_region
          _
        $region32: #{actor_forward.7} parent=11 // pred_fallthru
          _
        // Predicated region
        $region33: #{actor_forward.7} parent=11 // pred_check
          %p356 = pneg %p174
        $region34: #{actor_forward.7} parent=11 // pred_check_branch
          %358 = sbr.rel (%p356) target = $region36
        $region35: #{actor_forward.7} parent=11 // pred_region
          _
        $region36: #{actor_forward.7} parent=11 // pred_fallthru
          _
        // Predicated region
        $region37: #{actor_forward.7} parent=11 // pred_check
          %p359 = pneg %p195
        $region38: #{actor_forward.7} parent=11 // pred_check_branch
          %361 = sbr.rel (%p359) target = $region40
        $region39: #{actor_forward.7} parent=11 // pred_region
          _
        $region40: #{actor_forward.7} parent=11 // pred_fallthru
          _
        // Predicated region
        $region41: #{actor_forward.7} parent=11 // pred_check
          %p362 = pneg %p216
        $region42: #{actor_forward.7} parent=11 // pred_check_branch
          %364 = sbr.rel (%p362) target = $region44
        $region43: #{actor_forward.7} parent=11 // pred_region
          _
        $region44: #{actor_forward.7} parent=11 // pred_fallthru
          _
        // Predicated region
        $region45: #{actor_forward.7} parent=11 // pred_check
          %p365 = pneg %p237
        $region46: #{actor_forward.7} parent=11 // pred_check_branch
          %367 = sbr.rel (%p365) target = $region48
        $region47: #{actor_forward.7} parent=11 // pred_region
          _
        $region48: #{actor_forward.7} parent=11 // pred_fallthru
          _
        // Predicated region
        $region49: #{actor_forward.7} parent=11 // pred_check
          %p368 = pneg %p258
        $region50: #{actor_forward.7} parent=11 // pred_check_branch
          %370 = sbr.rel (%p368) target = $region52
        $region51: #{actor_forward.7} parent=11 // pred_region
          _
        $region52: #{actor_forward.7} parent=11 // pred_fallthru
          _
        // Predicated region
        $region53: #{actor_forward.7} parent=11 // pred_check
          %p371 = pneg %p279
        $region54: #{actor_forward.7} parent=11 // pred_check_branch
          %373 = sbr.rel (%p371) target = $region56
        $region55: #{actor_forward.7} parent=11 // pred_region
          _
        $region56: #{actor_forward.7} parent=11 // pred_fallthru
          _
        // Predicated region
        $region57: #{actor_forward.7} parent=11 // pred_check
          %p374 = pneg %p300
        $region58: #{actor_forward.7} parent=11 // pred_check_branch
          %376 = sbr.rel (%p374) target = $region60
        $region59: #{actor_forward.7} parent=11 // pred_region
          _
        $region60: #{actor_forward.7} parent=11 // pred_fallthru
          _
      $region12: #{actor_forward.7} parent=5 // pred_fallthru
        _
      %p377 = scmp.lt.s32.totalorder %s22, 2
      // Predicated region
      $region61: #{actor_forward.7} parent=5 // pred_check
        %p378 = pneg %p377
      $region62: #{actor_forward.7} parent=5 // pred_check_branch
        %380 = sbr.rel (%p378) target = $region64
      $region63: #{actor_forward.7} parent=5 // pred_region
        // Predicated region
        $region65: #{actor_forward.7} parent=63 // pred_check
          %p381 = pneg %p42
        $region66: #{actor_forward.7} parent=63 // pred_check_branch
          %383 = sbr.rel (%p381) target = $region68
        $region67: #{actor_forward.7} parent=63 // pred_region
          %p384 = scmp.lt.s32.totalorder %s22, 1
          %s385 = scalar_select %p384, %s22, 1
          %s386 = smul.addr %s385, 12
          %s387 = smul.addr %s386, 4
          %s388 = scalar_lea.vmem %s0, %s387
        $region68: #{actor_forward.7} parent=63 // pred_fallthru
          _
      $region64: #{actor_forward.7} parent=5 // pred_fallthru
        _
      %p389 = scmp.le.s32.totalorder 1, %s22
      %p390 = scmp.lt.s32.totalorder %s22, 3
      %p391 = pnand %p389, %p390
      %p392 = pneg %p391
      // Predicated region
      $region69: #{actor_forward.7} parent=5 // pred_check
        _
      $region70: #{actor_forward.7} parent=5 // pred_check_branch
        %394 = sbr.rel (%p391) target = $region72
      $region71: #{actor_forward.7} parent=5 // pred_region
        %s395 = ssub.s32 %s22, 1
        %p396 = scmp.lt.s32.totalorder %s27, 1
        %s397 = scalar_select %p396, %s27, 1
        %s398 = smul.addr %s397, 12
        %s399 = smul.addr %s398, 4
        %s400 = scalar_lea.vmem %s0, %s399
        %p401 = pneg %p48
        %p402 = pneg %p45
        %p403 = pneg %p69
        %p404 = pneg %p66
        %p405 = pneg %p90
        %p406 = pneg %p87
        %p407 = pneg %p111
        %p408 = pneg %p108
        %p409 = pneg %p132
        %p410 = pneg %p129
        %p411 = pneg %p153
        %p412 = pneg %p150
        %p413 = pneg %p174
        %p414 = pneg %p171
        %p415 = pneg %p195
        %p416 = pneg %p192
        %p417 = pneg %p216
        %p418 = pneg %p213
        %p419 = pneg %p237
        %p420 = pneg %p234
        %p421 = pneg %p258
        %p422 = pneg %p255
        %p423 = pneg %p279
        %p424 = pneg %p276
        %p425 = pneg %p300
        %p426 = pneg %p297
        %p427 = pneg %p326
        %p428 = pneg %p323
        %s429 = sand.u32 %s313, 1
        %s430 = scalar_lea.sflag [#allocation3], %s429
        %s431 = sand.u32 %s313, 1
        %s432 = scalar_lea.vmem [#allocation2], %s431
        %p433 = scmp.lt.s32.totalorder %s27, 1
        %s434 = scalar_select %p433, %s27, 1
        %s435 = smul.addr %s434, 12
        %s436 = smul.addr %s435, 4
        %s437 = scalar_lea.vmem %s0, %s436
        %v439 = vld [vmem:[%s437] sm:$0xff]
        %v440 = vld [vmem:[%s437 + $0x8] sm:$0xf]
        %v441 = vld [vmem:[%s437 + $0xc] sm:$0xff]
        %v442 = vld [vmem:[%s437 + $0x14] sm:$0xf]
        %v443 = vld [vmem:[%s437 + $0x18] sm:$0xff]
        %v444 = vld [vmem:[%s437 + $0x20] sm:$0xf]
        %v445 = vld [vmem:[%s437 + $0x24] sm:$0x11]
        %v446 = vld [vmem:[%s437 + $0x2c] sm:$0x1]
        %v447 = vld [vmem:[%s1] sm:$0xf]
        %v448 = vld [vmem:[%s1 + $0x4] sm:$0xf]
        %v449 = vld [vmem:[%s1 + $0x8] sm:$0xf]
        %v450 = vld [vmem:[%s1 + $0xc] sm:$0xf]
        %v451 = vld [vmem:[%s1 + $0x10] sm:$0xf]
        %v452 = vld [vmem:[%s1 + $0x14] sm:$0xf]
        %v453 = vld [vmem:[%s1 + $0x18] sm:$0xf]
        %v454 = vld [vmem:[%s1 + $0x1c] sm:$0xf]
        %v455 = vld [vmem:[%s1 + $0x20] sm:$0xf]
        %v456 = vld [vmem:[%s1 + $0x24] sm:$0xf]
        %v457 = vld [vmem:[%s1 + $0x28] sm:$0xf]
        %v458 = vld [vmem:[%s1 + $0x2c] sm:$0xf]
        %v459 = vld [vmem:[%s1 + $0x30] sm:$0xf]
        %v460 = vld [vmem:[%s1 + $0x34] sm:$0xf]
        %v461 = vld [vmem:[%s1 + $0x38] sm:$0xf]
        %v462 = vld [vmem:[%s1 + $0x3c] sm:$0xf]
        %v463 = vld [vmem:[%s1 + $0x40] sm:$0xf]
        %v464 = vld [vmem:[%s1 + $0x44] sm:$0xf]
        %v465 = vld [vmem:[%s1 + $0x48] sm:$0xf]
        %v466 = vld [vmem:[%s1 + $0x4c] sm:$0xf]
        %v467 = vld [vmem:[%s1 + $0x50] sm:$0xf]
        %v468 = vld [vmem:[%s1 + $0x54] sm:$0xf]
        %v469 = vld [vmem:[%s1 + $0x58] sm:$0xf]
        %v470 = vld [vmem:[%s1 + $0x5c] sm:$0xf]
        %v471 = vld [vmem:[%s1 + $0x60] sm:$0xf]
        %v472 = vld [vmem:[%s1 + $0x64] sm:$0xf]
        %v473 = vld [vmem:[%s1 + $0x68] sm:$0xf]
        %v474 = vld [vmem:[%s1 + $0x6c] sm:$0xf]
        %v475 = vld [vmem:[%s1 + $0x70] sm:$0xf]
        %v476 = vld [vmem:[%s1 + $0x74] sm:$0xf]
        %v477 = vld [vmem:[%s1 + $0x78] sm:$0xf]
        %v478 = vld [vmem:[%s1 + $0x7c] sm:$0xf]
        %v479 = vld [vmem:[%s1 + $0x80] sm:$0xf]
        %v480 = vld [vmem:[%s1 + $0x84] sm:$0xf]
        %v481 = vld [vmem:[%s1 + $0x88] sm:$0xf]
        %v482 = vld [vmem:[%s1 + $0x8c] sm:$0xf]
        %v483 = vld [vmem:[%s2] sm:$0x1]
        %v485 = vperm.slane %v483, 0
        %v495 = vunpack.c.l.b16 %v439
        %v496 = vunpack.c.h.b16 %v439
        %v497 = vunpack.c.l.b16 %v440
        %v498 = vunpack.c.l.b16 %v441
        %v499 = vunpack.c.h.b16 %v441
        %v500 = vunpack.c.l.b16 %v442
        %v501 = vunpack.c.l.b16 %v443
        %v502 = vunpack.c.h.b16 %v443
        %v503 = vunpack.c.l.b16 %v444
        %v504 = vunpack.c.l.b16 %v445
        %v505 = vunpack.c.h.b16 %v445
        %v506 = vunpack.c.l.b16 %v446
        %v507 = vpack.c.b16 %v498, %v495
        %v508 = vpack.c.b16 %v499, %v496
        %v509 = vpack.c.b16 %v500, %v497
        %v510 = vpack.c.b16 %v504, %v501
        %v511 = vpack.c.b16 %v505, %v502
        %v512 = vpack.c.b16 %v506, %v503
        %v553 = vunpack.c.l.b16 %v447
        %v554 = vunpack.c.l.b16 %v448
        %v555 = vunpack.c.l.b16 %v449
        %v556 = vunpack.c.l.b16 %v450
        %v557 = vunpack.c.l.b16 %v451
        %v558 = vunpack.c.l.b16 %v452
        %v559 = vunpack.c.l.b16 %v453
        %v560 = vunpack.c.l.b16 %v454
        %v561 = vunpack.c.l.b16 %v455
        %v562 = vunpack.c.l.b16 %v456
        %v563 = vunpack.c.l.b16 %v457
        %v564 = vunpack.c.l.b16 %v458
        %v565 = vunpack.c.l.b16 %v459
        %v566 = vunpack.c.l.b16 %v460
        %v567 = vunpack.c.l.b16 %v461
        %v568 = vunpack.c.l.b16 %v462
        %v569 = vunpack.c.l.b16 %v463
        %v570 = vunpack.c.l.b16 %v464
        %v571 = vunpack.c.l.b16 %v465
        %v572 = vunpack.c.l.b16 %v466
        %v573 = vunpack.c.l.b16 %v467
        %v574 = vunpack.c.l.b16 %v468
        %v575 = vunpack.c.l.b16 %v469
        %v576 = vunpack.c.l.b16 %v470
        %v577 = vunpack.c.l.b16 %v471
        %v578 = vunpack.c.l.b16 %v472
        %v579 = vunpack.c.l.b16 %v473
        %v580 = vunpack.c.l.b16 %v474
        %v581 = vunpack.c.l.b16 %v475
        %v582 = vunpack.c.l.b16 %v476
        %v583 = vunpack.c.l.b16 %v477
        %v584 = vunpack.c.l.b16 %v478
        %v585 = vunpack.c.l.b16 %v479
        %v586 = vunpack.c.l.b16 %v480
        %v587 = vunpack.c.l.b16 %v481
        %v588 = vunpack.c.l.b16 %v482
        %v589 = vpack.c.b16 %v554, %v553
        %v590 = vpack.c.b16 %v556, %v555
        %v591 = vpack.c.b16 %v558, %v557
        %v592 = vpack.c.b16 %v560, %v559
        %v593 = vpack.c.b16 %v562, %v561
        %v594 = vpack.c.b16 %v564, %v563
        %v595 = vpack.c.b16 %v566, %v565
        %v596 = vpack.c.b16 %v568, %v567
        %v597 = vpack.c.b16 %v570, %v569
        %v598 = vpack.c.b16 %v572, %v571
        %v599 = vpack.c.b16 %v574, %v573
        %v600 = vpack.c.b16 %v576, %v575
        %v601 = vpack.c.b16 %v578, %v577
        %v602 = vpack.c.b16 %v580, %v579
        %v603 = vpack.c.b16 %v582, %v581
        %v604 = vpack.c.b16 %v584, %v583
        %v605 = vpack.c.b16 %v586, %v585
        %v606 = vpack.c.b16 %v588, %v587
        %vm625 = vcmask 261120
        %v627 = vsel %vm625, %v509, 0
        %v630 = vsel %vm625, %v512, 0
        %632 = vmatpush.bf16.msra.mxu0 %v596
        %633 = vmatpush.bf16.msra.mxu0 %v595
        %634 = vmatpush.bf16.msra.mxu0 %v594
        %635 = vmatpush.bf16.msra.mxu0 %v593
        %636 = vmatpush.bf16.msra.mxu0 %v592
        %637 = vmatpush.bf16.msra.mxu0 %v591
        %638 = vmatpush.bf16.msra.mxu0 %v590
        %639 = vmatpush.bf16.msra.mxu0 %v589
        %640 = vmatmul.bf16.gmra.mxu0 %v507
        %v641 = vpop.f32.mrf.mxu0
        %v642 = vadd.f32 %v485, %v641
        %v643 = vpop.f32.mrf.mxu0
        %v644 = vadd.f32 %v485, %v643
        %645 = vmatmul.bf16.gmra.mxu0 %v510
        %v646 = vpop.f32.mrf.mxu0
        %v647 = vadd.f32 %v485, %v646
        %v648 = vpop.f32.mrf.mxu0
        %v649 = vadd.f32 %v485, %v648
        %650 = vdwg.mxu0
        %651 = vmatpush.bf16.msra.mxu0 %v604
        %652 = vmatpush.bf16.msra.mxu0 %v603
        %653 = vmatpush.bf16.msra.mxu0 %v602
        %654 = vmatpush.bf16.msra.mxu0 %v601
        %655 = vmatpush.bf16.msra.mxu0 %v600
        %656 = vmatpush.bf16.msra.mxu0 %v599
        %657 = vmatpush.bf16.msra.mxu0 %v598
        %658 = vmatpush.bf16.msra.mxu0 %v597
        %659 = vmatmul.bf16.gmra.mxu0 %v508
        %v660 = vpop.f32.mrf.mxu0
        %v661 = vadd.f32 %v642, %v660
        %v662 = vpop.f32.mrf.mxu0
        %v663 = vadd.f32 %v644, %v662
        %664 = vmatmul.bf16.gmra.mxu0 %v511
        %v665 = vpop.f32.mrf.mxu0
        %v666 = vadd.f32 %v647, %v665
        %v667 = vpop.f32.mrf.mxu0
        %v668 = vadd.f32 %v649, %v667
        %669 = vdwg.mxu0
        %670 = vmatpush.bf16.msra.mxu0 0
        %671 = vmatpush.bf16.msra.mxu0 0
        %672 = vmatpush.bf16.msra.mxu0 0
        %673 = vmatpush.bf16.msra.mxu0 0
        %674 = vmatpush.bf16.msra.mxu0 0
        %675 = vmatpush.bf16.msra.mxu0 0
        %676 = vmatpush.bf16.msra.mxu0 %v606
        %677 = vmatpush.bf16.msra.mxu0 %v605
        %678 = vmatmul.bf16.gmra.mxu0 %v627
        %v679 = vpop.f32.mrf.mxu0
        %v680 = vadd.f32 %v661, %v679
        %v681 = vpop.f32.mrf.mxu0
        %v682 = vadd.f32 %v663, %v681
        %683 = vmatmul.bf16.gmra.mxu0 %v630
        %v684 = vpop.f32.mrf.mxu0
        %v685 = vadd.f32 %v666, %v684
        %v686 = vpop.f32.mrf.mxu0
        %v687 = vadd.f32 %v668, %v686
        %688 = vdwg.mxu0
        %v689 = vmax.f32 %v680, 0.0
        %v690 = vmax.f32 %v682, 0.0
        %v691 = vmax.f32 %v685, 0.0
        %v692 = vmax.f32 %v687, 0.0
        %v693 = vpack.c.bf16 %v689, %v689
        %v694 = vld [vmem:[%s3] sm:$0xf]
        %v695 = vld [vmem:[%s3 + $0x4] sm:$0xf]
        %v696 = vld [vmem:[%s3 + $0x8] sm:$0xf]
        %v697 = vld [vmem:[%s3 + $0xc] sm:$0xf]
        %v698 = vld [vmem:[%s3 + $0x10] sm:$0xf]
        %v699 = vld [vmem:[%s3 + $0x14] sm:$0xf]
        %v700 = vld [vmem:[%s3 + $0x18] sm:$0xf]
        %v701 = vld [vmem:[%s3 + $0x1c] sm:$0xf]
        %v702 = vld [vmem:[%s3 + $0x20] sm:$0xf]
        %v703 = vld [vmem:[%s3 + $0x24] sm:$0xf]
        %v704 = vld [vmem:[%s3 + $0x28] sm:$0xf]
        %v705 = vld [vmem:[%s3 + $0x2c] sm:$0xf]
        %v706 = vld [vmem:[%s3 + $0x30] sm:$0xf]
        %v707 = vld [vmem:[%s3 + $0x34] sm:$0xf]
        %v708 = vld [vmem:[%s3 + $0x38] sm:$0xf]
        %v709 = vld [vmem:[%s3 + $0x3c] sm:$0xf]
        %v711 = vshrl.u32 %v693, 16
        %v713 = vshll.u32 %v693, 16
        %v715 = vrot.slane %v713, 1
        %v716 = vor.u32 %v711, %v715
        %v725 = vunpack.c.l.b16 %v702
        %v726 = vunpack.c.l.b16 %v703
        %v727 = vunpack.c.l.b16 %v704
        %v728 = vunpack.c.l.b16 %v705
        %v729 = vunpack.c.l.b16 %v706
        %v730 = vunpack.c.l.b16 %v707
        %v731 = vunpack.c.l.b16 %v708
        %v732 = vunpack.c.l.b16 %v709
        %v733 = vpack.c.b16 %v726, %v725
        %v734 = vpack.c.b16 %v728, %v727
        %v735 = vpack.c.b16 %v730, %v729
        %v736 = vpack.c.b16 %v732, %v731
        %vm741 = vcmask 523264
        %v743 = vsel %vm741, %v716, 0
        %745 = vmatpush.bf16.msra.mxu0 0
        %746 = vmatpush.bf16.msra.mxu0 0
        %747 = vmatpush.bf16.msra.mxu0 0
        %748 = vmatpush.bf16.msra.mxu0 0
        %749 = vmatpush.bf16.msra.mxu0 %v736
        %750 = vmatpush.bf16.msra.mxu0 %v735
        %751 = vmatpush.bf16.msra.mxu0 %v734
        %752 = vmatpush.bf16.msra.mxu0 %v733
        %753 = vmatmul.bf16.gmra.mxu0 %v743
        %v754 = vpop.f32.mrf.mxu0
        %v755 = vadd.f32 0.0, %v754
        %v756 = vpop.f32.mrf.mxu0
        %757 = vdwg.mxu0
        %v766 = vunpack.c.l.b16 %v694
        %v767 = vunpack.c.l.b16 %v695
        %v768 = vunpack.c.l.b16 %v696
        %v769 = vunpack.c.l.b16 %v697
        %v770 = vunpack.c.l.b16 %v698
        %v771 = vunpack.c.l.b16 %v699
        %v772 = vunpack.c.l.b16 %v700
        %v773 = vunpack.c.l.b16 %v701
        %v774 = vpack.c.b16 %v767, %v766
        %v775 = vpack.c.b16 %v769, %v768
        %v776 = vpack.c.b16 %v771, %v770
        %v777 = vpack.c.b16 %v773, %v772
        %v782 = vsel %vm741, %v693, 0
        %784 = vmatpush.bf16.msra.mxu0 0
        %785 = vmatpush.bf16.msra.mxu0 0
        %786 = vmatpush.bf16.msra.mxu0 0
        %787 = vmatpush.bf16.msra.mxu0 0
        %788 = vmatpush.bf16.msra.mxu0 %v777
        %789 = vmatpush.bf16.msra.mxu0 %v776
        %790 = vmatpush.bf16.msra.mxu0 %v775
        %791 = vmatpush.bf16.msra.mxu0 %v774
        %792 = vmatmul.bf16.gmra.mxu0 %v782
        %v793 = vpop.f32.mrf.mxu0
        %v794 = vadd.f32 %v755, %v793
        %v795 = vpop.f32.mrf.mxu0
        %796 = vdwg.mxu0
        %v797 = vld [vmem:[%s3 + $0x40] sm:$0xf]
        %v798 = vld [vmem:[%s3 + $0x44] sm:$0xf]
        %v799 = vld [vmem:[%s3 + $0x48] sm:$0xf]
        %v800 = vld [vmem:[%s3 + $0x4c] sm:$0xf]
        %v801 = vld [vmem:[%s3 + $0x50] sm:$0xf]
        %v802 = vld [vmem:[%s3 + $0x54] sm:$0xf]
        %v803 = vld [vmem:[%s3 + $0x58] sm:$0xf]
        %v804 = vld [vmem:[%s3 + $0x5c] sm:$0xf]
        %v806 = vrot.slane %v693, 1
        %v815 = vunpack.c.l.b16 %v797
        %v816 = vunpack.c.l.b16 %v798
        %v817 = vunpack.c.l.b16 %v799
        %v818 = vunpack.c.l.b16 %v800
        %v819 = vunpack.c.l.b16 %v801
        %v820 = vunpack.c.l.b16 %v802
        %v821 = vunpack.c.l.b16 %v803
        %v822 = vunpack.c.l.b16 %v804
        %v823 = vpack.c.b16 %v816, %v815
        %v824 = vpack.c.b16 %v818, %v817
        %v825 = vpack.c.b16 %v820, %v819
        %v826 = vpack.c.b16 %v822, %v821
        %v832 = vsel %vm741, %v806, 0
        %834 = vmatpush.bf16.msra.mxu0 0
        %835 = vmatpush.bf16.msra.mxu0 0
        %836 = vmatpush.bf16.msra.mxu0 0
        %837 = vmatpush.bf16.msra.mxu0 0
        %838 = vmatpush.bf16.msra.mxu0 %v826
        %839 = vmatpush.bf16.msra.mxu0 %v825
        %840 = vmatpush.bf16.msra.mxu0 %v824
        %841 = vmatpush.bf16.msra.mxu0 %v823
        %842 = vmatmul.bf16.gmra.mxu0 %v832
        %v843 = vpop.f32.mrf.mxu0
        %v844 = vadd.f32 0.0, %v843
        %v845 = vpop.f32.mrf.mxu0
        %846 = vdwg.mxu0
        %v847 = vadd.f32 %v794, %v844
        %v848 = vld [vmem:[%s3 + $0x60] sm:$0xf]
        %v849 = vld [vmem:[%s3 + $0x64] sm:$0xf]
        %v850 = vld [vmem:[%s3 + $0x68] sm:$0xf]
        %v851 = vld [vmem:[%s3 + $0x6c] sm:$0xf]
        %v852 = vld [vmem:[%s3 + $0x70] sm:$0xf]
        %v853 = vld [vmem:[%s3 + $0x74] sm:$0xf]
        %v854 = vld [vmem:[%s3 + $0x78] sm:$0xf]
        %v855 = vld [vmem:[%s3 + $0x7c] sm:$0xf]
        %v856 = vrot.slane %v711, 2
        %v857 = vrot.slane %v713, 3
        %v858 = vor.u32 %v856, %v857
        %v867 = vunpack.c.l.b16 %v848
        %v868 = vunpack.c.l.b16 %v849
        %v869 = vunpack.c.l.b16 %v850
        %v870 = vunpack.c.l.b16 %v851
        %v871 = vunpack.c.l.b16 %v852
        %v872 = vunpack.c.l.b16 %v853
        %v873 = vunpack.c.l.b16 %v854
        %v874 = vunpack.c.l.b16 %v855
        %v875 = vpack.c.b16 %v868, %v867
        %v876 = vpack.c.b16 %v870, %v869
        %v877 = vpack.c.b16 %v872, %v871
        %v878 = vpack.c.b16 %v874, %v873
        %v884 = vsel %vm741, %v858, 0
        %886 = vmatpush.bf16.msra.mxu0 0
        %887 = vmatpush.bf16.msra.mxu0 0
        %888 = vmatpush.bf16.msra.mxu0 0
        %889 = vmatpush.bf16.msra.mxu0 0
        %890 = vmatpush.bf16.msra.mxu0 %v878
        %891 = vmatpush.bf16.msra.mxu0 %v877
        %892 = vmatpush.bf16.msra.mxu0 %v876
        %893 = vmatpush.bf16.msra.mxu0 %v875
        %894 = vmatmul.bf16.gmra.mxu0 %v884
        %v895 = vpop.f32.mrf.mxu0
        %v896 = vadd.f32 0.0, %v895
        %v897 = vpop.f32.mrf.mxu0
        %898 = vdwg.mxu0
        %v899 = vadd.f32 %v847, %v896
        %v900 = vpack.c.bf16 %v690, %v689
        %v901 = vld [vmem:[%s3 + $0x80] sm:$0xf]
        %v902 = vld [vmem:[%s3 + $0x84] sm:$0xf]
        %v903 = vld [vmem:[%s3 + $0x88] sm:$0xf]
        %v904 = vld [vmem:[%s3 + $0x8c] sm:$0xf]
        %v905 = vld [vmem:[%s3 + $0x90] sm:$0xf]
        %v906 = vld [vmem:[%s3 + $0x94] sm:$0xf]
        %v907 = vld [vmem:[%s3 + $0x98] sm:$0xf]
        %v908 = vld [vmem:[%s3 + $0x9c] sm:$0xf]
        %v910 = vrot.slane %v900, 3
        %v919 = vunpack.c.l.b16 %v901
        %v920 = vunpack.c.l.b16 %v902
        %v921 = vunpack.c.l.b16 %v903
        %v922 = vunpack.c.l.b16 %v904
        %v923 = vunpack.c.l.b16 %v905
        %v924 = vunpack.c.l.b16 %v906
        %v925 = vunpack.c.l.b16 %v907
        %v926 = vunpack.c.l.b16 %v908
        %v927 = vpack.c.b16 %v920, %v919
        %v928 = vpack.c.b16 %v922, %v921
        %v929 = vpack.c.b16 %v924, %v923
        %v930 = vpack.c.b16 %v926, %v925
        %v936 = vsel %vm741, %v910, 0
        %938 = vmatpush.bf16.msra.mxu0 0
        %939 = vmatpush.bf16.msra.mxu0 0
        %940 = vmatpush.bf16.msra.mxu0 0
        %941 = vmatpush.bf16.msra.mxu0 0
        %942 = vmatpush.bf16.msra.mxu0 %v930
        %943 = vmatpush.bf16.msra.mxu0 %v929
        %944 = vmatpush.bf16.msra.mxu0 %v928
        %945 = vmatpush.bf16.msra.mxu0 %v927
        %946 = vmatmul.bf16.gmra.mxu0 %v936
        %v947 = vpop.f32.mrf.mxu0
        %v948 = vadd.f32 0.0, %v947
        %v949 = vpop.f32.mrf.mxu0
        %950 = vdwg.mxu0
        %v951 = vadd.f32 %v899, %v948
        %v952 = vld [vmem:[%s3 + $0xa0] sm:$0xf]
        %v953 = vld [vmem:[%s3 + $0xa4] sm:$0xf]
        %v954 = vld [vmem:[%s3 + $0xa8] sm:$0xf]
        %v955 = vld [vmem:[%s3 + $0xac] sm:$0xf]
        %v956 = vld [vmem:[%s3 + $0xb0] sm:$0xf]
        %v957 = vld [vmem:[%s3 + $0xb4] sm:$0xf]
        %v958 = vld [vmem:[%s3 + $0xb8] sm:$0xf]
        %v959 = vld [vmem:[%s3 + $0xbc] sm:$0xf]
        %v961 = vshrl.u32 %v900, 16
        %v963 = vrot.slane %v961, 3
        %v964 = vshll.u32 %v900, 16
        %v966 = vrot.slane %v964, 4
        %v967 = vor.u32 %v963, %v966
        %v976 = vunpack.c.l.b16 %v952
        %v977 = vunpack.c.l.b16 %v953
        %v978 = vunpack.c.l.b16 %v954
        %v979 = vunpack.c.l.b16 %v955
        %v980 = vunpack.c.l.b16 %v956
        %v981 = vunpack.c.l.b16 %v957
        %v982 = vunpack.c.l.b16 %v958
        %v983 = vunpack.c.l.b16 %v959
        %v984 = vpack.c.b16 %v977, %v976
        %v985 = vpack.c.b16 %v979, %v978
        %v986 = vpack.c.b16 %v981, %v980
        %v987 = vpack.c.b16 %v983, %v982
        %v993 = vsel %vm741, %v967, 0
        %995 = vmatpush.bf16.msra.mxu0 0
        %996 = vmatpush.bf16.msra.mxu0 0
        %997 = vmatpush.bf16.msra.mxu0 0
        %998 = vmatpush.bf16.msra.mxu0 0
        %999 = vmatpush.bf16.msra.mxu0 %v987
        %1000 = vmatpush.bf16.msra.mxu0 %v986
        %1001 = vmatpush.bf16.msra.mxu0 %v985
        %1002 = vmatpush.bf16.msra.mxu0 %v984
        %1003 = vmatmul.bf16.gmra.mxu0 %v993
        %v1004 = vpop.f32.mrf.mxu0
        %v1005 = vadd.f32 0.0, %v1004
        %v1006 = vpop.f32.mrf.mxu0
        %1007 = vdwg.mxu0
        %v1008 = vadd.f32 %v951, %v1005
        %v1009 = vpack.c.bf16 %v690, %v690
        %v1010 = vld [vmem:[%s3 + $0xc0] sm:$0xf]
        %v1011 = vld [vmem:[%s3 + $0xc4] sm:$0xf]
        %v1012 = vld [vmem:[%s3 + $0xc8] sm:$0xf]
        %v1013 = vld [vmem:[%s3 + $0xcc] sm:$0xf]
        %v1014 = vld [vmem:[%s3 + $0xd0] sm:$0xf]
        %v1015 = vld [vmem:[%s3 + $0xd4] sm:$0xf]
        %v1016 = vld [vmem:[%s3 + $0xd8] sm:$0xf]
        %v1017 = vld [vmem:[%s3 + $0xdc] sm:$0xf]
        %v1019 = vrot.slane %v1009, 1
        %v1028 = vunpack.c.l.b16 %v1010
        %v1029 = vunpack.c.l.b16 %v1011
        %v1030 = vunpack.c.l.b16 %v1012
        %v1031 = vunpack.c.l.b16 %v1013
        %v1032 = vunpack.c.l.b16 %v1014
        %v1033 = vunpack.c.l.b16 %v1015
        %v1034 = vunpack.c.l.b16 %v1016
        %v1035 = vunpack.c.l.b16 %v1017
        %v1036 = vpack.c.b16 %v1029, %v1028
        %v1037 = vpack.c.b16 %v1031, %v1030
        %v1038 = vpack.c.b16 %v1033, %v1032
        %v1039 = vpack.c.b16 %v1035, %v1034
        %v1045 = vsel %vm741, %v1019, 0
        %1047 = vmatpush.bf16.msra.mxu0 0
        %1048 = vmatpush.bf16.msra.mxu0 0
        %1049 = vmatpush.bf16.msra.mxu0 0
        %1050 = vmatpush.bf16.msra.mxu0 0
        %1051 = vmatpush.bf16.msra.mxu0 %v1039
        %1052 = vmatpush.bf16.msra.mxu0 %v1038
        %1053 = vmatpush.bf16.msra.mxu0 %v1037
        %1054 = vmatpush.bf16.msra.mxu0 %v1036
        %1055 = vmatmul.bf16.gmra.mxu0 %v1045
        %v1056 = vpop.f32.mrf.mxu0
        %v1057 = vadd.f32 0.0, %v1056
        %v1058 = vpop.f32.mrf.mxu0
        %1059 = vdwg.mxu0
        %v1060 = vadd.f32 %v1008, %v1057
        %v1061 = vld [vmem:[%s3 + $0xe0] sm:$0xf]
        %v1062 = vld [vmem:[%s3 + $0xe4] sm:$0xf]
        %v1063 = vld [vmem:[%s3 + $0xe8] sm:$0xf]
        %v1064 = vld [vmem:[%s3 + $0xec] sm:$0xf]
        %v1065 = vld [vmem:[%s3 + $0xf0] sm:$0xf]
        %v1066 = vld [vmem:[%s3 + $0xf4] sm:$0xf]
        %v1067 = vld [vmem:[%s3 + $0xf8] sm:$0xf]
        %v1068 = vld [vmem:[%s3 + $0xfc] sm:$0xf]
        %v1070 = vshrl.u32 %v1009, 16
        %v1072 = vrot.slane %v1070, 1
        %v1073 = vshll.u32 %v1009, 16
        %v1075 = vrot.slane %v1073, 2
        %v1076 = vor.u32 %v1072, %v1075
        %v1085 = vunpack.c.l.b16 %v1061
        %v1086 = vunpack.c.l.b16 %v1062
        %v1087 = vunpack.c.l.b16 %v1063
        %v1088 = vunpack.c.l.b16 %v1064
        %v1089 = vunpack.c.l.b16 %v1065
        %v1090 = vunpack.c.l.b16 %v1066
        %v1091 = vunpack.c.l.b16 %v1067
        %v1092 = vunpack.c.l.b16 %v1068
        %v1093 = vpack.c.b16 %v1086, %v1085
        %v1094 = vpack.c.b16 %v1088, %v1087
        %v1095 = vpack.c.b16 %v1090, %v1089
        %v1096 = vpack.c.b16 %v1092, %v1091
        %v1102 = vsel %vm741, %v1076, 0
        %1104 = vmatpush.bf16.msra.mxu0 0
        %1105 = vmatpush.bf16.msra.mxu0 0
        %1106 = vmatpush.bf16.msra.mxu0 0
        %1107 = vmatpush.bf16.msra.mxu0 0
        %1108 = vmatpush.bf16.msra.mxu0 %v1096
        %1109 = vmatpush.bf16.msra.mxu0 %v1095
        %1110 = vmatpush.bf16.msra.mxu0 %v1094
        %1111 = vmatpush.bf16.msra.mxu0 %v1093
        %1112 = vmatmul.bf16.gmra.mxu0 %v1102
        %v1113 = vpop.f32.mrf.mxu0
        %v1114 = vadd.f32 0.0, %v1113
        %v1115 = vpop.f32.mrf.mxu0
        %1116 = vdwg.mxu0
        %v1117 = vadd.f32 %v1060, %v1114
        %v1118 = vld [vmem:[%s3 + $0x100] sm:$0xf]
        %v1119 = vld [vmem:[%s3 + $0x104] sm:$0xf]
        %v1120 = vld [vmem:[%s3 + $0x108] sm:$0xf]
        %v1121 = vld [vmem:[%s3 + $0x10c] sm:$0xf]
        %v1122 = vld [vmem:[%s3 + $0x110] sm:$0xf]
        %v1123 = vld [vmem:[%s3 + $0x114] sm:$0xf]
        %v1124 = vld [vmem:[%s3 + $0x118] sm:$0xf]
        %v1125 = vld [vmem:[%s3 + $0x11c] sm:$0xf]
        %v1126 = vrot.slane %v1009, 2
        %v1135 = vunpack.c.l.b16 %v1118
        %v1136 = vunpack.c.l.b16 %v1119
        %v1137 = vunpack.c.l.b16 %v1120
        %v1138 = vunpack.c.l.b16 %v1121
        %v1139 = vunpack.c.l.b16 %v1122
        %v1140 = vunpack.c.l.b16 %v1123
        %v1141 = vunpack.c.l.b16 %v1124
        %v1142 = vunpack.c.l.b16 %v1125
        %v1143 = vpack.c.b16 %v1136, %v1135
        %v1144 = vpack.c.b16 %v1138, %v1137
        %v1145 = vpack.c.b16 %v1140, %v1139
        %v1146 = vpack.c.b16 %v1142, %v1141
        %v1152 = vsel %vm741, %v1126, 0
        %1154 = vmatpush.bf16.msra.mxu0 0
        %1155 = vmatpush.bf16.msra.mxu0 0
        %1156 = vmatpush.bf16.msra.mxu0 0
        %1157 = vmatpush.bf16.msra.mxu0 0
        %1158 = vmatpush.bf16.msra.mxu0 %v1146
        %1159 = vmatpush.bf16.msra.mxu0 %v1145
        %1160 = vmatpush.bf16.msra.mxu0 %v1144
        %1161 = vmatpush.bf16.msra.mxu0 %v1143
        %1162 = vmatmul.bf16.gmra.mxu0 %v1152
        %v1163 = vpop.f32.mrf.mxu0
        %v1164 = vadd.f32 0.0, %v1163
        %v1165 = vpop.f32.mrf.mxu0
        %1166 = vdwg.mxu0
        %v1167 = vadd.f32 %v1117, %v1164
        %v1168 = vld [vmem:[%s4] sm:$0x1]
        %v1170 = vperm.slane %v1168, 0
        %v1172 = vadd.f32 %v1167, %v1170
        %v1173 = vmax.f32 %v1172, 0.0
        %1174 = vmatpush.bf16.msra.mxu0 0
        %1175 = vmatpush.bf16.msra.mxu0 0
        %1176 = vmatpush.bf16.msra.mxu0 0
        %1177 = vmatpush.bf16.msra.mxu0 0
        %1178 = vmatpush.bf16.msra.mxu0 %v736
        %1179 = vmatpush.bf16.msra.mxu0 %v735
        %1180 = vmatpush.bf16.msra.mxu0 %v734
        %1181 = vmatpush.bf16.msra.mxu0 %v733
        %1182 = vmatmul.bf16.gmra.mxu0 %v936
        %v1183 = vpop.f32.mrf.mxu0
        %v1184 = vadd.f32 0.0, %v1183
        %v1185 = vpop.f32.mrf.mxu0
        %1186 = vdwg.mxu0
        %1187 = vmatpush.bf16.msra.mxu0 0
        %1188 = vmatpush.bf16.msra.mxu0 0
        %1189 = vmatpush.bf16.msra.mxu0 0
        %1190 = vmatpush.bf16.msra.mxu0 0
        %1191 = vmatpush.bf16.msra.mxu0 %v777
        %1192 = vmatpush.bf16.msra.mxu0 %v776
        %1193 = vmatpush.bf16.msra.mxu0 %v775
        %1194 = vmatpush.bf16.msra.mxu0 %v774
        %1195 = vmatmul.bf16.gmra.mxu0 %v884
        %v1196 = vpop.f32.mrf.mxu0
        %v1197 = vadd.f32 %v1184, %v1196
        %v1198 = vpop.f32.mrf.mxu0
        %1199 = vdwg.mxu0
        %1200 = vmatpush.bf16.msra.mxu0 0
        %1201 = vmatpush.bf16.msra.mxu0 0
        %1202 = vmatpush.bf16.msra.mxu0 0
        %1203 = vmatpush.bf16.msra.mxu0 0
        %1204 = vmatpush.bf16.msra.mxu0 %v826
        %1205 = vmatpush.bf16.msra.mxu0 %v825
        %1206 = vmatpush.bf16.msra.mxu0 %v824
        %1207 = vmatpush.bf16.msra.mxu0 %v823
        %1208 = vmatmul.bf16.gmra.mxu0 %v993
        %v1209 = vpop.f32.mrf.mxu0
        %v1210 = vadd.f32 0.0, %v1209
        %v1211 = vpop.f32.mrf.mxu0
        %1212 = vdwg.mxu0
        %v1213 = vadd.f32 %v1197, %v1210
        %1214 = vmatpush.bf16.msra.mxu0 0
        %1215 = vmatpush.bf16.msra.mxu0 0
        %1216 = vmatpush.bf16.msra.mxu0 0
        %1217 = vmatpush.bf16.msra.mxu0 0
        %1218 = vmatpush.bf16.msra.mxu0 %v878
        %1219 = vmatpush.bf16.msra.mxu0 %v877
        %1220 = vmatpush.bf16.msra.mxu0 %v876
        %1221 = vmatpush.bf16.msra.mxu0 %v875
        %1222 = vmatmul.bf16.gmra.mxu0 %v1045
        %v1223 = vpop.f32.mrf.mxu0
        %v1224 = vadd.f32 0.0, %v1223
        %v1225 = vpop.f32.mrf.mxu0
        %1226 = vdwg.mxu0
        %v1227 = vadd.f32 %v1213, %v1224
        %1228 = vmatpush.bf16.msra.mxu0 0
        %1229 = vmatpush.bf16.msra.mxu0 0
        %1230 = vmatpush.bf16.msra.mxu0 0
        %1231 = vmatpush.bf16.msra.mxu0 0
        %1232 = vmatpush.bf16.msra.mxu0 %v930
        %1233 = vmatpush.bf16.msra.mxu0 %v929
        %1234 = vmatpush.bf16.msra.mxu0 %v928
        %1235 = vmatpush.bf16.msra.mxu0 %v927
        %1236 = vmatmul.bf16.gmra.mxu0 %v1102
        %v1237 = vpop.f32.mrf.mxu0
        %v1238 = vadd.f32 0.0, %v1237
        %v1239 = vpop.f32.mrf.mxu0
        %1240 = vdwg.mxu0
        %v1241 = vadd.f32 %v1227, %v1238
        %1242 = vmatpush.bf16.msra.mxu0 0
        %1243 = vmatpush.bf16.msra.mxu0 0
        %1244 = vmatpush.bf16.msra.mxu0 0
        %1245 = vmatpush.bf16.msra.mxu0 0
        %1246 = vmatpush.bf16.msra.mxu0 %v987
        %1247 = vmatpush.bf16.msra.mxu0 %v986
        %1248 = vmatpush.bf16.msra.mxu0 %v985
        %1249 = vmatpush.bf16.msra.mxu0 %v984
        %1250 = vmatmul.bf16.gmra.mxu0 %v1152
        %v1251 = vpop.f32.mrf.mxu0
        %v1252 = vadd.f32 0.0, %v1251
        %v1253 = vpop.f32.mrf.mxu0
        %1254 = vdwg.mxu0
        %v1255 = vadd.f32 %v1241, %v1252
        %v1256 = vpack.c.bf16 %v691, %v690
        %v1258 = vshrl.u32 %v1256, 16
        %v1260 = vrot.slane %v1258, 3
        %v1261 = vshll.u32 %v1256, 16
        %v1263 = vrot.slane %v1261, 4
        %v1264 = vor.u32 %v1260, %v1263
        %v1266 = vsel %vm741, %v1264, 0
        %1268 = vmatpush.bf16.msra.mxu0 0
        %1269 = vmatpush.bf16.msra.mxu0 0
        %1270 = vmatpush.bf16.msra.mxu0 0
        %1271 = vmatpush.bf16.msra.mxu0 0
        %1272 = vmatpush.bf16.msra.mxu0 %v1039
        %1273 = vmatpush.bf16.msra.mxu0 %v1038
        %1274 = vmatpush.bf16.msra.mxu0 %v1037
        %1275 = vmatpush.bf16.msra.mxu0 %v1036
        %1276 = vmatmul.bf16.gmra.mxu0 %v1266
        %v1277 = vpop.f32.mrf.mxu0
        %v1278 = vadd.f32 0.0, %v1277
        %v1279 = vpop.f32.mrf.mxu0
        %1280 = vdwg.mxu0
        %v1281 = vadd.f32 %v1255, %v1278
        %v1282 = vpack.c.bf16 %v691, %v691
        %v1284 = vsel %vm741, %v1282, 0
        %1286 = vmatpush.bf16.msra.mxu0 0
        %1287 = vmatpush.bf16.msra.mxu0 0
        %1288 = vmatpush.bf16.msra.mxu0 0
        %1289 = vmatpush.bf16.msra.mxu0 0
        %1290 = vmatpush.bf16.msra.mxu0 %v1096
        %1291 = vmatpush.bf16.msra.mxu0 %v1095
        %1292 = vmatpush.bf16.msra.mxu0 %v1094
        %1293 = vmatpush.bf16.msra.mxu0 %v1093
        %1294 = vmatmul.bf16.gmra.mxu0 %v1284
        %v1295 = vpop.f32.mrf.mxu0
        %v1296 = vadd.f32 0.0, %v1295
        %v1297 = vpop.f32.mrf.mxu0
        %1298 = vdwg.mxu0
        %v1299 = vadd.f32 %v1281, %v1296
        %v1300 = vshrl.u32 %v1282, 16
        %v1302 = vshll.u32 %v1282, 16
        %v1304 = vrot.slane %v1302, 1
        %v1305 = vor.u32 %v1300, %v1304
        %v1307 = vsel %vm741, %v1305, 0
        %1309 = vmatpush.bf16.msra.mxu0 0
        %1310 = vmatpush.bf16.msra.mxu0 0
        %1311 = vmatpush.bf16.msra.mxu0 0
        %1312 = vmatpush.bf16.msra.mxu0 0
        %1313 = vmatpush.bf16.msra.mxu0 %v1146
        %1314 = vmatpush.bf16.msra.mxu0 %v1145
        %1315 = vmatpush.bf16.msra.mxu0 %v1144
        %1316 = vmatpush.bf16.msra.mxu0 %v1143
        %1317 = vmatmul.bf16.gmra.mxu0 %v1307
        %v1318 = vpop.f32.mrf.mxu0
        %v1319 = vadd.f32 0.0, %v1318
        %v1320 = vpop.f32.mrf.mxu0
        %1321 = vdwg.mxu0
        %v1322 = vadd.f32 %v1299, %v1319
        %v1323 = vadd.f32 %v1322, %v1170
        %v1324 = vmax.f32 %v1323, 0.0
        %1325 = vmatpush.bf16.msra.mxu0 0
        %1326 = vmatpush.bf16.msra.mxu0 0
        %1327 = vmatpush.bf16.msra.mxu0 0
        %1328 = vmatpush.bf16.msra.mxu0 0
        %1329 = vmatpush.bf16.msra.mxu0 %v736
        %1330 = vmatpush.bf16.msra.mxu0 %v735
        %1331 = vmatpush.bf16.msra.mxu0 %v734
        %1332 = vmatpush.bf16.msra.mxu0 %v733
        %1333 = vmatmul.bf16.gmra.mxu0 %v1102
        %v1334 = vpop.f32.mrf.mxu0
        %v1335 = vadd.f32 0.0, %v1334
        %v1336 = vpop.f32.mrf.mxu0
        %1337 = vdwg.mxu0
        %1338 = vmatpush.bf16.msra.mxu0 0
        %1339 = vmatpush.bf16.msra.mxu0 0
        %1340 = vmatpush.bf16.msra.mxu0 0
        %1341 = vmatpush.bf16.msra.mxu0 0
        %1342 = vmatpush.bf16.msra.mxu0 %v777
        %1343 = vmatpush.bf16.msra.mxu0 %v776
        %1344 = vmatpush.bf16.msra.mxu0 %v775
        %1345 = vmatpush.bf16.msra.mxu0 %v774
        %1346 = vmatmul.bf16.gmra.mxu0 %v1045
        %v1347 = vpop.f32.mrf.mxu0
        %v1348 = vadd.f32 %v1335, %v1347
        %v1349 = vpop.f32.mrf.mxu0
        %1350 = vdwg.mxu0
        %1351 = vmatpush.bf16.msra.mxu0 0
        %1352 = vmatpush.bf16.msra.mxu0 0
        %1353 = vmatpush.bf16.msra.mxu0 0
        %1354 = vmatpush.bf16.msra.mxu0 0
        %1355 = vmatpush.bf16.msra.mxu0 %v826
        %1356 = vmatpush.bf16.msra.mxu0 %v825
        %1357 = vmatpush.bf16.msra.mxu0 %v824
        %1358 = vmatpush.bf16.msra.mxu0 %v823
        %1359 = vmatmul.bf16.gmra.mxu0 %v1152
        %v1360 = vpop.f32.mrf.mxu0
        %v1361 = vadd.f32 0.0, %v1360
        %v1362 = vpop.f32.mrf.mxu0
        %1363 = vdwg.mxu0
        %v1364 = vadd.f32 %v1348, %v1361
        %1365 = vmatpush.bf16.msra.mxu0 0
        %1366 = vmatpush.bf16.msra.mxu0 0
        %1367 = vmatpush.bf16.msra.mxu0 0
        %1368 = vmatpush.bf16.msra.mxu0 0
        %1369 = vmatpush.bf16.msra.mxu0 %v878
        %1370 = vmatpush.bf16.msra.mxu0 %v877
        %1371 = vmatpush.bf16.msra.mxu0 %v876
        %1372 = vmatpush.bf16.msra.mxu0 %v875
        %1373 = vmatmul.bf16.gmra.mxu0 %v1266
        %v1374 = vpop.f32.mrf.mxu0
        %v1375 = vadd.f32 0.0, %v1374
        %v1376 = vpop.f32.mrf.mxu0
        %1377 = vdwg.mxu0
        %v1378 = vadd.f32 %v1364, %v1375
        %1379 = vmatpush.bf16.msra.mxu0 0
        %1380 = vmatpush.bf16.msra.mxu0 0
        %1381 = vmatpush.bf16.msra.mxu0 0
        %1382 = vmatpush.bf16.msra.mxu0 0
        %1383 = vmatpush.bf16.msra.mxu0 %v930
        %1384 = vmatpush.bf16.msra.mxu0 %v929
        %1385 = vmatpush.bf16.msra.mxu0 %v928
        %1386 = vmatpush.bf16.msra.mxu0 %v927
        %1387 = vmatmul.bf16.gmra.mxu0 %v1284
        %v1388 = vpop.f32.mrf.mxu0
        %v1389 = vadd.f32 0.0, %v1388
        %v1390 = vpop.f32.mrf.mxu0
        %1391 = vdwg.mxu0
        %v1392 = vadd.f32 %v1378, %v1389
        %1393 = vmatpush.bf16.msra.mxu0 0
        %1394 = vmatpush.bf16.msra.mxu0 0
        %1395 = vmatpush.bf16.msra.mxu0 0
        %1396 = vmatpush.bf16.msra.mxu0 0
        %1397 = vmatpush.bf16.msra.mxu0 %v987
        %1398 = vmatpush.bf16.msra.mxu0 %v986
        %1399 = vmatpush.bf16.msra.mxu0 %v985
        %1400 = vmatpush.bf16.msra.mxu0 %v984
        %1401 = vmatmul.bf16.gmra.mxu0 %v1307
        %v1402 = vpop.f32.mrf.mxu0
        %v1403 = vadd.f32 0.0, %v1402
        %v1404 = vpop.f32.mrf.mxu0
        %1405 = vdwg.mxu0
        %v1406 = vadd.f32 %v1392, %v1403
        %v1408 = vrot.slane %v1282, 2
        %v1410 = vsel %vm741, %v1408, 0
        %1412 = vmatpush.bf16.msra.mxu0 0
        %1413 = vmatpush.bf16.msra.mxu0 0
        %1414 = vmatpush.bf16.msra.mxu0 0
        %1415 = vmatpush.bf16.msra.mxu0 0
        %1416 = vmatpush.bf16.msra.mxu0 %v1039
        %1417 = vmatpush.bf16.msra.mxu0 %v1038
        %1418 = vmatpush.bf16.msra.mxu0 %v1037
        %1419 = vmatpush.bf16.msra.mxu0 %v1036
        %1420 = vmatmul.bf16.gmra.mxu0 %v1410
        %v1421 = vpop.f32.mrf.mxu0
        %v1422 = vadd.f32 0.0, %v1421
        %v1423 = vpop.f32.mrf.mxu0
        %1424 = vdwg.mxu0
        %v1425 = vadd.f32 %v1406, %v1422
        %v1426 = vrot.slane %v1300, 2
        %v1427 = vrot.slane %v1302, 3
        %v1428 = vor.u32 %v1426, %v1427
        %v1430 = vsel %vm741, %v1428, 0
        %1432 = vmatpush.bf16.msra.mxu0 0
        %1433 = vmatpush.bf16.msra.mxu0 0
        %1434 = vmatpush.bf16.msra.mxu0 0
        %1435 = vmatpush.bf16.msra.mxu0 0
        %1436 = vmatpush.bf16.msra.mxu0 %v1096
        %1437 = vmatpush.bf16.msra.mxu0 %v1095
        %1438 = vmatpush.bf16.msra.mxu0 %v1094
        %1439 = vmatpush.bf16.msra.mxu0 %v1093
        %1440 = vmatmul.bf16.gmra.mxu0 %v1430
        %v1441 = vpop.f32.mrf.mxu0
        %v1442 = vadd.f32 0.0, %v1441
        %v1443 = vpop.f32.mrf.mxu0
        %1444 = vdwg.mxu0
        %v1445 = vadd.f32 %v1425, %v1442
        %v1446 = vpack.c.bf16 %v692, %v691
        %v1448 = vrot.slane %v1446, 3
        %v1450 = vsel %vm741, %v1448, 0
        %1452 = vmatpush.bf16.msra.mxu0 0
        %1453 = vmatpush.bf16.msra.mxu0 0
        %1454 = vmatpush.bf16.msra.mxu0 0
        %1455 = vmatpush.bf16.msra.mxu0 0
        %1456 = vmatpush.bf16.msra.mxu0 %v1146
        %1457 = vmatpush.bf16.msra.mxu0 %v1145
        %1458 = vmatpush.bf16.msra.mxu0 %v1144
        %1459 = vmatpush.bf16.msra.mxu0 %v1143
        %1460 = vmatmul.bf16.gmra.mxu0 %v1450
        %v1461 = vpop.f32.mrf.mxu0
        %v1462 = vadd.f32 0.0, %v1461
        %v1463 = vpop.f32.mrf.mxu0
        %1464 = vdwg.mxu0
        %v1465 = vadd.f32 %v1445, %v1462
        %v1466 = vadd.f32 %v1465, %v1170
        %v1467 = vmax.f32 %v1466, 0.0
        %v1468 = vpack.c.bf16 %v1173, %v1173
        %v1469 = vld [vmem:[%s5] sm:$0xff]
        %v1470 = vld [vmem:[%s5 + $0x8] sm:$0xff]
        %v1471 = vld [vmem:[%s5 + $0x10] sm:$0xff]
        %v1472 = vld [vmem:[%s5 + $0x18] sm:$0xff]
        %v1473 = vld [vmem:[%s5 + $0x20] sm:$0xff]
        %v1474 = vld [vmem:[%s5 + $0x28] sm:$0xff]
        %v1475 = vld [vmem:[%s5 + $0x30] sm:$0xff]
        %v1476 = vld [vmem:[%s5 + $0x38] sm:$0xff]
        %v1477 = vld [vmem:[%s5 + $0x40] sm:$0xff]
        %v1478 = vld [vmem:[%s5 + $0x48] sm:$0xff]
        %v1479 = vld [vmem:[%s5 + $0x50] sm:$0xff]
        %v1480 = vld [vmem:[%s5 + $0x58] sm:$0xff]
        %v1481 = vld [vmem:[%s5 + $0x60] sm:$0xff]
        %v1482 = vld [vmem:[%s5 + $0x68] sm:$0xff]
        %v1483 = vld [vmem:[%s5 + $0x70] sm:$0xff]
        %v1484 = vld [vmem:[%s5 + $0x78] sm:$0xff]
        %v1485 = vld [vmem:[%s5 + $0x80] sm:$0xff]
        %v1486 = vld [vmem:[%s5 + $0x88] sm:$0xff]
        %v1487 = vld [vmem:[%s5 + $0x90] sm:$0xff]
        %v1488 = vld [vmem:[%s5 + $0x98] sm:$0xff]
        %v1489 = vld [vmem:[%s5 + $0xa0] sm:$0xff]
        %v1490 = vld [vmem:[%s5 + $0xa8] sm:$0xff]
        %v1491 = vld [vmem:[%s5 + $0xb0] sm:$0xff]
        %v1492 = vld [vmem:[%s5 + $0xb8] sm:$0xff]
        %v1493 = vld [vmem:[%s5 + $0xc0] sm:$0xff]
        %v1494 = vld [vmem:[%s5 + $0xc8] sm:$0xff]
        %v1495 = vld [vmem:[%s5 + $0xd0] sm:$0xff]
        %v1496 = vld [vmem:[%s5 + $0xd8] sm:$0xff]
        %v1497 = vld [vmem:[%s5 + $0xe0] sm:$0xff]
        %v1498 = vld [vmem:[%s5 + $0xe8] sm:$0xff]
        %v1499 = vld [vmem:[%s5 + $0xf0] sm:$0xff]
        %v1500 = vld [vmem:[%s5 + $0xf8] sm:$0xff]
        %v1502 = vshrl.u32 %v1468, 16
        %v1521 = vunpack.c.l.b16 %v1485
        %v1522 = vunpack.c.h.b16 %v1485
        %v1523 = vunpack.c.l.b16 %v1486
        %v1524 = vunpack.c.h.b16 %v1486
        %v1525 = vunpack.c.l.b16 %v1487
        %v1526 = vunpack.c.h.b16 %v1487
        %v1527 = vunpack.c.l.b16 %v1488
        %v1528 = vunpack.c.h.b16 %v1488
        %v1529 = vunpack.c.l.b16 %v1489
        %v1530 = vunpack.c.h.b16 %v1489
        %v1531 = vunpack.c.l.b16 %v1490
        %v1532 = vunpack.c.h.b16 %v1490
        %v1533 = vunpack.c.l.b16 %v1491
        %v1534 = vunpack.c.h.b16 %v1491
        %v1535 = vunpack.c.l.b16 %v1492
        %v1536 = vunpack.c.h.b16 %v1492
        %v1537 = vunpack.c.l.b16 %v1493
        %v1538 = vunpack.c.h.b16 %v1493
        %v1539 = vunpack.c.l.b16 %v1494
        %v1540 = vunpack.c.h.b16 %v1494
        %v1541 = vunpack.c.l.b16 %v1495
        %v1542 = vunpack.c.h.b16 %v1495
        %v1543 = vunpack.c.l.b16 %v1496
        %v1544 = vunpack.c.h.b16 %v1496
        %v1545 = vunpack.c.l.b16 %v1497
        %v1546 = vunpack.c.h.b16 %v1497
        %v1547 = vunpack.c.l.b16 %v1498
        %v1548 = vunpack.c.h.b16 %v1498
        %v1549 = vunpack.c.l.b16 %v1499
        %v1550 = vunpack.c.h.b16 %v1499
        %v1551 = vunpack.c.l.b16 %v1500
        %v1552 = vunpack.c.h.b16 %v1500
        %v1553 = vpack.c.b16 %v1523, %v1521
        %v1554 = vpack.c.b16 %v1524, %v1522
        %v1555 = vpack.c.b16 %v1527, %v1525
        %v1556 = vpack.c.b16 %v1528, %v1526
        %v1557 = vpack.c.b16 %v1531, %v1529
        %v1558 = vpack.c.b16 %v1532, %v1530
        %v1559 = vpack.c.b16 %v1535, %v1533
        %v1560 = vpack.c.b16 %v1536, %v1534
        %v1561 = vpack.c.b16 %v1539, %v1537
        %v1562 = vpack.c.b16 %v1540, %v1538
        %v1563 = vpack.c.b16 %v1543, %v1541
        %v1564 = vpack.c.b16 %v1544, %v1542
        %v1565 = vpack.c.b16 %v1547, %v1545
        %v1566 = vpack.c.b16 %v1548, %v1546
        %v1567 = vpack.c.b16 %v1551, %v1549
        %v1568 = vpack.c.b16 %v1552, %v1550
        %1585 = vmatpush.bf16.msra.mxu0 %v1567
        %1586 = vmatpush.bf16.msra.mxu0 %v1565
        %1587 = vmatpush.bf16.msra.mxu0 %v1563
        %1588 = vmatpush.bf16.msra.mxu0 %v1561
        %1589 = vmatpush.bf16.msra.mxu0 %v1559
        %1590 = vmatpush.bf16.msra.mxu0 %v1557
        %1591 = vmatpush.bf16.msra.mxu0 %v1555
        %1592 = vmatpush.bf16.msra.mxu0 %v1553
        %1593 = vmatmul.bf16.gmra.mxu0 %v1502
        %v1594 = vpop.f32.mrf.mxu0
        %v1595 = vadd.f32 0.0, %v1594
        %v1596 = vpop.f32.mrf.mxu0
        %1597 = vdwg.mxu0
        %1598 = vmatpush.bf16.msra.mxu0 %v1568
        %1599 = vmatpush.bf16.msra.mxu0 %v1566
        %1600 = vmatpush.bf16.msra.mxu0 %v1564
        %1601 = vmatpush.bf16.msra.mxu0 %v1562
        %1602 = vmatpush.bf16.msra.mxu0 %v1560
        %1603 = vmatpush.bf16.msra.mxu0 %v1558
        %1604 = vmatpush.bf16.msra.mxu0 %v1556
        %1605 = vmatpush.bf16.msra.mxu0 %v1554
        %1606 = vmatmul.bf16.gmra.mxu0 %v1502
        %v1607 = vpop.f32.mrf.mxu0
        %v1608 = vadd.f32 0.0, %v1607
        %v1609 = vpop.f32.mrf.mxu0
        %1610 = vdwg.mxu0
        %v1627 = vunpack.c.l.b16 %v1469
        %v1628 = vunpack.c.h.b16 %v1469
        %v1629 = vunpack.c.l.b16 %v1470
        %v1630 = vunpack.c.h.b16 %v1470
        %v1631 = vunpack.c.l.b16 %v1471
        %v1632 = vunpack.c.h.b16 %v1471
        %v1633 = vunpack.c.l.b16 %v1472
        %v1634 = vunpack.c.h.b16 %v1472
        %v1635 = vunpack.c.l.b16 %v1473
        %v1636 = vunpack.c.h.b16 %v1473
        %v1637 = vunpack.c.l.b16 %v1474
        %v1638 = vunpack.c.h.b16 %v1474
        %v1639 = vunpack.c.l.b16 %v1475
        %v1640 = vunpack.c.h.b16 %v1475
        %v1641 = vunpack.c.l.b16 %v1476
        %v1642 = vunpack.c.h.b16 %v1476
        %v1643 = vunpack.c.l.b16 %v1477
        %v1644 = vunpack.c.h.b16 %v1477
        %v1645 = vunpack.c.l.b16 %v1478
        %v1646 = vunpack.c.h.b16 %v1478
        %v1647 = vunpack.c.l.b16 %v1479
        %v1648 = vunpack.c.h.b16 %v1479
        %v1649 = vunpack.c.l.b16 %v1480
        %v1650 = vunpack.c.h.b16 %v1480
        %v1651 = vunpack.c.l.b16 %v1481
        %v1652 = vunpack.c.h.b16 %v1481
        %v1653 = vunpack.c.l.b16 %v1482
        %v1654 = vunpack.c.h.b16 %v1482
        %v1655 = vunpack.c.l.b16 %v1483
        %v1656 = vunpack.c.h.b16 %v1483
        %v1657 = vunpack.c.l.b16 %v1484
        %v1658 = vunpack.c.h.b16 %v1484
        %v1659 = vpack.c.b16 %v1629, %v1627
        %v1660 = vpack.c.b16 %v1630, %v1628
        %v1661 = vpack.c.b16 %v1633, %v1631
        %v1662 = vpack.c.b16 %v1634, %v1632
        %v1663 = vpack.c.b16 %v1637, %v1635
        %v1664 = vpack.c.b16 %v1638, %v1636
        %v1665 = vpack.c.b16 %v1641, %v1639
        %v1666 = vpack.c.b16 %v1642, %v1640
        %v1667 = vpack.c.b16 %v1645, %v1643
        %v1668 = vpack.c.b16 %v1646, %v1644
        %v1669 = vpack.c.b16 %v1649, %v1647
        %v1670 = vpack.c.b16 %v1650, %v1648
        %v1671 = vpack.c.b16 %v1653, %v1651
        %v1672 = vpack.c.b16 %v1654, %v1652
        %v1673 = vpack.c.b16 %v1657, %v1655
        %v1674 = vpack.c.b16 %v1658, %v1656
        %1691 = vmatpush.bf16.msra.mxu0 %v1673
        %1692 = vmatpush.bf16.msra.mxu0 %v1671
        %1693 = vmatpush.bf16.msra.mxu0 %v1669
        %1694 = vmatpush.bf16.msra.mxu0 %v1667
        %1695 = vmatpush.bf16.msra.mxu0 %v1665
        %1696 = vmatpush.bf16.msra.mxu0 %v1663
        %1697 = vmatpush.bf16.msra.mxu0 %v1661
        %1698 = vmatpush.bf16.msra.mxu0 %v1659
        %1699 = vmatmul.bf16.gmra.mxu0 %v1468
        %v1700 = vpop.f32.mrf.mxu0
        %v1701 = vadd.f32 %v1595, %v1700
        %v1702 = vpop.f32.mrf.mxu0
        %1703 = vdwg.mxu0
        %1704 = vmatpush.bf16.msra.mxu0 %v1674
        %1705 = vmatpush.bf16.msra.mxu0 %v1672
        %1706 = vmatpush.bf16.msra.mxu0 %v1670
        %1707 = vmatpush.bf16.msra.mxu0 %v1668
        %1708 = vmatpush.bf16.msra.mxu0 %v1666
        %1709 = vmatpush.bf16.msra.mxu0 %v1664
        %1710 = vmatpush.bf16.msra.mxu0 %v1662
        %1711 = vmatpush.bf16.msra.mxu0 %v1660
        %1712 = vmatmul.bf16.gmra.mxu0 %v1468
        %v1713 = vpop.f32.mrf.mxu0
        %v1714 = vadd.f32 %v1608, %v1713
        %v1715 = vpop.f32.mrf.mxu0
        %1716 = vdwg.mxu0
        %v1717 = vld [vmem:[%s5 + $0x100] sm:$0xff]
        %v1718 = vld [vmem:[%s5 + $0x108] sm:$0xff]
        %v1719 = vld [vmem:[%s5 + $0x110] sm:$0xff]
        %v1720 = vld [vmem:[%s5 + $0x118] sm:$0xff]
        %v1721 = vld [vmem:[%s5 + $0x120] sm:$0xff]
        %v1722 = vld [vmem:[%s5 + $0x128] sm:$0xff]
        %v1723 = vld [vmem:[%s5 + $0x130] sm:$0xff]
        %v1724 = vld [vmem:[%s5 + $0x138] sm:$0xff]
        %v1725 = vld [vmem:[%s5 + $0x140] sm:$0xff]
        %v1726 = vld [vmem:[%s5 + $0x148] sm:$0xff]
        %v1727 = vld [vmem:[%s5 + $0x150] sm:$0xff]
        %v1728 = vld [vmem:[%s5 + $0x158] sm:$0xff]
        %v1729 = vld [vmem:[%s5 + $0x160] sm:$0xff]
        %v1730 = vld [vmem:[%s5 + $0x168] sm:$0xff]
        %v1731 = vld [vmem:[%s5 + $0x170] sm:$0xff]
        %v1732 = vld [vmem:[%s5 + $0x178] sm:$0xff]
        %v1734 = vrot.slane %v1468, 1
        %v1752 = vunpack.c.l.b16 %v1717
        %v1753 = vunpack.c.h.b16 %v1717
        %v1754 = vunpack.c.l.b16 %v1718
        %v1755 = vunpack.c.h.b16 %v1718
        %v1756 = vunpack.c.l.b16 %v1719
        %v1757 = vunpack.c.h.b16 %v1719
        %v1758 = vunpack.c.l.b16 %v1720
        %v1759 = vunpack.c.h.b16 %v1720
        %v1760 = vunpack.c.l.b16 %v1721
        %v1761 = vunpack.c.h.b16 %v1721
        %v1762 = vunpack.c.l.b16 %v1722
        %v1763 = vunpack.c.h.b16 %v1722
        %v1764 = vunpack.c.l.b16 %v1723
        %v1765 = vunpack.c.h.b16 %v1723
        %v1766 = vunpack.c.l.b16 %v1724
        %v1767 = vunpack.c.h.b16 %v1724
        %v1768 = vunpack.c.l.b16 %v1725
        %v1769 = vunpack.c.h.b16 %v1725
        %v1770 = vunpack.c.l.b16 %v1726
        %v1771 = vunpack.c.h.b16 %v1726
        %v1772 = vunpack.c.l.b16 %v1727
        %v1773 = vunpack.c.h.b16 %v1727
        %v1774 = vunpack.c.l.b16 %v1728
        %v1775 = vunpack.c.h.b16 %v1728
        %v1776 = vunpack.c.l.b16 %v1729
        %v1777 = vunpack.c.h.b16 %v1729
        %v1778 = vunpack.c.l.b16 %v1730
        %v1779 = vunpack.c.h.b16 %v1730
        %v1780 = vunpack.c.l.b16 %v1731
        %v1781 = vunpack.c.h.b16 %v1731
        %v1782 = vunpack.c.l.b16 %v1732
        %v1783 = vunpack.c.h.b16 %v1732
        %v1784 = vpack.c.b16 %v1754, %v1752
        %v1785 = vpack.c.b16 %v1755, %v1753
        %v1786 = vpack.c.b16 %v1758, %v1756
        %v1787 = vpack.c.b16 %v1759, %v1757
        %v1788 = vpack.c.b16 %v1762, %v1760
        %v1789 = vpack.c.b16 %v1763, %v1761
        %v1790 = vpack.c.b16 %v1766, %v1764
        %v1791 = vpack.c.b16 %v1767, %v1765
        %v1792 = vpack.c.b16 %v1770, %v1768
        %v1793 = vpack.c.b16 %v1771, %v1769
        %v1794 = vpack.c.b16 %v1774, %v1772
        %v1795 = vpack.c.b16 %v1775, %v1773
        %v1796 = vpack.c.b16 %v1778, %v1776
        %v1797 = vpack.c.b16 %v1779, %v1777
        %v1798 = vpack.c.b16 %v1782, %v1780
        %v1799 = vpack.c.b16 %v1783, %v1781
        %1816 = vmatpush.bf16.msra.mxu0 %v1798
        %1817 = vmatpush.bf16.msra.mxu0 %v1796
        %1818 = vmatpush.bf16.msra.mxu0 %v1794
        %1819 = vmatpush.bf16.msra.mxu0 %v1792
        %1820 = vmatpush.bf16.msra.mxu0 %v1790
        %1821 = vmatpush.bf16.msra.mxu0 %v1788
        %1822 = vmatpush.bf16.msra.mxu0 %v1786
        %1823 = vmatpush.bf16.msra.mxu0 %v1784
        %1824 = vmatmul.bf16.gmra.mxu0 %v1734
        %v1825 = vpop.f32.mrf.mxu0
        %v1826 = vadd.f32 0.0, %v1825
        %v1827 = vpop.f32.mrf.mxu0
        %1828 = vdwg.mxu0
        %1829 = vmatpush.bf16.msra.mxu0 %v1799
        %1830 = vmatpush.bf16.msra.mxu0 %v1797
        %1831 = vmatpush.bf16.msra.mxu0 %v1795
        %1832 = vmatpush.bf16.msra.mxu0 %v1793
        %1833 = vmatpush.bf16.msra.mxu0 %v1791
        %1834 = vmatpush.bf16.msra.mxu0 %v1789
        %1835 = vmatpush.bf16.msra.mxu0 %v1787
        %1836 = vmatpush.bf16.msra.mxu0 %v1785
        %1837 = vmatmul.bf16.gmra.mxu0 %v1734
        %v1838 = vpop.f32.mrf.mxu0
        %v1839 = vadd.f32 0.0, %v1838
        %v1840 = vpop.f32.mrf.mxu0
        %1841 = vdwg.mxu0
        %v1842 = vadd.f32 %v1701, %v1826
        %v1843 = vadd.f32 %v1714, %v1839
        %v1844 = vpack.c.bf16 %v1324, %v1324
        %v1845 = vld [vmem:[%s5 + $0x180] sm:$0xff]
        %v1846 = vld [vmem:[%s5 + $0x188] sm:$0xff]
        %v1847 = vld [vmem:[%s5 + $0x190] sm:$0xff]
        %v1848 = vld [vmem:[%s5 + $0x198] sm:$0xff]
        %v1849 = vld [vmem:[%s5 + $0x1a0] sm:$0xff]
        %v1850 = vld [vmem:[%s5 + $0x1a8] sm:$0xff]
        %v1851 = vld [vmem:[%s5 + $0x1b0] sm:$0xff]
        %v1852 = vld [vmem:[%s5 + $0x1b8] sm:$0xff]
        %v1853 = vld [vmem:[%s5 + $0x1c0] sm:$0xff]
        %v1854 = vld [vmem:[%s5 + $0x1c8] sm:$0xff]
        %v1855 = vld [vmem:[%s5 + $0x1d0] sm:$0xff]
        %v1856 = vld [vmem:[%s5 + $0x1d8] sm:$0xff]
        %v1857 = vld [vmem:[%s5 + $0x1e0] sm:$0xff]
        %v1858 = vld [vmem:[%s5 + $0x1e8] sm:$0xff]
        %v1859 = vld [vmem:[%s5 + $0x1f0] sm:$0xff]
        %v1860 = vld [vmem:[%s5 + $0x1f8] sm:$0xff]
        %v1877 = vunpack.c.l.b16 %v1845
        %v1878 = vunpack.c.h.b16 %v1845
        %v1879 = vunpack.c.l.b16 %v1846
        %v1880 = vunpack.c.h.b16 %v1846
        %v1881 = vunpack.c.l.b16 %v1847
        %v1882 = vunpack.c.h.b16 %v1847
        %v1883 = vunpack.c.l.b16 %v1848
        %v1884 = vunpack.c.h.b16 %v1848
        %v1885 = vunpack.c.l.b16 %v1849
        %v1886 = vunpack.c.h.b16 %v1849
        %v1887 = vunpack.c.l.b16 %v1850
        %v1888 = vunpack.c.h.b16 %v1850
        %v1889 = vunpack.c.l.b16 %v1851
        %v1890 = vunpack.c.h.b16 %v1851
        %v1891 = vunpack.c.l.b16 %v1852
        %v1892 = vunpack.c.h.b16 %v1852
        %v1893 = vunpack.c.l.b16 %v1853
        %v1894 = vunpack.c.h.b16 %v1853
        %v1895 = vunpack.c.l.b16 %v1854
        %v1896 = vunpack.c.h.b16 %v1854
        %v1897 = vunpack.c.l.b16 %v1855
        %v1898 = vunpack.c.h.b16 %v1855
        %v1899 = vunpack.c.l.b16 %v1856
        %v1900 = vunpack.c.h.b16 %v1856
        %v1901 = vunpack.c.l.b16 %v1857
        %v1902 = vunpack.c.h.b16 %v1857
        %v1903 = vunpack.c.l.b16 %v1858
        %v1904 = vunpack.c.h.b16 %v1858
        %v1905 = vunpack.c.l.b16 %v1859
        %v1906 = vunpack.c.h.b16 %v1859
        %v1907 = vunpack.c.l.b16 %v1860
        %v1908 = vunpack.c.h.b16 %v1860
        %v1909 = vpack.c.b16 %v1879, %v1877
        %v1910 = vpack.c.b16 %v1880, %v1878
        %v1911 = vpack.c.b16 %v1883, %v1881
        %v1912 = vpack.c.b16 %v1884, %v1882
        %v1913 = vpack.c.b16 %v1887, %v1885
        %v1914 = vpack.c.b16 %v1888, %v1886
        %v1915 = vpack.c.b16 %v1891, %v1889
        %v1916 = vpack.c.b16 %v1892, %v1890
        %v1917 = vpack.c.b16 %v1895, %v1893
        %v1918 = vpack.c.b16 %v1896, %v1894
        %v1919 = vpack.c.b16 %v1899, %v1897
        %v1920 = vpack.c.b16 %v1900, %v1898
        %v1921 = vpack.c.b16 %v1903, %v1901
        %v1922 = vpack.c.b16 %v1904, %v1902
        %v1923 = vpack.c.b16 %v1907, %v1905
        %v1924 = vpack.c.b16 %v1908, %v1906
        %1941 = vmatpush.bf16.msra.mxu0 %v1923
        %1942 = vmatpush.bf16.msra.mxu0 %v1921
        %1943 = vmatpush.bf16.msra.mxu0 %v1919
        %1944 = vmatpush.bf16.msra.mxu0 %v1917
        %1945 = vmatpush.bf16.msra.mxu0 %v1915
        %1946 = vmatpush.bf16.msra.mxu0 %v1913
        %1947 = vmatpush.bf16.msra.mxu0 %v1911
        %1948 = vmatpush.bf16.msra.mxu0 %v1909
        %1949 = vmatmul.bf16.gmra.mxu0 %v1844
        %v1950 = vpop.f32.mrf.mxu0
        %v1951 = vadd.f32 0.0, %v1950
        %v1952 = vpop.f32.mrf.mxu0
        %1953 = vdwg.mxu0
        %1954 = vmatpush.bf16.msra.mxu0 %v1924
        %1955 = vmatpush.bf16.msra.mxu0 %v1922
        %1956 = vmatpush.bf16.msra.mxu0 %v1920
        %1957 = vmatpush.bf16.msra.mxu0 %v1918
        %1958 = vmatpush.bf16.msra.mxu0 %v1916
        %1959 = vmatpush.bf16.msra.mxu0 %v1914
        %1960 = vmatpush.bf16.msra.mxu0 %v1912
        %1961 = vmatpush.bf16.msra.mxu0 %v1910
        %1962 = vmatmul.bf16.gmra.mxu0 %v1844
        %v1963 = vpop.f32.mrf.mxu0
        %v1964 = vadd.f32 0.0, %v1963
        %v1965 = vpop.f32.mrf.mxu0
        %1966 = vdwg.mxu0
        %v1967 = vadd.f32 %v1842, %v1951
        %v1968 = vadd.f32 %v1843, %v1964
        %v1969 = vld [vmem:[%s5 + $0x200] sm:$0xff]
        %v1970 = vld [vmem:[%s5 + $0x208] sm:$0xff]
        %v1971 = vld [vmem:[%s5 + $0x210] sm:$0xff]
        %v1972 = vld [vmem:[%s5 + $0x218] sm:$0xff]
        %v1973 = vld [vmem:[%s5 + $0x220] sm:$0xff]
        %v1974 = vld [vmem:[%s5 + $0x228] sm:$0xff]
        %v1975 = vld [vmem:[%s5 + $0x230] sm:$0xff]
        %v1976 = vld [vmem:[%s5 + $0x238] sm:$0xff]
        %v1977 = vld [vmem:[%s5 + $0x240] sm:$0xff]
        %v1978 = vld [vmem:[%s5 + $0x248] sm:$0xff]
        %v1979 = vld [vmem:[%s5 + $0x250] sm:$0xff]
        %v1980 = vld [vmem:[%s5 + $0x258] sm:$0xff]
        %v1981 = vld [vmem:[%s5 + $0x260] sm:$0xff]
        %v1982 = vld [vmem:[%s5 + $0x268] sm:$0xff]
        %v1983 = vld [vmem:[%s5 + $0x270] sm:$0xff]
        %v1984 = vld [vmem:[%s5 + $0x278] sm:$0xff]
        %v1986 = vshrl.u32 %v1844, 16
        %v2005 = vunpack.c.l.b16 %v1969
        %v2006 = vunpack.c.h.b16 %v1969
        %v2007 = vunpack.c.l.b16 %v1970
        %v2008 = vunpack.c.h.b16 %v1970
        %v2009 = vunpack.c.l.b16 %v1971
        %v2010 = vunpack.c.h.b16 %v1971
        %v2011 = vunpack.c.l.b16 %v1972
        %v2012 = vunpack.c.h.b16 %v1972
        %v2013 = vunpack.c.l.b16 %v1973
        %v2014 = vunpack.c.h.b16 %v1973
        %v2015 = vunpack.c.l.b16 %v1974
        %v2016 = vunpack.c.h.b16 %v1974
        %v2017 = vunpack.c.l.b16 %v1975
        %v2018 = vunpack.c.h.b16 %v1975
        %v2019 = vunpack.c.l.b16 %v1976
        %v2020 = vunpack.c.h.b16 %v1976
        %v2021 = vunpack.c.l.b16 %v1977
        %v2022 = vunpack.c.h.b16 %v1977
        %v2023 = vunpack.c.l.b16 %v1978
        %v2024 = vunpack.c.h.b16 %v1978
        %v2025 = vunpack.c.l.b16 %v1979
        %v2026 = vunpack.c.h.b16 %v1979
        %v2027 = vunpack.c.l.b16 %v1980
        %v2028 = vunpack.c.h.b16 %v1980
        %v2029 = vunpack.c.l.b16 %v1981
        %v2030 = vunpack.c.h.b16 %v1981
        %v2031 = vunpack.c.l.b16 %v1982
        %v2032 = vunpack.c.h.b16 %v1982
        %v2033 = vunpack.c.l.b16 %v1983
        %v2034 = vunpack.c.h.b16 %v1983
        %v2035 = vunpack.c.l.b16 %v1984
        %v2036 = vunpack.c.h.b16 %v1984
        %v2037 = vpack.c.b16 %v2007, %v2005
        %v2038 = vpack.c.b16 %v2008, %v2006
        %v2039 = vpack.c.b16 %v2011, %v2009
        %v2040 = vpack.c.b16 %v2012, %v2010
        %v2041 = vpack.c.b16 %v2015, %v2013
        %v2042 = vpack.c.b16 %v2016, %v2014
        %v2043 = vpack.c.b16 %v2019, %v2017
        %v2044 = vpack.c.b16 %v2020, %v2018
        %v2045 = vpack.c.b16 %v2023, %v2021
        %v2046 = vpack.c.b16 %v2024, %v2022
        %v2047 = vpack.c.b16 %v2027, %v2025
        %v2048 = vpack.c.b16 %v2028, %v2026
        %v2049 = vpack.c.b16 %v2031, %v2029
        %v2050 = vpack.c.b16 %v2032, %v2030
        %v2051 = vpack.c.b16 %v2035, %v2033
        %v2052 = vpack.c.b16 %v2036, %v2034
        %2069 = vmatpush.bf16.msra.mxu0 %v2051
        %2070 = vmatpush.bf16.msra.mxu0 %v2049
        %2071 = vmatpush.bf16.msra.mxu0 %v2047
        %2072 = vmatpush.bf16.msra.mxu0 %v2045
        %2073 = vmatpush.bf16.msra.mxu0 %v2043
        %2074 = vmatpush.bf16.msra.mxu0 %v2041
        %2075 = vmatpush.bf16.msra.mxu0 %v2039
        %2076 = vmatpush.bf16.msra.mxu0 %v2037
        %2077 = vmatmul.bf16.gmra.mxu0 %v1986
        %v2078 = vpop.f32.mrf.mxu0
        %v2079 = vadd.f32 0.0, %v2078
        %v2080 = vpop.f32.mrf.mxu0
        %2081 = vdwg.mxu0
        %2082 = vmatpush.bf16.msra.mxu0 %v2052
        %2083 = vmatpush.bf16.msra.mxu0 %v2050
        %2084 = vmatpush.bf16.msra.mxu0 %v2048
        %2085 = vmatpush.bf16.msra.mxu0 %v2046
        %2086 = vmatpush.bf16.msra.mxu0 %v2044
        %2087 = vmatpush.bf16.msra.mxu0 %v2042
        %2088 = vmatpush.bf16.msra.mxu0 %v2040
        %2089 = vmatpush.bf16.msra.mxu0 %v2038
        %2090 = vmatmul.bf16.gmra.mxu0 %v1986
        %v2091 = vpop.f32.mrf.mxu0
        %v2092 = vadd.f32 0.0, %v2091
        %v2093 = vpop.f32.mrf.mxu0
        %2094 = vdwg.mxu0
        %v2095 = vadd.f32 %v1967, %v2079
        %v2096 = vadd.f32 %v1968, %v2092
        %v2097 = vld [vmem:[%s5 + $0x280] sm:$0xff]
        %v2098 = vld [vmem:[%s5 + $0x288] sm:$0xff]
        %v2099 = vld [vmem:[%s5 + $0x290] sm:$0xff]
        %v2100 = vld [vmem:[%s5 + $0x298] sm:$0xff]
        %v2101 = vld [vmem:[%s5 + $0x2a0] sm:$0xff]
        %v2102 = vld [vmem:[%s5 + $0x2a8] sm:$0xff]
        %v2103 = vld [vmem:[%s5 + $0x2b0] sm:$0xff]
        %v2104 = vld [vmem:[%s5 + $0x2b8] sm:$0xff]
        %v2105 = vld [vmem:[%s5 + $0x2c0] sm:$0xff]
        %v2106 = vld [vmem:[%s5 + $0x2c8] sm:$0xff]
        %v2107 = vld [vmem:[%s5 + $0x2d0] sm:$0xff]
        %v2108 = vld [vmem:[%s5 + $0x2d8] sm:$0xff]
        %v2109 = vld [vmem:[%s5 + $0x2e0] sm:$0xff]
        %v2110 = vld [vmem:[%s5 + $0x2e8] sm:$0xff]
        %v2111 = vld [vmem:[%s5 + $0x2f0] sm:$0xff]
        %v2112 = vld [vmem:[%s5 + $0x2f8] sm:$0xff]
        %v2114 = vrot.slane %v1844, 1
        %v2132 = vunpack.c.l.b16 %v2097
        %v2133 = vunpack.c.h.b16 %v2097
        %v2134 = vunpack.c.l.b16 %v2098
        %v2135 = vunpack.c.h.b16 %v2098
        %v2136 = vunpack.c.l.b16 %v2099
        %v2137 = vunpack.c.h.b16 %v2099
        %v2138 = vunpack.c.l.b16 %v2100
        %v2139 = vunpack.c.h.b16 %v2100
        %v2140 = vunpack.c.l.b16 %v2101
        %v2141 = vunpack.c.h.b16 %v2101
        %v2142 = vunpack.c.l.b16 %v2102
        %v2143 = vunpack.c.h.b16 %v2102
        %v2144 = vunpack.c.l.b16 %v2103
        %v2145 = vunpack.c.h.b16 %v2103
        %v2146 = vunpack.c.l.b16 %v2104
        %v2147 = vunpack.c.h.b16 %v2104
        %v2148 = vunpack.c.l.b16 %v2105
        %v2149 = vunpack.c.h.b16 %v2105
        %v2150 = vunpack.c.l.b16 %v2106
        %v2151 = vunpack.c.h.b16 %v2106
        %v2152 = vunpack.c.l.b16 %v2107
        %v2153 = vunpack.c.h.b16 %v2107
        %v2154 = vunpack.c.l.b16 %v2108
        %v2155 = vunpack.c.h.b16 %v2108
        %v2156 = vunpack.c.l.b16 %v2109
        %v2157 = vunpack.c.h.b16 %v2109
        %v2158 = vunpack.c.l.b16 %v2110
        %v2159 = vunpack.c.h.b16 %v2110
        %v2160 = vunpack.c.l.b16 %v2111
        %v2161 = vunpack.c.h.b16 %v2111
        %v2162 = vunpack.c.l.b16 %v2112
        %v2163 = vunpack.c.h.b16 %v2112
        %v2164 = vpack.c.b16 %v2134, %v2132
        %v2165 = vpack.c.b16 %v2135, %v2133
        %v2166 = vpack.c.b16 %v2138, %v2136
        %v2167 = vpack.c.b16 %v2139, %v2137
        %v2168 = vpack.c.b16 %v2142, %v2140
        %v2169 = vpack.c.b16 %v2143, %v2141
        %v2170 = vpack.c.b16 %v2146, %v2144
        %v2171 = vpack.c.b16 %v2147, %v2145
        %v2172 = vpack.c.b16 %v2150, %v2148
        %v2173 = vpack.c.b16 %v2151, %v2149
        %v2174 = vpack.c.b16 %v2154, %v2152
        %v2175 = vpack.c.b16 %v2155, %v2153
        %v2176 = vpack.c.b16 %v2158, %v2156
        %v2177 = vpack.c.b16 %v2159, %v2157
        %v2178 = vpack.c.b16 %v2162, %v2160
        %v2179 = vpack.c.b16 %v2163, %v2161
        %2196 = vmatpush.bf16.msra.mxu0 %v2178
        %2197 = vmatpush.bf16.msra.mxu0 %v2176
        %2198 = vmatpush.bf16.msra.mxu0 %v2174
        %2199 = vmatpush.bf16.msra.mxu0 %v2172
        %2200 = vmatpush.bf16.msra.mxu0 %v2170
        %2201 = vmatpush.bf16.msra.mxu0 %v2168
        %2202 = vmatpush.bf16.msra.mxu0 %v2166
        %2203 = vmatpush.bf16.msra.mxu0 %v2164
        %2204 = vmatmul.bf16.gmra.mxu0 %v2114
        %v2205 = vpop.f32.mrf.mxu0
        %v2206 = vadd.f32 0.0, %v2205
        %v2207 = vpop.f32.mrf.mxu0
        %2208 = vdwg.mxu0
        %2209 = vmatpush.bf16.msra.mxu0 %v2179
        %2210 = vmatpush.bf16.msra.mxu0 %v2177
        %2211 = vmatpush.bf16.msra.mxu0 %v2175
        %2212 = vmatpush.bf16.msra.mxu0 %v2173
        %2213 = vmatpush.bf16.msra.mxu0 %v2171
        %2214 = vmatpush.bf16.msra.mxu0 %v2169
        %2215 = vmatpush.bf16.msra.mxu0 %v2167
        %2216 = vmatpush.bf16.msra.mxu0 %v2165
        %2217 = vmatmul.bf16.gmra.mxu0 %v2114
        %v2218 = vpop.f32.mrf.mxu0
        %v2219 = vadd.f32 0.0, %v2218
        %v2220 = vpop.f32.mrf.mxu0
        %2221 = vdwg.mxu0
        %v2222 = vadd.f32 %v2095, %v2206
        %v2223 = vadd.f32 %v2096, %v2219
        %v2224 = vpack.c.bf16 %v1467, %v1467
        %v2225 = vld [vmem:[%s5 + $0x300] sm:$0xff]
        %v2226 = vld [vmem:[%s5 + $0x308] sm:$0xff]
        %v2227 = vld [vmem:[%s5 + $0x310] sm:$0xff]
        %v2228 = vld [vmem:[%s5 + $0x318] sm:$0xff]
        %v2229 = vld [vmem:[%s5 + $0x320] sm:$0xff]
        %v2230 = vld [vmem:[%s5 + $0x328] sm:$0xff]
        %v2231 = vld [vmem:[%s5 + $0x330] sm:$0xff]
        %v2232 = vld [vmem:[%s5 + $0x338] sm:$0xff]
        %v2233 = vld [vmem:[%s5 + $0x340] sm:$0xff]
        %v2234 = vld [vmem:[%s5 + $0x348] sm:$0xff]
        %v2235 = vld [vmem:[%s5 + $0x350] sm:$0xff]
        %v2236 = vld [vmem:[%s5 + $0x358] sm:$0xff]
        %v2237 = vld [vmem:[%s5 + $0x360] sm:$0xff]
        %v2238 = vld [vmem:[%s5 + $0x368] sm:$0xff]
        %v2239 = vld [vmem:[%s5 + $0x370] sm:$0xff]
        %v2240 = vld [vmem:[%s5 + $0x378] sm:$0xff]
        %v2257 = vunpack.c.l.b16 %v2225
        %v2258 = vunpack.c.h.b16 %v2225
        %v2259 = vunpack.c.l.b16 %v2226
        %v2260 = vunpack.c.h.b16 %v2226
        %v2261 = vunpack.c.l.b16 %v2227
        %v2262 = vunpack.c.h.b16 %v2227
        %v2263 = vunpack.c.l.b16 %v2228
        %v2264 = vunpack.c.h.b16 %v2228
        %v2265 = vunpack.c.l.b16 %v2229
        %v2266 = vunpack.c.h.b16 %v2229
        %v2267 = vunpack.c.l.b16 %v2230
        %v2268 = vunpack.c.h.b16 %v2230
        %v2269 = vunpack.c.l.b16 %v2231
        %v2270 = vunpack.c.h.b16 %v2231
        %v2271 = vunpack.c.l.b16 %v2232
        %v2272 = vunpack.c.h.b16 %v2232
        %v2273 = vunpack.c.l.b16 %v2233
        %v2274 = vunpack.c.h.b16 %v2233
        %v2275 = vunpack.c.l.b16 %v2234
        %v2276 = vunpack.c.h.b16 %v2234
        %v2277 = vunpack.c.l.b16 %v2235
        %v2278 = vunpack.c.h.b16 %v2235
        %v2279 = vunpack.c.l.b16 %v2236
        %v2280 = vunpack.c.h.b16 %v2236
        %v2281 = vunpack.c.l.b16 %v2237
        %v2282 = vunpack.c.h.b16 %v2237
        %v2283 = vunpack.c.l.b16 %v2238
        %v2284 = vunpack.c.h.b16 %v2238
        %v2285 = vunpack.c.l.b16 %v2239
        %v2286 = vunpack.c.h.b16 %v2239
        %v2287 = vunpack.c.l.b16 %v2240
        %v2288 = vunpack.c.h.b16 %v2240
        %v2289 = vpack.c.b16 %v2259, %v2257
        %v2290 = vpack.c.b16 %v2260, %v2258
        %v2291 = vpack.c.b16 %v2263, %v2261
        %v2292 = vpack.c.b16 %v2264, %v2262
        %v2293 = vpack.c.b16 %v2267, %v2265
        %v2294 = vpack.c.b16 %v2268, %v2266
        %v2295 = vpack.c.b16 %v2271, %v2269
        %v2296 = vpack.c.b16 %v2272, %v2270
        %v2297 = vpack.c.b16 %v2275, %v2273
        %v2298 = vpack.c.b16 %v2276, %v2274
        %v2299 = vpack.c.b16 %v2279, %v2277
        %v2300 = vpack.c.b16 %v2280, %v2278
        %v2301 = vpack.c.b16 %v2283, %v2281
        %v2302 = vpack.c.b16 %v2284, %v2282
        %v2303 = vpack.c.b16 %v2287, %v2285
        %v2304 = vpack.c.b16 %v2288, %v2286
        %2321 = vmatpush.bf16.msra.mxu0 %v2303
        %2322 = vmatpush.bf16.msra.mxu0 %v2301
        %2323 = vmatpush.bf16.msra.mxu0 %v2299
        %2324 = vmatpush.bf16.msra.mxu0 %v2297
        %2325 = vmatpush.bf16.msra.mxu0 %v2295
        %2326 = vmatpush.bf16.msra.mxu0 %v2293
        %2327 = vmatpush.bf16.msra.mxu0 %v2291
        %2328 = vmatpush.bf16.msra.mxu0 %v2289
        %2329 = vmatmul.bf16.gmra.mxu0 %v2224
        %v2330 = vpop.f32.mrf.mxu0
        %v2331 = vadd.f32 0.0, %v2330
        %v2332 = vpop.f32.mrf.mxu0
        %2333 = vdwg.mxu0
        %2334 = vmatpush.bf16.msra.mxu0 %v2304
        %2335 = vmatpush.bf16.msra.mxu0 %v2302
        %2336 = vmatpush.bf16.msra.mxu0 %v2300
        %2337 = vmatpush.bf16.msra.mxu0 %v2298
        %2338 = vmatpush.bf16.msra.mxu0 %v2296
        %2339 = vmatpush.bf16.msra.mxu0 %v2294
        %2340 = vmatpush.bf16.msra.mxu0 %v2292
        %2341 = vmatpush.bf16.msra.mxu0 %v2290
        %2342 = vmatmul.bf16.gmra.mxu0 %v2224
        %v2343 = vpop.f32.mrf.mxu0
        %v2344 = vadd.f32 0.0, %v2343
        %v2345 = vpop.f32.mrf.mxu0
        %2346 = vdwg.mxu0
        %v2347 = vadd.f32 %v2222, %v2331
        %v2348 = vadd.f32 %v2223, %v2344
        %v2349 = vld [vmem:[%s5 + $0x380] sm:$0xff]
        %v2350 = vld [vmem:[%s5 + $0x388] sm:$0xff]
        %v2351 = vld [vmem:[%s5 + $0x390] sm:$0xff]
        %v2352 = vld [vmem:[%s5 + $0x398] sm:$0xff]
        %v2353 = vld [vmem:[%s5 + $0x3a0] sm:$0xff]
        %v2354 = vld [vmem:[%s5 + $0x3a8] sm:$0xff]
        %v2355 = vld [vmem:[%s5 + $0x3b0] sm:$0xff]
        %v2356 = vld [vmem:[%s5 + $0x3b8] sm:$0xff]
        %v2357 = vld [vmem:[%s5 + $0x3c0] sm:$0xff]
        %v2358 = vld [vmem:[%s5 + $0x3c8] sm:$0xff]
        %v2359 = vld [vmem:[%s5 + $0x3d0] sm:$0xff]
        %v2360 = vld [vmem:[%s5 + $0x3d8] sm:$0xff]
        %v2361 = vld [vmem:[%s5 + $0x3e0] sm:$0xff]
        %v2362 = vld [vmem:[%s5 + $0x3e8] sm:$0xff]
        %v2363 = vld [vmem:[%s5 + $0x3f0] sm:$0xff]
        %v2364 = vld [vmem:[%s5 + $0x3f8] sm:$0xff]
        %v2366 = vshrl.u32 %v2224, 16
        %v2385 = vunpack.c.l.b16 %v2349
        %v2386 = vunpack.c.h.b16 %v2349
        %v2387 = vunpack.c.l.b16 %v2350
        %v2388 = vunpack.c.h.b16 %v2350
        %v2389 = vunpack.c.l.b16 %v2351
        %v2390 = vunpack.c.h.b16 %v2351
        %v2391 = vunpack.c.l.b16 %v2352
        %v2392 = vunpack.c.h.b16 %v2352
        %v2393 = vunpack.c.l.b16 %v2353
        %v2394 = vunpack.c.h.b16 %v2353
        %v2395 = vunpack.c.l.b16 %v2354
        %v2396 = vunpack.c.h.b16 %v2354
        %v2397 = vunpack.c.l.b16 %v2355
        %v2398 = vunpack.c.h.b16 %v2355
        %v2399 = vunpack.c.l.b16 %v2356
        %v2400 = vunpack.c.h.b16 %v2356
        %v2401 = vunpack.c.l.b16 %v2357
        %v2402 = vunpack.c.h.b16 %v2357
        %v2403 = vunpack.c.l.b16 %v2358
        %v2404 = vunpack.c.h.b16 %v2358
        %v2405 = vunpack.c.l.b16 %v2359
        %v2406 = vunpack.c.h.b16 %v2359
        %v2407 = vunpack.c.l.b16 %v2360
        %v2408 = vunpack.c.h.b16 %v2360
        %v2409 = vunpack.c.l.b16 %v2361
        %v2410 = vunpack.c.h.b16 %v2361
        %v2411 = vunpack.c.l.b16 %v2362
        %v2412 = vunpack.c.h.b16 %v2362
        %v2413 = vunpack.c.l.b16 %v2363
        %v2414 = vunpack.c.h.b16 %v2363
        %v2415 = vunpack.c.l.b16 %v2364
        %v2416 = vunpack.c.h.b16 %v2364
        %v2417 = vpack.c.b16 %v2387, %v2385
        %v2418 = vpack.c.b16 %v2388, %v2386
        %v2419 = vpack.c.b16 %v2391, %v2389
        %v2420 = vpack.c.b16 %v2392, %v2390
        %v2421 = vpack.c.b16 %v2395, %v2393
        %v2422 = vpack.c.b16 %v2396, %v2394
        %v2423 = vpack.c.b16 %v2399, %v2397
        %v2424 = vpack.c.b16 %v2400, %v2398
        %v2425 = vpack.c.b16 %v2403, %v2401
        %v2426 = vpack.c.b16 %v2404, %v2402
        %v2427 = vpack.c.b16 %v2407, %v2405
        %v2428 = vpack.c.b16 %v2408, %v2406
        %v2429 = vpack.c.b16 %v2411, %v2409
        %v2430 = vpack.c.b16 %v2412, %v2410
        %v2431 = vpack.c.b16 %v2415, %v2413
        %v2432 = vpack.c.b16 %v2416, %v2414
        %2449 = vmatpush.bf16.msra.mxu0 %v2431
        %2450 = vmatpush.bf16.msra.mxu0 %v2429
        %2451 = vmatpush.bf16.msra.mxu0 %v2427
        %2452 = vmatpush.bf16.msra.mxu0 %v2425
        %2453 = vmatpush.bf16.msra.mxu0 %v2423
        %2454 = vmatpush.bf16.msra.mxu0 %v2421
        %2455 = vmatpush.bf16.msra.mxu0 %v2419
        %2456 = vmatpush.bf16.msra.mxu0 %v2417
        %2457 = vmatmul.bf16.gmra.mxu0 %v2366
        %v2458 = vpop.f32.mrf.mxu0
        %v2459 = vadd.f32 0.0, %v2458
        %v2460 = vpop.f32.mrf.mxu0
        %2461 = vdwg.mxu0
        %2462 = vmatpush.bf16.msra.mxu0 %v2432
        %2463 = vmatpush.bf16.msra.mxu0 %v2430
        %2464 = vmatpush.bf16.msra.mxu0 %v2428
        %2465 = vmatpush.bf16.msra.mxu0 %v2426
        %2466 = vmatpush.bf16.msra.mxu0 %v2424
        %2467 = vmatpush.bf16.msra.mxu0 %v2422
        %2468 = vmatpush.bf16.msra.mxu0 %v2420
        %2469 = vmatpush.bf16.msra.mxu0 %v2418
        %2470 = vmatmul.bf16.gmra.mxu0 %v2366
        %v2471 = vpop.f32.mrf.mxu0
        %v2472 = vadd.f32 0.0, %v2471
        %v2473 = vpop.f32.mrf.mxu0
        %2474 = vdwg.mxu0
        %v2475 = vadd.f32 %v2347, %v2459
        %v2476 = vadd.f32 %v2348, %v2472
        %v2477 = vld [vmem:[%s5 + $0x400] sm:$0xff]
        %v2478 = vld [vmem:[%s5 + $0x408] sm:$0xff]
        %v2479 = vld [vmem:[%s5 + $0x410] sm:$0xff]
        %v2480 = vld [vmem:[%s5 + $0x418] sm:$0xff]
        %v2481 = vld [vmem:[%s5 + $0x420] sm:$0xff]
        %v2482 = vld [vmem:[%s5 + $0x428] sm:$0xff]
        %v2483 = vld [vmem:[%s5 + $0x430] sm:$0xff]
        %v2484 = vld [vmem:[%s5 + $0x438] sm:$0xff]
        %v2485 = vld [vmem:[%s5 + $0x440] sm:$0xff]
        %v2486 = vld [vmem:[%s5 + $0x448] sm:$0xff]
        %v2487 = vld [vmem:[%s5 + $0x450] sm:$0xff]
        %v2488 = vld [vmem:[%s5 + $0x458] sm:$0xff]
        %v2489 = vld [vmem:[%s5 + $0x460] sm:$0xff]
        %v2490 = vld [vmem:[%s5 + $0x468] sm:$0xff]
        %v2491 = vld [vmem:[%s5 + $0x470] sm:$0xff]
        %v2492 = vld [vmem:[%s5 + $0x478] sm:$0xff]
        %v2494 = vrot.slane %v2224, 1
        %v2512 = vunpack.c.l.b16 %v2477
        %v2513 = vunpack.c.h.b16 %v2477
        %v2514 = vunpack.c.l.b16 %v2478
        %v2515 = vunpack.c.h.b16 %v2478
        %v2516 = vunpack.c.l.b16 %v2479
        %v2517 = vunpack.c.h.b16 %v2479
        %v2518 = vunpack.c.l.b16 %v2480
        %v2519 = vunpack.c.h.b16 %v2480
        %v2520 = vunpack.c.l.b16 %v2481
        %v2521 = vunpack.c.h.b16 %v2481
        %v2522 = vunpack.c.l.b16 %v2482
        %v2523 = vunpack.c.h.b16 %v2482
        %v2524 = vunpack.c.l.b16 %v2483
        %v2525 = vunpack.c.h.b16 %v2483
        %v2526 = vunpack.c.l.b16 %v2484
        %v2527 = vunpack.c.h.b16 %v2484
        %v2528 = vunpack.c.l.b16 %v2485
        %v2529 = vunpack.c.h.b16 %v2485
        %v2530 = vunpack.c.l.b16 %v2486
        %v2531 = vunpack.c.h.b16 %v2486
        %v2532 = vunpack.c.l.b16 %v2487
        %v2533 = vunpack.c.h.b16 %v2487
        %v2534 = vunpack.c.l.b16 %v2488
        %v2535 = vunpack.c.h.b16 %v2488
        %v2536 = vunpack.c.l.b16 %v2489
        %v2537 = vunpack.c.h.b16 %v2489
        %v2538 = vunpack.c.l.b16 %v2490
        %v2539 = vunpack.c.h.b16 %v2490
        %v2540 = vunpack.c.l.b16 %v2491
        %v2541 = vunpack.c.h.b16 %v2491
        %v2542 = vunpack.c.l.b16 %v2492
        %v2543 = vunpack.c.h.b16 %v2492
        %v2544 = vpack.c.b16 %v2514, %v2512
        %v2545 = vpack.c.b16 %v2515, %v2513
        %v2546 = vpack.c.b16 %v2518, %v2516
        %v2547 = vpack.c.b16 %v2519, %v2517
        %v2548 = vpack.c.b16 %v2522, %v2520
        %v2549 = vpack.c.b16 %v2523, %v2521
        %v2550 = vpack.c.b16 %v2526, %v2524
        %v2551 = vpack.c.b16 %v2527, %v2525
        %v2552 = vpack.c.b16 %v2530, %v2528
        %v2553 = vpack.c.b16 %v2531, %v2529
        %v2554 = vpack.c.b16 %v2534, %v2532
        %v2555 = vpack.c.b16 %v2535, %v2533
        %v2556 = vpack.c.b16 %v2538, %v2536
        %v2557 = vpack.c.b16 %v2539, %v2537
        %v2558 = vpack.c.b16 %v2542, %v2540
        %v2559 = vpack.c.b16 %v2543, %v2541
        %2576 = vmatpush.bf16.msra.mxu0 %v2558
        %2577 = vmatpush.bf16.msra.mxu0 %v2556
        %2578 = vmatpush.bf16.msra.mxu0 %v2554
        %2579 = vmatpush.bf16.msra.mxu0 %v2552
        %2580 = vmatpush.bf16.msra.mxu0 %v2550
        %2581 = vmatpush.bf16.msra.mxu0 %v2548
        %2582 = vmatpush.bf16.msra.mxu0 %v2546
        %2583 = vmatpush.bf16.msra.mxu0 %v2544
        %2584 = vmatmul.bf16.gmra.mxu0 %v2494
        %v2585 = vpop.f32.mrf.mxu0
        %v2586 = vadd.f32 0.0, %v2585
        %v2587 = vpop.f32.mrf.mxu0
        %2588 = vdwg.mxu0
        %2589 = vmatpush.bf16.msra.mxu0 %v2559
        %2590 = vmatpush.bf16.msra.mxu0 %v2557
        %2591 = vmatpush.bf16.msra.mxu0 %v2555
        %2592 = vmatpush.bf16.msra.mxu0 %v2553
        %2593 = vmatpush.bf16.msra.mxu0 %v2551
        %2594 = vmatpush.bf16.msra.mxu0 %v2549
        %2595 = vmatpush.bf16.msra.mxu0 %v2547
        %2596 = vmatpush.bf16.msra.mxu0 %v2545
        %2597 = vmatmul.bf16.gmra.mxu0 %v2494
        %v2598 = vpop.f32.mrf.mxu0
        %v2599 = vadd.f32 0.0, %v2598
        %v2600 = vpop.f32.mrf.mxu0
        %2601 = vdwg.mxu0
        %v2602 = vadd.f32 %v2475, %v2586
        %v2603 = vadd.f32 %v2476, %v2599
        %v2604 = vld [vmem:[%s6] sm:$0x3]
        %v2606 = vperm.slane %v2604, 0
        %v2607 = vperm.slane %v2604, 1
        %v2610 = vadd.f32 %v2602, %v2606
        %v2611 = vadd.f32 %v2603, %v2607
        %v2612 = vmax.f32 %v2610, 0.0
        %v2613 = vmax.f32 %v2611, 0.0
        %v2614 = vpack.c.bf16 %v2612, %v2612
        %v2615 = vpack.c.bf16 %v2613, %v2613
        %v2616 = vld [vmem:[%s7] sm:$0xff]
        %v2617 = vld [vmem:[%s7 + $0x8] sm:$0xff]
        %v2618 = vld [vmem:[%s7 + $0x10] sm:$0xff]
        %v2619 = vld [vmem:[%s7 + $0x18] sm:$0xff]
        %v2620 = vld [vmem:[%s7 + $0x20] sm:$0xff]
        %v2621 = vld [vmem:[%s7 + $0x28] sm:$0xff]
        %v2622 = vld [vmem:[%s7 + $0x30] sm:$0xff]
        %v2623 = vld [vmem:[%s7 + $0x38] sm:$0xff]
        %v2624 = vld [vmem:[%s7 + $0x40] sm:$0xff]
        %v2625 = vld [vmem:[%s7 + $0x48] sm:$0xff]
        %v2626 = vld [vmem:[%s7 + $0x50] sm:$0xff]
        %v2627 = vld [vmem:[%s7 + $0x58] sm:$0xff]
        %v2628 = vld [vmem:[%s7 + $0x60] sm:$0xff]
        %v2629 = vld [vmem:[%s7 + $0x68] sm:$0xff]
        %v2630 = vld [vmem:[%s7 + $0x70] sm:$0xff]
        %v2631 = vld [vmem:[%s7 + $0x78] sm:$0xff]
        %v2632 = vld [vmem:[%s7 + $0x80] sm:$0xff]
        %v2633 = vld [vmem:[%s7 + $0x88] sm:$0xff]
        %v2634 = vld [vmem:[%s7 + $0x90] sm:$0xff]
        %v2635 = vld [vmem:[%s7 + $0x98] sm:$0xff]
        %v2636 = vld [vmem:[%s7 + $0xa0] sm:$0xff]
        %v2637 = vld [vmem:[%s7 + $0xa8] sm:$0xff]
        %v2638 = vld [vmem:[%s7 + $0xb0] sm:$0xff]
        %v2639 = vld [vmem:[%s7 + $0xb8] sm:$0xff]
        %v2640 = vld [vmem:[%s7 + $0xc0] sm:$0xff]
        %v2641 = vld [vmem:[%s7 + $0xc8] sm:$0xff]
        %v2642 = vld [vmem:[%s7 + $0xd0] sm:$0xff]
        %v2643 = vld [vmem:[%s7 + $0xd8] sm:$0xff]
        %v2644 = vld [vmem:[%s7 + $0xe0] sm:$0xff]
        %v2645 = vld [vmem:[%s7 + $0xe8] sm:$0xff]
        %v2646 = vld [vmem:[%s7 + $0xf0] sm:$0xff]
        %v2647 = vld [vmem:[%s7 + $0xf8] sm:$0xff]
        %v2648 = vld [vmem:[%s7 + $0x100] sm:$0xff]
        %v2649 = vld [vmem:[%s7 + $0x108] sm:$0xff]
        %v2650 = vld [vmem:[%s7 + $0x110] sm:$0xff]
        %v2651 = vld [vmem:[%s7 + $0x118] sm:$0xff]
        %v2652 = vld [vmem:[%s7 + $0x120] sm:$0xff]
        %v2653 = vld [vmem:[%s7 + $0x128] sm:$0xff]
        %v2654 = vld [vmem:[%s7 + $0x130] sm:$0xff]
        %v2655 = vld [vmem:[%s7 + $0x138] sm:$0xff]
        %v2656 = vld [vmem:[%s7 + $0x140] sm:$0xff]
        %v2657 = vld [vmem:[%s7 + $0x148] sm:$0xff]
        %v2658 = vld [vmem:[%s7 + $0x150] sm:$0xff]
        %v2659 = vld [vmem:[%s7 + $0x158] sm:$0xff]
        %v2660 = vld [vmem:[%s7 + $0x160] sm:$0xff]
        %v2661 = vld [vmem:[%s7 + $0x168] sm:$0xff]
        %v2662 = vld [vmem:[%s7 + $0x170] sm:$0xff]
        %v2663 = vld [vmem:[%s7 + $0x178] sm:$0xff]
        %v2664 = vld [vmem:[%s7 + $0x180] sm:$0xff]
        %v2665 = vld [vmem:[%s7 + $0x188] sm:$0xff]
        %v2666 = vld [vmem:[%s7 + $0x190] sm:$0xff]
        %v2667 = vld [vmem:[%s7 + $0x198] sm:$0xff]
        %v2668 = vld [vmem:[%s7 + $0x1a0] sm:$0xff]
        %v2669 = vld [vmem:[%s7 + $0x1a8] sm:$0xff]
        %v2670 = vld [vmem:[%s7 + $0x1b0] sm:$0xff]
        %v2671 = vld [vmem:[%s7 + $0x1b8] sm:$0xff]
        %v2672 = vld [vmem:[%s7 + $0x1c0] sm:$0xff]
        %v2673 = vld [vmem:[%s7 + $0x1c8] sm:$0xff]
        %v2674 = vld [vmem:[%s7 + $0x1d0] sm:$0xff]
        %v2675 = vld [vmem:[%s7 + $0x1d8] sm:$0xff]
        %v2676 = vld [vmem:[%s7 + $0x1e0] sm:$0xff]
        %v2677 = vld [vmem:[%s7 + $0x1e8] sm:$0xff]
        %v2678 = vld [vmem:[%s7 + $0x1f0] sm:$0xff]
        %v2679 = vld [vmem:[%s7 + $0x1f8] sm:$0xff]
        %v2680 = vld [vmem:[%s8] sm:$0xf]
        %v2745 = vunpack.c.l.b16 %v2616
        %v2746 = vunpack.c.h.b16 %v2616
        %v2747 = vunpack.c.l.b16 %v2617
        %v2748 = vunpack.c.h.b16 %v2617
        %v2749 = vunpack.c.l.b16 %v2618
        %v2750 = vunpack.c.h.b16 %v2618
        %v2751 = vunpack.c.l.b16 %v2619
        %v2752 = vunpack.c.h.b16 %v2619
        %v2753 = vunpack.c.l.b16 %v2620
        %v2754 = vunpack.c.h.b16 %v2620
        %v2755 = vunpack.c.l.b16 %v2621
        %v2756 = vunpack.c.h.b16 %v2621
        %v2757 = vunpack.c.l.b16 %v2622
        %v2758 = vunpack.c.h.b16 %v2622
        %v2759 = vunpack.c.l.b16 %v2623
        %v2760 = vunpack.c.h.b16 %v2623
        %v2761 = vunpack.c.l.b16 %v2624
        %v2762 = vunpack.c.h.b16 %v2624
        %v2763 = vunpack.c.l.b16 %v2625
        %v2764 = vunpack.c.h.b16 %v2625
        %v2765 = vunpack.c.l.b16 %v2626
        %v2766 = vunpack.c.h.b16 %v2626
        %v2767 = vunpack.c.l.b16 %v2627
        %v2768 = vunpack.c.h.b16 %v2627
        %v2769 = vunpack.c.l.b16 %v2628
        %v2770 = vunpack.c.h.b16 %v2628
        %v2771 = vunpack.c.l.b16 %v2629
        %v2772 = vunpack.c.h.b16 %v2629
        %v2773 = vunpack.c.l.b16 %v2630
        %v2774 = vunpack.c.h.b16 %v2630
        %v2775 = vunpack.c.l.b16 %v2631
        %v2776 = vunpack.c.h.b16 %v2631
        %v2777 = vunpack.c.l.b16 %v2632
        %v2778 = vunpack.c.h.b16 %v2632
        %v2779 = vunpack.c.l.b16 %v2633
        %v2780 = vunpack.c.h.b16 %v2633
        %v2781 = vunpack.c.l.b16 %v2634
        %v2782 = vunpack.c.h.b16 %v2634
        %v2783 = vunpack.c.l.b16 %v2635
        %v2784 = vunpack.c.h.b16 %v2635
        %v2785 = vunpack.c.l.b16 %v2636
        %v2786 = vunpack.c.h.b16 %v2636
        %v2787 = vunpack.c.l.b16 %v2637
        %v2788 = vunpack.c.h.b16 %v2637
        %v2789 = vunpack.c.l.b16 %v2638
        %v2790 = vunpack.c.h.b16 %v2638
        %v2791 = vunpack.c.l.b16 %v2639
        %v2792 = vunpack.c.h.b16 %v2639
        %v2793 = vunpack.c.l.b16 %v2640
        %v2794 = vunpack.c.h.b16 %v2640
        %v2795 = vunpack.c.l.b16 %v2641
        %v2796 = vunpack.c.h.b16 %v2641
        %v2797 = vunpack.c.l.b16 %v2642
        %v2798 = vunpack.c.h.b16 %v2642
        %v2799 = vunpack.c.l.b16 %v2643
        %v2800 = vunpack.c.h.b16 %v2643
        %v2801 = vunpack.c.l.b16 %v2644
        %v2802 = vunpack.c.h.b16 %v2644
        %v2803 = vunpack.c.l.b16 %v2645
        %v2804 = vunpack.c.h.b16 %v2645
        %v2805 = vunpack.c.l.b16 %v2646
        %v2806 = vunpack.c.h.b16 %v2646
        %v2807 = vunpack.c.l.b16 %v2647
        %v2808 = vunpack.c.h.b16 %v2647
        %v2809 = vunpack.c.l.b16 %v2648
        %v2810 = vunpack.c.h.b16 %v2648
        %v2811 = vunpack.c.l.b16 %v2649
        %v2812 = vunpack.c.h.b16 %v2649
        %v2813 = vunpack.c.l.b16 %v2650
        %v2814 = vunpack.c.h.b16 %v2650
        %v2815 = vunpack.c.l.b16 %v2651
        %v2816 = vunpack.c.h.b16 %v2651
        %v2817 = vunpack.c.l.b16 %v2652
        %v2818 = vunpack.c.h.b16 %v2652
        %v2819 = vunpack.c.l.b16 %v2653
        %v2820 = vunpack.c.h.b16 %v2653
        %v2821 = vunpack.c.l.b16 %v2654
        %v2822 = vunpack.c.h.b16 %v2654
        %v2823 = vunpack.c.l.b16 %v2655
        %v2824 = vunpack.c.h.b16 %v2655
        %v2825 = vunpack.c.l.b16 %v2656
        %v2826 = vunpack.c.h.b16 %v2656
        %v2827 = vunpack.c.l.b16 %v2657
        %v2828 = vunpack.c.h.b16 %v2657
        %v2829 = vunpack.c.l.b16 %v2658
        %v2830 = vunpack.c.h.b16 %v2658
        %v2831 = vunpack.c.l.b16 %v2659
        %v2832 = vunpack.c.h.b16 %v2659
        %v2833 = vunpack.c.l.b16 %v2660
        %v2834 = vunpack.c.h.b16 %v2660
        %v2835 = vunpack.c.l.b16 %v2661
        %v2836 = vunpack.c.h.b16 %v2661
        %v2837 = vunpack.c.l.b16 %v2662
        %v2838 = vunpack.c.h.b16 %v2662
        %v2839 = vunpack.c.l.b16 %v2663
        %v2840 = vunpack.c.h.b16 %v2663
        %v2841 = vunpack.c.l.b16 %v2664
        %v2842 = vunpack.c.h.b16 %v2664
        %v2843 = vunpack.c.l.b16 %v2665
        %v2844 = vunpack.c.h.b16 %v2665
        %v2845 = vunpack.c.l.b16 %v2666
        %v2846 = vunpack.c.h.b16 %v2666
        %v2847 = vunpack.c.l.b16 %v2667
        %v2848 = vunpack.c.h.b16 %v2667
        %v2849 = vunpack.c.l.b16 %v2668
        %v2850 = vunpack.c.h.b16 %v2668
        %v2851 = vunpack.c.l.b16 %v2669
        %v2852 = vunpack.c.h.b16 %v2669
        %v2853 = vunpack.c.l.b16 %v2670
        %v2854 = vunpack.c.h.b16 %v2670
        %v2855 = vunpack.c.l.b16 %v2671
        %v2856 = vunpack.c.h.b16 %v2671
        %v2857 = vunpack.c.l.b16 %v2672
        %v2858 = vunpack.c.h.b16 %v2672
        %v2859 = vunpack.c.l.b16 %v2673
        %v2860 = vunpack.c.h.b16 %v2673
        %v2861 = vunpack.c.l.b16 %v2674
        %v2862 = vunpack.c.h.b16 %v2674
        %v2863 = vunpack.c.l.b16 %v2675
        %v2864 = vunpack.c.h.b16 %v2675
        %v2865 = vunpack.c.l.b16 %v2676
        %v2866 = vunpack.c.h.b16 %v2676
        %v2867 = vunpack.c.l.b16 %v2677
        %v2868 = vunpack.c.h.b16 %v2677
        %v2869 = vunpack.c.l.b16 %v2678
        %v2870 = vunpack.c.h.b16 %v2678
        %v2871 = vunpack.c.l.b16 %v2679
        %v2872 = vunpack.c.h.b16 %v2679
        %v2873 = vpack.c.b16 %v2749, %v2745
        %v2874 = vpack.c.b16 %v2750, %v2746
        %v2875 = vpack.c.b16 %v2751, %v2747
        %v2876 = vpack.c.b16 %v2752, %v2748
        %v2877 = vpack.c.b16 %v2757, %v2753
        %v2878 = vpack.c.b16 %v2758, %v2754
        %v2879 = vpack.c.b16 %v2759, %v2755
        %v2880 = vpack.c.b16 %v2760, %v2756
        %v2881 = vpack.c.b16 %v2765, %v2761
        %v2882 = vpack.c.b16 %v2766, %v2762
        %v2883 = vpack.c.b16 %v2767, %v2763
        %v2884 = vpack.c.b16 %v2768, %v2764
        %v2885 = vpack.c.b16 %v2773, %v2769
        %v2886 = vpack.c.b16 %v2774, %v2770
        %v2887 = vpack.c.b16 %v2775, %v2771
        %v2888 = vpack.c.b16 %v2776, %v2772
        %v2889 = vpack.c.b16 %v2781, %v2777
        %v2890 = vpack.c.b16 %v2782, %v2778
        %v2891 = vpack.c.b16 %v2783, %v2779
        %v2892 = vpack.c.b16 %v2784, %v2780
        %v2893 = vpack.c.b16 %v2789, %v2785
        %v2894 = vpack.c.b16 %v2790, %v2786
        %v2895 = vpack.c.b16 %v2791, %v2787
        %v2896 = vpack.c.b16 %v2792, %v2788
        %v2897 = vpack.c.b16 %v2797, %v2793
        %v2898 = vpack.c.b16 %v2798, %v2794
        %v2899 = vpack.c.b16 %v2799, %v2795
        %v2900 = vpack.c.b16 %v2800, %v2796
        %v2901 = vpack.c.b16 %v2805, %v2801
        %v2902 = vpack.c.b16 %v2806, %v2802
        %v2903 = vpack.c.b16 %v2807, %v2803
        %v2904 = vpack.c.b16 %v2808, %v2804
        %v2905 = vpack.c.b16 %v2813, %v2809
        %v2906 = vpack.c.b16 %v2814, %v2810
        %v2907 = vpack.c.b16 %v2815, %v2811
        %v2908 = vpack.c.b16 %v2816, %v2812
        %v2909 = vpack.c.b16 %v2821, %v2817
        %v2910 = vpack.c.b16 %v2822, %v2818
        %v2911 = vpack.c.b16 %v2823, %v2819
        %v2912 = vpack.c.b16 %v2824, %v2820
        %v2913 = vpack.c.b16 %v2829, %v2825
        %v2914 = vpack.c.b16 %v2830, %v2826
        %v2915 = vpack.c.b16 %v2831, %v2827
        %v2916 = vpack.c.b16 %v2832, %v2828
        %v2917 = vpack.c.b16 %v2837, %v2833
        %v2918 = vpack.c.b16 %v2838, %v2834
        %v2919 = vpack.c.b16 %v2839, %v2835
        %v2920 = vpack.c.b16 %v2840, %v2836
        %v2921 = vpack.c.b16 %v2845, %v2841
        %v2922 = vpack.c.b16 %v2846, %v2842
        %v2923 = vpack.c.b16 %v2847, %v2843
        %v2924 = vpack.c.b16 %v2848, %v2844
        %v2925 = vpack.c.b16 %v2853, %v2849
        %v2926 = vpack.c.b16 %v2854, %v2850
        %v2927 = vpack.c.b16 %v2855, %v2851
        %v2928 = vpack.c.b16 %v2856, %v2852
        %v2929 = vpack.c.b16 %v2861, %v2857
        %v2930 = vpack.c.b16 %v2862, %v2858
        %v2931 = vpack.c.b16 %v2863, %v2859
        %v2932 = vpack.c.b16 %v2864, %v2860
        %v2933 = vpack.c.b16 %v2869, %v2865
        %v2934 = vpack.c.b16 %v2870, %v2866
        %v2935 = vpack.c.b16 %v2871, %v2867
        %v2936 = vpack.c.b16 %v2872, %v2868
        %v3002 = vperm.slane %v2680, 0
        %v3003 = vperm.slane %v2680, 1
        %v3004 = vperm.slane %v2680, 2
        %v3005 = vperm.slane %v2680, 3
        %3010 = vmatpush.bf16.msra.mxu0 %v2901
        %3011 = vmatpush.bf16.msra.mxu0 %v2897
        %3012 = vmatpush.bf16.msra.mxu0 %v2893
        %3013 = vmatpush.bf16.msra.mxu0 %v2889
        %3014 = vmatpush.bf16.msra.mxu0 %v2885
        %3015 = vmatpush.bf16.msra.mxu0 %v2881
        %3016 = vmatpush.bf16.msra.mxu0 %v2877
        %3017 = vmatpush.bf16.msra.mxu0 %v2873
        %3018 = vmatmul.bf16.gmra.mxu0 %v2614
        %v3019 = vpop.f32.mrf.mxu0
        %v3020 = vadd.f32 %v3002, %v3019
        %v3021 = vpop.f32.mrf.mxu0
        %3022 = vdwg.mxu0
        %3023 = vmatpush.bf16.msra.mxu0 %v2933
        %3024 = vmatpush.bf16.msra.mxu0 %v2929
        %3025 = vmatpush.bf16.msra.mxu0 %v2925
        %3026 = vmatpush.bf16.msra.mxu0 %v2921
        %3027 = vmatpush.bf16.msra.mxu0 %v2917
        %3028 = vmatpush.bf16.msra.mxu0 %v2913
        %3029 = vmatpush.bf16.msra.mxu0 %v2909
        %3030 = vmatpush.bf16.msra.mxu0 %v2905
        %3031 = vmatmul.bf16.gmra.mxu0 %v2615
        %v3032 = vpop.f32.mrf.mxu0
        %v3033 = vadd.f32 %v3020, %v3032
        %v3034 = vpop.f32.mrf.mxu0
        %3035 = vdwg.mxu0
        %3036 = vmatpush.bf16.msra.mxu0 %v2902
        %3037 = vmatpush.bf16.msra.mxu0 %v2898
        %3038 = vmatpush.bf16.msra.mxu0 %v2894
        %3039 = vmatpush.bf16.msra.mxu0 %v2890
        %3040 = vmatpush.bf16.msra.mxu0 %v2886
        %3041 = vmatpush.bf16.msra.mxu0 %v2882
        %3042 = vmatpush.bf16.msra.mxu0 %v2878
        %3043 = vmatpush.bf16.msra.mxu0 %v2874
        %3044 = vmatmul.bf16.gmra.mxu0 %v2614
        %v3045 = vpop.f32.mrf.mxu0
        %v3046 = vadd.f32 %v3003, %v3045
        %v3047 = vpop.f32.mrf.mxu0
        %3048 = vdwg.mxu0
        %3049 = vmatpush.bf16.msra.mxu0 %v2934
        %3050 = vmatpush.bf16.msra.mxu0 %v2930
        %3051 = vmatpush.bf16.msra.mxu0 %v2926
        %3052 = vmatpush.bf16.msra.mxu0 %v2922
        %3053 = vmatpush.bf16.msra.mxu0 %v2918
        %3054 = vmatpush.bf16.msra.mxu0 %v2914
        %3055 = vmatpush.bf16.msra.mxu0 %v2910
        %3056 = vmatpush.bf16.msra.mxu0 %v2906
        %3057 = vmatmul.bf16.gmra.mxu0 %v2615
        %v3058 = vpop.f32.mrf.mxu0
        %v3059 = vadd.f32 %v3046, %v3058
        %v3060 = vpop.f32.mrf.mxu0
        %3061 = vdwg.mxu0
        %3062 = vmatpush.bf16.msra.mxu0 %v2903
        %3063 = vmatpush.bf16.msra.mxu0 %v2899
        %3064 = vmatpush.bf16.msra.mxu0 %v2895
        %3065 = vmatpush.bf16.msra.mxu0 %v2891
        %3066 = vmatpush.bf16.msra.mxu0 %v2887
        %3067 = vmatpush.bf16.msra.mxu0 %v2883
        %3068 = vmatpush.bf16.msra.mxu0 %v2879
        %3069 = vmatpush.bf16.msra.mxu0 %v2875
        %3070 = vmatmul.bf16.gmra.mxu0 %v2614
        %v3071 = vpop.f32.mrf.mxu0
        %v3072 = vadd.f32 %v3004, %v3071
        %v3073 = vpop.f32.mrf.mxu0
        %3074 = vdwg.mxu0
        %3075 = vmatpush.bf16.msra.mxu0 %v2935
        %3076 = vmatpush.bf16.msra.mxu0 %v2931
        %3077 = vmatpush.bf16.msra.mxu0 %v2927
        %3078 = vmatpush.bf16.msra.mxu0 %v2923
        %3079 = vmatpush.bf16.msra.mxu0 %v2919
        %3080 = vmatpush.bf16.msra.mxu0 %v2915
        %3081 = vmatpush.bf16.msra.mxu0 %v2911
        %3082 = vmatpush.bf16.msra.mxu0 %v2907
        %3083 = vmatmul.bf16.gmra.mxu0 %v2615
        %v3084 = vpop.f32.mrf.mxu0
        %v3085 = vadd.f32 %v3072, %v3084
        %v3086 = vpop.f32.mrf.mxu0
        %3087 = vdwg.mxu0
        %3088 = vmatpush.bf16.msra.mxu0 %v2904
        %3089 = vmatpush.bf16.msra.mxu0 %v2900
        %3090 = vmatpush.bf16.msra.mxu0 %v2896
        %3091 = vmatpush.bf16.msra.mxu0 %v2892
        %3092 = vmatpush.bf16.msra.mxu0 %v2888
        %3093 = vmatpush.bf16.msra.mxu0 %v2884
        %3094 = vmatpush.bf16.msra.mxu0 %v2880
        %3095 = vmatpush.bf16.msra.mxu0 %v2876
        %3096 = vmatmul.bf16.gmra.mxu0 %v2614
        %v3097 = vpop.f32.mrf.mxu0
        %v3098 = vadd.f32 %v3005, %v3097
        %v3099 = vpop.f32.mrf.mxu0
        %3100 = vdwg.mxu0
        %3101 = vmatpush.bf16.msra.mxu0 %v2936
        %3102 = vmatpush.bf16.msra.mxu0 %v2932
        %3103 = vmatpush.bf16.msra.mxu0 %v2928
        %3104 = vmatpush.bf16.msra.mxu0 %v2924
        %3105 = vmatpush.bf16.msra.mxu0 %v2920
        %3106 = vmatpush.bf16.msra.mxu0 %v2916
        %3107 = vmatpush.bf16.msra.mxu0 %v2912
        %3108 = vmatpush.bf16.msra.mxu0 %v2908
        %3109 = vmatmul.bf16.gmra.mxu0 %v2615
        %v3110 = vpop.f32.mrf.mxu0
        %v3111 = vadd.f32 %v3098, %v3110
        %v3112 = vpop.f32.mrf.mxu0
        %3113 = vdwg.mxu0
        %v3114 = vmax.f32 %v3033, 0.0
        %v3115 = vmax.f32 %v3059, 0.0
        %v3116 = vmax.f32 %v3085, 0.0
        %v3117 = vmax.f32 %v3111, 0.0
        %v3118 = vpack.c.bf16 %v3114, %v3114
        %v3119 = vpack.c.bf16 %v3115, %v3115
        %v3120 = vpack.c.bf16 %v3116, %v3116
        %v3121 = vpack.c.bf16 %v3117, %v3117
        %v3122 = vld [vmem:[%s9] sm:$0xff]
        %v3123 = vld [vmem:[%s9 + $0x8] sm:$0xf]
        %v3124 = vld [vmem:[%s9 + $0xc] sm:$0xff]
        %v3125 = vld [vmem:[%s9 + $0x14] sm:$0xf]
        %v3126 = vld [vmem:[%s9 + $0x18] sm:$0xff]
        %v3127 = vld [vmem:[%s9 + $0x20] sm:$0xf]
        %v3128 = vld [vmem:[%s9 + $0x24] sm:$0xff]
        %v3129 = vld [vmem:[%s9 + $0x2c] sm:$0xf]
        %v3130 = vld [vmem:[%s9 + $0x30] sm:$0xff]
        %v3131 = vld [vmem:[%s9 + $0x38] sm:$0xf]
        %v3132 = vld [vmem:[%s9 + $0x3c] sm:$0xff]
        %v3133 = vld [vmem:[%s9 + $0x44] sm:$0xf]
        %v3134 = vld [vmem:[%s9 + $0x48] sm:$0xff]
        %v3135 = vld [vmem:[%s9 + $0x50] sm:$0xf]
        %v3136 = vld [vmem:[%s9 + $0x54] sm:$0xff]
        %v3137 = vld [vmem:[%s9 + $0x5c] sm:$0xf]
        %v3138 = vld [vmem:[%s9 + $0x60] sm:$0xff]
        %v3139 = vld [vmem:[%s9 + $0x68] sm:$0xf]
        %v3140 = vld [vmem:[%s9 + $0x6c] sm:$0xff]
        %v3141 = vld [vmem:[%s9 + $0x74] sm:$0xf]
        %v3142 = vld [vmem:[%s9 + $0x78] sm:$0xff]
        %v3143 = vld [vmem:[%s9 + $0x80] sm:$0xf]
        %v3144 = vld [vmem:[%s9 + $0x84] sm:$0xff]
        %v3145 = vld [vmem:[%s9 + $0x8c] sm:$0xf]
        %v3146 = vld [vmem:[%s9 + $0x90] sm:$0xff]
        %v3147 = vld [vmem:[%s9 + $0x98] sm:$0xf]
        %v3148 = vld [vmem:[%s9 + $0x9c] sm:$0xff]
        %v3149 = vld [vmem:[%s9 + $0xa4] sm:$0xf]
        %v3150 = vld [vmem:[%s9 + $0xa8] sm:$0xff]
        %v3151 = vld [vmem:[%s9 + $0xb0] sm:$0xf]
        %v3152 = vld [vmem:[%s9 + $0xb4] sm:$0xff]
        %v3153 = vld [vmem:[%s9 + $0xbc] sm:$0xf]
        %v3154 = vld [vmem:[%s9 + $0xc0] sm:$0xff]
        %v3155 = vld [vmem:[%s9 + $0xc8] sm:$0xf]
        %v3156 = vld [vmem:[%s9 + $0xcc] sm:$0xff]
        %v3157 = vld [vmem:[%s9 + $0xd4] sm:$0xf]
        %v3158 = vld [vmem:[%s9 + $0xd8] sm:$0xff]
        %v3159 = vld [vmem:[%s9 + $0xe0] sm:$0xf]
        %v3160 = vld [vmem:[%s9 + $0xe4] sm:$0xff]
        %v3161 = vld [vmem:[%s9 + $0xec] sm:$0xf]
        %v3162 = vld [vmem:[%s9 + $0xf0] sm:$0xff]
        %v3163 = vld [vmem:[%s9 + $0xf8] sm:$0xf]
        %v3164 = vld [vmem:[%s9 + $0xfc] sm:$0xff]
        %v3165 = vld [vmem:[%s9 + $0x104] sm:$0xf]
        %v3166 = vld [vmem:[%s9 + $0x108] sm:$0xff]
        %v3167 = vld [vmem:[%s9 + $0x110] sm:$0xf]
        %v3168 = vld [vmem:[%s9 + $0x114] sm:$0xff]
        %v3169 = vld [vmem:[%s9 + $0x11c] sm:$0xf]
        %v3170 = vld [vmem:[%s9 + $0x120] sm:$0xff]
        %v3171 = vld [vmem:[%s9 + $0x128] sm:$0xf]
        %v3172 = vld [vmem:[%s9 + $0x12c] sm:$0xff]
        %v3173 = vld [vmem:[%s9 + $0x134] sm:$0xf]
        %v3174 = vld [vmem:[%s9 + $0x138] sm:$0xff]
        %v3175 = vld [vmem:[%s9 + $0x140] sm:$0xf]
        %v3176 = vld [vmem:[%s9 + $0x144] sm:$0xff]
        %v3177 = vld [vmem:[%s9 + $0x14c] sm:$0xf]
        %v3178 = vld [vmem:[%s9 + $0x150] sm:$0xff]
        %v3179 = vld [vmem:[%s9 + $0x158] sm:$0xf]
        %v3180 = vld [vmem:[%s9 + $0x15c] sm:$0xff]
        %v3181 = vld [vmem:[%s9 + $0x164] sm:$0xf]
        %v3182 = vld [vmem:[%s9 + $0x168] sm:$0xff]
        %v3183 = vld [vmem:[%s9 + $0x170] sm:$0xf]
        %v3184 = vld [vmem:[%s9 + $0x174] sm:$0xff]
        %v3185 = vld [vmem:[%s9 + $0x17c] sm:$0xf]
        %v3186 = vld [vmem:[%s9 + $0x180] sm:$0xff]
        %v3187 = vld [vmem:[%s9 + $0x188] sm:$0xf]
        %v3188 = vld [vmem:[%s9 + $0x18c] sm:$0xff]
        %v3189 = vld [vmem:[%s9 + $0x194] sm:$0xf]
        %v3190 = vld [vmem:[%s9 + $0x198] sm:$0xff]
        %v3191 = vld [vmem:[%s9 + $0x1a0] sm:$0xf]
        %v3192 = vld [vmem:[%s9 + $0x1a4] sm:$0xff]
        %v3193 = vld [vmem:[%s9 + $0x1ac] sm:$0xf]
        %v3194 = vld [vmem:[%s9 + $0x1b0] sm:$0xff]
        %v3195 = vld [vmem:[%s9 + $0x1b8] sm:$0xf]
        %v3196 = vld [vmem:[%s9 + $0x1bc] sm:$0xff]
        %v3197 = vld [vmem:[%s9 + $0x1c4] sm:$0xf]
        %v3198 = vld [vmem:[%s9 + $0x1c8] sm:$0xff]
        %v3199 = vld [vmem:[%s9 + $0x1d0] sm:$0xf]
        %v3200 = vld [vmem:[%s9 + $0x1d4] sm:$0xff]
        %v3201 = vld [vmem:[%s9 + $0x1dc] sm:$0xf]
        %v3202 = vld [vmem:[%s9 + $0x1e0] sm:$0xff]
        %v3203 = vld [vmem:[%s9 + $0x1e8] sm:$0xf]
        %v3204 = vld [vmem:[%s9 + $0x1ec] sm:$0xff]
        %v3205 = vld [vmem:[%s9 + $0x1f4] sm:$0xf]
        %v3206 = vld [vmem:[%s9 + $0x1f8] sm:$0xff]
        %v3207 = vld [vmem:[%s9 + $0x200] sm:$0xf]
        %v3208 = vld [vmem:[%s9 + $0x204] sm:$0xff]
        %v3209 = vld [vmem:[%s9 + $0x20c] sm:$0xf]
        %v3210 = vld [vmem:[%s9 + $0x210] sm:$0xff]
        %v3211 = vld [vmem:[%s9 + $0x218] sm:$0xf]
        %v3212 = vld [vmem:[%s9 + $0x21c] sm:$0xff]
        %v3213 = vld [vmem:[%s9 + $0x224] sm:$0xf]
        %v3214 = vld [vmem:[%s9 + $0x228] sm:$0xff]
        %v3215 = vld [vmem:[%s9 + $0x230] sm:$0xf]
        %v3216 = vld [vmem:[%s9 + $0x234] sm:$0xff]
        %v3217 = vld [vmem:[%s9 + $0x23c] sm:$0xf]
        %v3218 = vld [vmem:[%s9 + $0x240] sm:$0xff]
        %v3219 = vld [vmem:[%s9 + $0x248] sm:$0xf]
        %v3220 = vld [vmem:[%s9 + $0x24c] sm:$0xff]
        %v3221 = vld [vmem:[%s9 + $0x254] sm:$0xf]
        %v3222 = vld [vmem:[%s9 + $0x258] sm:$0xff]
        %v3223 = vld [vmem:[%s9 + $0x260] sm:$0xf]
        %v3224 = vld [vmem:[%s9 + $0x264] sm:$0xff]
        %v3225 = vld [vmem:[%s9 + $0x26c] sm:$0xf]
        %v3226 = vld [vmem:[%s9 + $0x270] sm:$0xff]
        %v3227 = vld [vmem:[%s9 + $0x278] sm:$0xf]
        %v3228 = vld [vmem:[%s9 + $0x27c] sm:$0xff]
        %v3229 = vld [vmem:[%s9 + $0x284] sm:$0xf]
        %v3230 = vld [vmem:[%s9 + $0x288] sm:$0xff]
        %v3231 = vld [vmem:[%s9 + $0x290] sm:$0xf]
        %v3232 = vld [vmem:[%s9 + $0x294] sm:$0xff]
        %v3233 = vld [vmem:[%s9 + $0x29c] sm:$0xf]
        %v3234 = vld [vmem:[%s9 + $0x2a0] sm:$0xff]
        %v3235 = vld [vmem:[%s9 + $0x2a8] sm:$0xf]
        %v3236 = vld [vmem:[%s9 + $0x2ac] sm:$0xff]
        %v3237 = vld [vmem:[%s9 + $0x2b4] sm:$0xf]
        %v3238 = vld [vmem:[%s9 + $0x2b8] sm:$0xff]
        %v3239 = vld [vmem:[%s9 + $0x2c0] sm:$0xf]
        %v3240 = vld [vmem:[%s9 + $0x2c4] sm:$0xff]
        %v3241 = vld [vmem:[%s9 + $0x2cc] sm:$0xf]
        %v3242 = vld [vmem:[%s9 + $0x2d0] sm:$0xff]
        %v3243 = vld [vmem:[%s9 + $0x2d8] sm:$0xf]
        %v3244 = vld [vmem:[%s9 + $0x2dc] sm:$0xff]
        %v3245 = vld [vmem:[%s9 + $0x2e4] sm:$0xf]
        %v3246 = vld [vmem:[%s9 + $0x2e8] sm:$0xff]
        %v3247 = vld [vmem:[%s9 + $0x2f0] sm:$0xf]
        %v3248 = vld [vmem:[%s9 + $0x2f4] sm:$0xff]
        %v3249 = vld [vmem:[%s9 + $0x2fc] sm:$0xf]
        %v3250 = vld [vmem:[%s10] sm:$0x7]
        %v3379 = vunpack.c.l.b16 %v3122
        %v3380 = vunpack.c.h.b16 %v3122
        %v3381 = vunpack.c.l.b16 %v3123
        %v3382 = vunpack.c.l.b16 %v3124
        %v3383 = vunpack.c.h.b16 %v3124
        %v3384 = vunpack.c.l.b16 %v3125
        %v3385 = vunpack.c.l.b16 %v3126
        %v3386 = vunpack.c.h.b16 %v3126
        %v3387 = vunpack.c.l.b16 %v3127
        %v3388 = vunpack.c.l.b16 %v3128
        %v3389 = vunpack.c.h.b16 %v3128
        %v3390 = vunpack.c.l.b16 %v3129
        %v3391 = vunpack.c.l.b16 %v3130
        %v3392 = vunpack.c.h.b16 %v3130
        %v3393 = vunpack.c.l.b16 %v3131
        %v3394 = vunpack.c.l.b16 %v3132
        %v3395 = vunpack.c.h.b16 %v3132
        %v3396 = vunpack.c.l.b16 %v3133
        %v3397 = vunpack.c.l.b16 %v3134
        %v3398 = vunpack.c.h.b16 %v3134
        %v3399 = vunpack.c.l.b16 %v3135
        %v3400 = vunpack.c.l.b16 %v3136
        %v3401 = vunpack.c.h.b16 %v3136
        %v3402 = vunpack.c.l.b16 %v3137
        %v3403 = vunpack.c.l.b16 %v3138
        %v3404 = vunpack.c.h.b16 %v3138
        %v3405 = vunpack.c.l.b16 %v3139
        %v3406 = vunpack.c.l.b16 %v3140
        %v3407 = vunpack.c.h.b16 %v3140
        %v3408 = vunpack.c.l.b16 %v3141
        %v3409 = vunpack.c.l.b16 %v3142
        %v3410 = vunpack.c.h.b16 %v3142
        %v3411 = vunpack.c.l.b16 %v3143
        %v3412 = vunpack.c.l.b16 %v3144
        %v3413 = vunpack.c.h.b16 %v3144
        %v3414 = vunpack.c.l.b16 %v3145
        %v3415 = vunpack.c.l.b16 %v3146
        %v3416 = vunpack.c.h.b16 %v3146
        %v3417 = vunpack.c.l.b16 %v3147
        %v3418 = vunpack.c.l.b16 %v3148
        %v3419 = vunpack.c.h.b16 %v3148
        %v3420 = vunpack.c.l.b16 %v3149
        %v3421 = vunpack.c.l.b16 %v3150
        %v3422 = vunpack.c.h.b16 %v3150
        %v3423 = vunpack.c.l.b16 %v3151
        %v3424 = vunpack.c.l.b16 %v3152
        %v3425 = vunpack.c.h.b16 %v3152
        %v3426 = vunpack.c.l.b16 %v3153
        %v3427 = vunpack.c.l.b16 %v3154
        %v3428 = vunpack.c.h.b16 %v3154
        %v3429 = vunpack.c.l.b16 %v3155
        %v3430 = vunpack.c.l.b16 %v3156
        %v3431 = vunpack.c.h.b16 %v3156
        %v3432 = vunpack.c.l.b16 %v3157
        %v3433 = vunpack.c.l.b16 %v3158
        %v3434 = vunpack.c.h.b16 %v3158
        %v3435 = vunpack.c.l.b16 %v3159
        %v3436 = vunpack.c.l.b16 %v3160
        %v3437 = vunpack.c.h.b16 %v3160
        %v3438 = vunpack.c.l.b16 %v3161
        %v3439 = vunpack.c.l.b16 %v3162
        %v3440 = vunpack.c.h.b16 %v3162
        %v3441 = vunpack.c.l.b16 %v3163
        %v3442 = vunpack.c.l.b16 %v3164
        %v3443 = vunpack.c.h.b16 %v3164
        %v3444 = vunpack.c.l.b16 %v3165
        %v3445 = vunpack.c.l.b16 %v3166
        %v3446 = vunpack.c.h.b16 %v3166
        %v3447 = vunpack.c.l.b16 %v3167
        %v3448 = vunpack.c.l.b16 %v3168
        %v3449 = vunpack.c.h.b16 %v3168
        %v3450 = vunpack.c.l.b16 %v3169
        %v3451 = vunpack.c.l.b16 %v3170
        %v3452 = vunpack.c.h.b16 %v3170
        %v3453 = vunpack.c.l.b16 %v3171
        %v3454 = vunpack.c.l.b16 %v3172
        %v3455 = vunpack.c.h.b16 %v3172
        %v3456 = vunpack.c.l.b16 %v3173
        %v3457 = vunpack.c.l.b16 %v3174
        %v3458 = vunpack.c.h.b16 %v3174
        %v3459 = vunpack.c.l.b16 %v3175
        %v3460 = vunpack.c.l.b16 %v3176
        %v3461 = vunpack.c.h.b16 %v3176
        %v3462 = vunpack.c.l.b16 %v3177
        %v3463 = vunpack.c.l.b16 %v3178
        %v3464 = vunpack.c.h.b16 %v3178
        %v3465 = vunpack.c.l.b16 %v3179
        %v3466 = vunpack.c.l.b16 %v3180
        %v3467 = vunpack.c.h.b16 %v3180
        %v3468 = vunpack.c.l.b16 %v3181
        %v3469 = vunpack.c.l.b16 %v3182
        %v3470 = vunpack.c.h.b16 %v3182
        %v3471 = vunpack.c.l.b16 %v3183
        %v3472 = vunpack.c.l.b16 %v3184
        %v3473 = vunpack.c.h.b16 %v3184
        %v3474 = vunpack.c.l.b16 %v3185
        %v3475 = vunpack.c.l.b16 %v3186
        %v3476 = vunpack.c.h.b16 %v3186
        %v3477 = vunpack.c.l.b16 %v3187
        %v3478 = vunpack.c.l.b16 %v3188
        %v3479 = vunpack.c.h.b16 %v3188
        %v3480 = vunpack.c.l.b16 %v3189
        %v3481 = vunpack.c.l.b16 %v3190
        %v3482 = vunpack.c.h.b16 %v3190
        %v3483 = vunpack.c.l.b16 %v3191
        %v3484 = vunpack.c.l.b16 %v3192
        %v3485 = vunpack.c.h.b16 %v3192
        %v3486 = vunpack.c.l.b16 %v3193
        %v3487 = vunpack.c.l.b16 %v3194
        %v3488 = vunpack.c.h.b16 %v3194
        %v3489 = vunpack.c.l.b16 %v3195
        %v3490 = vunpack.c.l.b16 %v3196
        %v3491 = vunpack.c.h.b16 %v3196
        %v3492 = vunpack.c.l.b16 %v3197
        %v3493 = vunpack.c.l.b16 %v3198
        %v3494 = vunpack.c.h.b16 %v3198
        %v3495 = vunpack.c.l.b16 %v3199
        %v3496 = vunpack.c.l.b16 %v3200
        %v3497 = vunpack.c.h.b16 %v3200
        %v3498 = vunpack.c.l.b16 %v3201
        %v3499 = vunpack.c.l.b16 %v3202
        %v3500 = vunpack.c.h.b16 %v3202
        %v3501 = vunpack.c.l.b16 %v3203
        %v3502 = vunpack.c.l.b16 %v3204
        %v3503 = vunpack.c.h.b16 %v3204
        %v3504 = vunpack.c.l.b16 %v3205
        %v3505 = vunpack.c.l.b16 %v3206
        %v3506 = vunpack.c.h.b16 %v3206
        %v3507 = vunpack.c.l.b16 %v3207
        %v3508 = vunpack.c.l.b16 %v3208
        %v3509 = vunpack.c.h.b16 %v3208
        %v3510 = vunpack.c.l.b16 %v3209
        %v3511 = vunpack.c.l.b16 %v3210
        %v3512 = vunpack.c.h.b16 %v3210
        %v3513 = vunpack.c.l.b16 %v3211
        %v3514 = vunpack.c.l.b16 %v3212
        %v3515 = vunpack.c.h.b16 %v3212
        %v3516 = vunpack.c.l.b16 %v3213
        %v3517 = vunpack.c.l.b16 %v3214
        %v3518 = vunpack.c.h.b16 %v3214
        %v3519 = vunpack.c.l.b16 %v3215
        %v3520 = vunpack.c.l.b16 %v3216
        %v3521 = vunpack.c.h.b16 %v3216
        %v3522 = vunpack.c.l.b16 %v3217
        %v3523 = vunpack.c.l.b16 %v3218
        %v3524 = vunpack.c.h.b16 %v3218
        %v3525 = vunpack.c.l.b16 %v3219
        %v3526 = vunpack.c.l.b16 %v3220
        %v3527 = vunpack.c.h.b16 %v3220
        %v3528 = vunpack.c.l.b16 %v3221
        %v3529 = vunpack.c.l.b16 %v3222
        %v3530 = vunpack.c.h.b16 %v3222
        %v3531 = vunpack.c.l.b16 %v3223
        %v3532 = vunpack.c.l.b16 %v3224
        %v3533 = vunpack.c.h.b16 %v3224
        %v3534 = vunpack.c.l.b16 %v3225
        %v3535 = vunpack.c.l.b16 %v3226
        %v3536 = vunpack.c.h.b16 %v3226
        %v3537 = vunpack.c.l.b16 %v3227
        %v3538 = vunpack.c.l.b16 %v3228
        %v3539 = vunpack.c.h.b16 %v3228
        %v3540 = vunpack.c.l.b16 %v3229
        %v3541 = vunpack.c.l.b16 %v3230
        %v3542 = vunpack.c.h.b16 %v3230
        %v3543 = vunpack.c.l.b16 %v3231
        %v3544 = vunpack.c.l.b16 %v3232
        %v3545 = vunpack.c.h.b16 %v3232
        %v3546 = vunpack.c.l.b16 %v3233
        %v3547 = vunpack.c.l.b16 %v3234
        %v3548 = vunpack.c.h.b16 %v3234
        %v3549 = vunpack.c.l.b16 %v3235
        %v3550 = vunpack.c.l.b16 %v3236
        %v3551 = vunpack.c.h.b16 %v3236
        %v3552 = vunpack.c.l.b16 %v3237
        %v3553 = vunpack.c.l.b16 %v3238
        %v3554 = vunpack.c.h.b16 %v3238
        %v3555 = vunpack.c.l.b16 %v3239
        %v3556 = vunpack.c.l.b16 %v3240
        %v3557 = vunpack.c.h.b16 %v3240
        %v3558 = vunpack.c.l.b16 %v3241
        %v3559 = vunpack.c.l.b16 %v3242
        %v3560 = vunpack.c.h.b16 %v3242
        %v3561 = vunpack.c.l.b16 %v3243
        %v3562 = vunpack.c.l.b16 %v3244
        %v3563 = vunpack.c.h.b16 %v3244
        %v3564 = vunpack.c.l.b16 %v3245
        %v3565 = vunpack.c.l.b16 %v3246
        %v3566 = vunpack.c.h.b16 %v3246
        %v3567 = vunpack.c.l.b16 %v3247
        %v3568 = vunpack.c.l.b16 %v3248
        %v3569 = vunpack.c.h.b16 %v3248
        %v3570 = vunpack.c.l.b16 %v3249
        %v3571 = vpack.c.b16 %v3382, %v3379
        %v3572 = vpack.c.b16 %v3383, %v3380
        %v3573 = vpack.c.b16 %v3384, %v3381
        %v3574 = vpack.c.b16 %v3388, %v3385
        %v3575 = vpack.c.b16 %v3389, %v3386
        %v3576 = vpack.c.b16 %v3390, %v3387
        %v3577 = vpack.c.b16 %v3394, %v3391
        %v3578 = vpack.c.b16 %v3395, %v3392
        %v3579 = vpack.c.b16 %v3396, %v3393
        %v3580 = vpack.c.b16 %v3400, %v3397
        %v3581 = vpack.c.b16 %v3401, %v3398
        %v3582 = vpack.c.b16 %v3402, %v3399
        %v3583 = vpack.c.b16 %v3406, %v3403
        %v3584 = vpack.c.b16 %v3407, %v3404
        %v3585 = vpack.c.b16 %v3408, %v3405
        %v3586 = vpack.c.b16 %v3412, %v3409
        %v3587 = vpack.c.b16 %v3413, %v3410
        %v3588 = vpack.c.b16 %v3414, %v3411
        %v3589 = vpack.c.b16 %v3418, %v3415
        %v3590 = vpack.c.b16 %v3419, %v3416
        %v3591 = vpack.c.b16 %v3420, %v3417
        %v3592 = vpack.c.b16 %v3424, %v3421
        %v3593 = vpack.c.b16 %v3425, %v3422
        %v3594 = vpack.c.b16 %v3426, %v3423
        %v3595 = vpack.c.b16 %v3430, %v3427
        %v3596 = vpack.c.b16 %v3431, %v3428
        %v3597 = vpack.c.b16 %v3432, %v3429
        %v3598 = vpack.c.b16 %v3436, %v3433
        %v3599 = vpack.c.b16 %v3437, %v3434
        %v3600 = vpack.c.b16 %v3438, %v3435
        %v3601 = vpack.c.b16 %v3442, %v3439
        %v3602 = vpack.c.b16 %v3443, %v3440
        %v3603 = vpack.c.b16 %v3444, %v3441
        %v3604 = vpack.c.b16 %v3448, %v3445
        %v3605 = vpack.c.b16 %v3449, %v3446
        %v3606 = vpack.c.b16 %v3450, %v3447
        %v3607 = vpack.c.b16 %v3454, %v3451
        %v3608 = vpack.c.b16 %v3455, %v3452
        %v3609 = vpack.c.b16 %v3456, %v3453
        %v3610 = vpack.c.b16 %v3460, %v3457
        %v3611 = vpack.c.b16 %v3461, %v3458
        %v3612 = vpack.c.b16 %v3462, %v3459
        %v3613 = vpack.c.b16 %v3466, %v3463
        %v3614 = vpack.c.b16 %v3467, %v3464
        %v3615 = vpack.c.b16 %v3468, %v3465
        %v3616 = vpack.c.b16 %v3472, %v3469
        %v3617 = vpack.c.b16 %v3473, %v3470
        %v3618 = vpack.c.b16 %v3474, %v3471
        %v3619 = vpack.c.b16 %v3478, %v3475
        %v3620 = vpack.c.b16 %v3479, %v3476
        %v3621 = vpack.c.b16 %v3480, %v3477
        %v3622 = vpack.c.b16 %v3484, %v3481
        %v3623 = vpack.c.b16 %v3485, %v3482
        %v3624 = vpack.c.b16 %v3486, %v3483
        %v3625 = vpack.c.b16 %v3490, %v3487
        %v3626 = vpack.c.b16 %v3491, %v3488
        %v3627 = vpack.c.b16 %v3492, %v3489
        %v3628 = vpack.c.b16 %v3496, %v3493
        %v3629 = vpack.c.b16 %v3497, %v3494
        %v3630 = vpack.c.b16 %v3498, %v3495
        %v3631 = vpack.c.b16 %v3502, %v3499
        %v3632 = vpack.c.b16 %v3503, %v3500
        %v3633 = vpack.c.b16 %v3504, %v3501
        %v3634 = vpack.c.b16 %v3508, %v3505
        %v3635 = vpack.c.b16 %v3509, %v3506
        %v3636 = vpack.c.b16 %v3510, %v3507
        %v3637 = vpack.c.b16 %v3514, %v3511
        %v3638 = vpack.c.b16 %v3515, %v3512
        %v3639 = vpack.c.b16 %v3516, %v3513
        %v3640 = vpack.c.b16 %v3520, %v3517
        %v3641 = vpack.c.b16 %v3521, %v3518
        %v3642 = vpack.c.b16 %v3522, %v3519
        %v3643 = vpack.c.b16 %v3526, %v3523
        %v3644 = vpack.c.b16 %v3527, %v3524
        %v3645 = vpack.c.b16 %v3528, %v3525
        %v3646 = vpack.c.b16 %v3532, %v3529
        %v3647 = vpack.c.b16 %v3533, %v3530
        %v3648 = vpack.c.b16 %v3534, %v3531
        %v3649 = vpack.c.b16 %v3538, %v3535
        %v3650 = vpack.c.b16 %v3539, %v3536
        %v3651 = vpack.c.b16 %v3540, %v3537
        %v3652 = vpack.c.b16 %v3544, %v3541
        %v3653 = vpack.c.b16 %v3545, %v3542
        %v3654 = vpack.c.b16 %v3546, %v3543
        %v3655 = vpack.c.b16 %v3550, %v3547
        %v3656 = vpack.c.b16 %v3551, %v3548
        %v3657 = vpack.c.b16 %v3552, %v3549
        %v3658 = vpack.c.b16 %v3556, %v3553
        %v3659 = vpack.c.b16 %v3557, %v3554
        %v3660 = vpack.c.b16 %v3558, %v3555
        %v3661 = vpack.c.b16 %v3562, %v3559
        %v3662 = vpack.c.b16 %v3563, %v3560
        %v3663 = vpack.c.b16 %v3564, %v3561
        %v3664 = vpack.c.b16 %v3568, %v3565
        %v3665 = vpack.c.b16 %v3569, %v3566
        %v3666 = vpack.c.b16 %v3570, %v3567
        %v3764 = vperm.slane %v3250, 0
        %v3765 = vperm.slane %v3250, 1
        %v3766 = vperm.slane %v3250, 2
        %3770 = vmatpush.bf16.msra.mxu0 %v3592
        %3771 = vmatpush.bf16.msra.mxu0 %v3589
        %3772 = vmatpush.bf16.msra.mxu0 %v3586
        %3773 = vmatpush.bf16.msra.mxu0 %v3583
        %3774 = vmatpush.bf16.msra.mxu0 %v3580
        %3775 = vmatpush.bf16.msra.mxu0 %v3577
        %3776 = vmatpush.bf16.msra.mxu0 %v3574
        %3777 = vmatpush.bf16.msra.mxu0 %v3571
        %3778 = vmatmul.bf16.gmra.mxu0 %v3118
        %v3779 = vpop.f32.mrf.mxu0
        %v3780 = vadd.f32 %v3764, %v3779
        %v3781 = vpop.f32.mrf.mxu0
        %3782 = vdwg.mxu0
        %3783 = vmatpush.bf16.msra.mxu0 %v3616
        %3784 = vmatpush.bf16.msra.mxu0 %v3613
        %3785 = vmatpush.bf16.msra.mxu0 %v3610
        %3786 = vmatpush.bf16.msra.mxu0 %v3607
        %3787 = vmatpush.bf16.msra.mxu0 %v3604
        %3788 = vmatpush.bf16.msra.mxu0 %v3601
        %3789 = vmatpush.bf16.msra.mxu0 %v3598
        %3790 = vmatpush.bf16.msra.mxu0 %v3595
        %3791 = vmatmul.bf16.gmra.mxu0 %v3119
        %v3792 = vpop.f32.mrf.mxu0
        %v3793 = vadd.f32 %v3780, %v3792
        %v3794 = vpop.f32.mrf.mxu0
        %3795 = vdwg.mxu0
        %3796 = vmatpush.bf16.msra.mxu0 %v3640
        %3797 = vmatpush.bf16.msra.mxu0 %v3637
        %3798 = vmatpush.bf16.msra.mxu0 %v3634
        %3799 = vmatpush.bf16.msra.mxu0 %v3631
        %3800 = vmatpush.bf16.msra.mxu0 %v3628
        %3801 = vmatpush.bf16.msra.mxu0 %v3625
        %3802 = vmatpush.bf16.msra.mxu0 %v3622
        %3803 = vmatpush.bf16.msra.mxu0 %v3619
        %3804 = vmatmul.bf16.gmra.mxu0 %v3120
        %v3805 = vpop.f32.mrf.mxu0
        %v3806 = vadd.f32 %v3793, %v3805
        %v3807 = vpop.f32.mrf.mxu0
        %3808 = vdwg.mxu0
        %3809 = vmatpush.bf16.msra.mxu0 %v3664
        %3810 = vmatpush.bf16.msra.mxu0 %v3661
        %3811 = vmatpush.bf16.msra.mxu0 %v3658
        %3812 = vmatpush.bf16.msra.mxu0 %v3655
        %3813 = vmatpush.bf16.msra.mxu0 %v3652
        %3814 = vmatpush.bf16.msra.mxu0 %v3649
        %3815 = vmatpush.bf16.msra.mxu0 %v3646
        %3816 = vmatpush.bf16.msra.mxu0 %v3643
        %3817 = vmatmul.bf16.gmra.mxu0 %v3121
        %v3818 = vpop.f32.mrf.mxu0
        %v3819 = vadd.f32 %v3806, %v3818
        %v3820 = vpop.f32.mrf.mxu0
        %3821 = vdwg.mxu0
        %3822 = vmatpush.bf16.msra.mxu0 %v3593
        %3823 = vmatpush.bf16.msra.mxu0 %v3590
        %3824 = vmatpush.bf16.msra.mxu0 %v3587
        %3825 = vmatpush.bf16.msra.mxu0 %v3584
        %3826 = vmatpush.bf16.msra.mxu0 %v3581
        %3827 = vmatpush.bf16.msra.mxu0 %v3578
        %3828 = vmatpush.bf16.msra.mxu0 %v3575
        %3829 = vmatpush.bf16.msra.mxu0 %v3572
        %3830 = vmatmul.bf16.gmra.mxu0 %v3118
        %v3831 = vpop.f32.mrf.mxu0
        %v3832 = vadd.f32 %v3765, %v3831
        %v3833 = vpop.f32.mrf.mxu0
        %3834 = vdwg.mxu0
        %3835 = vmatpush.bf16.msra.mxu0 %v3617
        %3836 = vmatpush.bf16.msra.mxu0 %v3614
        %3837 = vmatpush.bf16.msra.mxu0 %v3611
        %3838 = vmatpush.bf16.msra.mxu0 %v3608
        %3839 = vmatpush.bf16.msra.mxu0 %v3605
        %3840 = vmatpush.bf16.msra.mxu0 %v3602
        %3841 = vmatpush.bf16.msra.mxu0 %v3599
        %3842 = vmatpush.bf16.msra.mxu0 %v3596
        %3843 = vmatmul.bf16.gmra.mxu0 %v3119
        %v3844 = vpop.f32.mrf.mxu0
        %v3845 = vadd.f32 %v3832, %v3844
        %v3846 = vpop.f32.mrf.mxu0
        %3847 = vdwg.mxu0
        %3848 = vmatpush.bf16.msra.mxu0 %v3641
        %3849 = vmatpush.bf16.msra.mxu0 %v3638
        %3850 = vmatpush.bf16.msra.mxu0 %v3635
        %3851 = vmatpush.bf16.msra.mxu0 %v3632
        %3852 = vmatpush.bf16.msra.mxu0 %v3629
        %3853 = vmatpush.bf16.msra.mxu0 %v3626
        %3854 = vmatpush.bf16.msra.mxu0 %v3623
        %3855 = vmatpush.bf16.msra.mxu0 %v3620
        %3856 = vmatmul.bf16.gmra.mxu0 %v3120
        %v3857 = vpop.f32.mrf.mxu0
        %v3858 = vadd.f32 %v3845, %v3857
        %v3859 = vpop.f32.mrf.mxu0
        %3860 = vdwg.mxu0
        %3861 = vmatpush.bf16.msra.mxu0 %v3665
        %3862 = vmatpush.bf16.msra.mxu0 %v3662
        %3863 = vmatpush.bf16.msra.mxu0 %v3659
        %3864 = vmatpush.bf16.msra.mxu0 %v3656
        %3865 = vmatpush.bf16.msra.mxu0 %v3653
        %3866 = vmatpush.bf16.msra.mxu0 %v3650
        %3867 = vmatpush.bf16.msra.mxu0 %v3647
        %3868 = vmatpush.bf16.msra.mxu0 %v3644
        %3869 = vmatmul.bf16.gmra.mxu0 %v3121
        %v3870 = vpop.f32.mrf.mxu0
        %v3871 = vadd.f32 %v3858, %v3870
        %v3872 = vpop.f32.mrf.mxu0
        %3873 = vdwg.mxu0
        %3874 = vmatpush.bf16.msra.mxu0 %v3594
        %3875 = vmatpush.bf16.msra.mxu0 %v3591
        %3876 = vmatpush.bf16.msra.mxu0 %v3588
        %3877 = vmatpush.bf16.msra.mxu0 %v3585
        %3878 = vmatpush.bf16.msra.mxu0 %v3582
        %3879 = vmatpush.bf16.msra.mxu0 %v3579
        %3880 = vmatpush.bf16.msra.mxu0 %v3576
        %3881 = vmatpush.bf16.msra.mxu0 %v3573
        %3882 = vmatmul.bf16.gmra.mxu0 %v3118
        %v3883 = vpop.f32.mrf.mxu0
        %v3884 = vadd.f32 %v3766, %v3883
        %v3885 = vpop.f32.mrf.mxu0
        %3886 = vdwg.mxu0
        %3887 = vmatpush.bf16.msra.mxu0 %v3618
        %3888 = vmatpush.bf16.msra.mxu0 %v3615
        %3889 = vmatpush.bf16.msra.mxu0 %v3612
        %3890 = vmatpush.bf16.msra.mxu0 %v3609
        %3891 = vmatpush.bf16.msra.mxu0 %v3606
        %3892 = vmatpush.bf16.msra.mxu0 %v3603
        %3893 = vmatpush.bf16.msra.mxu0 %v3600
        %3894 = vmatpush.bf16.msra.mxu0 %v3597
        %3895 = vmatmul.bf16.gmra.mxu0 %v3119
        %v3896 = vpop.f32.mrf.mxu0
        %v3897 = vadd.f32 %v3884, %v3896
        %v3898 = vpop.f32.mrf.mxu0
        %3899 = vdwg.mxu0
        %3900 = vmatpush.bf16.msra.mxu0 %v3642
        %3901 = vmatpush.bf16.msra.mxu0 %v3639
        %3902 = vmatpush.bf16.msra.mxu0 %v3636
        %3903 = vmatpush.bf16.msra.mxu0 %v3633
        %3904 = vmatpush.bf16.msra.mxu0 %v3630
        %3905 = vmatpush.bf16.msra.mxu0 %v3627
        %3906 = vmatpush.bf16.msra.mxu0 %v3624
        %3907 = vmatpush.bf16.msra.mxu0 %v3621
        %3908 = vmatmul.bf16.gmra.mxu0 %v3120
        %v3909 = vpop.f32.mrf.mxu0
        %v3910 = vadd.f32 %v3897, %v3909
        %v3911 = vpop.f32.mrf.mxu0
        %3912 = vdwg.mxu0
        %3913 = vmatpush.bf16.msra.mxu0 %v3666
        %3914 = vmatpush.bf16.msra.mxu0 %v3663
        %3915 = vmatpush.bf16.msra.mxu0 %v3660
        %3916 = vmatpush.bf16.msra.mxu0 %v3657
        %3917 = vmatpush.bf16.msra.mxu0 %v3654
        %3918 = vmatpush.bf16.msra.mxu0 %v3651
        %3919 = vmatpush.bf16.msra.mxu0 %v3648
        %3920 = vmatpush.bf16.msra.mxu0 %v3645
        %3921 = vmatmul.bf16.gmra.mxu0 %v3121
        %v3922 = vpop.f32.mrf.mxu0
        %v3923 = vadd.f32 %v3910, %v3922
        %v3924 = vpop.f32.mrf.mxu0
        %3925 = vdwg.mxu0
        %v3926 = vmax.f32 %v3819, 0.0
        %v3927 = vmax.f32 %v3871, 0.0
        %v3928 = vmax.f32 %v3923, 0.0
        %v3929 = vpack.c.bf16 %v3926, %v3926
        %v3930 = vpack.c.bf16 %v3927, %v3927
        %v3931 = vpack.c.bf16 %v3928, %v3928
        %v3932 = vld [vmem:[%s11] sm:$0xf]
        %v3933 = vld [vmem:[%s11 + $0x4] sm:$0xf]
        %v3934 = vld [vmem:[%s11 + $0x8] sm:$0xf]
        %v3935 = vld [vmem:[%s11 + $0xc] sm:$0xf]
        %v3936 = vld [vmem:[%s11 + $0x10] sm:$0xf]
        %v3937 = vld [vmem:[%s11 + $0x14] sm:$0xf]
        %v3938 = vld [vmem:[%s11 + $0x18] sm:$0xf]
        %v3939 = vld [vmem:[%s11 + $0x1c] sm:$0xf]
        %v3940 = vld [vmem:[%s11 + $0x20] sm:$0xf]
        %v3941 = vld [vmem:[%s11 + $0x24] sm:$0xf]
        %v3942 = vld [vmem:[%s11 + $0x28] sm:$0xf]
        %v3943 = vld [vmem:[%s11 + $0x2c] sm:$0xf]
        %v3944 = vld [vmem:[%s11 + $0x30] sm:$0xf]
        %v3945 = vld [vmem:[%s11 + $0x34] sm:$0xf]
        %v3946 = vld [vmem:[%s11 + $0x38] sm:$0xf]
        %v3947 = vld [vmem:[%s11 + $0x3c] sm:$0xf]
        %v3948 = vld [vmem:[%s11 + $0x40] sm:$0xf]
        %v3949 = vld [vmem:[%s11 + $0x44] sm:$0xf]
        %v3950 = vld [vmem:[%s11 + $0x48] sm:$0xf]
        %v3951 = vld [vmem:[%s11 + $0x4c] sm:$0xf]
        %v3952 = vld [vmem:[%s11 + $0x50] sm:$0xf]
        %v3953 = vld [vmem:[%s11 + $0x54] sm:$0xf]
        %v3954 = vld [vmem:[%s11 + $0x58] sm:$0xf]
        %v3955 = vld [vmem:[%s11 + $0x5c] sm:$0xf]
        %v3956 = vld [vmem:[%s11 + $0x60] sm:$0xf]
        %v3957 = vld [vmem:[%s11 + $0x64] sm:$0xf]
        %v3958 = vld [vmem:[%s11 + $0x68] sm:$0xf]
        %v3959 = vld [vmem:[%s11 + $0x6c] sm:$0xf]
        %v3960 = vld [vmem:[%s11 + $0x70] sm:$0xf]
        %v3961 = vld [vmem:[%s11 + $0x74] sm:$0xf]
        %v3962 = vld [vmem:[%s11 + $0x78] sm:$0xf]
        %v3963 = vld [vmem:[%s11 + $0x7c] sm:$0xf]
        %v3964 = vld [vmem:[%s11 + $0x80] sm:$0xf]
        %v3965 = vld [vmem:[%s11 + $0x84] sm:$0xf]
        %v3966 = vld [vmem:[%s11 + $0x88] sm:$0xf]
        %v3967 = vld [vmem:[%s11 + $0x8c] sm:$0xf]
        %v3968 = vld [vmem:[%s11 + $0x90] sm:$0xf]
        %v3969 = vld [vmem:[%s11 + $0x94] sm:$0xf]
        %v3970 = vld [vmem:[%s11 + $0x98] sm:$0xf]
        %v3971 = vld [vmem:[%s11 + $0x9c] sm:$0xf]
        %v3972 = vld [vmem:[%s11 + $0xa0] sm:$0xf]
        %v3973 = vld [vmem:[%s11 + $0xa4] sm:$0xf]
        %v3974 = vld [vmem:[%s11 + $0xa8] sm:$0xf]
        %v3975 = vld [vmem:[%s11 + $0xac] sm:$0xf]
        %v3976 = vld [vmem:[%s11 + $0xb0] sm:$0xf]
        %v3977 = vld [vmem:[%s11 + $0xb4] sm:$0xf]
        %v3978 = vld [vmem:[%s11 + $0xb8] sm:$0xf]
        %v3979 = vld [vmem:[%s11 + $0xbc] sm:$0xf]
        %v3980 = vld [vmem:[%s12] sm:$0x1]
        %v4029 = vunpack.c.l.b16 %v3932
        %v4030 = vunpack.c.l.b16 %v3933
        %v4031 = vunpack.c.l.b16 %v3934
        %v4032 = vunpack.c.l.b16 %v3935
        %v4033 = vunpack.c.l.b16 %v3936
        %v4034 = vunpack.c.l.b16 %v3937
        %v4035 = vunpack.c.l.b16 %v3938
        %v4036 = vunpack.c.l.b16 %v3939
        %v4037 = vunpack.c.l.b16 %v3940
        %v4038 = vunpack.c.l.b16 %v3941
        %v4039 = vunpack.c.l.b16 %v3942
        %v4040 = vunpack.c.l.b16 %v3943
        %v4041 = vunpack.c.l.b16 %v3944
        %v4042 = vunpack.c.l.b16 %v3945
        %v4043 = vunpack.c.l.b16 %v3946
        %v4044 = vunpack.c.l.b16 %v3947
        %v4045 = vunpack.c.l.b16 %v3948
        %v4046 = vunpack.c.l.b16 %v3949
        %v4047 = vunpack.c.l.b16 %v3950
        %v4048 = vunpack.c.l.b16 %v3951
        %v4049 = vunpack.c.l.b16 %v3952
        %v4050 = vunpack.c.l.b16 %v3953
        %v4051 = vunpack.c.l.b16 %v3954
        %v4052 = vunpack.c.l.b16 %v3955
        %v4053 = vunpack.c.l.b16 %v3956
        %v4054 = vunpack.c.l.b16 %v3957
        %v4055 = vunpack.c.l.b16 %v3958
        %v4056 = vunpack.c.l.b16 %v3959
        %v4057 = vunpack.c.l.b16 %v3960
        %v4058 = vunpack.c.l.b16 %v3961
        %v4059 = vunpack.c.l.b16 %v3962
        %v4060 = vunpack.c.l.b16 %v3963
        %v4061 = vunpack.c.l.b16 %v3964
        %v4062 = vunpack.c.l.b16 %v3965
        %v4063 = vunpack.c.l.b16 %v3966
        %v4064 = vunpack.c.l.b16 %v3967
        %v4065 = vunpack.c.l.b16 %v3968
        %v4066 = vunpack.c.l.b16 %v3969
        %v4067 = vunpack.c.l.b16 %v3970
        %v4068 = vunpack.c.l.b16 %v3971
        %v4069 = vunpack.c.l.b16 %v3972
        %v4070 = vunpack.c.l.b16 %v3973
        %v4071 = vunpack.c.l.b16 %v3974
        %v4072 = vunpack.c.l.b16 %v3975
        %v4073 = vunpack.c.l.b16 %v3976
        %v4074 = vunpack.c.l.b16 %v3977
        %v4075 = vunpack.c.l.b16 %v3978
        %v4076 = vunpack.c.l.b16 %v3979
        %v4077 = vpack.c.b16 %v4030, %v4029
        %v4078 = vpack.c.b16 %v4032, %v4031
        %v4079 = vpack.c.b16 %v4034, %v4033
        %v4080 = vpack.c.b16 %v4036, %v4035
        %v4081 = vpack.c.b16 %v4038, %v4037
        %v4082 = vpack.c.b16 %v4040, %v4039
        %v4083 = vpack.c.b16 %v4042, %v4041
        %v4084 = vpack.c.b16 %v4044, %v4043
        %v4085 = vpack.c.b16 %v4046, %v4045
        %v4086 = vpack.c.b16 %v4048, %v4047
        %v4087 = vpack.c.b16 %v4050, %v4049
        %v4088 = vpack.c.b16 %v4052, %v4051
        %v4089 = vpack.c.b16 %v4054, %v4053
        %v4090 = vpack.c.b16 %v4056, %v4055
        %v4091 = vpack.c.b16 %v4058, %v4057
        %v4092 = vpack.c.b16 %v4060, %v4059
        %v4093 = vpack.c.b16 %v4062, %v4061
        %v4094 = vpack.c.b16 %v4064, %v4063
        %v4095 = vpack.c.b16 %v4066, %v4065
        %v4096 = vpack.c.b16 %v4068, %v4067
        %v4097 = vpack.c.b16 %v4070, %v4069
        %v4098 = vpack.c.b16 %v4072, %v4071
        %v4099 = vpack.c.b16 %v4074, %v4073
        %v4100 = vpack.c.b16 %v4076, %v4075
        %4125 = vmatpush.bf16.msra.mxu0 %v4084
        %4126 = vmatpush.bf16.msra.mxu0 %v4083
        %4127 = vmatpush.bf16.msra.mxu0 %v4082
        %4128 = vmatpush.bf16.msra.mxu0 %v4081
        %4129 = vmatpush.bf16.msra.mxu0 %v4080
        %4130 = vmatpush.bf16.msra.mxu0 %v4079
        %4131 = vmatpush.bf16.msra.mxu0 %v4078
        %4132 = vmatpush.bf16.msra.mxu0 %v4077
        %4133 = vmatmul.bf16.gmra.mxu0 %v3929
        %v4134 = vpop.f32.mrf.mxu0
        %v4135 = vadd.f32 %v3980, %v4134
        %v4136 = vpop.f32.mrf.mxu0
        %4137 = vdwg.mxu0
        %4138 = vmatpush.bf16.msra.mxu0 %v4092
        %4139 = vmatpush.bf16.msra.mxu0 %v4091
        %4140 = vmatpush.bf16.msra.mxu0 %v4090
        %4141 = vmatpush.bf16.msra.mxu0 %v4089
        %4142 = vmatpush.bf16.msra.mxu0 %v4088
        %4143 = vmatpush.bf16.msra.mxu0 %v4087
        %4144 = vmatpush.bf16.msra.mxu0 %v4086
        %4145 = vmatpush.bf16.msra.mxu0 %v4085
        %4146 = vmatmul.bf16.gmra.mxu0 %v3930
        %v4147 = vpop.f32.mrf.mxu0
        %v4148 = vadd.f32 %v4135, %v4147
        %v4149 = vpop.f32.mrf.mxu0
        %4150 = vdwg.mxu0
        %4151 = vmatpush.bf16.msra.mxu0 %v4100
        %4152 = vmatpush.bf16.msra.mxu0 %v4099
        %4153 = vmatpush.bf16.msra.mxu0 %v4098
        %4154 = vmatpush.bf16.msra.mxu0 %v4097
        %4155 = vmatpush.bf16.msra.mxu0 %v4096
        %4156 = vmatpush.bf16.msra.mxu0 %v4095
        %4157 = vmatpush.bf16.msra.mxu0 %v4094
        %4158 = vmatpush.bf16.msra.mxu0 %v4093
        %4159 = vmatmul.bf16.gmra.mxu0 %v3931
        %v4160 = vpop.f32.mrf.mxu0
        %v4161 = vadd.f32 %v4148, %v4160
        %v4162 = vpop.f32.mrf.mxu0
        %4163 = vdwg.mxu0
        %v4164 = vtanh.pop %v4161
        %vm4165 = vcmask 16384
        %4166 = vst.msk [vmem:[%s432] sm:$0x1] %vm4165, %v4164
        %s4167 = sand.u32 %s313, 1
        %s4168 = scalar_lea.sflag [#allocation3], %s4167
        %s4169 = sand.u32 %s313, 1
        %s4170 = scalar_lea.vmem [#allocation2], %s4169
        // Predicated region
        $region73: #{actor_forward.7} parent=71 // pred_check
          %p4171 = pneg %p323
        $region74: #{actor_forward.7} parent=71 // pred_check_branch
          %4173 = sbr.rel (%p4171) target = $region76
        $region75: #{actor_forward.7} parent=71 // pred_region
          %4175 = vsyncadd %s4168, 0
          %s4176 = scalar_lea.hbm %s13, %s27
          %s4178 = sshll.u32 %s4170, 4
          %s4179 = int_to_ptr.vmem [resolvable:$true] %s4178
          %s4180 = sshll.u32 %s4176, 4
          %s4181 = int_to_ptr.hbm [resolvable:$true] %s4180
          %4183 = dma.vmem_to_hbm [thread:$0]  %s4179, 16, %s4181, %s4168
        $region76: #{actor_forward.7} parent=71 // pred_fallthru
          _
      $region72: #{actor_forward.7} parent=5 // pred_fallthru
        _
      %p4184 = scmp.le.s32.totalorder 2, %s22
      // Predicated region
      $region77: #{actor_forward.7} parent=5 // pred_check
        %p4185 = pneg %p4184
      $region78: #{actor_forward.7} parent=5 // pred_check_branch
        %4187 = sbr.rel (%p4185) target = $region80
      $region79: #{actor_forward.7} parent=5 // pred_region
        %s4188 = ssub.s32 %s22, 2
        // Predicated region
        $region81: #{actor_forward.7} parent=79 // pred_check
          %p4189 = pneg %p329
        $region82: #{actor_forward.7} parent=79 // pred_check_branch
          %4191 = sbr.rel (%p4189) target = $region84
        $region83: #{actor_forward.7} parent=79 // pred_region
          %s4192 = sand.u32 %s314, 1
          %s4193 = scalar_lea.sflag [#allocation3], %s4192
          %s4194 = sand.u32 %s314, 1
          %s4195 = scalar_lea.vmem [#allocation2], %s4194
          %4197 = dma.done %s4193, 16
        $region84: #{actor_forward.7} parent=79 // pred_fallthru
          _
      $region80: #{actor_forward.7} parent=5 // pred_fallthru
        _
    $region6: #{actor_forward.7} parent=1 // loop_footer
      %s26 = sadd.s32 1, %s22
    $region7: #{actor_forward.7} parent=1 // loop_footer_branch
      %21 = sbr.rel target = $region3
    $region8: #{actor_forward.7} parent=1 // loop_exit
      _
    %4198 = vsyncpa [#allocation3], 1
    %s4199 = scalar_lea.sflag [#allocation3], 1
    %4200 = vsyncpa %s4199, 1

</llo_original>
